<compile_context>
chip_gen: v6e
topology: v6e:2x2x1
jax: 0.10.0
libtpu: 0.0.40
codegen_flags: <defaults>
</compile_context>

<pallas_src>
import functools

import jax
import jax.numpy as jnp
from jax.experimental import pallas as pl
from jax.experimental.pallas import tpu as pltpu

EPS = 1e-5
K_PAD = 128        # fc1 contraction padded 74 -> 128
TILE_N2 = 896      # fc2 column tile: 6272 = 7 * 896 (multiple of 128)


# ----------------------------------------------------------------------------
# Fused fc stack: Linear(74->1024)+BN+ReLU  then  Linear(1024->6272)+BN+ReLU
# One kernel, grid over fc2 column blocks; fc1 is tiny and recomputed per block
# so every block sees identical BN1 statistics and the axis stays "parallel".
# ----------------------------------------------------------------------------
def _fc_kernel(x_ref, w1_ref, b1_ref, g1_ref, be1_ref,
               w2_ref, g2_ref, be2_ref, o_ref):
    # fc1 + BN1 + ReLU (bf16 matmul, f32 accumulate / BN)
    h = jnp.dot(x_ref[...], w1_ref[...], preferred_element_type=jnp.float32)
    h = h + b1_ref[...]
    mu1 = jnp.mean(h, axis=0, keepdims=True)
    var1 = jnp.mean(jnp.square(h - mu1), axis=0, keepdims=True)
    h = (h - mu1) * jax.lax.rsqrt(var1 + EPS) * g1_ref[...] + be1_ref[...]
    h = jnp.maximum(h, 0.0)
    # fc2 (this column block) + BN2 + ReLU
    y = jnp.dot(h.astype(jnp.bfloat16), w2_ref[...],
                preferred_element_type=jnp.float32)
    mu2 = jnp.mean(y, axis=0, keepdims=True)
    var2 = jnp.mean(jnp.square(y - mu2), axis=0, keepdims=True)
    y = (y - mu2) * jax.lax.rsqrt(var2 + EPS) * g2_ref[...] + be2_ref[...]
    o_ref[...] = jnp.maximum(y, 0.0).astype(o_ref.dtype)


def fc_forward(x_bf16, pp):
    M = x_bf16.shape[0]
    kp, h1 = pp["fc1_w"].shape
    n2 = pp["fc2_w"].shape[1]
    assert n2 % TILE_N2 == 0
    const = lambda j: (0, 0)
    colmap = lambda j: (0, j)
    return pl.pallas_call(
        _fc_kernel,
        out_shape=jax.ShapeDtypeStruct((M, n2), jnp.float32),
        grid=(n2 // TILE_N2,),
        in_specs=[
            pl.BlockSpec((M, kp), const),        # x (padded, bf16)
            pl.BlockSpec((kp, h1), const),       # fc1 weight (bf16)
            pl.BlockSpec((1, h1), const),        # fc1 bias
            pl.BlockSpec((1, h1), const),        # bn1 gamma
            pl.BlockSpec((1, h1), const),        # bn1 beta
            pl.BlockSpec((h1, TILE_N2), colmap),  # fc2 weight block (bf16)
            pl.BlockSpec((1, TILE_N2), colmap),   # bn2 gamma block
            pl.BlockSpec((1, TILE_N2), colmap),   # bn2 beta block
        ],
        out_specs=pl.BlockSpec((M, TILE_N2), colmap),
        compiler_params=pltpu.CompilerParams(dimension_semantics=("parallel",)),
    )(x_bf16, pp["fc1_w"], pp["fc1_b"], pp["bn1_g"], pp["bn1_b"],
      pp["fc2_w"], pp["bn2_g"], pp["bn2_b"])


# ----------------------------------------------------------------------------
# Sub-pixel ConvTranspose2d (k=4, s=2, p=1):
#   out[n, 2q+r, 2p+c, co] = sum over a 2x2 tap subset of the 3x3 window of the
#   1-padded input at (q, p).  patches(rows=N*H*W, 9*Cin) @ Wsp(9*Cin, 4*Cout)
#   gives all four (r, c) sub-images as a lane-dense slab; bias/BN/act fused.
# ----------------------------------------------------------------------------
def _deconv_kernel(p_ref, w_ref, b_ref, g_ref, be_ref, o_ref, *, cout, do_bn, act):
    y = jnp.dot(p_ref[...], w_ref[...], preferred_element_type=jnp.float32)
    y = y + b_ref[...]                                   # (rows, 4*cout)
    if do_bn:
        # per-channel stats over all rows AND the 4 (r,c) sub-image groups
        s0 = y[:, 0 * cout:1 * cout]
        s1 = y[:, 1 * cout:2 * cout]
        s2 = y[:, 2 * cout:3 * cout]
        s3 = y[:, 3 * cout:4 * cout]
        ssum = s0 + s1 + s2 + s3
        ssq = s0 * s0 + s1 * s1 + s2 * s2 + s3 * s3
        mu = jnp.mean(ssum, axis=0, keepdims=True) * 0.25
        var = jnp.mean(ssq, axis=0, keepdims=True) * 0.25 - mu * mu
        inv = jax.lax.rsqrt(var + EPS)
        mu_f = jnp.concatenate([mu, mu, mu, mu], axis=1)
        inv_f = jnp.concatenate([inv, inv, inv, inv], axis=1)
        y = (y - mu_f) * inv_f * g_ref[...] + be_ref[...]
    if act == "relu":
        y = jnp.maximum(y, 0.0)
    elif act == "tanh":
        y = jnp.tanh(y)
    o_ref[...] = y.astype(o_ref.dtype)


def deconv_layer(patches, w, b, gamma, beta, *, cout, do_bn, act):
    M, K = patches.shape
    Nc = w.shape[1]
    kernel = functools.partial(_deconv_kernel, cout=cout, do_bn=do_bn, act=act)
    c2 = lambda i: (0, 0)
    return pl.pallas_call(
        kernel,
        out_shape=jax.ShapeDtypeStruct((M, Nc), jnp.float32),
        grid=(1,),
        in_specs=[pl.BlockSpec((M, K), c2),
                  pl.BlockSpec((K, Nc), c2),
                  pl.BlockSpec((1, Nc), c2),
                  pl.BlockSpec((1, Nc), c2),
                  pl.BlockSpec((1, Nc), c2)],
        out_specs=pl.BlockSpec((M, Nc), c2),
        compiler_params=pltpu.CompilerParams(dimension_semantics=("arbitrary",)),
    )(patches, w, b, gamma, beta)


# ----------------------------------------------------------------------------
# XLA-side glue (tiny tensors): patch extraction and sub-pixel interleave.
# ----------------------------------------------------------------------------
def _subpixel_patches(x_nhwc):
    """(N,H,W,C) -> (N*H*W, 9*C): 3x3 windows of the 1-padded input."""
    N, H, W, C = x_nhwc.shape
    xp = jnp.pad(x_nhwc, ((0, 0), (1, 1), (1, 1), (0, 0)))
    cols = [xp[:, a:a + H, b:b + W, :] for a in range(3) for b in range(3)]
    return jnp.concatenate(cols, axis=-1).reshape(N * H * W, 9 * C)


def _interleave(y, N, H, W, cout):
    """(N*H*W, 4*cout) grouped output -> (N, 2H, 2W, cout) NHWC."""
    return (y.reshape(N, H, W, 2, 2, cout)
             .transpose(0, 1, 3, 2, 4, 5)
             .reshape(N, 2 * H, 2 * W, cout))


# ----------------------------------------------------------------------------
# One-time weight packing (layout + bf16).
# ----------------------------------------------------------------------------
def _subpixel_weight(w_pt):
    """PyTorch ConvTranspose2d weight (Cin,Cout,4,4) -> (9*Cin, 4*Cout)."""
    cin, cout = w_pt.shape[0], w_pt.shape[1]
    w = jnp.zeros((9, cin, 4, cout), jnp.float32)
    for r in range(2):
        row_taps = ((0, 3), (1, 1)) if r == 0 else ((1, 2), (2, 0))   # (a, kh)
        for c in range(2):
            col_taps = ((0, 3), (1, 1)) if c == 0 else ((1, 2), (2, 0))  # (b, kw)
            g = r * 2 + c
            for a, kh in row_taps:
                for b, kw in col_taps:
                    t = a * 3 + b
                    w = w.at[t, :, g, :].set(w_pt[:, :, kh, kw].astype(jnp.float32))
    return w.reshape(9 * cin, 4 * cout)


def prepare_params(p):
    f32 = jnp.float32
    k_in, h1 = p["fc1_w"].shape                     # (74, 1024)
    n2 = p["fc2_w"].shape[1]                        # 6272
    # fc1: pad contraction 74 -> 128, bf16
    fc1_w = jnp.zeros((K_PAD, h1), f32).at[:k_in].set(p["fc1_w"]).astype(jnp.bfloat16)
    # fc2: permute columns CHW -> HWC (so output reshapes directly to NHWC), bf16
    perm = jnp.arange(n2).reshape(128, 7, 7).transpose(1, 2, 0).reshape(-1)
    fc2_w = p["fc2_w"][:, perm].astype(jnp.bfloat16)
    # deconv sub-pixel weights (bf16); per-channel vectors tiled to 4 groups
    def tile4(v):
        return jnp.tile(v.reshape(1, -1).astype(f32), (1, 4))
    return {
        "fc1_w": fc1_w,
        "fc1_b": p["fc1_b"].reshape(1, h1).astype(f32),
        "bn1_g": p["bn1_g"].reshape(1, h1).astype(f32),
        "bn1_b": p["bn1_b"].reshape(1, h1).astype(f32),
        "fc2_w": fc2_w,
        "bn2_g": p["bn2_g"][perm].reshape(1, n2).astype(f32),
        "bn2_b": p["bn2_b"][perm].reshape(1, n2).astype(f32),
        "dc1_w": _subpixel_weight(p["dc1_w"]).astype(jnp.bfloat16),   # (1152, 256)
        "dc1_b": tile4(p["dc1_b"]),
        "bn3_g": tile4(p["bn3_g"]),
        "bn3_b": tile4(p["bn3_b"]),
        "dc2_w": _subpixel_weight(p["dc2_w"]).astype(jnp.bfloat16),   # (576, 4)
        "dc2_b": tile4(p["dc2_b"]),
        "bn4_g": jnp.ones((1, 4), f32),     # dummies (no BN on last layer)
        "bn4_b": jnp.zeros((1, 4), f32),
    }


# ----------------------------------------------------------------------------
# Forward pass.
# ----------------------------------------------------------------------------
@jax.jit
def generator_forward(x, pp):
    N = x.shape[0]
    xin = jnp.pad(x, ((0, 0), (0, K_PAD - x.shape[1]))).astype(jnp.bfloat16)
    # fc1+BN+ReLU -> fc2+BN+ReLU (single fused kernel), output already HWC ordered
    h = fc_forward(xin, pp)                                   # (N, 6272) f32
    h = h.reshape(N, 7, 7, 128).astype(jnp.bfloat16)          # NHWC
    # ConvTranspose2d(128->64) + BN + ReLU  (sub-pixel form, fused BN/ReLU)
    p1 = _subpixel_patches(h)                                 # (N*49, 1152) bf16
    y1 = deconv_layer(p1, pp["dc1_w"], pp["dc1_b"], pp["bn3_g"], pp["bn3_b"],
                      cout=64, do_bn=True, act="relu")        # (N*49, 256) f32
    h2 = _interleave(y1, N, 7, 7, 64).astype(jnp.bfloat16)    # (N,14,14,64)
    # ConvTranspose2d(64->1) + Tanh
    p2 = _subpixel_patches(h2)                                # (N*196, 576) bf16
    y2 = deconv_layer(p2, pp["dc2_w"], pp["dc2_b"], pp["bn4_g"], pp["bn4_b"],
                      cout=1, do_bn=False, act="tanh")        # (N*196, 4) f32
    img = _interleave(y2, N, 14, 14, 1)                       # (N,28,28,1)
    return img.transpose(0, 3, 1, 2)                          # NCHW


# ----------------------------------------------------------------------------
# Parameter init (PyTorch layout) and smoke test.
# ----------------------------------------------------------------------------
def init_params(key):
    z_dim, cc_dim, dc_dim = 62, 2, 1
    in_dim = z_dim + cc_dim + dc_dim * 10          # 74
    ks = jax.random.split(key, 8)
    f32 = jnp.float32
    p = {
        "fc1_w": 0.05 * jax.random.normal(ks[0], (in_dim, 1024), f32),
        "fc1_b": 0.05 * jax.random.normal(ks[1], (1024,), f32),
        "bn1_g": jnp.ones((1024,), f32),
        "bn1_b": jnp.zeros((1024,), f32),
        "fc2_w": 0.05 * jax.random.normal(ks[2], (1024, 128 * 7 * 7), f32),  # bias=False
        "bn2_g": jnp.ones((128 * 7 * 7,), f32),
        "bn2_b": jnp.zeros((128 * 7 * 7,), f32),
        "dc1_w": 0.05 * jax.random.normal(ks[3], (128, 64, 4, 4), f32),      # (Cin,Cout,k,k)
        "dc1_b": 0.05 * jax.random.normal(ks[4], (64,), f32),
        "bn3_g": jnp.ones((64,), f32),
        "bn3_b": jnp.zeros((64,), f32),
        "dc2_w": 0.05 * jax.random.normal(ks[5], (64, 1, 4, 4), f32),
        "dc2_b": 0.05 * jax.random.normal(ks[6], (1,), f32),
    }
    return p, in_dim, ks[7]


if __name__ == "__main__":
    params, in_dim, xkey = init_params(jax.random.PRNGKey(0))
    pp = prepare_params(params)          # one-time weight packing (bf16 / layout)
    batch = 2
    x = jax.random.normal(xkey, (batch, in_dim), jnp.float32)   # (2, 74) latent code
    out = generator_forward(x, pp)
    out = jax.block_until_ready(out)
    assert out.shape == (batch, 1, 28, 28), out.shape
    assert bool(jnp.all(jnp.isfinite(out)))
    assert bool(jnp.all(jnp.abs(out) <= 1.0 + 1e-6))            # tanh range
    print("KERNEL_OK")
</pallas_src>

<mosaic_0001>
module attributes {stable_mosaic.version = 11 : i64} {
  func.func @_fc_kernel(%arg0: i32, %arg1: memref<2x128xbf16, #tpu.memory_space<vmem>>, %arg2: memref<128x1024xbf16, #tpu.memory_space<vmem>>, %arg3: memref<1x1024xf32, #tpu.memory_space<vmem>>, %arg4: memref<1x1024xf32, #tpu.memory_space<vmem>>, %arg5: memref<1x1024xf32, #tpu.memory_space<vmem>>, %arg6: memref<1024x896xbf16, #tpu.memory_space<vmem>>, %arg7: memref<1x896xf32, #tpu.memory_space<vmem>>, %arg8: memref<1x896xf32, #tpu.memory_space<vmem>>, %arg9: memref<2x896xf32, #tpu.memory_space<vmem>>) attributes {dimension_semantics = [#tpu.dimension_semantics<parallel>], iteration_bounds = array<i64: 7>, scalar_prefetch = 0 : i64, scratch_operands = 0 : i64, tpu.core_type = #tpu.core_type<tc>, window_params = [{pipeline_mode = #tpu.pipeline_mode<synchronous>, transform_indices = @transform_0, window_bounds = array<i64: 2, 128>}, {pipeline_mode = #tpu.pipeline_mode<synchronous>, transform_indices = @transform_1, window_bounds = array<i64: 128, 1024>}, {pipeline_mode = #tpu.pipeline_mode<synchronous>, transform_indices = @transform_2, window_bounds = array<i64: 1, 1024>}, {pipeline_mode = #tpu.pipeline_mode<synchronous>, transform_indices = @transform_3, window_bounds = array<i64: 1, 1024>}, {pipeline_mode = #tpu.pipeline_mode<synchronous>, transform_indices = @transform_4, window_bounds = array<i64: 1, 1024>}, {transform_indices = @transform_5, window_bounds = array<i64: 1024, 896>}, {transform_indices = @transform_6, window_bounds = array<i64: 1, 896>}, {transform_indices = @transform_7, window_bounds = array<i64: 1, 896>}, {transform_indices = @transform_8, window_bounds = array<i64: 2, 896>}]} {
    %c0 = arith.constant 0 : index
    %c0_0 = arith.constant 0 : index
    %0 = vector.load %arg1[%c0, %c0_0] : memref<2x128xbf16, #tpu.memory_space<vmem>>, vector<2x128xbf16>
    %c0_1 = arith.constant 0 : index
    %c0_2 = arith.constant 0 : index
    %1 = vector.load %arg2[%c0_1, %c0_2] : memref<128x1024xbf16, #tpu.memory_space<vmem>>, vector<128x1024xbf16>
    %cst = arith.constant dense<0.000000e+00> : vector<2x1024xf32>
    %2 = tpu.matmul %0, %1, %cst {dimension_numbers = #tpu.dot_dimension_numbers<[1], [0], [0], [1], [0, 0, 1, 1], [], []>} : vector<2x128xbf16>, vector<128x1024xbf16>, vector<2x1024xf32> -> vector<2x1024xf32>
    %c0_3 = arith.constant 0 : index
    %c0_4 = arith.constant 0 : index
    %3 = vector.load %arg3[%c0_3, %c0_4] : memref<1x1024xf32, #tpu.memory_space<vmem>>, vector<1x1024xf32>
    %4 = vector.broadcast %3 : vector<1x1024xf32> to vector<2x1024xf32>
    %5 = arith.addf %2, %4 : vector<2x1024xf32>
    %cst_5 = arith.constant dense<0.000000e+00> : vector<1024xf32>
    %6 = vector.multi_reduction <add>, %5, %cst_5 [0] : vector<2x1024xf32> to vector<1024xf32>
    %7 = vector.shape_cast %6 : vector<1024xf32> to vector<1x1024xf32>
    %cst_6 = arith.constant 2.000000e+00 : f32
    %8 = vector.broadcast %cst_6 : f32 to vector<1x1024xf32>
    %9 = arith.divf %7, %8 : vector<1x1024xf32>
    %10 = vector.broadcast %9 : vector<1x1024xf32> to vector<2x1024xf32>
    %11 = arith.subf %5, %10 : vector<2x1024xf32>
    %12 = arith.mulf %11, %11 : vector<2x1024xf32>
    %cst_7 = arith.constant dense<0.000000e+00> : vector<1024xf32>
    %13 = vector.multi_reduction <add>, %12, %cst_7 [0] : vector<2x1024xf32> to vector<1024xf32>
    %14 = vector.shape_cast %13 : vector<1024xf32> to vector<1x1024xf32>
    %cst_8 = arith.constant 2.000000e+00 : f32
    %15 = vector.broadcast %cst_8 : f32 to vector<1x1024xf32>
    %16 = arith.divf %14, %15 : vector<1x1024xf32>
    %17 = vector.broadcast %9 : vector<1x1024xf32> to vector<2x1024xf32>
    %18 = arith.subf %5, %17 : vector<2x1024xf32>
    %cst_9 = arith.constant 9.99999974E-6 : f32
    %19 = vector.broadcast %cst_9 : f32 to vector<1x1024xf32>
    %20 = arith.addf %16, %19 : vector<1x1024xf32>
    %21 = math.rsqrt %20 : vector<1x1024xf32>
    %22 = vector.broadcast %21 : vector<1x1024xf32> to vector<2x1024xf32>
    %23 = arith.mulf %18, %22 : vector<2x1024xf32>
    %c0_10 = arith.constant 0 : index
    %c0_11 = arith.constant 0 : index
    %24 = vector.load %arg4[%c0_10, %c0_11] : memref<1x1024xf32, #tpu.memory_space<vmem>>, vector<1x1024xf32>
    %25 = vector.broadcast %24 : vector<1x1024xf32> to vector<2x1024xf32>
    %26 = arith.mulf %23, %25 : vector<2x1024xf32>
    %c0_12 = arith.constant 0 : index
    %c0_13 = arith.constant 0 : index
    %27 = vector.load %arg5[%c0_12, %c0_13] : memref<1x1024xf32, #tpu.memory_space<vmem>>, vector<1x1024xf32>
    %28 = vector.broadcast %27 : vector<1x1024xf32> to vector<2x1024xf32>
    %29 = arith.addf %26, %28 : vector<2x1024xf32>
    %cst_14 = arith.constant 0.000000e+00 : f32
    %30 = vector.broadcast %cst_14 : f32 to vector<2x1024xf32>
    %31 = arith.maximumf %29, %30 : vector<2x1024xf32>
    %32 = arith.truncf %31 : vector<2x1024xf32> to vector<2x1024xbf16>
    %c0_15 = arith.constant 0 : index
    %c0_16 = arith.constant 0 : index
    %33 = vector.load %arg6[%c0_15, %c0_16] : memref<1024x896xbf16, #tpu.memory_space<vmem>>, vector<1024x896xbf16>
    %cst_17 = arith.constant dense<0.000000e+00> : vector<2x896xf32>
    %34 = tpu.matmul %32, %33, %cst_17 {dimension_numbers = #tpu.dot_dimension_numbers<[1], [0], [0], [1], [0, 0, 1, 1], [], []>} : vector<2x1024xbf16>, vector<1024x896xbf16>, vector<2x896xf32> -> vector<2x896xf32>
    %cst_18 = arith.constant dense<0.000000e+00> : vector<896xf32>
    %35 = vector.multi_reduction <add>, %34, %cst_18 [0] : vector<2x896xf32> to vector<896xf32>
    %36 = vector.shape_cast %35 : vector<896xf32> to vector<1x896xf32>
    %cst_19 = arith.constant 2.000000e+00 : f32
    %37 = vector.broadcast %cst_19 : f32 to vector<1x896xf32>
    %38 = arith.divf %36, %37 : vector<1x896xf32>
    %39 = vector.broadcast %38 : vector<1x896xf32> to vector<2x896xf32>
    %40 = arith.subf %34, %39 : vector<2x896xf32>
    %41 = arith.mulf %40, %40 : vector<2x896xf32>
    %cst_20 = arith.constant dense<0.000000e+00> : vector<896xf32>
    %42 = vector.multi_reduction <add>, %41, %cst_20 [0] : vector<2x896xf32> to vector<896xf32>
    %43 = vector.shape_cast %42 : vector<896xf32> to vector<1x896xf32>
    %cst_21 = arith.constant 2.000000e+00 : f32
    %44 = vector.broadcast %cst_21 : f32 to vector<1x896xf32>
    %45 = arith.divf %43, %44 : vector<1x896xf32>
    %46 = vector.broadcast %38 : vector<1x896xf32> to vector<2x896xf32>
    %47 = arith.subf %34, %46 : vector<2x896xf32>
    %cst_22 = arith.constant 9.99999974E-6 : f32
    %48 = vector.broadcast %cst_22 : f32 to vector<1x896xf32>
    %49 = arith.addf %45, %48 : vector<1x896xf32>
    %50 = math.rsqrt %49 : vector<1x896xf32>
    %51 = vector.broadcast %50 : vector<1x896xf32> to vector<2x896xf32>
    %52 = arith.mulf %47, %51 : vector<2x896xf32>
    %c0_23 = arith.constant 0 : index
    %c0_24 = arith.constant 0 : index
    %53 = vector.load %arg7[%c0_23, %c0_24] : memref<1x896xf32, #tpu.memory_space<vmem>>, vector<1x896xf32>
    %54 = vector.broadcast %53 : vector<1x896xf32> to vector<2x896xf32>
    %55 = arith.mulf %52, %54 : vector<2x896xf32>
    %c0_25 = arith.constant 0 : index
    %c0_26 = arith.constant 0 : index
    %56 = vector.load %arg8[%c0_25, %c0_26] : memref<1x896xf32, #tpu.memory_space<vmem>>, vector<1x896xf32>
    %57 = vector.broadcast %56 : vector<1x896xf32> to vector<2x896xf32>
    %58 = arith.addf %55, %57 : vector<2x896xf32>
    %cst_27 = arith.constant 0.000000e+00 : f32
    %59 = vector.broadcast %cst_27 : f32 to vector<2x896xf32>
    %60 = arith.maximumf %58, %59 : vector<2x896xf32>
    %c0_28 = arith.constant 0 : index
    %c0_29 = arith.constant 0 : index
    %61 = vector.load %arg9[%c0_28, %c0_29] : memref<2x896xf32, #tpu.memory_space<vmem>>, vector<2x896xf32>
    tpu.vector_store %arg9[%c0_28, %c0_29], %60 {strides = array<i32>} : memref<2x896xf32, #tpu.memory_space<vmem>>, vector<2x896xf32>,
    return
  }
  func.func @transform_0(%arg0: i32) -> (i32, i32) {
    %c0_i32 = arith.constant 0 : i32
    %c0_i32_0 = arith.constant 0 : i32
    %c0_i32_1 = arith.constant 0 : i32
    return %c0_i32, %c0_i32_0 : i32, i32
  }
  func.func @transform_1(%arg0: i32) -> (i32, i32) {
    %c0_i32 = arith.constant 0 : i32
    %c0_i32_0 = arith.constant 0 : i32
    %c0_i32_1 = arith.constant 0 : i32
    return %c0_i32, %c0_i32_0 : i32, i32
  }
  func.func @transform_2(%arg0: i32) -> (i32, i32) {
    %c0_i32 = arith.constant 0 : i32
    %c0_i32_0 = arith.constant 0 : i32
    %c0_i32_1 = arith.constant 0 : i32
    return %c0_i32, %c0_i32_0 : i32, i32
  }
  func.func @transform_3(%arg0: i32) -> (i32, i32) {
    %c0_i32 = arith.constant 0 : i32
    %c0_i32_0 = arith.constant 0 : i32
    %c0_i32_1 = arith.constant 0 : i32
    return %c0_i32, %c0_i32_0 : i32, i32
  }
  func.func @transform_4(%arg0: i32) -> (i32, i32) {
    %c0_i32 = arith.constant 0 : i32
    %c0_i32_0 = arith.constant 0 : i32
    %c0_i32_1 = arith.constant 0 : i32
    return %c0_i32, %c0_i32_0 : i32, i32
  }
  func.func @transform_5(%arg0: i32) -> (i32, i32) {
    %c0_i32 = arith.constant 0 : i32
    %c0_i32_0 = arith.constant 0 : i32
    return %c0_i32, %arg0 : i32, i32
  }
  func.func @transform_6(%arg0: i32) -> (i32, i32) {
    %c0_i32 = arith.constant 0 : i32
    %c0_i32_0 = arith.constant 0 : i32
    return %c0_i32, %arg0 : i32, i32
  }
  func.func @transform_7(%arg0: i32) -> (i32, i32) {
    %c0_i32 = arith.constant 0 : i32
    %c0_i32_0 = arith.constant 0 : i32
    return %c0_i32, %arg0 : i32, i32
  }
  func.func @transform_8(%arg0: i32) -> (i32, i32) {
    %c0_i32 = arith.constant 0 : i32
    %c0_i32_0 = arith.constant 0 : i32
    return %c0_i32, %arg0 : i32, i32
  }
}

module attributes {stable_mosaic.version = 11 : i64} {
  func.func @_deconv_kernel(%arg0: i32, %arg1: memref<98x1152xbf16, #tpu.memory_space<vmem>>, %arg2: memref<1152x256xbf16, #tpu.memory_space<vmem>>, %arg3: memref<1x256xf32, #tpu.memory_space<vmem>>, %arg4: memref<1x256xf32, #tpu.memory_space<vmem>>, %arg5: memref<1x256xf32, #tpu.memory_space<vmem>>, %arg6: memref<98x256xf32, #tpu.memory_space<vmem>>) attributes {dimension_semantics = [#tpu.dimension_semantics<arbitrary>], iteration_bounds = array<i64: 1>, scalar_prefetch = 0 : i64, scratch_operands = 0 : i64, tpu.core_type = #tpu.core_type<tc>, window_params = [{pipeline_mode = #tpu.pipeline_mode<synchronous>, transform_indices = @transform_0, window_bounds = array<i64: 98, 1152>}, {pipeline_mode = #tpu.pipeline_mode<synchronous>, transform_indices = @transform_1, window_bounds = array<i64: 1152, 256>}, {pipeline_mode = #tpu.pipeline_mode<synchronous>, transform_indices = @transform_2, window_bounds = array<i64: 1, 256>}, {pipeline_mode = #tpu.pipeline_mode<synchronous>, transform_indices = @transform_3, window_bounds = array<i64: 1, 256>}, {pipeline_mode = #tpu.pipeline_mode<synchronous>, transform_indices = @transform_4, window_bounds = array<i64: 1, 256>}, {pipeline_mode = #tpu.pipeline_mode<synchronous>, transform_indices = @transform_5, window_bounds = array<i64: 98, 256>}]} {
    %c0 = arith.constant 0 : index
    %c0_0 = arith.constant 0 : index
    %0 = vector.load %arg1[%c0, %c0_0] : memref<98x1152xbf16, #tpu.memory_space<vmem>>, vector<98x1152xbf16>
    %c0_1 = arith.constant 0 : index
    %c0_2 = arith.constant 0 : index
    %1 = vector.load %arg2[%c0_1, %c0_2] : memref<1152x256xbf16, #tpu.memory_space<vmem>>, vector<1152x256xbf16>
    %cst = arith.constant dense<0.000000e+00> : vector<98x256xf32>
    %2 = tpu.matmul %0, %1, %cst {dimension_numbers = #tpu.dot_dimension_numbers<[1], [0], [0], [1], [0, 0, 1, 1], [], []>} : vector<98x1152xbf16>, vector<1152x256xbf16>, vector<98x256xf32> -> vector<98x256xf32>
    %c0_3 = arith.constant 0 : index
    %c0_4 = arith.constant 0 : index
    %3 = vector.load %arg3[%c0_3, %c0_4] : memref<1x256xf32, #tpu.memory_space<vmem>>, vector<1x256xf32>
    %4 = vector.broadcast %3 : vector<1x256xf32> to vector<98x256xf32>
    %5 = arith.addf %2, %4 : vector<98x256xf32>
    %6 = vector.extract_strided_slice %5 {offsets = [0, 0], sizes = [98, 64], strides = [1, 1]} : vector<98x256xf32> to vector<98x64xf32>
    %7 = vector.extract_strided_slice %5 {offsets = [0, 64], sizes = [98, 64], strides = [1, 1]} : vector<98x256xf32> to vector<98x64xf32>
    %8 = vector.extract_strided_slice %5 {offsets = [0, 128], sizes = [98, 64], strides = [1, 1]} : vector<98x256xf32> to vector<98x64xf32>
    %9 = vector.extract_strided_slice %5 {offsets = [0, 192], sizes = [98, 64], strides = [1, 1]} : vector<98x256xf32> to vector<98x64xf32>
    %10 = arith.addf %6, %7 : vector<98x64xf32>
    %11 = arith.addf %10, %8 : vector<98x64xf32>
    %12 = arith.addf %11, %9 : vector<98x64xf32>
    %13 = arith.mulf %6, %6 : vector<98x64xf32>
    %14 = arith.mulf %7, %7 : vector<98x64xf32>
    %15 = arith.addf %13, %14 : vector<98x64xf32>
    %16 = arith.mulf %8, %8 : vector<98x64xf32>
    %17 = arith.addf %15, %16 : vector<98x64xf32>
    %18 = arith.mulf %9, %9 : vector<98x64xf32>
    %19 = arith.addf %17, %18 : vector<98x64xf32>
    %cst_5 = arith.constant dense<0.000000e+00> : vector<64xf32>
    %20 = vector.multi_reduction <add>, %12, %cst_5 [0] : vector<98x64xf32> to vector<64xf32>
    %21 = vector.shape_cast %20 : vector<64xf32> to vector<1x64xf32>
    %cst_6 = arith.constant 9.800000e+01 : f32
    %22 = vector.broadcast %cst_6 : f32 to vector<1x64xf32>
    %23 = arith.divf %21, %22 : vector<1x64xf32>
    %cst_7 = arith.constant 2.500000e-01 : f32
    %24 = vector.broadcast %cst_7 : f32 to vector<1x64xf32>
    %25 = arith.mulf %23, %24 : vector<1x64xf32>
    %cst_8 = arith.constant dense<0.000000e+00> : vector<64xf32>
    %26 = vector.multi_reduction <add>, %19, %cst_8 [0] : vector<98x64xf32> to vector<64xf32>
    %27 = vector.shape_cast %26 : vector<64xf32> to vector<1x64xf32>
    %cst_9 = arith.constant 9.800000e+01 : f32
    %28 = vector.broadcast %cst_9 : f32 to vector<1x64xf32>
    %29 = arith.divf %27, %28 : vector<1x64xf32>
    %cst_10 = arith.constant 2.500000e-01 : f32
    %30 = vector.broadcast %cst_10 : f32 to vector<1x64xf32>
    %31 = arith.mulf %29, %30 : vector<1x64xf32>
    %32 = arith.mulf %25, %25 : vector<1x64xf32>
    %33 = arith.subf %31, %32 : vector<1x64xf32>
    %cst_11 = arith.constant 9.99999974E-6 : f32
    %34 = vector.broadcast %cst_11 : f32 to vector<1x64xf32>
    %35 = arith.addf %33, %34 : vector<1x64xf32>
    %36 = math.rsqrt %35 : vector<1x64xf32>
    %37 = tpu.concatenate %25, %25, %25, %25 in 1 : vector<1x64xf32>, vector<1x64xf32>, vector<1x64xf32>, vector<1x64xf32> -> vector<1x256xf32>
    %38 = tpu.concatenate %36, %36, %36, %36 in 1 : vector<1x64xf32>, vector<1x64xf32>, vector<1x64xf32>, vector<1x64xf32> -> vector<1x256xf32>
    %39 = vector.broadcast %37 : vector<1x256xf32> to vector<98x256xf32>
    %40 = arith.subf %5, %39 : vector<98x256xf32>
    %41 = vector.broadcast %38 : vector<1x256xf32> to vector<98x256xf32>
    %42 = arith.mulf %40, %41 : vector<98x256xf32>
    %c0_12 = arith.constant 0 : index
    %c0_13 = arith.constant 0 : index
    %43 = vector.load %arg4[%c0_12, %c0_13] : memref<1x256xf32, #tpu.memory_space<vmem>>, vector<1x256xf32>
    %44 = vector.broadcast %43 : vector<1x256xf32> to vector<98x256xf32>
    %45 = arith.mulf %42, %44 : vector<98x256xf32>
    %c0_14 = arith.constant 0 : index
    %c0_15 = arith.constant 0 : index
    %46 = vector.load %arg5[%c0_14, %c0_15] : memref<1x256xf32, #tpu.memory_space<vmem>>, vector<1x256xf32>
    %47 = vector.broadcast %46 : vector<1x256xf32> to vector<98x256xf32>
    %48 = arith.addf %45, %47 : vector<98x256xf32>
    %cst_16 = arith.constant 0.000000e+00 : f32
    %49 = vector.broadcast %cst_16 : f32 to vector<98x256xf32>
    %50 = arith.maximumf %48, %49 : vector<98x256xf32>
    %c0_17 = arith.constant 0 : index
    %c0_18 = arith.constant 0 : index
    %51 = vector.load %arg6[%c0_17, %c0_18] : memref<98x256xf32, #tpu.memory_space<vmem>>, vector<98x256xf32>
    tpu.vector_store %arg6[%c0_17, %c0_18], %50 {strides = array<i32>} : memref<98x256xf32, #tpu.memory_space<vmem>>, vector<98x256xf32>,
    return
  }
  func.func @transform_0(%arg0: i32) -> (i32, i32) {
    %c0_i32 = arith.constant 0 : i32
    %c0_i32_0 = arith.constant 0 : i32
    %c0_i32_1 = arith.constant 0 : i32
    return %c0_i32, %c0_i32_0 : i32, i32
  }
  func.func @transform_1(%arg0: i32) -> (i32, i32) {
    %c0_i32 = arith.constant 0 : i32
    %c0_i32_0 = arith.constant 0 : i32
    %c0_i32_1 = arith.constant 0 : i32
    return %c0_i32, %c0_i32_0 : i32, i32
  }
  func.func @transform_2(%arg0: i32) -> (i32, i32) {
    %c0_i32 = arith.constant 0 : i32
    %c0_i32_0 = arith.constant 0 : i32
    %c0_i32_1 = arith.constant 0 : i32
    return %c0_i32, %c0_i32_0 : i32, i32
  }
  func.func @transform_3(%arg0: i32) -> (i32, i32) {
    %c0_i32 = arith.constant 0 : i32
    %c0_i32_0 = arith.constant 0 : i32
    %c0_i32_1 = arith.constant 0 : i32
    return %c0_i32, %c0_i32_0 : i32, i32
  }
  func.func @transform_4(%arg0: i32) -> (i32, i32) {
    %c0_i32 = arith.constant 0 : i32
    %c0_i32_0 = arith.constant 0 : i32
    %c0_i32_1 = arith.constant 0 : i32
    return %c0_i32, %c0_i32_0 : i32, i32
  }
  func.func @transform_5(%arg0: i32) -> (i32, i32) {
    %c0_i32 = arith.constant 0 : i32
    %c0_i32_0 = arith.constant 0 : i32
    %c0_i32_1 = arith.constant 0 : i32
    return %c0_i32, %c0_i32_0 : i32, i32
  }
}

module attributes {stable_mosaic.version = 11 : i64} {
  func.func @_deconv_kernel(%arg0: i32, %arg1: memref<392x576xbf16, #tpu.memory_space<vmem>>, %arg2: memref<576x4xbf16, #tpu.memory_space<vmem>>, %arg3: memref<1x4xf32, #tpu.memory_space<vmem>>, %arg4: memref<1x4xf32, #tpu.memory_space<vmem>>, %arg5: memref<1x4xf32, #tpu.memory_space<vmem>>, %arg6: memref<392x4xf32, #tpu.memory_space<vmem>>) attributes {dimension_semantics = [#tpu.dimension_semantics<arbitrary>], iteration_bounds = array<i64: 1>, scalar_prefetch = 0 : i64, scratch_operands = 0 : i64, tpu.core_type = #tpu.core_type<tc>, window_params = [{pipeline_mode = #tpu.pipeline_mode<synchronous>, transform_indices = @transform_0, window_bounds = array<i64: 392, 576>}, {pipeline_mode = #tpu.pipeline_mode<synchronous>, transform_indices = @transform_1, window_bounds = array<i64: 576, 4>}, {pipeline_mode = #tpu.pipeline_mode<synchronous>, transform_indices = @transform_2, window_bounds = array<i64: 1, 4>}, {pipeline_mode = #tpu.pipeline_mode<synchronous>, transform_indices = @transform_3, window_bounds = array<i64: 1, 4>}, {pipeline_mode = #tpu.pipeline_mode<synchronous>, transform_indices = @transform_4, window_bounds = array<i64: 1, 4>}, {pipeline_mode = #tpu.pipeline_mode<synchronous>, transform_indices = @transform_5, window_bounds = array<i64: 392, 4>}]} {
    %c0 = arith.constant 0 : index
    %c0_0 = arith.constant 0 : index
    %0 = vector.load %arg1[%c0, %c0_0] : memref<392x576xbf16, #tpu.memory_space<vmem>>, vector<392x576xbf16>
    %c0_1 = arith.constant 0 : index
    %c0_2 = arith.constant 0 : index
    %1 = vector.load %arg2[%c0_1, %c0_2] : memref<576x4xbf16, #tpu.memory_space<vmem>>, vector<576x4xbf16>
    %cst = arith.constant dense<0.000000e+00> : vector<392x4xf32>
    %2 = tpu.matmul %0, %1, %cst {dimension_numbers = #tpu.dot_dimension_numbers<[1], [0], [0], [1], [0, 0, 1, 1], [], []>} : vector<392x576xbf16>, vector<576x4xbf16>, vector<392x4xf32> -> vector<392x4xf32>
    %c0_3 = arith.constant 0 : index
    %c0_4 = arith.constant 0 : index
    %3 = vector.load %arg3[%c0_3, %c0_4] : memref<1x4xf32, #tpu.memory_space<vmem>>, vector<1x4xf32>
    %4 = vector.broadcast %3 : vector<1x4xf32> to vector<392x4xf32>
    %5 = arith.addf %2, %4 : vector<392x4xf32>
    %6 = math.tanh %5 : vector<392x4xf32>
    %c0_5 = arith.constant 0 : index
    %c0_6 = arith.constant 0 : index
    %7 = vector.load %arg6[%c0_5, %c0_6] : memref<392x4xf32, #tpu.memory_space<vmem>>, vector<392x4xf32>
    tpu.vector_store %arg6[%c0_5, %c0_6], %6 {strides = array<i32>} : memref<392x4xf32, #tpu.memory_space<vmem>>, vector<392x4xf32>,
    return
  }
  func.func @transform_0(%arg0: i32) -> (i32, i32) {
    %c0_i32 = arith.constant 0 : i32
    %c0_i32_0 = arith.constant 0 : i32
    %c0_i32_1 = arith.constant 0 : i32
    return %c0_i32, %c0_i32_0 : i32, i32
  }
  func.func @transform_1(%arg0: i32) -> (i32, i32) {
    %c0_i32 = arith.constant 0 : i32
    %c0_i32_0 = arith.constant 0 : i32
    %c0_i32_1 = arith.constant 0 : i32
    return %c0_i32, %c0_i32_0 : i32, i32
  }
  func.func @transform_2(%arg0: i32) -> (i32, i32) {
    %c0_i32 = arith.constant 0 : i32
    %c0_i32_0 = arith.constant 0 : i32
    %c0_i32_1 = arith.constant 0 : i32
    return %c0_i32, %c0_i32_0 : i32, i32
  }
  func.func @transform_3(%arg0: i32) -> (i32, i32) {
    %c0_i32 = arith.constant 0 : i32
    %c0_i32_0 = arith.constant 0 : i32
    %c0_i32_1 = arith.constant 0 : i32
    return %c0_i32, %c0_i32_0 : i32, i32
  }
  func.func @transform_4(%arg0: i32) -> (i32, i32) {
    %c0_i32 = arith.constant 0 : i32
    %c0_i32_0 = arith.constant 0 : i32
    %c0_i32_1 = arith.constant 0 : i32
    return %c0_i32, %c0_i32_0 : i32, i32
  }
  func.func @transform_5(%arg0: i32) -> (i32, i32) {
    %c0_i32 = arith.constant 0 : i32
    %c0_i32_0 = arith.constant 0 : i32
    %c0_i32_1 = arith.constant 0 : i32
    return %c0_i32, %c0_i32_0 : i32, i32
  }
}

</mosaic_0001>

<llo_original>
// kernel: generator_forward.4
$region0: #{generator_forward.4}
  #allocation0 [shape = 'u32[]', space=smem, size = 0x4, offset = 0x4, fixed_abs, tag = 'smem constant byte address 0x4 - core index']
  #allocation1 [shape = 'u32[144,128]{1,0:T(1,128)}', space=vmem, size = 0x12000, scoped, tag = 'internal scratch']
  %s0 = inlined_call_operand.vmem [shape: bf16[98,1152], index: 0, kind: input, shape index: {}]
  %s1 = inlined_call_operand.vmem [shape: bf16[1152,256], index: 1, kind: input, shape index: {}]
  %s2 = inlined_call_operand.vmem [shape: f32[1,256], index: 2, kind: input, shape index: {}]
  %s3 = inlined_call_operand.vmem [shape: f32[1,256], index: 3, kind: input, shape index: {}]
  %s4 = inlined_call_operand.vmem [shape: f32[1,256], index: 4, kind: input, shape index: {}]
  %s5 = inlined_call_operand.vmem [shape: f32[98,256], index: 5, kind: output, shape index: {}]
  %s6 = sld [smem:[#allocation0]]
  $region30: #{generator_forward.4} parent=0
    _
  %s8 = ssub.s32 1, %s6
  %s9 = scalar_select 0, %s8, %s6
  // Predicated region
  $region2: #{generator_forward.4} parent=0 // pred_check
    _
  $region3: #{generator_forward.4} parent=0 // pred_check_branch
    %11 = sbr.rel (0) target = $region5
  $region4: #{generator_forward.4} parent=0 // pred_region
    _
  $region5: #{generator_forward.4} parent=0 // pred_fallthru
    _
  // Predicated region
  $region6: #{generator_forward.4} parent=0 // pred_check
    _
  $region7: #{generator_forward.4} parent=0 // pred_check_branch
    %13 = sbr.rel (0) target = $region9
  $region8: #{generator_forward.4} parent=0 // pred_region
    _
  $region9: #{generator_forward.4} parent=0 // pred_fallthru
    _
  // Predicated region
  $region10: #{generator_forward.4} parent=0 // pred_check
    _
  $region11: #{generator_forward.4} parent=0 // pred_check_branch
    %15 = sbr.rel (0) target = $region13
  $region12: #{generator_forward.4} parent=0 // pred_region
    _
  $region13: #{generator_forward.4} parent=0 // pred_fallthru
    _
  // Predicated region
  $region14: #{generator_forward.4} parent=0 // pred_check
    _
  $region15: #{generator_forward.4} parent=0 // pred_check_branch
    %17 = sbr.rel (0) target = $region17
  $region16: #{generator_forward.4} parent=0 // pred_region
    _
  $region17: #{generator_forward.4} parent=0 // pred_fallthru
    _
  // Predicated region
  $region18: #{generator_forward.4} parent=0 // pred_check
    _
  $region19: #{generator_forward.4} parent=0 // pred_check_branch
    %19 = sbr.rel (0) target = $region21
  $region20: #{generator_forward.4} parent=0 // pred_region
    _
  $region21: #{generator_forward.4} parent=0 // pred_fallthru
    _
  %v21 = vld [vmem:[%s0] sm:$0xff]
  %v22 = vld [vmem:[%s0 + $0x8] sm:$0xff]
  %v23 = vld [vmem:[%s0 + $0x10] sm:$0xff]
  %v24 = vld [vmem:[%s0 + $0x18] sm:$0xff]
  %v25 = vld [vmem:[%s0 + $0x20] sm:$0xf]
  %v26 = vld [vmem:[%s0 + $0x24] sm:$0xff]
  %v27 = vld [vmem:[%s0 + $0x2c] sm:$0xff]
  %v28 = vld [vmem:[%s0 + $0x34] sm:$0xff]
  %v29 = vld [vmem:[%s0 + $0x3c] sm:$0xff]
  %v30 = vld [vmem:[%s0 + $0x44] sm:$0xf]
  %v31 = vld [vmem:[%s0 + $0x48] sm:$0xff]
  %v32 = vld [vmem:[%s0 + $0x50] sm:$0xff]
  %v33 = vld [vmem:[%s0 + $0x58] sm:$0xff]
  %v34 = vld [vmem:[%s0 + $0x60] sm:$0xff]
  %v35 = vld [vmem:[%s0 + $0x68] sm:$0xf]
  %v36 = vld [vmem:[%s0 + $0x6c] sm:$0xff]
  %v37 = vld [vmem:[%s0 + $0x74] sm:$0xff]
  %v38 = vld [vmem:[%s0 + $0x7c] sm:$0xff]
  %v39 = vld [vmem:[%s0 + $0x84] sm:$0xff]
  %v40 = vld [vmem:[%s0 + $0x8c] sm:$0xf]
  %v41 = vld [vmem:[%s0 + $0x90] sm:$0xff]
  %v42 = vld [vmem:[%s0 + $0x98] sm:$0xff]
  %v43 = vld [vmem:[%s0 + $0xa0] sm:$0xff]
  %v44 = vld [vmem:[%s0 + $0xa8] sm:$0xff]
  %v45 = vld [vmem:[%s0 + $0xb0] sm:$0xf]
  %v46 = vld [vmem:[%s0 + $0xb4] sm:$0xff]
  %v47 = vld [vmem:[%s0 + $0xbc] sm:$0xff]
  %v48 = vld [vmem:[%s0 + $0xc4] sm:$0xff]
  %v49 = vld [vmem:[%s0 + $0xcc] sm:$0xff]
  %v50 = vld [vmem:[%s0 + $0xd4] sm:$0xf]
  %v51 = vld [vmem:[%s0 + $0xd8] sm:$0xff]
  %v52 = vld [vmem:[%s0 + $0xe0] sm:$0xff]
  %v53 = vld [vmem:[%s0 + $0xe8] sm:$0xff]
  %v54 = vld [vmem:[%s0 + $0xf0] sm:$0xff]
  %v55 = vld [vmem:[%s0 + $0xf8] sm:$0xf]
  %v56 = vld [vmem:[%s0 + $0xfc] sm:$0xff]
  %v57 = vld [vmem:[%s0 + $0x104] sm:$0xff]
  %v58 = vld [vmem:[%s0 + $0x10c] sm:$0xff]
  %v59 = vld [vmem:[%s0 + $0x114] sm:$0xff]
  %v60 = vld [vmem:[%s0 + $0x11c] sm:$0xf]
  %v61 = vld [vmem:[%s0 + $0x120] sm:$0xff]
  %v62 = vld [vmem:[%s0 + $0x128] sm:$0xff]
  %v63 = vld [vmem:[%s0 + $0x130] sm:$0xff]
  %v64 = vld [vmem:[%s0 + $0x138] sm:$0xff]
  %v65 = vld [vmem:[%s0 + $0x140] sm:$0xf]
  %v66 = vld [vmem:[%s0 + $0x144] sm:$0xff]
  %v67 = vld [vmem:[%s0 + $0x14c] sm:$0xff]
  %v68 = vld [vmem:[%s0 + $0x154] sm:$0xff]
  %v69 = vld [vmem:[%s0 + $0x15c] sm:$0xff]
  %v70 = vld [vmem:[%s0 + $0x164] sm:$0xf]
  %v71 = vld [vmem:[%s0 + $0x168] sm:$0xff]
  %v72 = vld [vmem:[%s0 + $0x170] sm:$0xff]
  %v73 = vld [vmem:[%s0 + $0x178] sm:$0xff]
  %v74 = vld [vmem:[%s0 + $0x180] sm:$0xff]
  %v75 = vld [vmem:[%s0 + $0x188] sm:$0xf]
  %v76 = vld [vmem:[%s0 + $0x18c] sm:$0xff]
  %v77 = vld [vmem:[%s0 + $0x194] sm:$0xff]
  %v78 = vld [vmem:[%s0 + $0x19c] sm:$0xff]
  %v79 = vld [vmem:[%s0 + $0x1a4] sm:$0xff]
  %v80 = vld [vmem:[%s0 + $0x1ac] sm:$0xf]
  %v81 = vld [vmem:[%s0 + $0x1b0] sm:$0x11]
  %v82 = vld [vmem:[%s0 + $0x1b8] sm:$0x11]
  %v83 = vld [vmem:[%s0 + $0x1c0] sm:$0x11]
  %v84 = vld [vmem:[%s0 + $0x1c8] sm:$0x11]
  %v85 = vld [vmem:[%s0 + $0x1d0] sm:$0x1]
  %v86 = vld [vmem:[%s1] sm:$0xff]
  %v87 = vld [vmem:[%s1 + $0x8] sm:$0xff]
  %v88 = vld [vmem:[%s1 + $0x10] sm:$0xff]
  %v89 = vld [vmem:[%s1 + $0x18] sm:$0xff]
  %v90 = vld [vmem:[%s1 + $0x20] sm:$0xff]
  %v91 = vld [vmem:[%s1 + $0x28] sm:$0xff]
  %v92 = vld [vmem:[%s1 + $0x30] sm:$0xff]
  %v93 = vld [vmem:[%s1 + $0x38] sm:$0xff]
  %v94 = vld [vmem:[%s1 + $0x40] sm:$0xff]
  %v95 = vld [vmem:[%s1 + $0x48] sm:$0xff]
  %v96 = vld [vmem:[%s1 + $0x50] sm:$0xff]
  %v97 = vld [vmem:[%s1 + $0x58] sm:$0xff]
  %v98 = vld [vmem:[%s1 + $0x60] sm:$0xff]
  %v99 = vld [vmem:[%s1 + $0x68] sm:$0xff]
  %v100 = vld [vmem:[%s1 + $0x70] sm:$0xff]
  %v101 = vld [vmem:[%s1 + $0x78] sm:$0xff]
  %v102 = vld [vmem:[%s1 + $0x80] sm:$0xff]
  %v103 = vld [vmem:[%s1 + $0x88] sm:$0xff]
  %v104 = vld [vmem:[%s1 + $0x90] sm:$0xff]
  %v105 = vld [vmem:[%s1 + $0x98] sm:$0xff]
  %v106 = vld [vmem:[%s1 + $0xa0] sm:$0xff]
  %v107 = vld [vmem:[%s1 + $0xa8] sm:$0xff]
  %v108 = vld [vmem:[%s1 + $0xb0] sm:$0xff]
  %v109 = vld [vmem:[%s1 + $0xb8] sm:$0xff]
  %v110 = vld [vmem:[%s1 + $0xc0] sm:$0xff]
  %v111 = vld [vmem:[%s1 + $0xc8] sm:$0xff]
  %v112 = vld [vmem:[%s1 + $0xd0] sm:$0xff]
  %v113 = vld [vmem:[%s1 + $0xd8] sm:$0xff]
  %v114 = vld [vmem:[%s1 + $0xe0] sm:$0xff]
  %v115 = vld [vmem:[%s1 + $0xe8] sm:$0xff]
  %v116 = vld [vmem:[%s1 + $0xf0] sm:$0xff]
  %v117 = vld [vmem:[%s1 + $0xf8] sm:$0xff]
  %v118 = vld [vmem:[%s1 + $0x100] sm:$0xff]
  %v119 = vld [vmem:[%s1 + $0x108] sm:$0xff]
  %v120 = vld [vmem:[%s1 + $0x110] sm:$0xff]
  %v121 = vld [vmem:[%s1 + $0x118] sm:$0xff]
  %v122 = vld [vmem:[%s1 + $0x120] sm:$0xff]
  %v123 = vld [vmem:[%s1 + $0x128] sm:$0xff]
  %v124 = vld [vmem:[%s1 + $0x130] sm:$0xff]
  %v125 = vld [vmem:[%s1 + $0x138] sm:$0xff]
  %v126 = vld [vmem:[%s1 + $0x140] sm:$0xff]
  %v127 = vld [vmem:[%s1 + $0x148] sm:$0xff]
  %v128 = vld [vmem:[%s1 + $0x150] sm:$0xff]
  %v129 = vld [vmem:[%s1 + $0x158] sm:$0xff]
  %v130 = vld [vmem:[%s1 + $0x160] sm:$0xff]
  %v131 = vld [vmem:[%s1 + $0x168] sm:$0xff]
  %v132 = vld [vmem:[%s1 + $0x170] sm:$0xff]
  %v133 = vld [vmem:[%s1 + $0x178] sm:$0xff]
  %v134 = vld [vmem:[%s1 + $0x180] sm:$0xff]
  %v135 = vld [vmem:[%s1 + $0x188] sm:$0xff]
  %v136 = vld [vmem:[%s1 + $0x190] sm:$0xff]
  %v137 = vld [vmem:[%s1 + $0x198] sm:$0xff]
  %v138 = vld [vmem:[%s1 + $0x1a0] sm:$0xff]
  %v139 = vld [vmem:[%s1 + $0x1a8] sm:$0xff]
  %v140 = vld [vmem:[%s1 + $0x1b0] sm:$0xff]
  %v141 = vld [vmem:[%s1 + $0x1b8] sm:$0xff]
  %v142 = vld [vmem:[%s1 + $0x1c0] sm:$0xff]
  %v143 = vld [vmem:[%s1 + $0x1c8] sm:$0xff]
  %v144 = vld [vmem:[%s1 + $0x1d0] sm:$0xff]
  %v145 = vld [vmem:[%s1 + $0x1d8] sm:$0xff]
  %v146 = vld [vmem:[%s1 + $0x1e0] sm:$0xff]
  %v147 = vld [vmem:[%s1 + $0x1e8] sm:$0xff]
  %v148 = vld [vmem:[%s1 + $0x1f0] sm:$0xff]
  %v149 = vld [vmem:[%s1 + $0x1f8] sm:$0xff]
  %v150 = vld [vmem:[%s1 + $0x200] sm:$0xff]
  %v151 = vld [vmem:[%s1 + $0x208] sm:$0xff]
  %v152 = vld [vmem:[%s1 + $0x210] sm:$0xff]
  %v153 = vld [vmem:[%s1 + $0x218] sm:$0xff]
  %v154 = vld [vmem:[%s1 + $0x220] sm:$0xff]
  %v155 = vld [vmem:[%s1 + $0x228] sm:$0xff]
  %v156 = vld [vmem:[%s1 + $0x230] sm:$0xff]
  %v157 = vld [vmem:[%s1 + $0x238] sm:$0xff]
  %v158 = vld [vmem:[%s1 + $0x240] sm:$0xff]
  %v159 = vld [vmem:[%s1 + $0x248] sm:$0xff]
  %v160 = vld [vmem:[%s1 + $0x250] sm:$0xff]
  %v161 = vld [vmem:[%s1 + $0x258] sm:$0xff]
  %v162 = vld [vmem:[%s1 + $0x260] sm:$0xff]
  %v163 = vld [vmem:[%s1 + $0x268] sm:$0xff]
  %v164 = vld [vmem:[%s1 + $0x270] sm:$0xff]
  %v165 = vld [vmem:[%s1 + $0x278] sm:$0xff]
  %v166 = vld [vmem:[%s1 + $0x280] sm:$0xff]
  %v167 = vld [vmem:[%s1 + $0x288] sm:$0xff]
  %v168 = vld [vmem:[%s1 + $0x290] sm:$0xff]
  %v169 = vld [vmem:[%s1 + $0x298] sm:$0xff]
  %v170 = vld [vmem:[%s1 + $0x2a0] sm:$0xff]
  %v171 = vld [vmem:[%s1 + $0x2a8] sm:$0xff]
  %v172 = vld [vmem:[%s1 + $0x2b0] sm:$0xff]
  %v173 = vld [vmem:[%s1 + $0x2b8] sm:$0xff]
  %v174 = vld [vmem:[%s1 + $0x2c0] sm:$0xff]
  %v175 = vld [vmem:[%s1 + $0x2c8] sm:$0xff]
  %v176 = vld [vmem:[%s1 + $0x2d0] sm:$0xff]
  %v177 = vld [vmem:[%s1 + $0x2d8] sm:$0xff]
  %v178 = vld [vmem:[%s1 + $0x2e0] sm:$0xff]
  %v179 = vld [vmem:[%s1 + $0x2e8] sm:$0xff]
  %v180 = vld [vmem:[%s1 + $0x2f0] sm:$0xff]
  %v181 = vld [vmem:[%s1 + $0x2f8] sm:$0xff]
  %v182 = vld [vmem:[%s1 + $0x300] sm:$0xff]
  %v183 = vld [vmem:[%s1 + $0x308] sm:$0xff]
  %v184 = vld [vmem:[%s1 + $0x310] sm:$0xff]
  %v185 = vld [vmem:[%s1 + $0x318] sm:$0xff]
  %v186 = vld [vmem:[%s1 + $0x320] sm:$0xff]
  %v187 = vld [vmem:[%s1 + $0x328] sm:$0xff]
  %v188 = vld [vmem:[%s1 + $0x330] sm:$0xff]
  %v189 = vld [vmem:[%s1 + $0x338] sm:$0xff]
  %v190 = vld [vmem:[%s1 + $0x340] sm:$0xff]
  %v191 = vld [vmem:[%s1 + $0x348] sm:$0xff]
  %v192 = vld [vmem:[%s1 + $0x350] sm:$0xff]
  %v193 = vld [vmem:[%s1 + $0x358] sm:$0xff]
  %v194 = vld [vmem:[%s1 + $0x360] sm:$0xff]
  %v195 = vld [vmem:[%s1 + $0x368] sm:$0xff]
  %v196 = vld [vmem:[%s1 + $0x370] sm:$0xff]
  %v197 = vld [vmem:[%s1 + $0x378] sm:$0xff]
  %v198 = vld [vmem:[%s1 + $0x380] sm:$0xff]
  %v199 = vld [vmem:[%s1 + $0x388] sm:$0xff]
  %v200 = vld [vmem:[%s1 + $0x390] sm:$0xff]
  %v201 = vld [vmem:[%s1 + $0x398] sm:$0xff]
  %v202 = vld [vmem:[%s1 + $0x3a0] sm:$0xff]
  %v203 = vld [vmem:[%s1 + $0x3a8] sm:$0xff]
  %v204 = vld [vmem:[%s1 + $0x3b0] sm:$0xff]
  %v205 = vld [vmem:[%s1 + $0x3b8] sm:$0xff]
  %v206 = vld [vmem:[%s1 + $0x3c0] sm:$0xff]
  %v207 = vld [vmem:[%s1 + $0x3c8] sm:$0xff]
  %v208 = vld [vmem:[%s1 + $0x3d0] sm:$0xff]
  %v209 = vld [vmem:[%s1 + $0x3d8] sm:$0xff]
  %v210 = vld [vmem:[%s1 + $0x3e0] sm:$0xff]
  %v211 = vld [vmem:[%s1 + $0x3e8] sm:$0xff]
  %v212 = vld [vmem:[%s1 + $0x3f0] sm:$0xff]
  %v213 = vld [vmem:[%s1 + $0x3f8] sm:$0xff]
  %v214 = vld [vmem:[%s1 + $0x400] sm:$0xff]
  %v215 = vld [vmem:[%s1 + $0x408] sm:$0xff]
  %v216 = vld [vmem:[%s1 + $0x410] sm:$0xff]
  %v217 = vld [vmem:[%s1 + $0x418] sm:$0xff]
  %v218 = vld [vmem:[%s1 + $0x420] sm:$0xff]
  %v219 = vld [vmem:[%s1 + $0x428] sm:$0xff]
  %v220 = vld [vmem:[%s1 + $0x430] sm:$0xff]
  %v221 = vld [vmem:[%s1 + $0x438] sm:$0xff]
  %v222 = vld [vmem:[%s1 + $0x440] sm:$0xff]
  %v223 = vld [vmem:[%s1 + $0x448] sm:$0xff]
  %v224 = vld [vmem:[%s1 + $0x450] sm:$0xff]
  %v225 = vld [vmem:[%s1 + $0x458] sm:$0xff]
  %v226 = vld [vmem:[%s1 + $0x460] sm:$0xff]
  %v227 = vld [vmem:[%s1 + $0x468] sm:$0xff]
  %v228 = vld [vmem:[%s1 + $0x470] sm:$0xff]
  %v229 = vld [vmem:[%s1 + $0x478] sm:$0xff]
  %v230 = vld [vmem:[%s2] sm:$0x3]
  %v232 = vlaneseq
  %v233 = vshrl.u32 %v232, 7
  %v234 = vsub.s32 0, %v233
  %v235 = vrot.slane %v230, %v234
  %v236 = vlaneseq
  %v237 = vshrl.u32 %v236, 7
  %v238 = vsub.s32 1, %v237
  %v239 = vrot.slane %v230, %v238
  %v307 = vunpack.c.l.b16 %v21
  %v308 = vunpack.c.h.b16 %v21
  %v309 = vunpack.c.l.b16 %v22
  %v310 = vunpack.c.h.b16 %v22
  %v311 = vunpack.c.l.b16 %v23
  %v312 = vunpack.c.h.b16 %v23
  %v313 = vunpack.c.l.b16 %v24
  %v314 = vunpack.c.h.b16 %v24
  %v315 = vunpack.c.l.b16 %v25
  %v316 = vunpack.c.l.b16 %v26
  %v317 = vunpack.c.h.b16 %v26
  %v318 = vunpack.c.l.b16 %v27
  %v319 = vunpack.c.h.b16 %v27
  %v320 = vunpack.c.l.b16 %v28
  %v321 = vunpack.c.h.b16 %v28
  %v322 = vunpack.c.l.b16 %v29
  %v323 = vunpack.c.h.b16 %v29
  %v324 = vunpack.c.l.b16 %v30
  %v325 = vunpack.c.l.b16 %v31
  %v326 = vunpack.c.h.b16 %v31
  %v327 = vunpack.c.l.b16 %v32
  %v328 = vunpack.c.h.b16 %v32
  %v329 = vunpack.c.l.b16 %v33
  %v330 = vunpack.c.h.b16 %v33
  %v331 = vunpack.c.l.b16 %v34
  %v332 = vunpack.c.h.b16 %v34
  %v333 = vunpack.c.l.b16 %v35
  %v334 = vunpack.c.l.b16 %v36
  %v335 = vunpack.c.h.b16 %v36
  %v336 = vunpack.c.l.b16 %v37
  %v337 = vunpack.c.h.b16 %v37
  %v338 = vunpack.c.l.b16 %v38
  %v339 = vunpack.c.h.b16 %v38
  %v340 = vunpack.c.l.b16 %v39
  %v341 = vunpack.c.h.b16 %v39
  %v342 = vunpack.c.l.b16 %v40
  %v343 = vunpack.c.l.b16 %v41
  %v344 = vunpack.c.h.b16 %v41
  %v345 = vunpack.c.l.b16 %v42
  %v346 = vunpack.c.h.b16 %v42
  %v347 = vunpack.c.l.b16 %v43
  %v348 = vunpack.c.h.b16 %v43
  %v349 = vunpack.c.l.b16 %v44
  %v350 = vunpack.c.h.b16 %v44
  %v351 = vunpack.c.l.b16 %v45
  %v352 = vunpack.c.l.b16 %v46
  %v353 = vunpack.c.h.b16 %v46
  %v354 = vunpack.c.l.b16 %v47
  %v355 = vunpack.c.h.b16 %v47
  %v356 = vunpack.c.l.b16 %v48
  %v357 = vunpack.c.h.b16 %v48
  %v358 = vunpack.c.l.b16 %v49
  %v359 = vunpack.c.h.b16 %v49
  %v360 = vunpack.c.l.b16 %v50
  %v361 = vunpack.c.l.b16 %v51
  %v362 = vunpack.c.h.b16 %v51
  %v363 = vunpack.c.l.b16 %v52
  %v364 = vunpack.c.h.b16 %v52
  %v365 = vunpack.c.l.b16 %v53
  %v366 = vunpack.c.h.b16 %v53
  %v367 = vunpack.c.l.b16 %v54
  %v368 = vunpack.c.h.b16 %v54
  %v369 = vunpack.c.l.b16 %v55
  %v370 = vunpack.c.l.b16 %v56
  %v371 = vunpack.c.h.b16 %v56
  %v372 = vunpack.c.l.b16 %v57
  %v373 = vunpack.c.h.b16 %v57
  %v374 = vunpack.c.l.b16 %v58
  %v375 = vunpack.c.h.b16 %v58
  %v376 = vunpack.c.l.b16 %v59
  %v377 = vunpack.c.h.b16 %v59
  %v378 = vunpack.c.l.b16 %v60
  %v379 = vunpack.c.l.b16 %v61
  %v380 = vunpack.c.h.b16 %v61
  %v381 = vunpack.c.l.b16 %v62
  %v382 = vunpack.c.h.b16 %v62
  %v383 = vunpack.c.l.b16 %v63
  %v384 = vunpack.c.h.b16 %v63
  %v385 = vunpack.c.l.b16 %v64
  %v386 = vunpack.c.h.b16 %v64
  %v387 = vunpack.c.l.b16 %v65
  %v388 = vunpack.c.l.b16 %v66
  %v389 = vunpack.c.h.b16 %v66
  %v390 = vunpack.c.l.b16 %v67
  %v391 = vunpack.c.h.b16 %v67
  %v392 = vunpack.c.l.b16 %v68
  %v393 = vunpack.c.h.b16 %v68
  %v394 = vunpack.c.l.b16 %v69
  %v395 = vunpack.c.h.b16 %v69
  %v396 = vunpack.c.l.b16 %v70
  %v397 = vunpack.c.l.b16 %v71
  %v398 = vunpack.c.h.b16 %v71
  %v399 = vunpack.c.l.b16 %v72
  %v400 = vunpack.c.h.b16 %v72
  %v401 = vunpack.c.l.b16 %v73
  %v402 = vunpack.c.h.b16 %v73
  %v403 = vunpack.c.l.b16 %v74
  %v404 = vunpack.c.h.b16 %v74
  %v405 = vunpack.c.l.b16 %v75
  %v406 = vunpack.c.l.b16 %v76
  %v407 = vunpack.c.h.b16 %v76
  %v408 = vunpack.c.l.b16 %v77
  %v409 = vunpack.c.h.b16 %v77
  %v410 = vunpack.c.l.b16 %v78
  %v411 = vunpack.c.h.b16 %v78
  %v412 = vunpack.c.l.b16 %v79
  %v413 = vunpack.c.h.b16 %v79
  %v414 = vunpack.c.l.b16 %v80
  %v415 = vunpack.c.l.b16 %v81
  %v416 = vunpack.c.h.b16 %v81
  %v417 = vunpack.c.l.b16 %v82
  %v418 = vunpack.c.h.b16 %v82
  %v419 = vunpack.c.l.b16 %v83
  %v420 = vunpack.c.h.b16 %v83
  %v421 = vunpack.c.l.b16 %v84
  %v422 = vunpack.c.h.b16 %v84
  %v423 = vunpack.c.l.b16 %v85
  %v424 = vpack.c.b16 %v316, %v307
  %v425 = vpack.c.b16 %v317, %v308
  %v426 = vpack.c.b16 %v318, %v309
  %v427 = vpack.c.b16 %v319, %v310
  %v428 = vpack.c.b16 %v320, %v311
  %v429 = vpack.c.b16 %v321, %v312
  %v430 = vpack.c.b16 %v322, %v313
  %v431 = vpack.c.b16 %v323, %v314
  %v432 = vpack.c.b16 %v324, %v315
  %v433 = vpack.c.b16 %v334, %v325
  %v434 = vpack.c.b16 %v335, %v326
  %v435 = vpack.c.b16 %v336, %v327
  %v436 = vpack.c.b16 %v337, %v328
  %v437 = vpack.c.b16 %v338, %v329
  %v438 = vpack.c.b16 %v339, %v330
  %v439 = vpack.c.b16 %v340, %v331
  %v440 = vpack.c.b16 %v341, %v332
  %v441 = vpack.c.b16 %v342, %v333
  %v442 = vpack.c.b16 %v352, %v343
  %v443 = vpack.c.b16 %v353, %v344
  %v444 = vpack.c.b16 %v354, %v345
  %v445 = vpack.c.b16 %v355, %v346
  %v446 = vpack.c.b16 %v356, %v347
  %v447 = vpack.c.b16 %v357, %v348
  %v448 = vpack.c.b16 %v358, %v349
  %v449 = vpack.c.b16 %v359, %v350
  %v450 = vpack.c.b16 %v360, %v351
  %v451 = vpack.c.b16 %v370, %v361
  %v452 = vpack.c.b16 %v371, %v362
  %v453 = vpack.c.b16 %v372, %v363
  %v454 = vpack.c.b16 %v373, %v364
  %v455 = vpack.c.b16 %v374, %v365
  %v456 = vpack.c.b16 %v375, %v366
  %v457 = vpack.c.b16 %v376, %v367
  %v458 = vpack.c.b16 %v377, %v368
  %v459 = vpack.c.b16 %v378, %v369
  %v460 = vpack.c.b16 %v388, %v379
  %v461 = vpack.c.b16 %v389, %v380
  %v462 = vpack.c.b16 %v390, %v381
  %v463 = vpack.c.b16 %v391, %v382
  %v464 = vpack.c.b16 %v392, %v383
  %v465 = vpack.c.b16 %v393, %v384
  %v466 = vpack.c.b16 %v394, %v385
  %v467 = vpack.c.b16 %v395, %v386
  %v468 = vpack.c.b16 %v396, %v387
  %v469 = vpack.c.b16 %v406, %v397
  %v470 = vpack.c.b16 %v407, %v398
  %v471 = vpack.c.b16 %v408, %v399
  %v472 = vpack.c.b16 %v409, %v400
  %v473 = vpack.c.b16 %v410, %v401
  %v474 = vpack.c.b16 %v411, %v402
  %v475 = vpack.c.b16 %v412, %v403
  %v476 = vpack.c.b16 %v413, %v404
  %v477 = vpack.c.b16 %v414, %v405
  %v478 = vpack.c.b16 %v415, %v415
  %v479 = vpack.c.b16 %v416, %v416
  %v480 = vpack.c.b16 %v417, %v417
  %v481 = vpack.c.b16 %v418, %v418
  %v482 = vpack.c.b16 %v419, %v419
  %v483 = vpack.c.b16 %v420, %v420
  %v484 = vpack.c.b16 %v421, %v421
  %v485 = vpack.c.b16 %v422, %v422
  %v486 = vpack.c.b16 %v423, %v423
  %v694 = vunpack.c.l.b16 %v86
  %v695 = vunpack.c.h.b16 %v86
  %v696 = vunpack.c.l.b16 %v87
  %v697 = vunpack.c.h.b16 %v87
  %v698 = vunpack.c.l.b16 %v88
  %v699 = vunpack.c.h.b16 %v88
  %v700 = vunpack.c.l.b16 %v89
  %v701 = vunpack.c.h.b16 %v89
  %v702 = vunpack.c.l.b16 %v90
  %v703 = vunpack.c.h.b16 %v90
  %v704 = vunpack.c.l.b16 %v91
  %v705 = vunpack.c.h.b16 %v91
  %v706 = vunpack.c.l.b16 %v92
  %v707 = vunpack.c.h.b16 %v92
  %v708 = vunpack.c.l.b16 %v93
  %v709 = vunpack.c.h.b16 %v93
  %v710 = vunpack.c.l.b16 %v94
  %v711 = vunpack.c.h.b16 %v94
  %v712 = vunpack.c.l.b16 %v95
  %v713 = vunpack.c.h.b16 %v95
  %v714 = vunpack.c.l.b16 %v96
  %v715 = vunpack.c.h.b16 %v96
  %v716 = vunpack.c.l.b16 %v97
  %v717 = vunpack.c.h.b16 %v97
  %v718 = vunpack.c.l.b16 %v98
  %v719 = vunpack.c.h.b16 %v98
  %v720 = vunpack.c.l.b16 %v99
  %v721 = vunpack.c.h.b16 %v99
  %v722 = vunpack.c.l.b16 %v100
  %v723 = vunpack.c.h.b16 %v100
  %v724 = vunpack.c.l.b16 %v101
  %v725 = vunpack.c.h.b16 %v101
  %v726 = vunpack.c.l.b16 %v102
  %v727 = vunpack.c.h.b16 %v102
  %v728 = vunpack.c.l.b16 %v103
  %v729 = vunpack.c.h.b16 %v103
  %v730 = vunpack.c.l.b16 %v104
  %v731 = vunpack.c.h.b16 %v104
  %v732 = vunpack.c.l.b16 %v105
  %v733 = vunpack.c.h.b16 %v105
  %v734 = vunpack.c.l.b16 %v106
  %v735 = vunpack.c.h.b16 %v106
  %v736 = vunpack.c.l.b16 %v107
  %v737 = vunpack.c.h.b16 %v107
  %v738 = vunpack.c.l.b16 %v108
  %v739 = vunpack.c.h.b16 %v108
  %v740 = vunpack.c.l.b16 %v109
  %v741 = vunpack.c.h.b16 %v109
  %v742 = vunpack.c.l.b16 %v110
  %v743 = vunpack.c.h.b16 %v110
  %v744 = vunpack.c.l.b16 %v111
  %v745 = vunpack.c.h.b16 %v111
  %v746 = vunpack.c.l.b16 %v112
  %v747 = vunpack.c.h.b16 %v112
  %v748 = vunpack.c.l.b16 %v113
  %v749 = vunpack.c.h.b16 %v113
  %v750 = vunpack.c.l.b16 %v114
  %v751 = vunpack.c.h.b16 %v114
  %v752 = vunpack.c.l.b16 %v115
  %v753 = vunpack.c.h.b16 %v115
  %v754 = vunpack.c.l.b16 %v116
  %v755 = vunpack.c.h.b16 %v116
  %v756 = vunpack.c.l.b16 %v117
  %v757 = vunpack.c.h.b16 %v117
  %v758 = vunpack.c.l.b16 %v118
  %v759 = vunpack.c.h.b16 %v118
  %v760 = vunpack.c.l.b16 %v119
  %v761 = vunpack.c.h.b16 %v119
  %v762 = vunpack.c.l.b16 %v120
  %v763 = vunpack.c.h.b16 %v120
  %v764 = vunpack.c.l.b16 %v121
  %v765 = vunpack.c.h.b16 %v121
  %v766 = vunpack.c.l.b16 %v122
  %v767 = vunpack.c.h.b16 %v122
  %v768 = vunpack.c.l.b16 %v123
  %v769 = vunpack.c.h.b16 %v123
  %v770 = vunpack.c.l.b16 %v124
  %v771 = vunpack.c.h.b16 %v124
  %v772 = vunpack.c.l.b16 %v125
  %v773 = vunpack.c.h.b16 %v125
  %v774 = vunpack.c.l.b16 %v126
  %v775 = vunpack.c.h.b16 %v126
  %v776 = vunpack.c.l.b16 %v127
  %v777 = vunpack.c.h.b16 %v127
  %v778 = vunpack.c.l.b16 %v128
  %v779 = vunpack.c.h.b16 %v128
  %v780 = vunpack.c.l.b16 %v129
  %v781 = vunpack.c.h.b16 %v129
  %v782 = vunpack.c.l.b16 %v130
  %v783 = vunpack.c.h.b16 %v130
  %v784 = vunpack.c.l.b16 %v131
  %v785 = vunpack.c.h.b16 %v131
  %v786 = vunpack.c.l.b16 %v132
  %v787 = vunpack.c.h.b16 %v132
  %v788 = vunpack.c.l.b16 %v133
  %v789 = vunpack.c.h.b16 %v133
  %v790 = vunpack.c.l.b16 %v134
  %v791 = vunpack.c.h.b16 %v134
  %v792 = vunpack.c.l.b16 %v135
  %v793 = vunpack.c.h.b16 %v135
  %v794 = vunpack.c.l.b16 %v136
  %v795 = vunpack.c.h.b16 %v136
  %v796 = vunpack.c.l.b16 %v137
  %v797 = vunpack.c.h.b16 %v137
  %v798 = vunpack.c.l.b16 %v138
  %v799 = vunpack.c.h.b16 %v138
  %v800 = vunpack.c.l.b16 %v139
  %v801 = vunpack.c.h.b16 %v139
  %v802 = vunpack.c.l.b16 %v140
  %v803 = vunpack.c.h.b16 %v140
  %v804 = vunpack.c.l.b16 %v141
  %v805 = vunpack.c.h.b16 %v141
  %v806 = vunpack.c.l.b16 %v142
  %v807 = vunpack.c.h.b16 %v142
  %v808 = vunpack.c.l.b16 %v143
  %v809 = vunpack.c.h.b16 %v143
  %v810 = vunpack.c.l.b16 %v144
  %v811 = vunpack.c.h.b16 %v144
  %v812 = vunpack.c.l.b16 %v145
  %v813 = vunpack.c.h.b16 %v145
  %v814 = vunpack.c.l.b16 %v146
  %v815 = vunpack.c.h.b16 %v146
  %v816 = vunpack.c.l.b16 %v147
  %v817 = vunpack.c.h.b16 %v147
  %v818 = vunpack.c.l.b16 %v148
  %v819 = vunpack.c.h.b16 %v148
  %v820 = vunpack.c.l.b16 %v149
  %v821 = vunpack.c.h.b16 %v149
  %v822 = vunpack.c.l.b16 %v150
  %v823 = vunpack.c.h.b16 %v150
  %v824 = vunpack.c.l.b16 %v151
  %v825 = vunpack.c.h.b16 %v151
  %v826 = vunpack.c.l.b16 %v152
  %v827 = vunpack.c.h.b16 %v152
  %v828 = vunpack.c.l.b16 %v153
  %v829 = vunpack.c.h.b16 %v153
  %v830 = vunpack.c.l.b16 %v154
  %v831 = vunpack.c.h.b16 %v154
  %v832 = vunpack.c.l.b16 %v155
  %v833 = vunpack.c.h.b16 %v155
  %v834 = vunpack.c.l.b16 %v156
  %v835 = vunpack.c.h.b16 %v156
  %v836 = vunpack.c.l.b16 %v157
  %v837 = vunpack.c.h.b16 %v157
  %v838 = vunpack.c.l.b16 %v158
  %v839 = vunpack.c.h.b16 %v158
  %v840 = vunpack.c.l.b16 %v159
  %v841 = vunpack.c.h.b16 %v159
  %v842 = vunpack.c.l.b16 %v160
  %v843 = vunpack.c.h.b16 %v160
  %v844 = vunpack.c.l.b16 %v161
  %v845 = vunpack.c.h.b16 %v161
  %v846 = vunpack.c.l.b16 %v162
  %v847 = vunpack.c.h.b16 %v162
  %v848 = vunpack.c.l.b16 %v163
  %v849 = vunpack.c.h.b16 %v163
  %v850 = vunpack.c.l.b16 %v164
  %v851 = vunpack.c.h.b16 %v164
  %v852 = vunpack.c.l.b16 %v165
  %v853 = vunpack.c.h.b16 %v165
  %v854 = vunpack.c.l.b16 %v166
  %v855 = vunpack.c.h.b16 %v166
  %v856 = vunpack.c.l.b16 %v167
  %v857 = vunpack.c.h.b16 %v167
  %v858 = vunpack.c.l.b16 %v168
  %v859 = vunpack.c.h.b16 %v168
  %v860 = vunpack.c.l.b16 %v169
  %v861 = vunpack.c.h.b16 %v169
  %v862 = vunpack.c.l.b16 %v170
  %v863 = vunpack.c.h.b16 %v170
  %v864 = vunpack.c.l.b16 %v171
  %v865 = vunpack.c.h.b16 %v171
  %v866 = vunpack.c.l.b16 %v172
  %v867 = vunpack.c.h.b16 %v172
  %v868 = vunpack.c.l.b16 %v173
  %v869 = vunpack.c.h.b16 %v173
  %v870 = vunpack.c.l.b16 %v174
  %v871 = vunpack.c.h.b16 %v174
  %v872 = vunpack.c.l.b16 %v175
  %v873 = vunpack.c.h.b16 %v175
  %v874 = vunpack.c.l.b16 %v176
  %v875 = vunpack.c.h.b16 %v176
  %v876 = vunpack.c.l.b16 %v177
  %v877 = vunpack.c.h.b16 %v177
  %v878 = vunpack.c.l.b16 %v178
  %v879 = vunpack.c.h.b16 %v178
  %v880 = vunpack.c.l.b16 %v179
  %v881 = vunpack.c.h.b16 %v179
  %v882 = vunpack.c.l.b16 %v180
  %v883 = vunpack.c.h.b16 %v180
  %v884 = vunpack.c.l.b16 %v181
  %v885 = vunpack.c.h.b16 %v181
  %v886 = vunpack.c.l.b16 %v182
  %v887 = vunpack.c.h.b16 %v182
  %v888 = vunpack.c.l.b16 %v183
  %v889 = vunpack.c.h.b16 %v183
  %v890 = vunpack.c.l.b16 %v184
  %v891 = vunpack.c.h.b16 %v184
  %v892 = vunpack.c.l.b16 %v185
  %v893 = vunpack.c.h.b16 %v185
  %v894 = vunpack.c.l.b16 %v186
  %v895 = vunpack.c.h.b16 %v186
  %v896 = vunpack.c.l.b16 %v187
  %v897 = vunpack.c.h.b16 %v187
  %v898 = vunpack.c.l.b16 %v188
  %v899 = vunpack.c.h.b16 %v188
  %v900 = vunpack.c.l.b16 %v189
  %v901 = vunpack.c.h.b16 %v189
  %v902 = vunpack.c.l.b16 %v190
  %v903 = vunpack.c.h.b16 %v190
  %v904 = vunpack.c.l.b16 %v191
  %v905 = vunpack.c.h.b16 %v191
  %v906 = vunpack.c.l.b16 %v192
  %v907 = vunpack.c.h.b16 %v192
  %v908 = vunpack.c.l.b16 %v193
  %v909 = vunpack.c.h.b16 %v193
  %v910 = vunpack.c.l.b16 %v194
  %v911 = vunpack.c.h.b16 %v194
  %v912 = vunpack.c.l.b16 %v195
  %v913 = vunpack.c.h.b16 %v195
  %v914 = vunpack.c.l.b16 %v196
  %v915 = vunpack.c.h.b16 %v196
  %v916 = vunpack.c.l.b16 %v197
  %v917 = vunpack.c.h.b16 %v197
  %v918 = vunpack.c.l.b16 %v198
  %v919 = vunpack.c.h.b16 %v198
  %v920 = vunpack.c.l.b16 %v199
  %v921 = vunpack.c.h.b16 %v199
  %v922 = vunpack.c.l.b16 %v200
  %v923 = vunpack.c.h.b16 %v200
  %v924 = vunpack.c.l.b16 %v201
  %v925 = vunpack.c.h.b16 %v201
  %v926 = vunpack.c.l.b16 %v202
  %v927 = vunpack.c.h.b16 %v202
  %v928 = vunpack.c.l.b16 %v203
  %v929 = vunpack.c.h.b16 %v203
  %v930 = vunpack.c.l.b16 %v204
  %v931 = vunpack.c.h.b16 %v204
  %v932 = vunpack.c.l.b16 %v205
  %v933 = vunpack.c.h.b16 %v205
  %v934 = vunpack.c.l.b16 %v206
  %v935 = vunpack.c.h.b16 %v206
  %v936 = vunpack.c.l.b16 %v207
  %v937 = vunpack.c.h.b16 %v207
  %v938 = vunpack.c.l.b16 %v208
  %v939 = vunpack.c.h.b16 %v208
  %v940 = vunpack.c.l.b16 %v209
  %v941 = vunpack.c.h.b16 %v209
  %v942 = vunpack.c.l.b16 %v210
  %v943 = vunpack.c.h.b16 %v210
  %v944 = vunpack.c.l.b16 %v211
  %v945 = vunpack.c.h.b16 %v211
  %v946 = vunpack.c.l.b16 %v212
  %v947 = vunpack.c.h.b16 %v212
  %v948 = vunpack.c.l.b16 %v213
  %v949 = vunpack.c.h.b16 %v213
  %v950 = vunpack.c.l.b16 %v214
  %v951 = vunpack.c.h.b16 %v214
  %v952 = vunpack.c.l.b16 %v215
  %v953 = vunpack.c.h.b16 %v215
  %v954 = vunpack.c.l.b16 %v216
  %v955 = vunpack.c.h.b16 %v216
  %v956 = vunpack.c.l.b16 %v217
  %v957 = vunpack.c.h.b16 %v217
  %v958 = vunpack.c.l.b16 %v218
  %v959 = vunpack.c.h.b16 %v218
  %v960 = vunpack.c.l.b16 %v219
  %v961 = vunpack.c.h.b16 %v219
  %v962 = vunpack.c.l.b16 %v220
  %v963 = vunpack.c.h.b16 %v220
  %v964 = vunpack.c.l.b16 %v221
  %v965 = vunpack.c.h.b16 %v221
  %v966 = vunpack.c.l.b16 %v222
  %v967 = vunpack.c.h.b16 %v222
  %v968 = vunpack.c.l.b16 %v223
  %v969 = vunpack.c.h.b16 %v223
  %v970 = vunpack.c.l.b16 %v224
  %v971 = vunpack.c.h.b16 %v224
  %v972 = vunpack.c.l.b16 %v225
  %v973 = vunpack.c.h.b16 %v225
  %v974 = vunpack.c.l.b16 %v226
  %v975 = vunpack.c.h.b16 %v226
  %v976 = vunpack.c.l.b16 %v227
  %v977 = vunpack.c.h.b16 %v227
  %v978 = vunpack.c.l.b16 %v228
  %v979 = vunpack.c.h.b16 %v228
  %v980 = vunpack.c.l.b16 %v229
  %v981 = vunpack.c.h.b16 %v229
  %v982 = vpack.c.b16 %v696, %v694
  %v983 = vpack.c.b16 %v697, %v695
  %v984 = vpack.c.b16 %v700, %v698
  %v985 = vpack.c.b16 %v701, %v699
  %v986 = vpack.c.b16 %v704, %v702
  %v987 = vpack.c.b16 %v705, %v703
  %v988 = vpack.c.b16 %v708, %v706
  %v989 = vpack.c.b16 %v709, %v707
  %v990 = vpack.c.b16 %v712, %v710
  %v991 = vpack.c.b16 %v713, %v711
  %v992 = vpack.c.b16 %v716, %v714
  %v993 = vpack.c.b16 %v717, %v715
  %v994 = vpack.c.b16 %v720, %v718
  %v995 = vpack.c.b16 %v721, %v719
  %v996 = vpack.c.b16 %v724, %v722
  %v997 = vpack.c.b16 %v725, %v723
  %v998 = vpack.c.b16 %v728, %v726
  %v999 = vpack.c.b16 %v729, %v727
  %v1000 = vpack.c.b16 %v732, %v730
  %v1001 = vpack.c.b16 %v733, %v731
  %v1002 = vpack.c.b16 %v736, %v734
  %v1003 = vpack.c.b16 %v737, %v735
  %v1004 = vpack.c.b16 %v740, %v738
  %v1005 = vpack.c.b16 %v741, %v739
  %v1006 = vpack.c.b16 %v744, %v742
  %v1007 = vpack.c.b16 %v745, %v743
  %v1008 = vpack.c.b16 %v748, %v746
  %v1009 = vpack.c.b16 %v749, %v747
  %v1010 = vpack.c.b16 %v752, %v750
  %v1011 = vpack.c.b16 %v753, %v751
  %v1012 = vpack.c.b16 %v756, %v754
  %v1013 = vpack.c.b16 %v757, %v755
  %v1014 = vpack.c.b16 %v760, %v758
  %v1015 = vpack.c.b16 %v761, %v759
  %v1016 = vpack.c.b16 %v764, %v762
  %v1017 = vpack.c.b16 %v765, %v763
  %v1018 = vpack.c.b16 %v768, %v766
  %v1019 = vpack.c.b16 %v769, %v767
  %v1020 = vpack.c.b16 %v772, %v770
  %v1021 = vpack.c.b16 %v773, %v771
  %v1022 = vpack.c.b16 %v776, %v774
  %v1023 = vpack.c.b16 %v777, %v775
  %v1024 = vpack.c.b16 %v780, %v778
  %v1025 = vpack.c.b16 %v781, %v779
  %v1026 = vpack.c.b16 %v784, %v782
  %v1027 = vpack.c.b16 %v785, %v783
  %v1028 = vpack.c.b16 %v788, %v786
  %v1029 = vpack.c.b16 %v789, %v787
  %v1030 = vpack.c.b16 %v792, %v790
  %v1031 = vpack.c.b16 %v793, %v791
  %v1032 = vpack.c.b16 %v796, %v794
  %v1033 = vpack.c.b16 %v797, %v795
  %v1034 = vpack.c.b16 %v800, %v798
  %v1035 = vpack.c.b16 %v801, %v799
  %v1036 = vpack.c.b16 %v804, %v802
  %v1037 = vpack.c.b16 %v805, %v803
  %v1038 = vpack.c.b16 %v808, %v806
  %v1039 = vpack.c.b16 %v809, %v807
  %v1040 = vpack.c.b16 %v812, %v810
  %v1041 = vpack.c.b16 %v813, %v811
  %v1042 = vpack.c.b16 %v816, %v814
  %v1043 = vpack.c.b16 %v817, %v815
  %v1044 = vpack.c.b16 %v820, %v818
  %v1045 = vpack.c.b16 %v821, %v819
  %v1046 = vpack.c.b16 %v824, %v822
  %v1047 = vpack.c.b16 %v825, %v823
  %v1048 = vpack.c.b16 %v828, %v826
  %v1049 = vpack.c.b16 %v829, %v827
  %v1050 = vpack.c.b16 %v832, %v830
  %v1051 = vpack.c.b16 %v833, %v831
  %v1052 = vpack.c.b16 %v836, %v834
  %v1053 = vpack.c.b16 %v837, %v835
  %v1054 = vpack.c.b16 %v840, %v838
  %v1055 = vpack.c.b16 %v841, %v839
  %v1056 = vpack.c.b16 %v844, %v842
  %v1057 = vpack.c.b16 %v845, %v843
  %v1058 = vpack.c.b16 %v848, %v846
  %v1059 = vpack.c.b16 %v849, %v847
  %v1060 = vpack.c.b16 %v852, %v850
  %v1061 = vpack.c.b16 %v853, %v851
  %v1062 = vpack.c.b16 %v856, %v854
  %v1063 = vpack.c.b16 %v857, %v855
  %v1064 = vpack.c.b16 %v860, %v858
  %v1065 = vpack.c.b16 %v861, %v859
  %v1066 = vpack.c.b16 %v864, %v862
  %v1067 = vpack.c.b16 %v865, %v863
  %v1068 = vpack.c.b16 %v868, %v866
  %v1069 = vpack.c.b16 %v869, %v867
  %v1070 = vpack.c.b16 %v872, %v870
  %v1071 = vpack.c.b16 %v873, %v871
  %v1072 = vpack.c.b16 %v876, %v874
  %v1073 = vpack.c.b16 %v877, %v875
  %v1074 = vpack.c.b16 %v880, %v878
  %v1075 = vpack.c.b16 %v881, %v879
  %v1076 = vpack.c.b16 %v884, %v882
  %v1077 = vpack.c.b16 %v885, %v883
  %v1078 = vpack.c.b16 %v888, %v886
  %v1079 = vpack.c.b16 %v889, %v887
  %v1080 = vpack.c.b16 %v892, %v890
  %v1081 = vpack.c.b16 %v893, %v891
  %v1082 = vpack.c.b16 %v896, %v894
  %v1083 = vpack.c.b16 %v897, %v895
  %v1084 = vpack.c.b16 %v900, %v898
  %v1085 = vpack.c.b16 %v901, %v899
  %v1086 = vpack.c.b16 %v904, %v902
  %v1087 = vpack.c.b16 %v905, %v903
  %v1088 = vpack.c.b16 %v908, %v906
  %v1089 = vpack.c.b16 %v909, %v907
  %v1090 = vpack.c.b16 %v912, %v910
  %v1091 = vpack.c.b16 %v913, %v911
  %v1092 = vpack.c.b16 %v916, %v914
  %v1093 = vpack.c.b16 %v917, %v915
  %v1094 = vpack.c.b16 %v920, %v918
  %v1095 = vpack.c.b16 %v921, %v919
  %v1096 = vpack.c.b16 %v924, %v922
  %v1097 = vpack.c.b16 %v925, %v923
  %v1098 = vpack.c.b16 %v928, %v926
  %v1099 = vpack.c.b16 %v929, %v927
  %v1100 = vpack.c.b16 %v932, %v930
  %v1101 = vpack.c.b16 %v933, %v931
  %v1102 = vpack.c.b16 %v936, %v934
  %v1103 = vpack.c.b16 %v937, %v935
  %v1104 = vpack.c.b16 %v940, %v938
  %v1105 = vpack.c.b16 %v941, %v939
  %v1106 = vpack.c.b16 %v944, %v942
  %v1107 = vpack.c.b16 %v945, %v943
  %v1108 = vpack.c.b16 %v948, %v946
  %v1109 = vpack.c.b16 %v949, %v947
  %v1110 = vpack.c.b16 %v952, %v950
  %v1111 = vpack.c.b16 %v953, %v951
  %v1112 = vpack.c.b16 %v956, %v954
  %v1113 = vpack.c.b16 %v957, %v955
  %v1114 = vpack.c.b16 %v960, %v958
  %v1115 = vpack.c.b16 %v961, %v959
  %v1116 = vpack.c.b16 %v964, %v962
  %v1117 = vpack.c.b16 %v965, %v963
  %v1118 = vpack.c.b16 %v968, %v966
  %v1119 = vpack.c.b16 %v969, %v967
  %v1120 = vpack.c.b16 %v972, %v970
  %v1121 = vpack.c.b16 %v973, %v971
  %v1122 = vpack.c.b16 %v976, %v974
  %v1123 = vpack.c.b16 %v977, %v975
  %v1124 = vpack.c.b16 %v980, %v978
  %v1125 = vpack.c.b16 %v981, %v979
  %1270 = vmatprep.subr.bf16.mxu0 %v997
  %1271 = vmatpush1.bf16.msra.mxu0 %v996
  %1272 = vmatprep.subr.bf16.mxu0 %v995
  %1273 = vmatpush1.bf16.msra.mxu0 %v994
  %1274 = vmatprep.subr.bf16.mxu0 %v993
  %1275 = vmatpush1.bf16.msra.mxu0 %v992
  %1276 = vmatprep.subr.bf16.mxu0 %v991
  %1277 = vmatpush1.bf16.msra.mxu0 %v990
  %1278 = vmatprep.subr.bf16.mxu0 %v989
  %1279 = vmatpush1.bf16.msra.mxu0 %v988
  %1280 = vmatprep.subr.bf16.mxu0 %v987
  %1281 = vmatpush1.bf16.msra.mxu0 %v986
  %1282 = vmatprep.subr.bf16.mxu0 %v985
  %1283 = vmatpush1.bf16.msra.mxu0 %v984
  %1284 = vmatprep.subr.bf16.mxu0 %v983
  %1285 = vmatpush1.bf16.msra.mxu0 %v982
  %1286 = vmatprep.subr.bf16.mxu0 %v1013
  %1287 = vmatpush2.bf16.msra.mxu0 %v1012
  %1288 = vmatprep.subr.bf16.mxu0 %v1011
  %1289 = vmatpush2.bf16.msra.mxu0 %v1010
  %1290 = vmatprep.subr.bf16.mxu0 %v1009
  %1291 = vmatpush2.bf16.msra.mxu0 %v1008
  %1292 = vmatprep.subr.bf16.mxu0 %v1007
  %1293 = vmatpush2.bf16.msra.mxu0 %v1006
  %1294 = vmatprep.subr.bf16.mxu0 %v1005
  %1295 = vmatpush2.bf16.msra.mxu0 %v1004
  %1296 = vmatprep.subr.bf16.mxu0 %v1003
  %1297 = vmatpush2.bf16.msra.mxu0 %v1002
  %1298 = vmatprep.subr.bf16.mxu0 %v1001
  %1299 = vmatpush2.bf16.msra.mxu0 %v1000
  %1300 = vmatprep.subr.bf16.mxu0 %v999
  %1301 = vmatpush2.bf16.msra.mxu0 %v998
  %1302 = vmatprep.mubr.bf16.mxu0 %v425
  %1303 = vmatmul.mubr.bf16.gmra.mxu0 %v424
  %v1304 = vpop.f32.mrf.mxu0
  %v1305 = vadd.f32 %v235, %v1304
  %v1306 = vpop.f32.mrf.mxu0
  %v1307 = vadd.f32 %v239, %v1306
  %v1308 = vpop.f32.mrf.mxu0
  %v1309 = vadd.f32 %v235, %v1308
  %v1310 = vpop.f32.mrf.mxu0
  %v1311 = vadd.f32 %v239, %v1310
  %1312 = vmatprep.mubr.bf16.mxu0 %v434
  %1313 = vmatmul.mubr.bf16.gmra.mxu0 %v433
  %v1314 = vpop.f32.mrf.mxu0
  %v1315 = vadd.f32 %v235, %v1314
  %v1316 = vpop.f32.mrf.mxu0
  %v1317 = vadd.f32 %v239, %v1316
  %v1318 = vpop.f32.mrf.mxu0
  %v1319 = vadd.f32 %v235, %v1318
  %v1320 = vpop.f32.mrf.mxu0
  %v1321 = vadd.f32 %v239, %v1320
  %1322 = vmatprep.mubr.bf16.mxu0 %v443
  %1323 = vmatmul.mubr.bf16.gmra.mxu0 %v442
  %v1324 = vpop.f32.mrf.mxu0
  %v1325 = vadd.f32 %v235, %v1324
  %v1326 = vpop.f32.mrf.mxu0
  %v1327 = vadd.f32 %v239, %v1326
  %v1328 = vpop.f32.mrf.mxu0
  %v1329 = vadd.f32 %v235, %v1328
  %v1330 = vpop.f32.mrf.mxu0
  %v1331 = vadd.f32 %v239, %v1330
  %1332 = vmatprep.mubr.bf16.mxu0 %v452
  %1333 = vmatmul.mubr.bf16.gmra.mxu0 %v451
  %v1334 = vpop.f32.mrf.mxu0
  %v1335 = vadd.f32 %v235, %v1334
  %v1336 = vpop.f32.mrf.mxu0
  %v1337 = vadd.f32 %v239, %v1336
  %v1338 = vpop.f32.mrf.mxu0
  %v1339 = vadd.f32 %v235, %v1338
  %v1340 = vpop.f32.mrf.mxu0
  %v1341 = vadd.f32 %v239, %v1340
  %1342 = vmatprep.mubr.bf16.mxu0 %v461
  %1343 = vmatmul.mubr.bf16.gmra.mxu0 %v460
  %v1344 = vpop.f32.mrf.mxu0
  %v1345 = vadd.f32 %v235, %v1344
  %v1346 = vpop.f32.mrf.mxu0
  %v1347 = vadd.f32 %v239, %v1346
  %v1348 = vpop.f32.mrf.mxu0
  %v1349 = vadd.f32 %v235, %v1348
  %v1350 = vpop.f32.mrf.mxu0
  %v1351 = vadd.f32 %v239, %v1350
  %1352 = vmatprep.mubr.bf16.mxu0 %v470
  %1353 = vmatmul.mubr.bf16.gmra.mxu0 %v469
  %v1354 = vpop.f32.mrf.mxu0
  %v1355 = vadd.f32 %v235, %v1354
  %v1356 = vpop.f32.mrf.mxu0
  %v1357 = vadd.f32 %v239, %v1356
  %v1358 = vpop.f32.mrf.mxu0
  %v1359 = vadd.f32 %v235, %v1358
  %v1360 = vpop.f32.mrf.mxu0
  %v1361 = vadd.f32 %v239, %v1360
  %1362 = vmatprep.mubr.bf16.mxu0 %v479
  %1363 = vmatmul.mubr.bf16.gmra.mxu0 %v478
  %v1364 = vpop.f32.mrf.mxu0
  %v1365 = vadd.f32 %v235, %v1364
  %v1366 = vpop.f32.mrf.mxu0
  %v1367 = vadd.f32 %v239, %v1366
  %v1368 = vpop.f32.mrf.mxu0
  %v1369 = vpop.f32.mrf.mxu0
  %1370 = vdwg.mxu0
  %1371 = vmatprep.subr.bf16.mxu0 %v1029
  %1372 = vmatpush1.bf16.msra.mxu0 %v1028
  %1373 = vmatprep.subr.bf16.mxu0 %v1027
  %1374 = vmatpush1.bf16.msra.mxu0 %v1026
  %1375 = vmatprep.subr.bf16.mxu0 %v1025
  %1376 = vmatpush1.bf16.msra.mxu0 %v1024
  %1377 = vmatprep.subr.bf16.mxu0 %v1023
  %1378 = vmatpush1.bf16.msra.mxu0 %v1022
  %1379 = vmatprep.subr.bf16.mxu0 %v1021
  %1380 = vmatpush1.bf16.msra.mxu0 %v1020
  %1381 = vmatprep.subr.bf16.mxu0 %v1019
  %1382 = vmatpush1.bf16.msra.mxu0 %v1018
  %1383 = vmatprep.subr.bf16.mxu0 %v1017
  %1384 = vmatpush1.bf16.msra.mxu0 %v1016
  %1385 = vmatprep.subr.bf16.mxu0 %v1015
  %1386 = vmatpush1.bf16.msra.mxu0 %v1014
  %1387 = vmatprep.subr.bf16.mxu0 %v1045
  %1388 = vmatpush2.bf16.msra.mxu0 %v1044
  %1389 = vmatprep.subr.bf16.mxu0 %v1043
  %1390 = vmatpush2.bf16.msra.mxu0 %v1042
  %1391 = vmatprep.subr.bf16.mxu0 %v1041
  %1392 = vmatpush2.bf16.msra.mxu0 %v1040
  %1393 = vmatprep.subr.bf16.mxu0 %v1039
  %1394 = vmatpush2.bf16.msra.mxu0 %v1038
  %1395 = vmatprep.subr.bf16.mxu0 %v1037
  %1396 = vmatpush2.bf16.msra.mxu0 %v1036
  %1397 = vmatprep.subr.bf16.mxu0 %v1035
  %1398 = vmatpush2.bf16.msra.mxu0 %v1034
  %1399 = vmatprep.subr.bf16.mxu0 %v1033
  %1400 = vmatpush2.bf16.msra.mxu0 %v1032
  %1401 = vmatprep.subr.bf16.mxu0 %v1031
  %1402 = vmatpush2.bf16.msra.mxu0 %v1030
  %1403 = vmatprep.mubr.bf16.mxu0 %v427
  %1404 = vmatmul.mubr.bf16.gmra.mxu0 %v426
  %v1405 = vpop.f32.mrf.mxu0
  %v1406 = vadd.f32 %v1305, %v1405
  %v1407 = vpop.f32.mrf.mxu0
  %v1408 = vadd.f32 %v1307, %v1407
  %v1409 = vpop.f32.mrf.mxu0
  %v1410 = vadd.f32 %v1309, %v1409
  %v1411 = vpop.f32.mrf.mxu0
  %v1412 = vadd.f32 %v1311, %v1411
  %1413 = vmatprep.mubr.bf16.mxu0 %v436
  %1414 = vmatmul.mubr.bf16.gmra.mxu0 %v435
  %v1415 = vpop.f32.mrf.mxu0
  %v1416 = vadd.f32 %v1315, %v1415
  %v1417 = vpop.f32.mrf.mxu0
  %v1418 = vadd.f32 %v1317, %v1417
  %v1419 = vpop.f32.mrf.mxu0
  %v1420 = vadd.f32 %v1319, %v1419
  %v1421 = vpop.f32.mrf.mxu0
  %v1422 = vadd.f32 %v1321, %v1421
  %1423 = vmatprep.mubr.bf16.mxu0 %v445
  %1424 = vmatmul.mubr.bf16.gmra.mxu0 %v444
  %v1425 = vpop.f32.mrf.mxu0
  %v1426 = vadd.f32 %v1325, %v1425
  %v1427 = vpop.f32.mrf.mxu0
  %v1428 = vadd.f32 %v1327, %v1427
  %v1429 = vpop.f32.mrf.mxu0
  %v1430 = vadd.f32 %v1329, %v1429
  %v1431 = vpop.f32.mrf.mxu0
  %v1432 = vadd.f32 %v1331, %v1431
  %1433 = vmatprep.mubr.bf16.mxu0 %v454
  %1434 = vmatmul.mubr.bf16.gmra.mxu0 %v453
  %v1435 = vpop.f32.mrf.mxu0
  %v1436 = vadd.f32 %v1335, %v1435
  %v1437 = vpop.f32.mrf.mxu0
  %v1438 = vadd.f32 %v1337, %v1437
  %v1439 = vpop.f32.mrf.mxu0
  %v1440 = vadd.f32 %v1339, %v1439
  %v1441 = vpop.f32.mrf.mxu0
  %v1442 = vadd.f32 %v1341, %v1441
  %1443 = vmatprep.mubr.bf16.mxu0 %v463
  %1444 = vmatmul.mubr.bf16.gmra.mxu0 %v462
  %v1445 = vpop.f32.mrf.mxu0
  %v1446 = vadd.f32 %v1345, %v1445
  %v1447 = vpop.f32.mrf.mxu0
  %v1448 = vadd.f32 %v1347, %v1447
  %v1449 = vpop.f32.mrf.mxu0
  %v1450 = vadd.f32 %v1349, %v1449
  %v1451 = vpop.f32.mrf.mxu0
  %v1452 = vadd.f32 %v1351, %v1451
  %1453 = vmatprep.mubr.bf16.mxu0 %v472
  %1454 = vmatmul.mubr.bf16.gmra.mxu0 %v471
  %v1455 = vpop.f32.mrf.mxu0
  %v1456 = vadd.f32 %v1355, %v1455
  %v1457 = vpop.f32.mrf.mxu0
  %v1458 = vadd.f32 %v1357, %v1457
  %v1459 = vpop.f32.mrf.mxu0
  %v1460 = vadd.f32 %v1359, %v1459
  %v1461 = vpop.f32.mrf.mxu0
  %v1462 = vadd.f32 %v1361, %v1461
  %1463 = vmatprep.mubr.bf16.mxu0 %v481
  %1464 = vmatmul.mubr.bf16.gmra.mxu0 %v480
  %v1465 = vpop.f32.mrf.mxu0
  %v1466 = vadd.f32 %v1365, %v1465
  %v1467 = vpop.f32.mrf.mxu0
  %v1468 = vadd.f32 %v1367, %v1467
  %v1469 = vpop.f32.mrf.mxu0
  %v1470 = vpop.f32.mrf.mxu0
  %1471 = vdwg.mxu0
  %1472 = vmatprep.subr.bf16.mxu0 %v1061
  %1473 = vmatpush1.bf16.msra.mxu0 %v1060
  %1474 = vmatprep.subr.bf16.mxu0 %v1059
  %1475 = vmatpush1.bf16.msra.mxu0 %v1058
  %1476 = vmatprep.subr.bf16.mxu0 %v1057
  %1477 = vmatpush1.bf16.msra.mxu0 %v1056
  %1478 = vmatprep.subr.bf16.mxu0 %v1055
  %1479 = vmatpush1.bf16.msra.mxu0 %v1054
  %1480 = vmatprep.subr.bf16.mxu0 %v1053
  %1481 = vmatpush1.bf16.msra.mxu0 %v1052
  %1482 = vmatprep.subr.bf16.mxu0 %v1051
  %1483 = vmatpush1.bf16.msra.mxu0 %v1050
  %1484 = vmatprep.subr.bf16.mxu0 %v1049
  %1485 = vmatpush1.bf16.msra.mxu0 %v1048
  %1486 = vmatprep.subr.bf16.mxu0 %v1047
  %1487 = vmatpush1.bf16.msra.mxu0 %v1046
  %1488 = vmatprep.subr.bf16.mxu0 %v1077
  %1489 = vmatpush2.bf16.msra.mxu0 %v1076
  %1490 = vmatprep.subr.bf16.mxu0 %v1075
  %1491 = vmatpush2.bf16.msra.mxu0 %v1074
  %1492 = vmatprep.subr.bf16.mxu0 %v1073
  %1493 = vmatpush2.bf16.msra.mxu0 %v1072
  %1494 = vmatprep.subr.bf16.mxu0 %v1071
  %1495 = vmatpush2.bf16.msra.mxu0 %v1070
  %1496 = vmatprep.subr.bf16.mxu0 %v1069
  %1497 = vmatpush2.bf16.msra.mxu0 %v1068
  %1498 = vmatprep.subr.bf16.mxu0 %v1067
  %1499 = vmatpush2.bf16.msra.mxu0 %v1066
  %1500 = vmatprep.subr.bf16.mxu0 %v1065
  %1501 = vmatpush2.bf16.msra.mxu0 %v1064
  %1502 = vmatprep.subr.bf16.mxu0 %v1063
  %1503 = vmatpush2.bf16.msra.mxu0 %v1062
  %1504 = vmatprep.mubr.bf16.mxu0 %v429
  %1505 = vmatmul.mubr.bf16.gmra.mxu0 %v428
  %v1506 = vpop.f32.mrf.mxu0
  %v1507 = vadd.f32 %v1406, %v1506
  %v1508 = vpop.f32.mrf.mxu0
  %v1509 = vadd.f32 %v1408, %v1508
  %v1510 = vpop.f32.mrf.mxu0
  %v1511 = vadd.f32 %v1410, %v1510
  %v1512 = vpop.f32.mrf.mxu0
  %v1513 = vadd.f32 %v1412, %v1512
  %1514 = vmatprep.mubr.bf16.mxu0 %v438
  %1515 = vmatmul.mubr.bf16.gmra.mxu0 %v437
  %v1516 = vpop.f32.mrf.mxu0
  %v1517 = vadd.f32 %v1416, %v1516
  %v1518 = vpop.f32.mrf.mxu0
  %v1519 = vadd.f32 %v1418, %v1518
  %v1520 = vpop.f32.mrf.mxu0
  %v1521 = vadd.f32 %v1420, %v1520
  %v1522 = vpop.f32.mrf.mxu0
  %v1523 = vadd.f32 %v1422, %v1522
  %1524 = vmatprep.mubr.bf16.mxu0 %v447
  %1525 = vmatmul.mubr.bf16.gmra.mxu0 %v446
  %v1526 = vpop.f32.mrf.mxu0
  %v1527 = vadd.f32 %v1426, %v1526
  %v1528 = vpop.f32.mrf.mxu0
  %v1529 = vadd.f32 %v1428, %v1528
  %v1530 = vpop.f32.mrf.mxu0
  %v1531 = vadd.f32 %v1430, %v1530
  %v1532 = vpop.f32.mrf.mxu0
  %v1533 = vadd.f32 %v1432, %v1532
  %1534 = vmatprep.mubr.bf16.mxu0 %v456
  %1535 = vmatmul.mubr.bf16.gmra.mxu0 %v455
  %v1536 = vpop.f32.mrf.mxu0
  %v1537 = vadd.f32 %v1436, %v1536
  %v1538 = vpop.f32.mrf.mxu0
  %v1539 = vadd.f32 %v1438, %v1538
  %v1540 = vpop.f32.mrf.mxu0
  %v1541 = vadd.f32 %v1440, %v1540
  %v1542 = vpop.f32.mrf.mxu0
  %v1543 = vadd.f32 %v1442, %v1542
  %1544 = vmatprep.mubr.bf16.mxu0 %v465
  %1545 = vmatmul.mubr.bf16.gmra.mxu0 %v464
  %v1546 = vpop.f32.mrf.mxu0
  %v1547 = vadd.f32 %v1446, %v1546
  %v1548 = vpop.f32.mrf.mxu0
  %v1549 = vadd.f32 %v1448, %v1548
  %v1550 = vpop.f32.mrf.mxu0
  %v1551 = vadd.f32 %v1450, %v1550
  %v1552 = vpop.f32.mrf.mxu0
  %v1553 = vadd.f32 %v1452, %v1552
  %1554 = vmatprep.mubr.bf16.mxu0 %v474
  %1555 = vmatmul.mubr.bf16.gmra.mxu0 %v473
  %v1556 = vpop.f32.mrf.mxu0
  %v1557 = vadd.f32 %v1456, %v1556
  %v1558 = vpop.f32.mrf.mxu0
  %v1559 = vadd.f32 %v1458, %v1558
  %v1560 = vpop.f32.mrf.mxu0
  %v1561 = vadd.f32 %v1460, %v1560
  %v1562 = vpop.f32.mrf.mxu0
  %v1563 = vadd.f32 %v1462, %v1562
  %1564 = vmatprep.mubr.bf16.mxu0 %v483
  %1565 = vmatmul.mubr.bf16.gmra.mxu0 %v482
  %v1566 = vpop.f32.mrf.mxu0
  %v1567 = vadd.f32 %v1466, %v1566
  %v1568 = vpop.f32.mrf.mxu0
  %v1569 = vadd.f32 %v1468, %v1568
  %v1570 = vpop.f32.mrf.mxu0
  %v1571 = vpop.f32.mrf.mxu0
  %1572 = vdwg.mxu0
  %1573 = vmatprep.subr.bf16.mxu0 %v1093
  %1574 = vmatpush1.bf16.msra.mxu0 %v1092
  %1575 = vmatprep.subr.bf16.mxu0 %v1091
  %1576 = vmatpush1.bf16.msra.mxu0 %v1090
  %1577 = vmatprep.subr.bf16.mxu0 %v1089
  %1578 = vmatpush1.bf16.msra.mxu0 %v1088
  %1579 = vmatprep.subr.bf16.mxu0 %v1087
  %1580 = vmatpush1.bf16.msra.mxu0 %v1086
  %1581 = vmatprep.subr.bf16.mxu0 %v1085
  %1582 = vmatpush1.bf16.msra.mxu0 %v1084
  %1583 = vmatprep.subr.bf16.mxu0 %v1083
  %1584 = vmatpush1.bf16.msra.mxu0 %v1082
  %1585 = vmatprep.subr.bf16.mxu0 %v1081
  %1586 = vmatpush1.bf16.msra.mxu0 %v1080
  %1587 = vmatprep.subr.bf16.mxu0 %v1079
  %1588 = vmatpush1.bf16.msra.mxu0 %v1078
  %1589 = vmatprep.subr.bf16.mxu0 %v1109
  %1590 = vmatpush2.bf16.msra.mxu0 %v1108
  %1591 = vmatprep.subr.bf16.mxu0 %v1107
  %1592 = vmatpush2.bf16.msra.mxu0 %v1106
  %1593 = vmatprep.subr.bf16.mxu0 %v1105
  %1594 = vmatpush2.bf16.msra.mxu0 %v1104
  %1595 = vmatprep.subr.bf16.mxu0 %v1103
  %1596 = vmatpush2.bf16.msra.mxu0 %v1102
  %1597 = vmatprep.subr.bf16.mxu0 %v1101
  %1598 = vmatpush2.bf16.msra.mxu0 %v1100
  %1599 = vmatprep.subr.bf16.mxu0 %v1099
  %1600 = vmatpush2.bf16.msra.mxu0 %v1098
  %1601 = vmatprep.subr.bf16.mxu0 %v1097
  %1602 = vmatpush2.bf16.msra.mxu0 %v1096
  %1603 = vmatprep.subr.bf16.mxu0 %v1095
  %1604 = vmatpush2.bf16.msra.mxu0 %v1094
  %1605 = vmatprep.mubr.bf16.mxu0 %v431
  %1606 = vmatmul.mubr.bf16.gmra.mxu0 %v430
  %v1607 = vpop.f32.mrf.mxu0
  %v1608 = vadd.f32 %v1507, %v1607
  %v1609 = vpop.f32.mrf.mxu0
  %v1610 = vadd.f32 %v1509, %v1609
  %v1611 = vpop.f32.mrf.mxu0
  %v1612 = vadd.f32 %v1511, %v1611
  %v1613 = vpop.f32.mrf.mxu0
  %v1614 = vadd.f32 %v1513, %v1613
  %1615 = vmatprep.mubr.bf16.mxu0 %v440
  %1616 = vmatmul.mubr.bf16.gmra.mxu0 %v439
  %v1617 = vpop.f32.mrf.mxu0
  %v1618 = vadd.f32 %v1517, %v1617
  %v1619 = vpop.f32.mrf.mxu0
  %v1620 = vadd.f32 %v1519, %v1619
  %v1621 = vpop.f32.mrf.mxu0
  %v1622 = vadd.f32 %v1521, %v1621
  %v1623 = vpop.f32.mrf.mxu0
  %v1624 = vadd.f32 %v1523, %v1623
  %1625 = vmatprep.mubr.bf16.mxu0 %v449
  %1626 = vmatmul.mubr.bf16.gmra.mxu0 %v448
  %v1627 = vpop.f32.mrf.mxu0
  %v1628 = vadd.f32 %v1527, %v1627
  %v1629 = vpop.f32.mrf.mxu0
  %v1630 = vadd.f32 %v1529, %v1629
  %v1631 = vpop.f32.mrf.mxu0
  %v1632 = vadd.f32 %v1531, %v1631
  %v1633 = vpop.f32.mrf.mxu0
  %v1634 = vadd.f32 %v1533, %v1633
  %1635 = vmatprep.mubr.bf16.mxu0 %v458
  %1636 = vmatmul.mubr.bf16.gmra.mxu0 %v457
  %v1637 = vpop.f32.mrf.mxu0
  %v1638 = vadd.f32 %v1537, %v1637
  %v1639 = vpop.f32.mrf.mxu0
  %v1640 = vadd.f32 %v1539, %v1639
  %v1641 = vpop.f32.mrf.mxu0
  %v1642 = vadd.f32 %v1541, %v1641
  %v1643 = vpop.f32.mrf.mxu0
  %v1644 = vadd.f32 %v1543, %v1643
  %1645 = vmatprep.mubr.bf16.mxu0 %v467
  %1646 = vmatmul.mubr.bf16.gmra.mxu0 %v466
  %v1647 = vpop.f32.mrf.mxu0
  %v1648 = vadd.f32 %v1547, %v1647
  %v1649 = vpop.f32.mrf.mxu0
  %v1650 = vadd.f32 %v1549, %v1649
  %v1651 = vpop.f32.mrf.mxu0
  %v1652 = vadd.f32 %v1551, %v1651
  %v1653 = vpop.f32.mrf.mxu0
  %v1654 = vadd.f32 %v1553, %v1653
  %1655 = vmatprep.mubr.bf16.mxu0 %v476
  %1656 = vmatmul.mubr.bf16.gmra.mxu0 %v475
  %v1657 = vpop.f32.mrf.mxu0
  %v1658 = vadd.f32 %v1557, %v1657
  %v1659 = vpop.f32.mrf.mxu0
  %v1660 = vadd.f32 %v1559, %v1659
  %v1661 = vpop.f32.mrf.mxu0
  %v1662 = vadd.f32 %v1561, %v1661
  %v1663 = vpop.f32.mrf.mxu0
  %v1664 = vadd.f32 %v1563, %v1663
  %1665 = vmatprep.mubr.bf16.mxu0 %v485
  %1666 = vmatmul.mubr.bf16.gmra.mxu0 %v484
  %v1667 = vpop.f32.mrf.mxu0
  %v1668 = vadd.f32 %v1567, %v1667
  %v1669 = vpop.f32.mrf.mxu0
  %v1670 = vadd.f32 %v1569, %v1669
  %v1671 = vpop.f32.mrf.mxu0
  %v1672 = vpop.f32.mrf.mxu0
  %1673 = vdwg.mxu0
  %1674 = vmatprep.subr.bf16.mxu0 %v1125
  %1675 = vmatpush1.bf16.msra.mxu0 %v1124
  %1676 = vmatprep.subr.bf16.mxu0 %v1123
  %1677 = vmatpush1.bf16.msra.mxu0 %v1122
  %1678 = vmatprep.subr.bf16.mxu0 %v1121
  %1679 = vmatpush1.bf16.msra.mxu0 %v1120
  %1680 = vmatprep.subr.bf16.mxu0 %v1119
  %1681 = vmatpush1.bf16.msra.mxu0 %v1118
  %1682 = vmatprep.subr.bf16.mxu0 %v1117
  %1683 = vmatpush1.bf16.msra.mxu0 %v1116
  %1684 = vmatprep.subr.bf16.mxu0 %v1115
  %1685 = vmatpush1.bf16.msra.mxu0 %v1114
  %1686 = vmatprep.subr.bf16.mxu0 %v1113
  %1687 = vmatpush1.bf16.msra.mxu0 %v1112
  %1688 = vmatprep.subr.bf16.mxu0 %v1111
  %1689 = vmatpush1.bf16.msra.mxu0 %v1110
  %1690 = vmatprep.subr.bf16.mxu0 0
  %1691 = vmatpush2.bf16.msra.mxu0 0
  %1692 = vmatprep.subr.bf16.mxu0 0
  %1693 = vmatpush2.bf16.msra.mxu0 0
  %1694 = vmatprep.subr.bf16.mxu0 0
  %1695 = vmatpush2.bf16.msra.mxu0 0
  %1696 = vmatprep.subr.bf16.mxu0 0
  %1697 = vmatpush2.bf16.msra.mxu0 0
  %1698 = vmatprep.subr.bf16.mxu0 0
  %1699 = vmatpush2.bf16.msra.mxu0 0
  %1700 = vmatprep.subr.bf16.mxu0 0
  %1701 = vmatpush2.bf16.msra.mxu0 0
  %1702 = vmatprep.subr.bf16.mxu0 0
  %1703 = vmatpush2.bf16.msra.mxu0 0
  %1704 = vmatprep.subr.bf16.mxu0 0
  %1705 = vmatpush2.bf16.msra.mxu0 0
  %1706 = vmatprep.mubr.bf16.mxu0 0
  %1707 = vmatmul.mubr.bf16.gmra.mxu0 %v432
  %v1708 = vpop.f32.mrf.mxu0
  %v1709 = vadd.f32 %v1608, %v1708
  %v1710 = vpop.f32.mrf.mxu0
  %v1711 = vadd.f32 %v1610, %v1710
  %v1712 = vpop.f32.mrf.mxu0
  %v1713 = vadd.f32 %v1612, %v1712
  %v1714 = vpop.f32.mrf.mxu0
  %v1715 = vadd.f32 %v1614, %v1714
  %1716 = vmatprep.mubr.bf16.mxu0 0
  %1717 = vmatmul.mubr.bf16.gmra.mxu0 %v441
  %v1718 = vpop.f32.mrf.mxu0
  %v1719 = vadd.f32 %v1618, %v1718
  %v1720 = vpop.f32.mrf.mxu0
  %v1721 = vadd.f32 %v1620, %v1720
  %v1722 = vpop.f32.mrf.mxu0
  %v1723 = vadd.f32 %v1622, %v1722
  %v1724 = vpop.f32.mrf.mxu0
  %v1725 = vadd.f32 %v1624, %v1724
  %1726 = vmatprep.mubr.bf16.mxu0 0
  %1727 = vmatmul.mubr.bf16.gmra.mxu0 %v450
  %v1728 = vpop.f32.mrf.mxu0
  %v1729 = vadd.f32 %v1628, %v1728
  %v1730 = vpop.f32.mrf.mxu0
  %v1731 = vadd.f32 %v1630, %v1730
  %v1732 = vpop.f32.mrf.mxu0
  %v1733 = vadd.f32 %v1632, %v1732
  %v1734 = vpop.f32.mrf.mxu0
  %v1735 = vadd.f32 %v1634, %v1734
  %1736 = vmatprep.mubr.bf16.mxu0 0
  %1737 = vmatmul.mubr.bf16.gmra.mxu0 %v459
  %v1738 = vpop.f32.mrf.mxu0
  %v1739 = vadd.f32 %v1638, %v1738
  %v1740 = vpop.f32.mrf.mxu0
  %v1741 = vadd.f32 %v1640, %v1740
  %v1742 = vpop.f32.mrf.mxu0
  %v1743 = vadd.f32 %v1642, %v1742
  %v1744 = vpop.f32.mrf.mxu0
  %v1745 = vadd.f32 %v1644, %v1744
  %1746 = vmatprep.mubr.bf16.mxu0 0
  %1747 = vmatmul.mubr.bf16.gmra.mxu0 %v468
  %v1748 = vpop.f32.mrf.mxu0
  %v1749 = vadd.f32 %v1648, %v1748
  %v1750 = vpop.f32.mrf.mxu0
  %v1751 = vadd.f32 %v1650, %v1750
  %v1752 = vpop.f32.mrf.mxu0
  %v1753 = vadd.f32 %v1652, %v1752
  %v1754 = vpop.f32.mrf.mxu0
  %v1755 = vadd.f32 %v1654, %v1754
  %1756 = vmatprep.mubr.bf16.mxu0 0
  %1757 = vmatmul.mubr.bf16.gmra.mxu0 %v477
  %v1758 = vpop.f32.mrf.mxu0
  %v1759 = vadd.f32 %v1658, %v1758
  %v1760 = vpop.f32.mrf.mxu0
  %v1761 = vadd.f32 %v1660, %v1760
  %v1762 = vpop.f32.mrf.mxu0
  %v1763 = vadd.f32 %v1662, %v1762
  %v1764 = vpop.f32.mrf.mxu0
  %v1765 = vadd.f32 %v1664, %v1764
  %1766 = vmatprep.mubr.bf16.mxu0 0
  %1767 = vmatmul.mubr.bf16.gmra.mxu0 %v486
  %v1768 = vpop.f32.mrf.mxu0
  %v1769 = vadd.f32 %v1668, %v1768
  %v1770 = vpop.f32.mrf.mxu0
  %v1771 = vadd.f32 %v1670, %v1770
  %v1772 = vpop.f32.mrf.mxu0
  %v1773 = vpop.f32.mrf.mxu0
  %1774 = vdwg.mxu0
  %1788 = vrot.lane.b32.xlu0 %v1709, 64
  %v1789 = vpop.permute.xlu0 %1788
  %1790 = vrot.lane.b32.xlu0 %v1713, 64
  %v1791 = vpop.permute.xlu0 %1790
  %1792 = vrot.lane.b32.xlu0 %v1719, 64
  %v1793 = vpop.permute.xlu0 %1792
  %1794 = vrot.lane.b32.xlu0 %v1723, 64
  %v1795 = vpop.permute.xlu0 %1794
  %1796 = vrot.lane.b32.xlu0 %v1729, 64
  %v1797 = vpop.permute.xlu0 %1796
  %1798 = vrot.lane.b32.xlu0 %v1733, 64
  %v1799 = vpop.permute.xlu0 %1798
  %1800 = vrot.lane.b32.xlu0 %v1739, 64
  %v1801 = vpop.permute.xlu0 %1800
  %1802 = vrot.lane.b32.xlu0 %v1743, 64
  %v1803 = vpop.permute.xlu0 %1802
  %1804 = vrot.lane.b32.xlu0 %v1749, 64
  %v1805 = vpop.permute.xlu0 %1804
  %1806 = vrot.lane.b32.xlu0 %v1753, 64
  %v1807 = vpop.permute.xlu0 %1806
  %1808 = vrot.lane.b32.xlu0 %v1759, 64
  %v1809 = vpop.permute.xlu0 %1808
  %1810 = vrot.lane.b32.xlu0 %v1763, 64
  %v1811 = vpop.permute.xlu0 %1810
  %1812 = vrot.lane.b32.xlu0 %v1769, 64
  %v1813 = vpop.permute.xlu0 %1812
  %v1827 = vadd.f32 %v1709, %v1789
  %v1828 = vadd.f32 %v1713, %v1791
  %v1829 = vadd.f32 %v1719, %v1793
  %v1830 = vadd.f32 %v1723, %v1795
  %v1831 = vadd.f32 %v1729, %v1797
  %v1832 = vadd.f32 %v1733, %v1799
  %v1833 = vadd.f32 %v1739, %v1801
  %v1834 = vadd.f32 %v1743, %v1803
  %v1835 = vadd.f32 %v1749, %v1805
  %v1836 = vadd.f32 %v1753, %v1807
  %v1837 = vadd.f32 %v1759, %v1809
  %v1838 = vadd.f32 %v1763, %v1811
  %v1839 = vadd.f32 %v1769, %v1813
  %v1840 = vadd.f32 %v1827, %v1711
  %v1841 = vadd.f32 %v1828, %v1715
  %v1842 = vadd.f32 %v1829, %v1721
  %v1843 = vadd.f32 %v1830, %v1725
  %v1844 = vadd.f32 %v1831, %v1731
  %v1845 = vadd.f32 %v1832, %v1735
  %v1846 = vadd.f32 %v1833, %v1741
  %v1847 = vadd.f32 %v1834, %v1745
  %v1848 = vadd.f32 %v1835, %v1751
  %v1849 = vadd.f32 %v1836, %v1755
  %v1850 = vadd.f32 %v1837, %v1761
  %v1851 = vadd.f32 %v1838, %v1765
  %v1852 = vadd.f32 %v1839, %v1771
  %1866 = vrot.lane.b32.xlu0 %v1711, 64
  %v1867 = vpop.permute.xlu0 %1866
  %1868 = vrot.lane.b32.xlu0 %v1715, 64
  %v1869 = vpop.permute.xlu0 %1868
  %1870 = vrot.lane.b32.xlu0 %v1721, 64
  %v1871 = vpop.permute.xlu0 %1870
  %1872 = vrot.lane.b32.xlu0 %v1725, 64
  %v1873 = vpop.permute.xlu0 %1872
  %1874 = vrot.lane.b32.xlu0 %v1731, 64
  %v1875 = vpop.permute.xlu0 %1874
  %1876 = vrot.lane.b32.xlu0 %v1735, 64
  %v1877 = vpop.permute.xlu0 %1876
  %1878 = vrot.lane.b32.xlu0 %v1741, 64
  %v1879 = vpop.permute.xlu0 %1878
  %1880 = vrot.lane.b32.xlu0 %v1745, 64
  %v1881 = vpop.permute.xlu0 %1880
  %1882 = vrot.lane.b32.xlu0 %v1751, 64
  %v1883 = vpop.permute.xlu0 %1882
  %1884 = vrot.lane.b32.xlu0 %v1755, 64
  %v1885 = vpop.permute.xlu0 %1884
  %1886 = vrot.lane.b32.xlu0 %v1761, 64
  %v1887 = vpop.permute.xlu0 %1886
  %1888 = vrot.lane.b32.xlu0 %v1765, 64
  %v1889 = vpop.permute.xlu0 %1888
  %1890 = vrot.lane.b32.xlu0 %v1771, 64
  %v1891 = vpop.permute.xlu0 %1890
  %v1905 = vadd.f32 %v1840, %v1867
  %v1906 = vadd.f32 %v1841, %v1869
  %v1907 = vadd.f32 %v1842, %v1871
  %v1908 = vadd.f32 %v1843, %v1873
  %v1909 = vadd.f32 %v1844, %v1875
  %v1910 = vadd.f32 %v1845, %v1877
  %v1911 = vadd.f32 %v1846, %v1879
  %v1912 = vadd.f32 %v1847, %v1881
  %v1913 = vadd.f32 %v1848, %v1883
  %v1914 = vadd.f32 %v1849, %v1885
  %v1915 = vadd.f32 %v1850, %v1887
  %v1916 = vadd.f32 %v1851, %v1889
  %v1917 = vadd.f32 %v1852, %v1891
  %v1918 = vmul.f32 %v1709, %v1709
  %v1919 = vmul.f32 %v1713, %v1713
  %v1920 = vmul.f32 %v1719, %v1719
  %v1921 = vmul.f32 %v1723, %v1723
  %v1922 = vmul.f32 %v1729, %v1729
  %v1923 = vmul.f32 %v1733, %v1733
  %v1924 = vmul.f32 %v1739, %v1739
  %v1925 = vmul.f32 %v1743, %v1743
  %v1926 = vmul.f32 %v1749, %v1749
  %v1927 = vmul.f32 %v1753, %v1753
  %v1928 = vmul.f32 %v1759, %v1759
  %v1929 = vmul.f32 %v1763, %v1763
  %v1930 = vmul.f32 %v1769, %v1769
  %1944 = vrot.lane.b32.xlu0 %v1918, 64
  %v1945 = vpop.permute.xlu0 %1944
  %1946 = vrot.lane.b32.xlu0 %v1919, 64
  %v1947 = vpop.permute.xlu0 %1946
  %1948 = vrot.lane.b32.xlu0 %v1920, 64
  %v1949 = vpop.permute.xlu0 %1948
  %1950 = vrot.lane.b32.xlu0 %v1921, 64
  %v1951 = vpop.permute.xlu0 %1950
  %1952 = vrot.lane.b32.xlu0 %v1922, 64
  %v1953 = vpop.permute.xlu0 %1952
  %1954 = vrot.lane.b32.xlu0 %v1923, 64
  %v1955 = vpop.permute.xlu0 %1954
  %1956 = vrot.lane.b32.xlu0 %v1924, 64
  %v1957 = vpop.permute.xlu0 %1956
  %1958 = vrot.lane.b32.xlu0 %v1925, 64
  %v1959 = vpop.permute.xlu0 %1958
  %1960 = vrot.lane.b32.xlu0 %v1926, 64
  %v1961 = vpop.permute.xlu0 %1960
  %1962 = vrot.lane.b32.xlu0 %v1927, 64
  %v1963 = vpop.permute.xlu0 %1962
  %1964 = vrot.lane.b32.xlu0 %v1928, 64
  %v1965 = vpop.permute.xlu0 %1964
  %1966 = vrot.lane.b32.xlu0 %v1929, 64
  %v1967 = vpop.permute.xlu0 %1966
  %1968 = vrot.lane.b32.xlu0 %v1930, 64
  %v1969 = vpop.permute.xlu0 %1968
  %v1983 = vadd.f32 %v1918, %v1945
  %v1984 = vadd.f32 %v1919, %v1947
  %v1985 = vadd.f32 %v1920, %v1949
  %v1986 = vadd.f32 %v1921, %v1951
  %v1987 = vadd.f32 %v1922, %v1953
  %v1988 = vadd.f32 %v1923, %v1955
  %v1989 = vadd.f32 %v1924, %v1957
  %v1990 = vadd.f32 %v1925, %v1959
  %v1991 = vadd.f32 %v1926, %v1961
  %v1992 = vadd.f32 %v1927, %v1963
  %v1993 = vadd.f32 %v1928, %v1965
  %v1994 = vadd.f32 %v1929, %v1967
  %v1995 = vadd.f32 %v1930, %v1969
  %v1996 = vmul.f32 %v1711, %v1711
  %v1997 = vmul.f32 %v1715, %v1715
  %v1998 = vmul.f32 %v1721, %v1721
  %v1999 = vmul.f32 %v1725, %v1725
  %v2000 = vmul.f32 %v1731, %v1731
  %v2001 = vmul.f32 %v1735, %v1735
  %v2002 = vmul.f32 %v1741, %v1741
  %v2003 = vmul.f32 %v1745, %v1745
  %v2004 = vmul.f32 %v1751, %v1751
  %v2005 = vmul.f32 %v1755, %v1755
  %v2006 = vmul.f32 %v1761, %v1761
  %v2007 = vmul.f32 %v1765, %v1765
  %v2008 = vmul.f32 %v1771, %v1771
  %v2009 = vadd.f32 %v1983, %v1996
  %v2010 = vadd.f32 %v1984, %v1997
  %v2011 = vadd.f32 %v1985, %v1998
  %v2012 = vadd.f32 %v1986, %v1999
  %v2013 = vadd.f32 %v1987, %v2000
  %v2014 = vadd.f32 %v1988, %v2001
  %v2015 = vadd.f32 %v1989, %v2002
  %v2016 = vadd.f32 %v1990, %v2003
  %v2017 = vadd.f32 %v1991, %v2004
  %v2018 = vadd.f32 %v1992, %v2005
  %v2019 = vadd.f32 %v1993, %v2006
  %v2020 = vadd.f32 %v1994, %v2007
  %v2021 = vadd.f32 %v1995, %v2008
  %2035 = vrot.lane.b32.xlu0 %v1996, 64
  %v2036 = vpop.permute.xlu0 %2035
  %2037 = vrot.lane.b32.xlu0 %v1997, 64
  %v2038 = vpop.permute.xlu0 %2037
  %2039 = vrot.lane.b32.xlu0 %v1998, 64
  %v2040 = vpop.permute.xlu0 %2039
  %2041 = vrot.lane.b32.xlu0 %v1999, 64
  %v2042 = vpop.permute.xlu0 %2041
  %2043 = vrot.lane.b32.xlu0 %v2000, 64
  %v2044 = vpop.permute.xlu0 %2043
  %2045 = vrot.lane.b32.xlu0 %v2001, 64
  %v2046 = vpop.permute.xlu0 %2045
  %2047 = vrot.lane.b32.xlu0 %v2002, 64
  %v2048 = vpop.permute.xlu0 %2047
  %2049 = vrot.lane.b32.xlu0 %v2003, 64
  %v2050 = vpop.permute.xlu0 %2049
  %2051 = vrot.lane.b32.xlu0 %v2004, 64
  %v2052 = vpop.permute.xlu0 %2051
  %2053 = vrot.lane.b32.xlu0 %v2005, 64
  %v2054 = vpop.permute.xlu0 %2053
  %2055 = vrot.lane.b32.xlu0 %v2006, 64
  %v2056 = vpop.permute.xlu0 %2055
  %2057 = vrot.lane.b32.xlu0 %v2007, 64
  %v2058 = vpop.permute.xlu0 %2057
  %2059 = vrot.lane.b32.xlu0 %v2008, 64
  %v2060 = vpop.permute.xlu0 %2059
  %v2074 = vadd.f32 %v2009, %v2036
  %v2075 = vadd.f32 %v2010, %v2038
  %v2076 = vadd.f32 %v2011, %v2040
  %v2077 = vadd.f32 %v2012, %v2042
  %v2078 = vadd.f32 %v2013, %v2044
  %v2079 = vadd.f32 %v2014, %v2046
  %v2080 = vadd.f32 %v2015, %v2048
  %v2081 = vadd.f32 %v2016, %v2050
  %v2082 = vadd.f32 %v2017, %v2052
  %v2083 = vadd.f32 %v2018, %v2054
  %v2084 = vadd.f32 %v2019, %v2056
  %v2085 = vadd.f32 %v2020, %v2058
  %v2086 = vadd.f32 %v2021, %v2060
  %vm2087 = vcmask 523264
  %v2088 = vsel %vm2087, %v1905, 0.0
  %v2089 = vsel %vm2087, %v1906, 0.0
  %v2090 = vadd.f32 %v2088, %v2089
  %v2091 = vsel %vm2087, %v1907, 0.0
  %v2092 = vadd.f32 %v2090, %v2091
  %v2093 = vsel %vm2087, %v1908, 0.0
  %v2094 = vadd.f32 %v2092, %v2093
  %v2095 = vsel %vm2087, %v1909, 0.0
  %v2096 = vadd.f32 %v2094, %v2095
  %v2097 = vsel %vm2087, %v1910, 0.0
  %v2098 = vadd.f32 %v2096, %v2097
  %v2099 = vsel %vm2087, %v1911, 0.0
  %v2100 = vadd.f32 %v2098, %v2099
  %v2101 = vsel %vm2087, %v1912, 0.0
  %v2102 = vadd.f32 %v2100, %v2101
  %v2103 = vsel %vm2087, %v1913, 0.0
  %v2104 = vadd.f32 %v2102, %v2103
  %v2105 = vsel %vm2087, %v1914, 0.0
  %v2106 = vadd.f32 %v2104, %v2105
  %v2107 = vsel %vm2087, %v1915, 0.0
  %v2108 = vadd.f32 %v2106, %v2107
  %v2109 = vsel %vm2087, %v1916, 0.0
  %v2110 = vadd.f32 %v2108, %v2109
  %vm2111 = vcmask 517120
  %v2112 = vsel %vm2111, %v1917, 0.0
  %v2113 = vadd.f32 %v2110, %v2112
  %v2114 = vrot.slane %v2113, 4
  %v2115 = vadd.f32 %v2113, %v2114
  %v2116 = vrot.slane %v2115, 2
  %v2117 = vadd.f32 %v2115, %v2116
  %v2118 = vrot.slane %v2117, 1
  %v2119 = vadd.f32 %v2117, %v2118
  %v2120 = vrcp.pop 98.0
  %v2121 = vmul.f32 %v2119, %v2120
  %v2122 = vmul.f32 %v2121, 0.25
  %v2123 = vsel %vm2087, %v2074, 0.0
  %v2124 = vsel %vm2087, %v2075, 0.0
  %v2125 = vadd.f32 %v2123, %v2124
  %v2126 = vsel %vm2087, %v2076, 0.0
  %v2127 = vadd.f32 %v2125, %v2126
  %v2128 = vsel %vm2087, %v2077, 0.0
  %v2129 = vadd.f32 %v2127, %v2128
  %v2130 = vsel %vm2087, %v2078, 0.0
  %v2131 = vadd.f32 %v2129, %v2130
  %v2132 = vsel %vm2087, %v2079, 0.0
  %v2133 = vadd.f32 %v2131, %v2132
  %v2134 = vsel %vm2087, %v2080, 0.0
  %v2135 = vadd.f32 %v2133, %v2134
  %v2136 = vsel %vm2087, %v2081, 0.0
  %v2137 = vadd.f32 %v2135, %v2136
  %v2138 = vsel %vm2087, %v2082, 0.0
  %v2139 = vadd.f32 %v2137, %v2138
  %v2140 = vsel %vm2087, %v2083, 0.0
  %v2141 = vadd.f32 %v2139, %v2140
  %v2142 = vsel %vm2087, %v2084, 0.0
  %v2143 = vadd.f32 %v2141, %v2142
  %v2144 = vsel %vm2087, %v2085, 0.0
  %v2145 = vadd.f32 %v2143, %v2144
  %v2146 = vsel %vm2111, %v2086, 0.0
  %v2147 = vadd.f32 %v2145, %v2146
  %v2148 = vrot.slane %v2147, 4
  %v2149 = vadd.f32 %v2147, %v2148
  %v2150 = vrot.slane %v2149, 2
  %v2151 = vadd.f32 %v2149, %v2150
  %v2152 = vrot.slane %v2151, 1
  %v2153 = vadd.f32 %v2151, %v2152
  %v2154 = vmul.f32 %v2153, %v2120
  %v2155 = vmul.f32 %v2154, 0.25
  %v2156 = vmul.f32 %v2122, %v2122
  %v2157 = vsub.f32 %v2155, %v2156
  %v2158 = vadd.f32 %v2157, 1e-05
  %v2159 = vrsqrt.pop %v2158
  %2161 = vrot.lane.b32.xlu0 %v2122, 64
  %v2162 = vpop.permute.xlu0 %2161
  %v2164 = vsel %vm2087, %v2122, %v2162
  %2166 = vrot.lane.b32.xlu0 %v2159, 64
  %v2167 = vpop.permute.xlu0 %2166
  %v2169 = vsel %vm2087, %v2159, %v2167
  %v2170 = vlaneseq
  %v2171 = vshrl.u32 %v2170, 7
  %v2172 = vsub.s32 0, %v2171
  %v2173 = vrot.slane %v2164, %v2172
  %v2174 = vsub.f32 %v1709, %v2173
  %v2175 = vsub.f32 %v1711, %v2173
  %v2176 = vsub.f32 %v1713, %v2173
  %v2177 = vsub.f32 %v1715, %v2173
  %v2178 = vsub.f32 %v1719, %v2173
  %v2179 = vsub.f32 %v1721, %v2173
  %v2180 = vsub.f32 %v1723, %v2173
  %v2181 = vsub.f32 %v1725, %v2173
  %v2182 = vsub.f32 %v1729, %v2173
  %v2183 = vsub.f32 %v1731, %v2173
  %v2184 = vsub.f32 %v1733, %v2173
  %v2185 = vsub.f32 %v1735, %v2173
  %v2186 = vsub.f32 %v1739, %v2173
  %v2187 = vsub.f32 %v1741, %v2173
  %v2188 = vsub.f32 %v1743, %v2173
  %v2189 = vsub.f32 %v1745, %v2173
  %v2190 = vsub.f32 %v1749, %v2173
  %v2191 = vsub.f32 %v1751, %v2173
  %v2192 = vsub.f32 %v1753, %v2173
  %v2193 = vsub.f32 %v1755, %v2173
  %v2194 = vsub.f32 %v1759, %v2173
  %v2195 = vsub.f32 %v1761, %v2173
  %v2196 = vsub.f32 %v1763, %v2173
  %v2197 = vsub.f32 %v1765, %v2173
  %v2198 = vsub.f32 %v1769, %v2173
  %v2199 = vsub.f32 %v1771, %v2173
  %v2200 = vlaneseq
  %v2201 = vshrl.u32 %v2200, 7
  %v2202 = vsub.s32 0, %v2201
  %v2203 = vrot.slane %v2169, %v2202
  %v2204 = vmul.f32 %v2174, %v2203
  %v2205 = vmul.f32 %v2175, %v2203
  %v2206 = vmul.f32 %v2176, %v2203
  %v2207 = vmul.f32 %v2177, %v2203
  %v2208 = vmul.f32 %v2178, %v2203
  %v2209 = vmul.f32 %v2179, %v2203
  %v2210 = vmul.f32 %v2180, %v2203
  %v2211 = vmul.f32 %v2181, %v2203
  %v2212 = vmul.f32 %v2182, %v2203
  %v2213 = vmul.f32 %v2183, %v2203
  %v2214 = vmul.f32 %v2184, %v2203
  %v2215 = vmul.f32 %v2185, %v2203
  %v2216 = vmul.f32 %v2186, %v2203
  %v2217 = vmul.f32 %v2187, %v2203
  %v2218 = vmul.f32 %v2188, %v2203
  %v2219 = vmul.f32 %v2189, %v2203
  %v2220 = vmul.f32 %v2190, %v2203
  %v2221 = vmul.f32 %v2191, %v2203
  %v2222 = vmul.f32 %v2192, %v2203
  %v2223 = vmul.f32 %v2193, %v2203
  %v2224 = vmul.f32 %v2194, %v2203
  %v2225 = vmul.f32 %v2195, %v2203
  %v2226 = vmul.f32 %v2196, %v2203
  %v2227 = vmul.f32 %v2197, %v2203
  %v2228 = vmul.f32 %v2198, %v2203
  %v2229 = vmul.f32 %v2199, %v2203
  %v2230 = vld [vmem:[%s3] sm:$0x3]
  %v2232 = vlaneseq
  %v2233 = vshrl.u32 %v2232, 7
  %v2234 = vsub.s32 0, %v2233
  %v2235 = vrot.slane %v2230, %v2234
  %v2236 = vlaneseq
  %v2237 = vshrl.u32 %v2236, 7
  %v2238 = vsub.s32 1, %v2237
  %v2239 = vrot.slane %v2230, %v2238
  %v2242 = vmul.f32 %v2204, %v2235
  %v2243 = vmul.f32 %v2205, %v2239
  %v2244 = vmul.f32 %v2206, %v2235
  %v2245 = vmul.f32 %v2207, %v2239
  %v2246 = vmul.f32 %v2208, %v2235
  %v2247 = vmul.f32 %v2209, %v2239
  %v2248 = vmul.f32 %v2210, %v2235
  %v2249 = vmul.f32 %v2211, %v2239
  %v2250 = vmul.f32 %v2212, %v2235
  %v2251 = vmul.f32 %v2213, %v2239
  %v2252 = vmul.f32 %v2214, %v2235
  %v2253 = vmul.f32 %v2215, %v2239
  %v2254 = vmul.f32 %v2216, %v2235
  %v2255 = vmul.f32 %v2217, %v2239
  %v2256 = vmul.f32 %v2218, %v2235
  %v2257 = vmul.f32 %v2219, %v2239
  %v2258 = vmul.f32 %v2220, %v2235
  %v2259 = vmul.f32 %v2221, %v2239
  %v2260 = vmul.f32 %v2222, %v2235
  %v2261 = vmul.f32 %v2223, %v2239
  %v2262 = vmul.f32 %v2224, %v2235
  %v2263 = vmul.f32 %v2225, %v2239
  %v2264 = vmul.f32 %v2226, %v2235
  %v2265 = vmul.f32 %v2227, %v2239
  %v2266 = vmul.f32 %v2228, %v2235
  %v2267 = vmul.f32 %v2229, %v2239
  %v2268 = vld [vmem:[%s4] sm:$0x3]
  %v2270 = vlaneseq
  %v2271 = vshrl.u32 %v2270, 7
  %v2272 = vsub.s32 0, %v2271
  %v2273 = vrot.slane %v2268, %v2272
  %v2274 = vlaneseq
  %v2275 = vshrl.u32 %v2274, 7
  %v2276 = vsub.s32 1, %v2275
  %v2277 = vrot.slane %v2268, %v2276
  %v2280 = vadd.f32 %v2242, %v2273
  %v2281 = vadd.f32 %v2243, %v2277
  %v2282 = vadd.f32 %v2244, %v2273
  %v2283 = vadd.f32 %v2245, %v2277
  %v2284 = vadd.f32 %v2246, %v2273
  %v2285 = vadd.f32 %v2247, %v2277
  %v2286 = vadd.f32 %v2248, %v2273
  %v2287 = vadd.f32 %v2249, %v2277
  %v2288 = vadd.f32 %v2250, %v2273
  %v2289 = vadd.f32 %v2251, %v2277
  %v2290 = vadd.f32 %v2252, %v2273
  %v2291 = vadd.f32 %v2253, %v2277
  %v2292 = vadd.f32 %v2254, %v2273
  %v2293 = vadd.f32 %v2255, %v2277
  %v2294 = vadd.f32 %v2256, %v2273
  %v2295 = vadd.f32 %v2257, %v2277
  %v2296 = vadd.f32 %v2258, %v2273
  %v2297 = vadd.f32 %v2259, %v2277
  %v2298 = vadd.f32 %v2260, %v2273
  %v2299 = vadd.f32 %v2261, %v2277
  %v2300 = vadd.f32 %v2262, %v2273
  %v2301 = vadd.f32 %v2263, %v2277
  %v2302 = vadd.f32 %v2264, %v2273
  %v2303 = vadd.f32 %v2265, %v2277
  %v2304 = vadd.f32 %v2266, %v2273
  %v2305 = vadd.f32 %v2267, %v2277
  %v2306 = vmax.f32 %v2280, 0.0
  %v2307 = vmax.f32 %v2281, 0.0
  %v2308 = vmax.f32 %v2282, 0.0
  %v2309 = vmax.f32 %v2283, 0.0
  %v2310 = vmax.f32 %v2284, 0.0
  %v2311 = vmax.f32 %v2285, 0.0
  %v2312 = vmax.f32 %v2286, 0.0
  %v2313 = vmax.f32 %v2287, 0.0
  %v2314 = vmax.f32 %v2288, 0.0
  %v2315 = vmax.f32 %v2289, 0.0
  %v2316 = vmax.f32 %v2290, 0.0
  %v2317 = vmax.f32 %v2291, 0.0
  %v2318 = vmax.f32 %v2292, 0.0
  %v2319 = vmax.f32 %v2293, 0.0
  %v2320 = vmax.f32 %v2294, 0.0
  %v2321 = vmax.f32 %v2295, 0.0
  %v2322 = vmax.f32 %v2296, 0.0
  %v2323 = vmax.f32 %v2297, 0.0
  %v2324 = vmax.f32 %v2298, 0.0
  %v2325 = vmax.f32 %v2299, 0.0
  %v2326 = vmax.f32 %v2300, 0.0
  %v2327 = vmax.f32 %v2301, 0.0
  %v2328 = vmax.f32 %v2302, 0.0
  %v2329 = vmax.f32 %v2303, 0.0
  %v2330 = vmax.f32 %v2304, 0.0
  %v2331 = vmax.f32 %v2305, 0.0
  %2332 = vst [vmem:[%s5] sm:$0xff] %v2306
  %2333 = vst [vmem:[%s5 + $0x8] sm:$0xff] %v2307
  %2334 = vst [vmem:[%s5 + $0x10] sm:$0xff] %v2308
  %2335 = vst [vmem:[%s5 + $0x18] sm:$0xff] %v2309
  %2336 = vst [vmem:[%s5 + $0x20] sm:$0xff] %v2310
  %2337 = vst [vmem:[%s5 + $0x28] sm:$0xff] %v2311
  %2338 = vst [vmem:[%s5 + $0x30] sm:$0xff] %v2312
  %2339 = vst [vmem:[%s5 + $0x38] sm:$0xff] %v2313
  %2340 = vst [vmem:[%s5 + $0x40] sm:$0xff] %v2314
  %2341 = vst [vmem:[%s5 + $0x48] sm:$0xff] %v2315
  %2342 = vst [vmem:[%s5 + $0x50] sm:$0xff] %v2316
  %2343 = vst [vmem:[%s5 + $0x58] sm:$0xff] %v2317
  %2344 = vst [vmem:[%s5 + $0x60] sm:$0xff] %v2318
  %2345 = vst [vmem:[%s5 + $0x68] sm:$0xff] %v2319
  %2346 = vst [vmem:[%s5 + $0x70] sm:$0xff] %v2320
  %2347 = vst [vmem:[%s5 + $0x78] sm:$0xff] %v2321
  %2348 = vst [vmem:[%s5 + $0x80] sm:$0xff] %v2322
  %2349 = vst [vmem:[%s5 + $0x88] sm:$0xff] %v2323
  %2350 = vst [vmem:[%s5 + $0x90] sm:$0xff] %v2324
  %2351 = vst [vmem:[%s5 + $0x98] sm:$0xff] %v2325
  %2352 = vst [vmem:[%s5 + $0xa0] sm:$0xff] %v2326
  %2353 = vst [vmem:[%s5 + $0xa8] sm:$0xff] %v2327
  %2354 = vst [vmem:[%s5 + $0xb0] sm:$0xff] %v2328
  %2355 = vst [vmem:[%s5 + $0xb8] sm:$0xff] %v2329
  %2356 = vst [vmem:[%s5 + $0xc0] sm:$0x3] %v2330
  %2357 = vst [vmem:[%s5 + $0xc8] sm:$0x3] %v2331
  // Predicated region
  $region22: #{generator_forward.4} parent=0 // pred_check
    _
  $region23: #{generator_forward.4} parent=0 // pred_check_branch
    %2359 = sbr.rel (0) target = $region25
  $region24: #{generator_forward.4} parent=0 // pred_region
    _
  $region25: #{generator_forward.4} parent=0 // pred_fallthru
    _
  // Predicated region
  $region26: #{generator_forward.4} parent=0 // pred_check
    _
  $region27: #{generator_forward.4} parent=0 // pred_check_branch
    %2361 = sbr.rel (0) target = $region29
  $region28: #{generator_forward.4} parent=0 // pred_region
    _
  $region29: #{generator_forward.4} parent=0 // pred_fallthru
    _

// kernel: generator_forward.3
$region0: #{generator_forward.3}
  #allocation0 [shape = 'u32[]', space=smem, size = 0x4, offset = 0x4, fixed_abs, tag = 'smem constant byte address 0x4 - core index']
  #allocation1 [shape = 'u32[144,128]{1,0:T(1,128)}', space=vmem, size = 0x12000, scoped, tag = 'internal scratch']
  %s0 = inlined_call_operand.vmem [shape: bf16[2,128], index: 0, kind: input, shape index: {}]
  %s1 = inlined_call_operand.hbm [shape: bf16[128,1024], index: 1, kind: input, shape index: {}]
  %s2 = inlined_call_operand.hbm [shape: f32[1,1024], index: 2, kind: input, shape index: {}]
  %s3 = inlined_call_operand.hbm [shape: f32[1,1024], index: 3, kind: input, shape index: {}]
  %s4 = inlined_call_operand.hbm [shape: f32[1,1024], index: 4, kind: input, shape index: {}]
  %s5 = inlined_call_operand.hbm [shape: bf16[1024,6272], index: 5, kind: input, shape index: {}]
  %s6 = inlined_call_operand.hbm [shape: f32[1,6272], index: 6, kind: input, shape index: {}]
  %s7 = inlined_call_operand.hbm [shape: f32[1,6272], index: 7, kind: input, shape index: {}]
  %s8 = inlined_call_operand.vmem [shape: f32[2,6272], index: 8, kind: output, shape index: {}]
  %s9 = sld [smem:[#allocation0]]
  $region93: #{generator_forward.3} parent=0
    _
  %s11 = ssub.s32 1, %s9
  %s12 = scalar_select 0, %s11, %s9
  $region1: #{generator_forward.3} parent=0
    #allocation2 [shape = 'u8[262144]{0}', space=vmem, size = 0x40000, scoped, tag = 'input window, operand 1, single buffered']
    #allocation3 [shape = 's32[2]{0}', space=sflag, size = 0x8, scoped, tag = 'scoped memory for generator_forward.3']
    #allocation4 [shape = 'u8[4096]{0}', space=vmem, size = 0x1000, scoped, tag = 'input window, operand 2, single buffered']
    #allocation5 [shape = 's32[1]{0}', space=sflag, size = 0x4, scoped, tag = 'scoped memory for generator_forward.3']
    #allocation6 [shape = 'u8[4096]{0}', space=vmem, size = 0x1000, scoped, tag = 'input window, operand 3, single buffered']
    #allocation7 [shape = 'u8[4096]{0}', space=vmem, size = 0x1000, scoped, tag = 'input window, operand 4, single buffered']
    #allocation8 [shape = 's32[1]{0}', space=sflag, size = 0x4, scoped, tag = 'scoped memory for generator_forward.3']
    #allocation9 [shape = 'u8[3670016]{0}', space=vmem, size = 0x380000, scoped, tag = 'input window, operand 5']
    #allocation10 [shape = 'u8[7168]{0}', space=vmem, size = 0x1c00, scoped, tag = 'input window, operand 6']
    #allocation11 [shape = 'u8[7168]{0}', space=vmem, size = 0x1c00, scoped, tag = 'input window, operand 7']
    %13 = vsyncpa [#allocation3], 0
    %14 = vsyncpa [#allocation5], 0
    %15 = vsyncpa [#allocation8], 0
    loop: start=0, step=1, limit=9
    $region2: #{generator_forward.3} parent=1 // loop_pre_header
      _
    $region3: #{generator_forward.3} parent=1 // loop_header
      %s17 = sphi 0, %s21
      %p18 = scmp.ge.s32.totalorder %s17, 9
      %s25 = sphi 0, %s25
      %s27 = sphi 0, %s25
      %s28 = sphi 0, %s27
      %s42 = sphi 0, %s28
      %s46 = sphi 0, %s46
      %s48 = sphi 0, %s46
      %s49 = sphi 0, %s48
      %s63 = sphi 0, %s49
      %s67 = sphi 0, %s67
      %s69 = sphi 0, %s67
      %s70 = sphi 0, %s69
      %s84 = sphi 0, %s70
      %s88 = sphi 0, %s88
      %s90 = sphi 0, %s88
      %s91 = sphi 0, %s90
      %s105 = sphi 0, %s91
      %s109 = sphi 0, %s109
      %s111 = sphi 0, %s109
      %s112 = sphi 0, %s111
      %s126 = sphi 0, %s112
      %s132 = sphi 0, %s134
      %s135 = sphi 0, %s132
      %s136 = sphi 0, %s135
      %s152 = sphi 0, %s136
      %s158 = sphi 0, %s160
      %s161 = sphi 0, %s158
      %s162 = sphi 0, %s161
      %s178 = sphi 0, %s162
      %s184 = sphi 0, %s186
      %s187 = sphi 0, %s184
      %s188 = sphi 0, %s187
      %s204 = sphi 0, %s188
      %s210 = sphi 0, %s212
      %s213 = sphi 0, %s210
      %s214 = sphi 0, %s213
      %s230 = sphi 0, %s214
    $region4: #{generator_forward.3} parent=1 // loop_header_branch
      %20 = sbr.rel (%p18) target = $region8
    $region5: #{generator_forward.3} parent=1 // loop_body
      %s22 = ssub.s32 %s17, 1
      %s23 = ssub.s32 %s17, 2
      %s24 = sadd.s32 %s17, 1
      %s26 = sadd.s32 %s25, 1
      %p29 = scmp.eq.s32.totalorder %s17, 6
      %p30 = scmp.ne.s32.totalorder %s25, %s27
      %p31 = scmp.eq.s32.totalorder %s17, 0
      %p32 = por %p30, %p31
      %p33 = scmp.ne.s32.totalorder %s25, %s27
      %p34 = scmp.eq.s32.totalorder %s22, 6
      %p35 = por %p33, %p34
      %p36 = scmp.ne.s32.totalorder %s27, %s28
      %p37 = scmp.eq.s32.totalorder %s22, 0
      %p38 = por %p36, %p37
      %p39 = scmp.ne.s32.totalorder %s27, %s28
      %p40 = scmp.eq.s32.totalorder %s23, 6
      %p41 = por %p39, %p40
      %p43 = scmp.ne.s32.totalorder %s28, %s42
      %p44 = scmp.eq.s32.totalorder %s23, 0
      %p45 = por %p43, %p44
      %s47 = sadd.s32 %s46, 1
      %p50 = scmp.eq.s32.totalorder %s17, 6
      %p51 = scmp.ne.s32.totalorder %s46, %s48
      %p52 = scmp.eq.s32.totalorder %s17, 0
      %p53 = por %p51, %p52
      %p54 = scmp.ne.s32.totalorder %s46, %s48
      %p55 = scmp.eq.s32.totalorder %s22, 6
      %p56 = por %p54, %p55
      %p57 = scmp.ne.s32.totalorder %s48, %s49
      %p58 = scmp.eq.s32.totalorder %s22, 0
      %p59 = por %p57, %p58
      %p60 = scmp.ne.s32.totalorder %s48, %s49
      %p61 = scmp.eq.s32.totalorder %s23, 6
      %p62 = por %p60, %p61
      %p64 = scmp.ne.s32.totalorder %s49, %s63
      %p65 = scmp.eq.s32.totalorder %s23, 0
      %p66 = por %p64, %p65
      %s68 = sadd.s32 %s67, 1
      %p71 = scmp.eq.s32.totalorder %s17, 6
      %p72 = scmp.ne.s32.totalorder %s67, %s69
      %p73 = scmp.eq.s32.totalorder %s17, 0
      %p74 = por %p72, %p73
      %p75 = scmp.ne.s32.totalorder %s67, %s69
      %p76 = scmp.eq.s32.totalorder %s22, 6
      %p77 = por %p75, %p76
      %p78 = scmp.ne.s32.totalorder %s69, %s70
      %p79 = scmp.eq.s32.totalorder %s22, 0
      %p80 = por %p78, %p79
      %p81 = scmp.ne.s32.totalorder %s69, %s70
      %p82 = scmp.eq.s32.totalorder %s23, 6
      %p83 = por %p81, %p82
      %p85 = scmp.ne.s32.totalorder %s70, %s84
      %p86 = scmp.eq.s32.totalorder %s23, 0
      %p87 = por %p85, %p86
      %s89 = sadd.s32 %s88, 1
      %p92 = scmp.eq.s32.totalorder %s17, 6
      %p93 = scmp.ne.s32.totalorder %s88, %s90
      %p94 = scmp.eq.s32.totalorder %s17, 0
      %p95 = por %p93, %p94
      %p96 = scmp.ne.s32.totalorder %s88, %s90
      %p97 = scmp.eq.s32.totalorder %s22, 6
      %p98 = por %p96, %p97
      %p99 = scmp.ne.s32.totalorder %s90, %s91
      %p100 = scmp.eq.s32.totalorder %s22, 0
      %p101 = por %p99, %p100
      %p102 = scmp.ne.s32.totalorder %s90, %s91
      %p103 = scmp.eq.s32.totalorder %s23, 6
      %p104 = por %p102, %p103
      %p106 = scmp.ne.s32.totalorder %s91, %s105
      %p107 = scmp.eq.s32.totalorder %s23, 0
      %p108 = por %p106, %p107
      %s110 = sadd.s32 %s109, 1
      %p113 = scmp.eq.s32.totalorder %s17, 6
      %p114 = scmp.ne.s32.totalorder %s109, %s111
      %p115 = scmp.eq.s32.totalorder %s17, 0
      %p116 = por %p114, %p115
      %p117 = scmp.ne.s32.totalorder %s109, %s111
      %p118 = scmp.eq.s32.totalorder %s22, 6
      %p119 = por %p117, %p118
      %p120 = scmp.ne.s32.totalorder %s111, %s112
      %p121 = scmp.eq.s32.totalorder %s22, 0
      %p122 = por %p120, %p121
      %p123 = scmp.ne.s32.totalorder %s111, %s112
      %p124 = scmp.eq.s32.totalorder %s23, 6
      %p125 = por %p123, %p124
      %p127 = scmp.ne.s32.totalorder %s112, %s126
      %p128 = scmp.eq.s32.totalorder %s23, 0
      %p129 = por %p127, %p128
      %s130 = ssub.s32 %s17, %s24
      %p131 = scmp.eq.s32.totalorder %s130, 0
      %s133 = sadd.s32 %s132, 1
      %s134 = scalar_select %p131, %s132, %s133
      %p137 = pneg %p131
      %p138 = scmp.eq.s32.totalorder %s17, 6
      %p139 = por %p137, %p138
      %p140 = scmp.ne.s32.totalorder %s132, %s135
      %p141 = scmp.eq.s32.totalorder %s17, 0
      %p142 = por %p140, %p141
      %p143 = scmp.ne.s32.totalorder %s132, %s135
      %p144 = scmp.eq.s32.totalorder %s22, 6
      %p145 = por %p143, %p144
      %p146 = scmp.ne.s32.totalorder %s135, %s136
      %p147 = scmp.eq.s32.totalorder %s22, 0
      %p148 = por %p146, %p147
      %p149 = scmp.ne.s32.totalorder %s135, %s136
      %p150 = scmp.eq.s32.totalorder %s23, 6
      %p151 = por %p149, %p150
      %p153 = scmp.ne.s32.totalorder %s136, %s152
      %p154 = scmp.eq.s32.totalorder %s23, 0
      %p155 = por %p153, %p154
      %s156 = ssub.s32 %s17, %s24
      %p157 = scmp.eq.s32.totalorder %s156, 0
      %s159 = sadd.s32 %s158, 1
      %s160 = scalar_select %p157, %s158, %s159
      %p163 = pneg %p157
      %p164 = scmp.eq.s32.totalorder %s17, 6
      %p165 = por %p163, %p164
      %p166 = scmp.ne.s32.totalorder %s158, %s161
      %p167 = scmp.eq.s32.totalorder %s17, 0
      %p168 = por %p166, %p167
      %p169 = scmp.ne.s32.totalorder %s158, %s161
      %p170 = scmp.eq.s32.totalorder %s22, 6
      %p171 = por %p169, %p170
      %p172 = scmp.ne.s32.totalorder %s161, %s162
      %p173 = scmp.eq.s32.totalorder %s22, 0
      %p174 = por %p172, %p173
      %p175 = scmp.ne.s32.totalorder %s161, %s162
      %p176 = scmp.eq.s32.totalorder %s23, 6
      %p177 = por %p175, %p176
      %p179 = scmp.ne.s32.totalorder %s162, %s178
      %p180 = scmp.eq.s32.totalorder %s23, 0
      %p181 = por %p179, %p180
      %s182 = ssub.s32 %s17, %s24
      %p183 = scmp.eq.s32.totalorder %s182, 0
      %s185 = sadd.s32 %s184, 1
      %s186 = scalar_select %p183, %s184, %s185
      %p189 = pneg %p183
      %p190 = scmp.eq.s32.totalorder %s17, 6
      %p191 = por %p189, %p190
      %p192 = scmp.ne.s32.totalorder %s184, %s187
      %p193 = scmp.eq.s32.totalorder %s17, 0
      %p194 = por %p192, %p193
      %p195 = scmp.ne.s32.totalorder %s184, %s187
      %p196 = scmp.eq.s32.totalorder %s22, 6
      %p197 = por %p195, %p196
      %p198 = scmp.ne.s32.totalorder %s187, %s188
      %p199 = scmp.eq.s32.totalorder %s22, 0
      %p200 = por %p198, %p199
      %p201 = scmp.ne.s32.totalorder %s187, %s188
      %p202 = scmp.eq.s32.totalorder %s23, 6
      %p203 = por %p201, %p202
      %p205 = scmp.ne.s32.totalorder %s188, %s204
      %p206 = scmp.eq.s32.totalorder %s23, 0
      %p207 = por %p205, %p206
      %s208 = ssub.s32 %s17, %s24
      %p209 = scmp.eq.s32.totalorder %s208, 0
      %s211 = sadd.s32 %s210, 1
      %s212 = scalar_select %p209, %s210, %s211
      %p215 = pneg %p209
      %p216 = scmp.eq.s32.totalorder %s17, 6
      %p217 = por %p215, %p216
      %p218 = scmp.ne.s32.totalorder %s210, %s213
      %p219 = scmp.eq.s32.totalorder %s17, 0
      %p220 = por %p218, %p219
      %p221 = scmp.ne.s32.totalorder %s210, %s213
      %p222 = scmp.eq.s32.totalorder %s22, 6
      %p223 = por %p221, %p222
      %p224 = scmp.ne.s32.totalorder %s213, %s214
      %p225 = scmp.eq.s32.totalorder %s22, 0
      %p226 = por %p224, %p225
      %p227 = scmp.ne.s32.totalorder %s213, %s214
      %p228 = scmp.eq.s32.totalorder %s23, 6
      %p229 = por %p227, %p228
      %p231 = scmp.ne.s32.totalorder %s214, %s230
      %p232 = scmp.eq.s32.totalorder %s23, 0
      %p233 = por %p231, %p232
      %p234 = scmp.le.s32.totalorder 1, %s17
      %p235 = scmp.lt.s32.totalorder %s17, 8
      %p236 = pnand %p234, %p235
      %p237 = pneg %p236
      // Predicated region
      $region9: #{generator_forward.3} parent=5 // pred_check
        _
      $region10: #{generator_forward.3} parent=5 // pred_check_branch
        %239 = sbr.rel (%p236) target = $region12
      $region11: #{generator_forward.3} parent=5 // pred_region
        %s240 = ssub.s32 %s17, 1
        // Predicated region
        $region13: #{generator_forward.3} parent=11 // pred_check
          %p241 = pneg %p38
        $region14: #{generator_forward.3} parent=11 // pred_check_branch
          %243 = sbr.rel (%p241) target = $region16
        $region15: #{generator_forward.3} parent=11 // pred_region
          _
        $region16: #{generator_forward.3} parent=11 // pred_fallthru
          _
        // Predicated region
        $region17: #{generator_forward.3} parent=11 // pred_check
          %p244 = pneg %p59
        $region18: #{generator_forward.3} parent=11 // pred_check_branch
          %246 = sbr.rel (%p244) target = $region20
        $region19: #{generator_forward.3} parent=11 // pred_region
          %s248 = ssub.s32 8192, 8192
          %249 = vsyncadd [#allocation3], %s248
          %s250 = sshll.u32 [#allocation2], 4
          %s251 = int_to_ptr.vmem [resolvable:$true] %s250
          %256 = dma.hbm_to_vmem [thread:$0]  %s1, 8192, %s251, [#allocation3], 512, 512, 32
        $region20: #{generator_forward.3} parent=11 // pred_fallthru
          _
        // Predicated region
        $region21: #{generator_forward.3} parent=11 // pred_check
          %p257 = pneg %p80
        $region22: #{generator_forward.3} parent=11 // pred_check_branch
          %259 = sbr.rel (%p257) target = $region24
        $region23: #{generator_forward.3} parent=11 // pred_region
          %s261 = ssub.s32 128, 128
          %262 = vsyncadd [#allocation5], %s261
          %s264 = sshll.u32 [#allocation4], 4
          %s265 = int_to_ptr.vmem [resolvable:$true] %s264
          %267 = dma.hbm_to_vmem [thread:$0]  %s2, 128, %s265, [#allocation5]
        $region24: #{generator_forward.3} parent=11 // pred_fallthru
          _
        // Predicated region
        $region25: #{generator_forward.3} parent=11 // pred_check
          %p268 = pneg %p101
        $region26: #{generator_forward.3} parent=11 // pred_check_branch
          %270 = sbr.rel (%p268) target = $region28
        $region27: #{generator_forward.3} parent=11 // pred_region
          %s272 = ssub.s32 128, 128
          %273 = vsyncadd [#allocation5], %s272
          %s275 = sshll.u32 [#allocation6], 4
          %s276 = int_to_ptr.vmem [resolvable:$true] %s275
          %278 = dma.hbm_to_vmem [thread:$0]  %s3, 128, %s276, [#allocation5]
        $region28: #{generator_forward.3} parent=11 // pred_fallthru
          _
        // Predicated region
        $region29: #{generator_forward.3} parent=11 // pred_check
          %p279 = pneg %p122
        $region30: #{generator_forward.3} parent=11 // pred_check_branch
          %281 = sbr.rel (%p279) target = $region32
        $region31: #{generator_forward.3} parent=11 // pred_region
          %s283 = ssub.s32 128, 128
          %284 = vsyncadd [#allocation8], %s283
          %s286 = sshll.u32 [#allocation7], 4
          %s287 = int_to_ptr.vmem [resolvable:$true] %s286
          %289 = dma.hbm_to_vmem [thread:$0]  %s4, 128, %s287, [#allocation8]
        $region32: #{generator_forward.3} parent=11 // pred_fallthru
          _
      $region12: #{generator_forward.3} parent=5 // pred_fallthru
        _
      %p290 = scmp.lt.s32.totalorder %s17, 7
      // Predicated region
      $region33: #{generator_forward.3} parent=5 // pred_check
        %p291 = pneg %p290
      $region34: #{generator_forward.3} parent=5 // pred_check_branch
        %293 = sbr.rel (%p291) target = $region36
      $region35: #{generator_forward.3} parent=5 // pred_region
        // Predicated region
        $region37: #{generator_forward.3} parent=35 // pred_check
          %p294 = pneg %p142
        $region38: #{generator_forward.3} parent=35 // pred_check_branch
          %296 = sbr.rel (%p294) target = $region40
        $region39: #{generator_forward.3} parent=35 // pred_region
          %s297 = sand.u32 %s17, 1
          %s298 = scalar_lea.sflag [#allocation3], %s297
          %s299 = sand.u32 %s132, 1
          %s300 = smul.addr %s299, 3584
          %s301 = scalar_lea.vmem [#allocation9], %s300
          %s302 = smul.u32 7, %s17
          %s304 = ssub.s32 57344, 57344
          %305 = vsyncadd %s298, %s304
          %s306 = smul.addr %s302, 64
          %s307 = scalar_lea.hbm %s5, %s306
          %s308 = sshll.u32 %s301, 4
          %s309 = int_to_ptr.vmem [resolvable:$true] %s308
          %314 = dma.hbm_to_vmem [thread:$0]  %s307, 57344, %s309, %s298, 3136, 448, 28
        $region40: #{generator_forward.3} parent=35 // pred_fallthru
          _
        // Predicated region
        $region41: #{generator_forward.3} parent=35 // pred_check
          %p315 = pneg %p168
        $region42: #{generator_forward.3} parent=35 // pred_check_branch
          %317 = sbr.rel (%p315) target = $region44
        $region43: #{generator_forward.3} parent=35 // pred_region
          %s318 = sand.u32 %s17, 1
          %s319 = scalar_lea.sflag [#allocation3], %s318
          %s320 = sand.u32 %s158, 1
          %s321 = smul.addr %s320, 7
          %s322 = scalar_lea.vmem [#allocation10], %s321
          %s323 = smul.u32 7, %s17
          %s325 = ssub.s32 112, 112
          %326 = vsyncadd %s319, %s325
          %s327 = smul.addr %s323, 16
          %s328 = scalar_lea.hbm %s6, %s327
          %s330 = sshll.u32 %s322, 4
          %s331 = int_to_ptr.vmem [resolvable:$true] %s330
          %333 = dma.hbm_to_vmem [thread:$0]  %s328, 112, %s331, %s319
        $region44: #{generator_forward.3} parent=35 // pred_fallthru
          _
        // Predicated region
        $region45: #{generator_forward.3} parent=35 // pred_check
          %p334 = pneg %p194
        $region46: #{generator_forward.3} parent=35 // pred_check_branch
          %336 = sbr.rel (%p334) target = $region48
        $region47: #{generator_forward.3} parent=35 // pred_region
          %s337 = sand.u32 %s17, 1
          %s338 = scalar_lea.sflag [#allocation3], %s337
          %s339 = sand.u32 %s184, 1
          %s340 = smul.addr %s339, 7
          %s341 = scalar_lea.vmem [#allocation11], %s340
          %s342 = smul.u32 7, %s17
          %s344 = ssub.s32 112, 112
          %345 = vsyncadd %s338, %s344
          %s346 = smul.addr %s342, 16
          %s347 = scalar_lea.hbm %s7, %s346
          %s349 = sshll.u32 %s341, 4
          %s350 = int_to_ptr.vmem [resolvable:$true] %s349
          %352 = dma.hbm_to_vmem [thread:$0]  %s347, 112, %s350, %s338
        $region48: #{generator_forward.3} parent=35 // pred_fallthru
          _
      $region36: #{generator_forward.3} parent=5 // pred_fallthru
        _
      %p353 = scmp.le.s32.totalorder 1, %s17
      %p354 = scmp.lt.s32.totalorder %s17, 8
      %p355 = pnand %p353, %p354
      %p356 = pneg %p355
      // Predicated region
      $region49: #{generator_forward.3} parent=5 // pred_check
        _
      $region50: #{generator_forward.3} parent=5 // pred_check_branch
        %358 = sbr.rel (%p355) target = $region52
      $region51: #{generator_forward.3} parent=5 // pred_region
        %s359 = ssub.s32 %s17, 1
        // Predicated region
        $region53: #{generator_forward.3} parent=51 // pred_check
          %p360 = pneg %p59
        $region54: #{generator_forward.3} parent=51 // pred_check_branch
          %362 = sbr.rel (%p360) target = $region56
        $region55: #{generator_forward.3} parent=51 // pred_region
          %363 = dma.done [#allocation3], 8192
        $region56: #{generator_forward.3} parent=51 // pred_fallthru
          _
        // Predicated region
        $region57: #{generator_forward.3} parent=51 // pred_check
          %p364 = pneg %p80
        $region58: #{generator_forward.3} parent=51 // pred_check_branch
          %366 = sbr.rel (%p364) target = $region60
        $region59: #{generator_forward.3} parent=51 // pred_region
          %367 = dma.done [#allocation5], 128
        $region60: #{generator_forward.3} parent=51 // pred_fallthru
          _
        // Predicated region
        $region61: #{generator_forward.3} parent=51 // pred_check
          %p368 = pneg %p101
        $region62: #{generator_forward.3} parent=51 // pred_check_branch
          %370 = sbr.rel (%p368) target = $region64
        $region63: #{generator_forward.3} parent=51 // pred_region
          %371 = dma.done [#allocation5], 128
        $region64: #{generator_forward.3} parent=51 // pred_fallthru
          _
        // Predicated region
        $region65: #{generator_forward.3} parent=51 // pred_check
          %p372 = pneg %p122
        $region66: #{generator_forward.3} parent=51 // pred_check_branch
          %374 = sbr.rel (%p372) target = $region68
        $region67: #{generator_forward.3} parent=51 // pred_region
          %375 = dma.done [#allocation8], 128
        $region68: #{generator_forward.3} parent=51 // pred_fallthru
          _
        %s376 = sand.u32 %s22, 1
        %s377 = scalar_lea.sflag [#allocation3], %s376
        %s378 = sand.u32 %s135, 1
        %s379 = smul.addr %s378, 3584
        %s380 = scalar_lea.vmem [#allocation9], %s379
        // Predicated region
        $region69: #{generator_forward.3} parent=51 // pred_check
          %p381 = pneg %p148
        $region70: #{generator_forward.3} parent=51 // pred_check_branch
          %383 = sbr.rel (%p381) target = $region72
        $region71: #{generator_forward.3} parent=51 // pred_region
          %384 = dma.done %s377, 57344
        $region72: #{generator_forward.3} parent=51 // pred_fallthru
          _
        %s385 = sand.u32 %s22, 1
        %s386 = scalar_lea.sflag [#allocation3], %s385
        %s387 = sand.u32 %s161, 1
        %s388 = smul.addr %s387, 7
        %s389 = scalar_lea.vmem [#allocation10], %s388
        // Predicated region
        $region73: #{generator_forward.3} parent=51 // pred_check
          %p390 = pneg %p174
        $region74: #{generator_forward.3} parent=51 // pred_check_branch
          %392 = sbr.rel (%p390) target = $region76
        $region75: #{generator_forward.3} parent=51 // pred_region
          %393 = dma.done %s386, 112
        $region76: #{generator_forward.3} parent=51 // pred_fallthru
          _
        %s394 = sand.u32 %s22, 1
        %s395 = scalar_lea.sflag [#allocation3], %s394
        %s396 = sand.u32 %s187, 1
        %s397 = smul.addr %s396, 7
        %s398 = scalar_lea.vmem [#allocation11], %s397
        // Predicated region
        $region77: #{generator_forward.3} parent=51 // pred_check
          %p399 = pneg %p200
        $region78: #{generator_forward.3} parent=51 // pred_check_branch
          %401 = sbr.rel (%p399) target = $region80
        $region79: #{generator_forward.3} parent=51 // pred_region
          %402 = dma.done %s395, 112
        $region80: #{generator_forward.3} parent=51 // pred_fallthru
          _
        %p403 = pneg %p38
        %p404 = pneg %p35
        %p405 = pneg %p59
        %p406 = pneg %p56
        %p407 = pneg %p80
        %p408 = pneg %p77
        %p409 = pneg %p101
        %p410 = pneg %p98
        %p411 = pneg %p122
        %p412 = pneg %p119
        %s413 = sand.u32 %s22, 1
        %s414 = scalar_lea.sflag [#allocation3], %s413
        %s415 = sand.u32 %s135, 1
        %s416 = smul.addr %s415, 3584
        %s417 = scalar_lea.vmem [#allocation9], %s416
        %p418 = pneg %p148
        %p419 = pneg %p145
        %s420 = sand.u32 %s22, 1
        %s421 = scalar_lea.sflag [#allocation3], %s420
        %s422 = sand.u32 %s161, 1
        %s423 = smul.addr %s422, 7
        %s424 = scalar_lea.vmem [#allocation10], %s423
        %p425 = pneg %p174
        %p426 = pneg %p171
        %s427 = sand.u32 %s22, 1
        %s428 = scalar_lea.sflag [#allocation3], %s427
        %s429 = sand.u32 %s187, 1
        %s430 = smul.addr %s429, 7
        %s431 = scalar_lea.vmem [#allocation11], %s430
        %p432 = pneg %p200
        %p433 = pneg %p197
        %p434 = pneg %p226
        %p435 = pneg %p223
        %s436 = smul.u32 7, %s22
        %p437 = scmp.lt.s32.totalorder %s436, 48
        %s438 = scalar_select %p437, %s436, 48
        %s439 = smul.addr %s438, 2
        %s440 = scalar_lea.vmem %s8, %s439
        %s441 = smul.u32 7, %s22
        %s442 = smul.u32 7, %s22
        %s443 = smul.u32 7, %s22
        %s444 = smul.u32 7, %s22
        %p445 = scmp.lt.s32.totalorder %s444, 48
        %s446 = scalar_select %p445, %s444, 48
        %s447 = smul.addr %s446, 2
        %s448 = scalar_lea.vmem %s8, %s447
        %s449 = smul.u32 7, %s22
        %v451 = vld [vmem:[%s0] sm:$0x1]
        %v452 = vld [vmem:[#allocation2] sm:$0xff]
        %v453 = vld [vmem:[#allocation2 + $0x8] sm:$0xff]
        %v454 = vld [vmem:[#allocation2 + $0x10] sm:$0xff]
        %v455 = vld [vmem:[#allocation2 + $0x18] sm:$0xff]
        %v456 = vld [vmem:[#allocation2 + $0x20] sm:$0xff]
        %v457 = vld [vmem:[#allocation2 + $0x28] sm:$0xff]
        %v458 = vld [vmem:[#allocation2 + $0x30] sm:$0xff]
        %v459 = vld [vmem:[#allocation2 + $0x38] sm:$0xff]
        %v460 = vld [vmem:[#allocation2 + $0x40] sm:$0xff]
        %v461 = vld [vmem:[#allocation2 + $0x48] sm:$0xff]
        %v462 = vld [vmem:[#allocation2 + $0x50] sm:$0xff]
        %v463 = vld [vmem:[#allocation2 + $0x58] sm:$0xff]
        %v464 = vld [vmem:[#allocation2 + $0x60] sm:$0xff]
        %v465 = vld [vmem:[#allocation2 + $0x68] sm:$0xff]
        %v466 = vld [vmem:[#allocation2 + $0x70] sm:$0xff]
        %v467 = vld [vmem:[#allocation2 + $0x78] sm:$0xff]
        %v468 = vld [vmem:[#allocation2 + $0x80] sm:$0xff]
        %v469 = vld [vmem:[#allocation2 + $0x88] sm:$0xff]
        %v470 = vld [vmem:[#allocation2 + $0x90] sm:$0xff]
        %v471 = vld [vmem:[#allocation2 + $0x98] sm:$0xff]
        %v472 = vld [vmem:[#allocation2 + $0xa0] sm:$0xff]
        %v473 = vld [vmem:[#allocation2 + $0xa8] sm:$0xff]
        %v474 = vld [vmem:[#allocation2 + $0xb0] sm:$0xff]
        %v475 = vld [vmem:[#allocation2 + $0xb8] sm:$0xff]
        %v476 = vld [vmem:[#allocation2 + $0xc0] sm:$0xff]
        %v477 = vld [vmem:[#allocation2 + $0xc8] sm:$0xff]
        %v478 = vld [vmem:[#allocation2 + $0xd0] sm:$0xff]
        %v479 = vld [vmem:[#allocation2 + $0xd8] sm:$0xff]
        %v480 = vld [vmem:[#allocation2 + $0xe0] sm:$0xff]
        %v481 = vld [vmem:[#allocation2 + $0xe8] sm:$0xff]
        %v482 = vld [vmem:[#allocation2 + $0xf0] sm:$0xff]
        %v483 = vld [vmem:[#allocation2 + $0xf8] sm:$0xff]
        %v484 = vld [vmem:[#allocation2 + $0x100] sm:$0xff]
        %v485 = vld [vmem:[#allocation2 + $0x108] sm:$0xff]
        %v486 = vld [vmem:[#allocation2 + $0x110] sm:$0xff]
        %v487 = vld [vmem:[#allocation2 + $0x118] sm:$0xff]
        %v488 = vld [vmem:[#allocation2 + $0x120] sm:$0xff]
        %v489 = vld [vmem:[#allocation2 + $0x128] sm:$0xff]
        %v490 = vld [vmem:[#allocation2 + $0x130] sm:$0xff]
        %v491 = vld [vmem:[#allocation2 + $0x138] sm:$0xff]
        %v492 = vld [vmem:[#allocation2 + $0x140] sm:$0xff]
        %v493 = vld [vmem:[#allocation2 + $0x148] sm:$0xff]
        %v494 = vld [vmem:[#allocation2 + $0x150] sm:$0xff]
        %v495 = vld [vmem:[#allocation2 + $0x158] sm:$0xff]
        %v496 = vld [vmem:[#allocation2 + $0x160] sm:$0xff]
        %v497 = vld [vmem:[#allocation2 + $0x168] sm:$0xff]
        %v498 = vld [vmem:[#allocation2 + $0x170] sm:$0xff]
        %v499 = vld [vmem:[#allocation2 + $0x178] sm:$0xff]
        %v500 = vld [vmem:[#allocation2 + $0x180] sm:$0xff]
        %v501 = vld [vmem:[#allocation2 + $0x188] sm:$0xff]
        %v502 = vld [vmem:[#allocation2 + $0x190] sm:$0xff]
        %v503 = vld [vmem:[#allocation2 + $0x198] sm:$0xff]
        %v504 = vld [vmem:[#allocation2 + $0x1a0] sm:$0xff]
        %v505 = vld [vmem:[#allocation2 + $0x1a8] sm:$0xff]
        %v506 = vld [vmem:[#allocation2 + $0x1b0] sm:$0xff]
        %v507 = vld [vmem:[#allocation2 + $0x1b8] sm:$0xff]
        %v508 = vld [vmem:[#allocation2 + $0x1c0] sm:$0xff]
        %v509 = vld [vmem:[#allocation2 + $0x1c8] sm:$0xff]
        %v510 = vld [vmem:[#allocation2 + $0x1d0] sm:$0xff]
        %v511 = vld [vmem:[#allocation2 + $0x1d8] sm:$0xff]
        %v512 = vld [vmem:[#allocation2 + $0x1e0] sm:$0xff]
        %v513 = vld [vmem:[#allocation2 + $0x1e8] sm:$0xff]
        %v514 = vld [vmem:[#allocation2 + $0x1f0] sm:$0xff]
        %v515 = vld [vmem:[#allocation2 + $0x1f8] sm:$0xff]
        %v516 = vld [vmem:[#allocation4] sm:$0xff]
        %v518 = vlaneseq
        %v519 = vshrl.u32 %v518, 7
        %v520 = vsub.s32 0, %v519
        %v521 = vrot.slane %v516, %v520
        %v522 = vlaneseq
        %v523 = vshrl.u32 %v522, 7
        %v524 = vsub.s32 1, %v523
        %v525 = vrot.slane %v516, %v524
        %v526 = vlaneseq
        %v527 = vshrl.u32 %v526, 7
        %v528 = vsub.s32 2, %v527
        %v529 = vrot.slane %v516, %v528
        %v530 = vlaneseq
        %v531 = vshrl.u32 %v530, 7
        %v532 = vsub.s32 3, %v531
        %v533 = vrot.slane %v516, %v532
        %v534 = vlaneseq
        %v535 = vshrl.u32 %v534, 7
        %v536 = vsub.s32 4, %v535
        %v537 = vrot.slane %v516, %v536
        %v538 = vlaneseq
        %v539 = vshrl.u32 %v538, 7
        %v540 = vsub.s32 5, %v539
        %v541 = vrot.slane %v516, %v540
        %v542 = vlaneseq
        %v543 = vshrl.u32 %v542, 7
        %v544 = vsub.s32 6, %v543
        %v545 = vrot.slane %v516, %v544
        %v546 = vlaneseq
        %v547 = vshrl.u32 %v546, 7
        %v548 = vsub.s32 7, %v547
        %v549 = vrot.slane %v516, %v548
        %v622 = vunpack.c.l.b16 %v452
        %v623 = vunpack.c.h.b16 %v452
        %v624 = vunpack.c.l.b16 %v453
        %v625 = vunpack.c.h.b16 %v453
        %v626 = vunpack.c.l.b16 %v454
        %v627 = vunpack.c.h.b16 %v454
        %v628 = vunpack.c.l.b16 %v455
        %v629 = vunpack.c.h.b16 %v455
        %v630 = vunpack.c.l.b16 %v456
        %v631 = vunpack.c.h.b16 %v456
        %v632 = vunpack.c.l.b16 %v457
        %v633 = vunpack.c.h.b16 %v457
        %v634 = vunpack.c.l.b16 %v458
        %v635 = vunpack.c.h.b16 %v458
        %v636 = vunpack.c.l.b16 %v459
        %v637 = vunpack.c.h.b16 %v459
        %v638 = vunpack.c.l.b16 %v460
        %v639 = vunpack.c.h.b16 %v460
        %v640 = vunpack.c.l.b16 %v461
        %v641 = vunpack.c.h.b16 %v461
        %v642 = vunpack.c.l.b16 %v462
        %v643 = vunpack.c.h.b16 %v462
        %v644 = vunpack.c.l.b16 %v463
        %v645 = vunpack.c.h.b16 %v463
        %v646 = vunpack.c.l.b16 %v464
        %v647 = vunpack.c.h.b16 %v464
        %v648 = vunpack.c.l.b16 %v465
        %v649 = vunpack.c.h.b16 %v465
        %v650 = vunpack.c.l.b16 %v466
        %v651 = vunpack.c.h.b16 %v466
        %v652 = vunpack.c.l.b16 %v467
        %v653 = vunpack.c.h.b16 %v467
        %v654 = vunpack.c.l.b16 %v468
        %v655 = vunpack.c.h.b16 %v468
        %v656 = vunpack.c.l.b16 %v469
        %v657 = vunpack.c.h.b16 %v469
        %v658 = vunpack.c.l.b16 %v470
        %v659 = vunpack.c.h.b16 %v470
        %v660 = vunpack.c.l.b16 %v471
        %v661 = vunpack.c.h.b16 %v471
        %v662 = vunpack.c.l.b16 %v472
        %v663 = vunpack.c.h.b16 %v472
        %v664 = vunpack.c.l.b16 %v473
        %v665 = vunpack.c.h.b16 %v473
        %v666 = vunpack.c.l.b16 %v474
        %v667 = vunpack.c.h.b16 %v474
        %v668 = vunpack.c.l.b16 %v475
        %v669 = vunpack.c.h.b16 %v475
        %v670 = vunpack.c.l.b16 %v476
        %v671 = vunpack.c.h.b16 %v476
        %v672 = vunpack.c.l.b16 %v477
        %v673 = vunpack.c.h.b16 %v477
        %v674 = vunpack.c.l.b16 %v478
        %v675 = vunpack.c.h.b16 %v478
        %v676 = vunpack.c.l.b16 %v479
        %v677 = vunpack.c.h.b16 %v479
        %v678 = vunpack.c.l.b16 %v480
        %v679 = vunpack.c.h.b16 %v480
        %v680 = vunpack.c.l.b16 %v481
        %v681 = vunpack.c.h.b16 %v481
        %v682 = vunpack.c.l.b16 %v482
        %v683 = vunpack.c.h.b16 %v482
        %v684 = vunpack.c.l.b16 %v483
        %v685 = vunpack.c.h.b16 %v483
        %v686 = vunpack.c.l.b16 %v484
        %v687 = vunpack.c.h.b16 %v484
        %v688 = vunpack.c.l.b16 %v485
        %v689 = vunpack.c.h.b16 %v485
        %v690 = vunpack.c.l.b16 %v486
        %v691 = vunpack.c.h.b16 %v486
        %v692 = vunpack.c.l.b16 %v487
        %v693 = vunpack.c.h.b16 %v487
        %v694 = vunpack.c.l.b16 %v488
        %v695 = vunpack.c.h.b16 %v488
        %v696 = vunpack.c.l.b16 %v489
        %v697 = vunpack.c.h.b16 %v489
        %v698 = vunpack.c.l.b16 %v490
        %v699 = vunpack.c.h.b16 %v490
        %v700 = vunpack.c.l.b16 %v491
        %v701 = vunpack.c.h.b16 %v491
        %v702 = vunpack.c.l.b16 %v492
        %v703 = vunpack.c.h.b16 %v492
        %v704 = vunpack.c.l.b16 %v493
        %v705 = vunpack.c.h.b16 %v493
        %v706 = vunpack.c.l.b16 %v494
        %v707 = vunpack.c.h.b16 %v494
        %v708 = vunpack.c.l.b16 %v495
        %v709 = vunpack.c.h.b16 %v495
        %v710 = vunpack.c.l.b16 %v496
        %v711 = vunpack.c.h.b16 %v496
        %v712 = vunpack.c.l.b16 %v497
        %v713 = vunpack.c.h.b16 %v497
        %v714 = vunpack.c.l.b16 %v498
        %v715 = vunpack.c.h.b16 %v498
        %v716 = vunpack.c.l.b16 %v499
        %v717 = vunpack.c.h.b16 %v499
        %v718 = vunpack.c.l.b16 %v500
        %v719 = vunpack.c.h.b16 %v500
        %v720 = vunpack.c.l.b16 %v501
        %v721 = vunpack.c.h.b16 %v501
        %v722 = vunpack.c.l.b16 %v502
        %v723 = vunpack.c.h.b16 %v502
        %v724 = vunpack.c.l.b16 %v503
        %v725 = vunpack.c.h.b16 %v503
        %v726 = vunpack.c.l.b16 %v504
        %v727 = vunpack.c.h.b16 %v504
        %v728 = vunpack.c.l.b16 %v505
        %v729 = vunpack.c.h.b16 %v505
        %v730 = vunpack.c.l.b16 %v506
        %v731 = vunpack.c.h.b16 %v506
        %v732 = vunpack.c.l.b16 %v507
        %v733 = vunpack.c.h.b16 %v507
        %v734 = vunpack.c.l.b16 %v508
        %v735 = vunpack.c.h.b16 %v508
        %v736 = vunpack.c.l.b16 %v509
        %v737 = vunpack.c.h.b16 %v509
        %v738 = vunpack.c.l.b16 %v510
        %v739 = vunpack.c.h.b16 %v510
        %v740 = vunpack.c.l.b16 %v511
        %v741 = vunpack.c.h.b16 %v511
        %v742 = vunpack.c.l.b16 %v512
        %v743 = vunpack.c.h.b16 %v512
        %v744 = vunpack.c.l.b16 %v513
        %v745 = vunpack.c.h.b16 %v513
        %v746 = vunpack.c.l.b16 %v514
        %v747 = vunpack.c.h.b16 %v514
        %v748 = vunpack.c.l.b16 %v515
        %v749 = vunpack.c.h.b16 %v515
        %v750 = vpack.c.b16 %v630, %v622
        %v751 = vpack.c.b16 %v631, %v623
        %v752 = vpack.c.b16 %v632, %v624
        %v753 = vpack.c.b16 %v633, %v625
        %v754 = vpack.c.b16 %v634, %v626
        %v755 = vpack.c.b16 %v635, %v627
        %v756 = vpack.c.b16 %v636, %v628
        %v757 = vpack.c.b16 %v637, %v629
        %v758 = vpack.c.b16 %v646, %v638
        %v759 = vpack.c.b16 %v647, %v639
        %v760 = vpack.c.b16 %v648, %v640
        %v761 = vpack.c.b16 %v649, %v641
        %v762 = vpack.c.b16 %v650, %v642
        %v763 = vpack.c.b16 %v651, %v643
        %v764 = vpack.c.b16 %v652, %v644
        %v765 = vpack.c.b16 %v653, %v645
        %v766 = vpack.c.b16 %v662, %v654
        %v767 = vpack.c.b16 %v663, %v655
        %v768 = vpack.c.b16 %v664, %v656
        %v769 = vpack.c.b16 %v665, %v657
        %v770 = vpack.c.b16 %v666, %v658
        %v771 = vpack.c.b16 %v667, %v659
        %v772 = vpack.c.b16 %v668, %v660
        %v773 = vpack.c.b16 %v669, %v661
        %v774 = vpack.c.b16 %v678, %v670
        %v775 = vpack.c.b16 %v679, %v671
        %v776 = vpack.c.b16 %v680, %v672
        %v777 = vpack.c.b16 %v681, %v673
        %v778 = vpack.c.b16 %v682, %v674
        %v779 = vpack.c.b16 %v683, %v675
        %v780 = vpack.c.b16 %v684, %v676
        %v781 = vpack.c.b16 %v685, %v677
        %v782 = vpack.c.b16 %v694, %v686
        %v783 = vpack.c.b16 %v695, %v687
        %v784 = vpack.c.b16 %v696, %v688
        %v785 = vpack.c.b16 %v697, %v689
        %v786 = vpack.c.b16 %v698, %v690
        %v787 = vpack.c.b16 %v699, %v691
        %v788 = vpack.c.b16 %v700, %v692
        %v789 = vpack.c.b16 %v701, %v693
        %v790 = vpack.c.b16 %v710, %v702
        %v791 = vpack.c.b16 %v711, %v703
        %v792 = vpack.c.b16 %v712, %v704
        %v793 = vpack.c.b16 %v713, %v705
        %v794 = vpack.c.b16 %v714, %v706
        %v795 = vpack.c.b16 %v715, %v707
        %v796 = vpack.c.b16 %v716, %v708
        %v797 = vpack.c.b16 %v717, %v709
        %v798 = vpack.c.b16 %v726, %v718
        %v799 = vpack.c.b16 %v727, %v719
        %v800 = vpack.c.b16 %v728, %v720
        %v801 = vpack.c.b16 %v729, %v721
        %v802 = vpack.c.b16 %v730, %v722
        %v803 = vpack.c.b16 %v731, %v723
        %v804 = vpack.c.b16 %v732, %v724
        %v805 = vpack.c.b16 %v733, %v725
        %v806 = vpack.c.b16 %v742, %v734
        %v807 = vpack.c.b16 %v743, %v735
        %v808 = vpack.c.b16 %v744, %v736
        %v809 = vpack.c.b16 %v745, %v737
        %v810 = vpack.c.b16 %v746, %v738
        %v811 = vpack.c.b16 %v747, %v739
        %v812 = vpack.c.b16 %v748, %v740
        %v813 = vpack.c.b16 %v749, %v741
        %878 = vmatprep.subr.bf16.mxu0 %v807
        %879 = vmatpush1.bf16.msra.mxu0 %v806
        %880 = vmatprep.subr.bf16.mxu0 %v799
        %881 = vmatpush1.bf16.msra.mxu0 %v798
        %882 = vmatprep.subr.bf16.mxu0 %v791
        %883 = vmatpush1.bf16.msra.mxu0 %v790
        %884 = vmatprep.subr.bf16.mxu0 %v783
        %885 = vmatpush1.bf16.msra.mxu0 %v782
        %886 = vmatprep.subr.bf16.mxu0 %v775
        %887 = vmatpush1.bf16.msra.mxu0 %v774
        %888 = vmatprep.subr.bf16.mxu0 %v767
        %889 = vmatpush1.bf16.msra.mxu0 %v766
        %890 = vmatprep.subr.bf16.mxu0 %v759
        %891 = vmatpush1.bf16.msra.mxu0 %v758
        %892 = vmatprep.subr.bf16.mxu0 %v751
        %893 = vmatpush1.bf16.msra.mxu0 %v750
        %894 = vmatprep.subr.bf16.mxu0 0
        %895 = vmatpush2.bf16.msra.mxu0 0
        %896 = vmatprep.subr.bf16.mxu0 0
        %897 = vmatpush2.bf16.msra.mxu0 0
        %898 = vmatprep.subr.bf16.mxu0 0
        %899 = vmatpush2.bf16.msra.mxu0 0
        %900 = vmatprep.subr.bf16.mxu0 0
        %901 = vmatpush2.bf16.msra.mxu0 0
        %902 = vmatprep.subr.bf16.mxu0 0
        %903 = vmatpush2.bf16.msra.mxu0 0
        %904 = vmatprep.subr.bf16.mxu0 0
        %905 = vmatpush2.bf16.msra.mxu0 0
        %906 = vmatprep.subr.bf16.mxu0 0
        %907 = vmatpush2.bf16.msra.mxu0 0
        %908 = vmatprep.subr.bf16.mxu0 0
        %909 = vmatpush2.bf16.msra.mxu0 0
        %910 = vmatprep.mubr.bf16.mxu0 0
        %911 = vmatmul.mubr.bf16.gmra.mxu0 %v451
        %v912 = vpop.f32.mrf.mxu0
        %v913 = vadd.f32 %v521, %v912
        %v914 = vpop.f32.mrf.mxu0
        %v915 = vadd.f32 %v525, %v914
        %v916 = vpop.f32.mrf.mxu0
        %v917 = vpop.f32.mrf.mxu0
        %918 = vdwg.mxu0
        %919 = vmatprep.subr.bf16.mxu0 %v809
        %920 = vmatpush1.bf16.msra.mxu0 %v808
        %921 = vmatprep.subr.bf16.mxu0 %v801
        %922 = vmatpush1.bf16.msra.mxu0 %v800
        %923 = vmatprep.subr.bf16.mxu0 %v793
        %924 = vmatpush1.bf16.msra.mxu0 %v792
        %925 = vmatprep.subr.bf16.mxu0 %v785
        %926 = vmatpush1.bf16.msra.mxu0 %v784
        %927 = vmatprep.subr.bf16.mxu0 %v777
        %928 = vmatpush1.bf16.msra.mxu0 %v776
        %929 = vmatprep.subr.bf16.mxu0 %v769
        %930 = vmatpush1.bf16.msra.mxu0 %v768
        %931 = vmatprep.subr.bf16.mxu0 %v761
        %932 = vmatpush1.bf16.msra.mxu0 %v760
        %933 = vmatprep.subr.bf16.mxu0 %v753
        %934 = vmatpush1.bf16.msra.mxu0 %v752
        %935 = vmatprep.subr.bf16.mxu0 0
        %936 = vmatpush2.bf16.msra.mxu0 0
        %937 = vmatprep.subr.bf16.mxu0 0
        %938 = vmatpush2.bf16.msra.mxu0 0
        %939 = vmatprep.subr.bf16.mxu0 0
        %940 = vmatpush2.bf16.msra.mxu0 0
        %941 = vmatprep.subr.bf16.mxu0 0
        %942 = vmatpush2.bf16.msra.mxu0 0
        %943 = vmatprep.subr.bf16.mxu0 0
        %944 = vmatpush2.bf16.msra.mxu0 0
        %945 = vmatprep.subr.bf16.mxu0 0
        %946 = vmatpush2.bf16.msra.mxu0 0
        %947 = vmatprep.subr.bf16.mxu0 0
        %948 = vmatpush2.bf16.msra.mxu0 0
        %949 = vmatprep.subr.bf16.mxu0 0
        %950 = vmatpush2.bf16.msra.mxu0 0
        %951 = vmatprep.mubr.bf16.mxu0 0
        %952 = vmatmul.mubr.bf16.gmra.mxu0 %v451
        %v953 = vpop.f32.mrf.mxu0
        %v954 = vadd.f32 %v529, %v953
        %v955 = vpop.f32.mrf.mxu0
        %v956 = vadd.f32 %v533, %v955
        %v957 = vpop.f32.mrf.mxu0
        %v958 = vpop.f32.mrf.mxu0
        %959 = vdwg.mxu0
        %960 = vmatprep.subr.bf16.mxu0 %v811
        %961 = vmatpush1.bf16.msra.mxu0 %v810
        %962 = vmatprep.subr.bf16.mxu0 %v803
        %963 = vmatpush1.bf16.msra.mxu0 %v802
        %964 = vmatprep.subr.bf16.mxu0 %v795
        %965 = vmatpush1.bf16.msra.mxu0 %v794
        %966 = vmatprep.subr.bf16.mxu0 %v787
        %967 = vmatpush1.bf16.msra.mxu0 %v786
        %968 = vmatprep.subr.bf16.mxu0 %v779
        %969 = vmatpush1.bf16.msra.mxu0 %v778
        %970 = vmatprep.subr.bf16.mxu0 %v771
        %971 = vmatpush1.bf16.msra.mxu0 %v770
        %972 = vmatprep.subr.bf16.mxu0 %v763
        %973 = vmatpush1.bf16.msra.mxu0 %v762
        %974 = vmatprep.subr.bf16.mxu0 %v755
        %975 = vmatpush1.bf16.msra.mxu0 %v754
        %976 = vmatprep.subr.bf16.mxu0 0
        %977 = vmatpush2.bf16.msra.mxu0 0
        %978 = vmatprep.subr.bf16.mxu0 0
        %979 = vmatpush2.bf16.msra.mxu0 0
        %980 = vmatprep.subr.bf16.mxu0 0
        %981 = vmatpush2.bf16.msra.mxu0 0
        %982 = vmatprep.subr.bf16.mxu0 0
        %983 = vmatpush2.bf16.msra.mxu0 0
        %984 = vmatprep.subr.bf16.mxu0 0
        %985 = vmatpush2.bf16.msra.mxu0 0
        %986 = vmatprep.subr.bf16.mxu0 0
        %987 = vmatpush2.bf16.msra.mxu0 0
        %988 = vmatprep.subr.bf16.mxu0 0
        %989 = vmatpush2.bf16.msra.mxu0 0
        %990 = vmatprep.subr.bf16.mxu0 0
        %991 = vmatpush2.bf16.msra.mxu0 0
        %992 = vmatprep.mubr.bf16.mxu0 0
        %993 = vmatmul.mubr.bf16.gmra.mxu0 %v451
        %v994 = vpop.f32.mrf.mxu0
        %v995 = vadd.f32 %v537, %v994
        %v996 = vpop.f32.mrf.mxu0
        %v997 = vadd.f32 %v541, %v996
        %v998 = vpop.f32.mrf.mxu0
        %v999 = vpop.f32.mrf.mxu0
        %1000 = vdwg.mxu0
        %1001 = vmatprep.subr.bf16.mxu0 %v813
        %1002 = vmatpush1.bf16.msra.mxu0 %v812
        %1003 = vmatprep.subr.bf16.mxu0 %v805
        %1004 = vmatpush1.bf16.msra.mxu0 %v804
        %1005 = vmatprep.subr.bf16.mxu0 %v797
        %1006 = vmatpush1.bf16.msra.mxu0 %v796
        %1007 = vmatprep.subr.bf16.mxu0 %v789
        %1008 = vmatpush1.bf16.msra.mxu0 %v788
        %1009 = vmatprep.subr.bf16.mxu0 %v781
        %1010 = vmatpush1.bf16.msra.mxu0 %v780
        %1011 = vmatprep.subr.bf16.mxu0 %v773
        %1012 = vmatpush1.bf16.msra.mxu0 %v772
        %1013 = vmatprep.subr.bf16.mxu0 %v765
        %1014 = vmatpush1.bf16.msra.mxu0 %v764
        %1015 = vmatprep.subr.bf16.mxu0 %v757
        %1016 = vmatpush1.bf16.msra.mxu0 %v756
        %1017 = vmatprep.subr.bf16.mxu0 0
        %1018 = vmatpush2.bf16.msra.mxu0 0
        %1019 = vmatprep.subr.bf16.mxu0 0
        %1020 = vmatpush2.bf16.msra.mxu0 0
        %1021 = vmatprep.subr.bf16.mxu0 0
        %1022 = vmatpush2.bf16.msra.mxu0 0
        %1023 = vmatprep.subr.bf16.mxu0 0
        %1024 = vmatpush2.bf16.msra.mxu0 0
        %1025 = vmatprep.subr.bf16.mxu0 0
        %1026 = vmatpush2.bf16.msra.mxu0 0
        %1027 = vmatprep.subr.bf16.mxu0 0
        %1028 = vmatpush2.bf16.msra.mxu0 0
        %1029 = vmatprep.subr.bf16.mxu0 0
        %1030 = vmatpush2.bf16.msra.mxu0 0
        %1031 = vmatprep.subr.bf16.mxu0 0
        %1032 = vmatpush2.bf16.msra.mxu0 0
        %1033 = vmatprep.mubr.bf16.mxu0 0
        %1034 = vmatmul.mubr.bf16.gmra.mxu0 %v451
        %v1035 = vpop.f32.mrf.mxu0
        %v1036 = vadd.f32 %v545, %v1035
        %v1037 = vpop.f32.mrf.mxu0
        %v1038 = vadd.f32 %v549, %v1037
        %v1039 = vpop.f32.mrf.mxu0
        %v1040 = vpop.f32.mrf.mxu0
        %1041 = vdwg.mxu0
        %vm1042 = vcmask 1041408
        %v1043 = vsel %vm1042, %v913, 0.0
        %v1044 = vrot.slane %v1043, 4
        %v1045 = vadd.f32 %v1043, %v1044
        %v1046 = vrot.slane %v1045, 2
        %v1047 = vadd.f32 %v1045, %v1046
        %v1048 = vrot.slane %v1047, 1
        %v1049 = vadd.f32 %v1047, %v1048
        %v1050 = vsel %vm1042, %v915, 0.0
        %v1051 = vrot.slane %v1050, 4
        %v1052 = vadd.f32 %v1050, %v1051
        %v1053 = vrot.slane %v1052, 2
        %v1054 = vadd.f32 %v1052, %v1053
        %v1055 = vrot.slane %v1054, 1
        %v1056 = vadd.f32 %v1054, %v1055
        %v1057 = vsel %vm1042, %v954, 0.0
        %v1058 = vrot.slane %v1057, 4
        %v1059 = vadd.f32 %v1057, %v1058
        %v1060 = vrot.slane %v1059, 2
        %v1061 = vadd.f32 %v1059, %v1060
        %v1062 = vrot.slane %v1061, 1
        %v1063 = vadd.f32 %v1061, %v1062
        %v1064 = vsel %vm1042, %v956, 0.0
        %v1065 = vrot.slane %v1064, 4
        %v1066 = vadd.f32 %v1064, %v1065
        %v1067 = vrot.slane %v1066, 2
        %v1068 = vadd.f32 %v1066, %v1067
        %v1069 = vrot.slane %v1068, 1
        %v1070 = vadd.f32 %v1068, %v1069
        %v1071 = vsel %vm1042, %v995, 0.0
        %v1072 = vrot.slane %v1071, 4
        %v1073 = vadd.f32 %v1071, %v1072
        %v1074 = vrot.slane %v1073, 2
        %v1075 = vadd.f32 %v1073, %v1074
        %v1076 = vrot.slane %v1075, 1
        %v1077 = vadd.f32 %v1075, %v1076
        %v1078 = vsel %vm1042, %v997, 0.0
        %v1079 = vrot.slane %v1078, 4
        %v1080 = vadd.f32 %v1078, %v1079
        %v1081 = vrot.slane %v1080, 2
        %v1082 = vadd.f32 %v1080, %v1081
        %v1083 = vrot.slane %v1082, 1
        %v1084 = vadd.f32 %v1082, %v1083
        %v1085 = vsel %vm1042, %v1036, 0.0
        %v1086 = vrot.slane %v1085, 4
        %v1087 = vadd.f32 %v1085, %v1086
        %v1088 = vrot.slane %v1087, 2
        %v1089 = vadd.f32 %v1087, %v1088
        %v1090 = vrot.slane %v1089, 1
        %v1091 = vadd.f32 %v1089, %v1090
        %v1092 = vsel %vm1042, %v1038, 0.0
        %v1093 = vrot.slane %v1092, 4
        %v1094 = vadd.f32 %v1092, %v1093
        %v1095 = vrot.slane %v1094, 2
        %v1096 = vadd.f32 %v1094, %v1095
        %v1097 = vrot.slane %v1096, 1
        %v1098 = vadd.f32 %v1096, %v1097
        %v1099 = vrcp.pop 2.0
        %v1100 = vmul.f32 %v1049, %v1099
        %v1101 = vmul.f32 %v1056, %v1099
        %v1102 = vmul.f32 %v1063, %v1099
        %v1103 = vmul.f32 %v1070, %v1099
        %v1104 = vmul.f32 %v1077, %v1099
        %v1105 = vmul.f32 %v1084, %v1099
        %v1106 = vmul.f32 %v1091, %v1099
        %v1107 = vmul.f32 %v1098, %v1099
        %v1108 = vsub.f32 %v913, %v1100
        %v1109 = vsub.f32 %v915, %v1101
        %v1110 = vsub.f32 %v954, %v1102
        %v1111 = vsub.f32 %v956, %v1103
        %v1112 = vsub.f32 %v995, %v1104
        %v1113 = vsub.f32 %v997, %v1105
        %v1114 = vsub.f32 %v1036, %v1106
        %v1115 = vsub.f32 %v1038, %v1107
        %v1116 = vmul.f32 %v1108, %v1108
        %v1117 = vmul.f32 %v1109, %v1109
        %v1118 = vmul.f32 %v1110, %v1110
        %v1119 = vmul.f32 %v1111, %v1111
        %v1120 = vmul.f32 %v1112, %v1112
        %v1121 = vmul.f32 %v1113, %v1113
        %v1122 = vmul.f32 %v1114, %v1114
        %v1123 = vmul.f32 %v1115, %v1115
        %v1124 = vsel %vm1042, %v1116, 0.0
        %v1125 = vrot.slane %v1124, 4
        %v1126 = vadd.f32 %v1124, %v1125
        %v1127 = vrot.slane %v1126, 2
        %v1128 = vadd.f32 %v1126, %v1127
        %v1129 = vrot.slane %v1128, 1
        %v1130 = vadd.f32 %v1128, %v1129
        %v1131 = vsel %vm1042, %v1117, 0.0
        %v1132 = vrot.slane %v1131, 4
        %v1133 = vadd.f32 %v1131, %v1132
        %v1134 = vrot.slane %v1133, 2
        %v1135 = vadd.f32 %v1133, %v1134
        %v1136 = vrot.slane %v1135, 1
        %v1137 = vadd.f32 %v1135, %v1136
        %v1138 = vsel %vm1042, %v1118, 0.0
        %v1139 = vrot.slane %v1138, 4
        %v1140 = vadd.f32 %v1138, %v1139
        %v1141 = vrot.slane %v1140, 2
        %v1142 = vadd.f32 %v1140, %v1141
        %v1143 = vrot.slane %v1142, 1
        %v1144 = vadd.f32 %v1142, %v1143
        %v1145 = vsel %vm1042, %v1119, 0.0
        %v1146 = vrot.slane %v1145, 4
        %v1147 = vadd.f32 %v1145, %v1146
        %v1148 = vrot.slane %v1147, 2
        %v1149 = vadd.f32 %v1147, %v1148
        %v1150 = vrot.slane %v1149, 1
        %v1151 = vadd.f32 %v1149, %v1150
        %v1152 = vsel %vm1042, %v1120, 0.0
        %v1153 = vrot.slane %v1152, 4
        %v1154 = vadd.f32 %v1152, %v1153
        %v1155 = vrot.slane %v1154, 2
        %v1156 = vadd.f32 %v1154, %v1155
        %v1157 = vrot.slane %v1156, 1
        %v1158 = vadd.f32 %v1156, %v1157
        %v1159 = vsel %vm1042, %v1121, 0.0
        %v1160 = vrot.slane %v1159, 4
        %v1161 = vadd.f32 %v1159, %v1160
        %v1162 = vrot.slane %v1161, 2
        %v1163 = vadd.f32 %v1161, %v1162
        %v1164 = vrot.slane %v1163, 1
        %v1165 = vadd.f32 %v1163, %v1164
        %v1166 = vsel %vm1042, %v1122, 0.0
        %v1167 = vrot.slane %v1166, 4
        %v1168 = vadd.f32 %v1166, %v1167
        %v1169 = vrot.slane %v1168, 2
        %v1170 = vadd.f32 %v1168, %v1169
        %v1171 = vrot.slane %v1170, 1
        %v1172 = vadd.f32 %v1170, %v1171
        %v1173 = vsel %vm1042, %v1123, 0.0
        %v1174 = vrot.slane %v1173, 4
        %v1175 = vadd.f32 %v1173, %v1174
        %v1176 = vrot.slane %v1175, 2
        %v1177 = vadd.f32 %v1175, %v1176
        %v1178 = vrot.slane %v1177, 1
        %v1179 = vadd.f32 %v1177, %v1178
        %v1180 = vmul.f32 %v1130, %v1099
        %v1181 = vmul.f32 %v1137, %v1099
        %v1182 = vmul.f32 %v1144, %v1099
        %v1183 = vmul.f32 %v1151, %v1099
        %v1184 = vmul.f32 %v1158, %v1099
        %v1185 = vmul.f32 %v1165, %v1099
        %v1186 = vmul.f32 %v1172, %v1099
        %v1187 = vmul.f32 %v1179, %v1099
        %v1188 = vadd.f32 %v1180, 1e-05
        %v1189 = vadd.f32 %v1181, 1e-05
        %v1190 = vadd.f32 %v1182, 1e-05
        %v1191 = vadd.f32 %v1183, 1e-05
        %v1192 = vadd.f32 %v1184, 1e-05
        %v1193 = vadd.f32 %v1185, 1e-05
        %v1194 = vadd.f32 %v1186, 1e-05
        %v1195 = vadd.f32 %v1187, 1e-05
        %v1196 = vrsqrt.pop %v1188
        %v1197 = vrsqrt.pop %v1189
        %v1198 = vrsqrt.pop %v1190
        %v1199 = vrsqrt.pop %v1191
        %v1200 = vrsqrt.pop %v1192
        %v1201 = vrsqrt.pop %v1193
        %v1202 = vrsqrt.pop %v1194
        %v1203 = vrsqrt.pop %v1195
        %v1204 = vmul.f32 %v1108, %v1196
        %v1205 = vmul.f32 %v1109, %v1197
        %v1206 = vmul.f32 %v1110, %v1198
        %v1207 = vmul.f32 %v1111, %v1199
        %v1208 = vmul.f32 %v1112, %v1200
        %v1209 = vmul.f32 %v1113, %v1201
        %v1210 = vmul.f32 %v1114, %v1202
        %v1211 = vmul.f32 %v1115, %v1203
        %v1212 = vld [vmem:[#allocation6] sm:$0xff]
        %v1214 = vlaneseq
        %v1215 = vshrl.u32 %v1214, 7
        %v1216 = vsub.s32 0, %v1215
        %v1217 = vrot.slane %v1212, %v1216
        %v1218 = vlaneseq
        %v1219 = vshrl.u32 %v1218, 7
        %v1220 = vsub.s32 1, %v1219
        %v1221 = vrot.slane %v1212, %v1220
        %v1222 = vlaneseq
        %v1223 = vshrl.u32 %v1222, 7
        %v1224 = vsub.s32 2, %v1223
        %v1225 = vrot.slane %v1212, %v1224
        %v1226 = vlaneseq
        %v1227 = vshrl.u32 %v1226, 7
        %v1228 = vsub.s32 3, %v1227
        %v1229 = vrot.slane %v1212, %v1228
        %v1230 = vlaneseq
        %v1231 = vshrl.u32 %v1230, 7
        %v1232 = vsub.s32 4, %v1231
        %v1233 = vrot.slane %v1212, %v1232
        %v1234 = vlaneseq
        %v1235 = vshrl.u32 %v1234, 7
        %v1236 = vsub.s32 5, %v1235
        %v1237 = vrot.slane %v1212, %v1236
        %v1238 = vlaneseq
        %v1239 = vshrl.u32 %v1238, 7
        %v1240 = vsub.s32 6, %v1239
        %v1241 = vrot.slane %v1212, %v1240
        %v1242 = vlaneseq
        %v1243 = vshrl.u32 %v1242, 7
        %v1244 = vsub.s32 7, %v1243
        %v1245 = vrot.slane %v1212, %v1244
        %v1254 = vmul.f32 %v1204, %v1217
        %v1255 = vmul.f32 %v1205, %v1221
        %v1256 = vmul.f32 %v1206, %v1225
        %v1257 = vmul.f32 %v1207, %v1229
        %v1258 = vmul.f32 %v1208, %v1233
        %v1259 = vmul.f32 %v1209, %v1237
        %v1260 = vmul.f32 %v1210, %v1241
        %v1261 = vmul.f32 %v1211, %v1245
        %v1262 = vld [vmem:[#allocation7] sm:$0xff]
        %v1264 = vlaneseq
        %v1265 = vshrl.u32 %v1264, 7
        %v1266 = vsub.s32 0, %v1265
        %v1267 = vrot.slane %v1262, %v1266
        %v1268 = vlaneseq
        %v1269 = vshrl.u32 %v1268, 7
        %v1270 = vsub.s32 1, %v1269
        %v1271 = vrot.slane %v1262, %v1270
        %v1272 = vlaneseq
        %v1273 = vshrl.u32 %v1272, 7
        %v1274 = vsub.s32 2, %v1273
        %v1275 = vrot.slane %v1262, %v1274
        %v1276 = vlaneseq
        %v1277 = vshrl.u32 %v1276, 7
        %v1278 = vsub.s32 3, %v1277
        %v1279 = vrot.slane %v1262, %v1278
        %v1280 = vlaneseq
        %v1281 = vshrl.u32 %v1280, 7
        %v1282 = vsub.s32 4, %v1281
        %v1283 = vrot.slane %v1262, %v1282
        %v1284 = vlaneseq
        %v1285 = vshrl.u32 %v1284, 7
        %v1286 = vsub.s32 5, %v1285
        %v1287 = vrot.slane %v1262, %v1286
        %v1288 = vlaneseq
        %v1289 = vshrl.u32 %v1288, 7
        %v1290 = vsub.s32 6, %v1289
        %v1291 = vrot.slane %v1262, %v1290
        %v1292 = vlaneseq
        %v1293 = vshrl.u32 %v1292, 7
        %v1294 = vsub.s32 7, %v1293
        %v1295 = vrot.slane %v1262, %v1294
        %v1304 = vadd.f32 %v1254, %v1267
        %v1305 = vadd.f32 %v1255, %v1271
        %v1306 = vadd.f32 %v1256, %v1275
        %v1307 = vadd.f32 %v1257, %v1279
        %v1308 = vadd.f32 %v1258, %v1283
        %v1309 = vadd.f32 %v1259, %v1287
        %v1310 = vadd.f32 %v1260, %v1291
        %v1311 = vadd.f32 %v1261, %v1295
        %v1312 = vmax.f32 %v1304, 0.0
        %v1313 = vmax.f32 %v1305, 0.0
        %v1314 = vmax.f32 %v1306, 0.0
        %v1315 = vmax.f32 %v1307, 0.0
        %v1316 = vmax.f32 %v1308, 0.0
        %v1317 = vmax.f32 %v1309, 0.0
        %v1318 = vmax.f32 %v1310, 0.0
        %v1319 = vmax.f32 %v1311, 0.0
        %v1320 = vpack.c.bf16 %v1312, %v1312
        %v1321 = vpack.c.bf16 %v1313, %v1313
        %v1322 = vpack.c.bf16 %v1314, %v1314
        %v1323 = vpack.c.bf16 %v1315, %v1315
        %v1324 = vpack.c.bf16 %v1316, %v1316
        %v1325 = vpack.c.bf16 %v1317, %v1317
        %v1326 = vpack.c.bf16 %v1318, %v1318
        %v1327 = vpack.c.bf16 %v1319, %v1319
        %v1328 = vld [vmem:[%s380] sm:$0xff]
        %v1329 = vld [vmem:[%s380 + $0x8] sm:$0xff]
        %v1330 = vld [vmem:[%s380 + $0x10] sm:$0xff]
        %v1331 = vld [vmem:[%s380 + $0x18] sm:$0xf]
        %v1332 = vld [vmem:[%s380 + $0x1c] sm:$0xff]
        %v1333 = vld [vmem:[%s380 + $0x24] sm:$0xff]
        %v1334 = vld [vmem:[%s380 + $0x2c] sm:$0xff]
        %v1335 = vld [vmem:[%s380 + $0x34] sm:$0xf]
        %v1336 = vld [vmem:[%s380 + $0x38] sm:$0xff]
        %v1337 = vld [vmem:[%s380 + $0x40] sm:$0xff]
        %v1338 = vld [vmem:[%s380 + $0x48] sm:$0xff]
        %v1339 = vld [vmem:[%s380 + $0x50] sm:$0xf]
        %v1340 = vld [vmem:[%s380 + $0x54] sm:$0xff]
        %v1341 = vld [vmem:[%s380 + $0x5c] sm:$0xff]
        %v1342 = vld [vmem:[%s380 + $0x64] sm:$0xff]
        %v1343 = vld [vmem:[%s380 + $0x6c] sm:$0xf]
        %v1344 = vld [vmem:[%s380 + $0x70] sm:$0xff]
        %v1345 = vld [vmem:[%s380 + $0x78] sm:$0xff]
        %v1346 = vld [vmem:[%s380 + $0x80] sm:$0xff]
        %v1347 = vld [vmem:[%s380 + $0x88] sm:$0xf]
        %v1348 = vld [vmem:[%s380 + $0x8c] sm:$0xff]
        %v1349 = vld [vmem:[%s380 + $0x94] sm:$0xff]
        %v1350 = vld [vmem:[%s380 + $0x9c] sm:$0xff]
        %v1351 = vld [vmem:[%s380 + $0xa4] sm:$0xf]
        %v1352 = vld [vmem:[%s380 + $0xa8] sm:$0xff]
        %v1353 = vld [vmem:[%s380 + $0xb0] sm:$0xff]
        %v1354 = vld [vmem:[%s380 + $0xb8] sm:$0xff]
        %v1355 = vld [vmem:[%s380 + $0xc0] sm:$0xf]
        %v1356 = vld [vmem:[%s380 + $0xc4] sm:$0xff]
        %v1357 = vld [vmem:[%s380 + $0xcc] sm:$0xff]
        %v1358 = vld [vmem:[%s380 + $0xd4] sm:$0xff]
        %v1359 = vld [vmem:[%s380 + $0xdc] sm:$0xf]
        %v1360 = vld [vmem:[%s380 + $0xe0] sm:$0xff]
        %v1361 = vld [vmem:[%s380 + $0xe8] sm:$0xff]
        %v1362 = vld [vmem:[%s380 + $0xf0] sm:$0xff]
        %v1363 = vld [vmem:[%s380 + $0xf8] sm:$0xf]
        %v1364 = vld [vmem:[%s380 + $0xfc] sm:$0xff]
        %v1365 = vld [vmem:[%s380 + $0x104] sm:$0xff]
        %v1366 = vld [vmem:[%s380 + $0x10c] sm:$0xff]
        %v1367 = vld [vmem:[%s380 + $0x114] sm:$0xf]
        %v1368 = vld [vmem:[%s380 + $0x118] sm:$0xff]
        %v1369 = vld [vmem:[%s380 + $0x120] sm:$0xff]
        %v1370 = vld [vmem:[%s380 + $0x128] sm:$0xff]
        %v1371 = vld [vmem:[%s380 + $0x130] sm:$0xf]
        %v1372 = vld [vmem:[%s380 + $0x134] sm:$0xff]
        %v1373 = vld [vmem:[%s380 + $0x13c] sm:$0xff]
        %v1374 = vld [vmem:[%s380 + $0x144] sm:$0xff]
        %v1375 = vld [vmem:[%s380 + $0x14c] sm:$0xf]
        %v1376 = vld [vmem:[%s380 + $0x150] sm:$0xff]
        %v1377 = vld [vmem:[%s380 + $0x158] sm:$0xff]
        %v1378 = vld [vmem:[%s380 + $0x160] sm:$0xff]
        %v1379 = vld [vmem:[%s380 + $0x168] sm:$0xf]
        %v1380 = vld [vmem:[%s380 + $0x16c] sm:$0xff]
        %v1381 = vld [vmem:[%s380 + $0x174] sm:$0xff]
        %v1382 = vld [vmem:[%s380 + $0x17c] sm:$0xff]
        %v1383 = vld [vmem:[%s380 + $0x184] sm:$0xf]
        %v1384 = vld [vmem:[%s380 + $0x188] sm:$0xff]
        %v1385 = vld [vmem:[%s380 + $0x190] sm:$0xff]
        %v1386 = vld [vmem:[%s380 + $0x198] sm:$0xff]
        %v1387 = vld [vmem:[%s380 + $0x1a0] sm:$0xf]
        %v1388 = vld [vmem:[%s380 + $0x1a4] sm:$0xff]
        %v1389 = vld [vmem:[%s380 + $0x1ac] sm:$0xff]
        %v1390 = vld [vmem:[%s380 + $0x1b4] sm:$0xff]
        %v1391 = vld [vmem:[%s380 + $0x1bc] sm:$0xf]
        %v1392 = vld [vmem:[%s380 + $0x1c0] sm:$0xff]
        %v1393 = vld [vmem:[%s380 + $0x1c8] sm:$0xff]
        %v1394 = vld [vmem:[%s380 + $0x1d0] sm:$0xff]
        %v1395 = vld [vmem:[%s380 + $0x1d8] sm:$0xf]
        %v1396 = vld [vmem:[%s380 + $0x1dc] sm:$0xff]
        %v1397 = vld [vmem:[%s380 + $0x1e4] sm:$0xff]
        %v1398 = vld [vmem:[%s380 + $0x1ec] sm:$0xff]
        %v1399 = vld [vmem:[%s380 + $0x1f4] sm:$0xf]
        %v1400 = vld [vmem:[%s380 + $0x1f8] sm:$0xff]
        %v1401 = vld [vmem:[%s380 + $0x200] sm:$0xff]
        %v1402 = vld [vmem:[%s380 + $0x208] sm:$0xff]
        %v1403 = vld [vmem:[%s380 + $0x210] sm:$0xf]
        %v1404 = vld [vmem:[%s380 + $0x214] sm:$0xff]
        %v1405 = vld [vmem:[%s380 + $0x21c] sm:$0xff]
        %v1406 = vld [vmem:[%s380 + $0x224] sm:$0xff]
        %v1407 = vld [vmem:[%s380 + $0x22c] sm:$0xf]
        %v1408 = vld [vmem:[%s380 + $0x230] sm:$0xff]
        %v1409 = vld [vmem:[%s380 + $0x238] sm:$0xff]
        %v1410 = vld [vmem:[%s380 + $0x240] sm:$0xff]
        %v1411 = vld [vmem:[%s380 + $0x248] sm:$0xf]
        %v1412 = vld [vmem:[%s380 + $0x24c] sm:$0xff]
        %v1413 = vld [vmem:[%s380 + $0x254] sm:$0xff]
        %v1414 = vld [vmem:[%s380 + $0x25c] sm:$0xff]
        %v1415 = vld [vmem:[%s380 + $0x264] sm:$0xf]
        %v1416 = vld [vmem:[%s380 + $0x268] sm:$0xff]
        %v1417 = vld [vmem:[%s380 + $0x270] sm:$0xff]
        %v1418 = vld [vmem:[%s380 + $0x278] sm:$0xff]
        %v1419 = vld [vmem:[%s380 + $0x280] sm:$0xf]
        %v1420 = vld [vmem:[%s380 + $0x284] sm:$0xff]
        %v1421 = vld [vmem:[%s380 + $0x28c] sm:$0xff]
        %v1422 = vld [vmem:[%s380 + $0x294] sm:$0xff]
        %v1423 = vld [vmem:[%s380 + $0x29c] sm:$0xf]
        %v1424 = vld [vmem:[%s380 + $0x2a0] sm:$0xff]
        %v1425 = vld [vmem:[%s380 + $0x2a8] sm:$0xff]
        %v1426 = vld [vmem:[%s380 + $0x2b0] sm:$0xff]
        %v1427 = vld [vmem:[%s380 + $0x2b8] sm:$0xf]
        %v1428 = vld [vmem:[%s380 + $0x2bc] sm:$0xff]
        %v1429 = vld [vmem:[%s380 + $0x2c4] sm:$0xff]
        %v1430 = vld [vmem:[%s380 + $0x2cc] sm:$0xff]
        %v1431 = vld [vmem:[%s380 + $0x2d4] sm:$0xf]
        %v1432 = vld [vmem:[%s380 + $0x2d8] sm:$0xff]
        %v1433 = vld [vmem:[%s380 + $0x2e0] sm:$0xff]
        %v1434 = vld [vmem:[%s380 + $0x2e8] sm:$0xff]
        %v1435 = vld [vmem:[%s380 + $0x2f0] sm:$0xf]
        %v1436 = vld [vmem:[%s380 + $0x2f4] sm:$0xff]
        %v1437 = vld [vmem:[%s380 + $0x2fc] sm:$0xff]
        %v1438 = vld [vmem:[%s380 + $0x304] sm:$0xff]
        %v1439 = vld [vmem:[%s380 + $0x30c] sm:$0xf]
        %v1440 = vld [vmem:[%s380 + $0x310] sm:$0xff]
        %v1441 = vld [vmem:[%s380 + $0x318] sm:$0xff]
        %v1442 = vld [vmem:[%s380 + $0x320] sm:$0xff]
        %v1443 = vld [vmem:[%s380 + $0x328] sm:$0xf]
        %v1444 = vld [vmem:[%s380 + $0x32c] sm:$0xff]
        %v1445 = vld [vmem:[%s380 + $0x334] sm:$0xff]
        %v1446 = vld [vmem:[%s380 + $0x33c] sm:$0xff]
        %v1447 = vld [vmem:[%s380 + $0x344] sm:$0xf]
        %v1448 = vld [vmem:[%s380 + $0x348] sm:$0xff]
        %v1449 = vld [vmem:[%s380 + $0x350] sm:$0xff]
        %v1450 = vld [vmem:[%s380 + $0x358] sm:$0xff]
        %v1451 = vld [vmem:[%s380 + $0x360] sm:$0xf]
        %v1452 = vld [vmem:[%s380 + $0x364] sm:$0xff]
        %v1453 = vld [vmem:[%s380 + $0x36c] sm:$0xff]
        %v1454 = vld [vmem:[%s380 + $0x374] sm:$0xff]
        %v1455 = vld [vmem:[%s380 + $0x37c] sm:$0xf]
        %v1456 = vld [vmem:[%s380 + $0x380] sm:$0xff]
        %v1457 = vld [vmem:[%s380 + $0x388] sm:$0xff]
        %v1458 = vld [vmem:[%s380 + $0x390] sm:$0xff]
        %v1459 = vld [vmem:[%s380 + $0x398] sm:$0xf]
        %v1460 = vld [vmem:[%s380 + $0x39c] sm:$0xff]
        %v1461 = vld [vmem:[%s380 + $0x3a4] sm:$0xff]
        %v1462 = vld [vmem:[%s380 + $0x3ac] sm:$0xff]
        %v1463 = vld [vmem:[%s380 + $0x3b4] sm:$0xf]
        %v1464 = vld [vmem:[%s380 + $0x3b8] sm:$0xff]
        %v1465 = vld [vmem:[%s380 + $0x3c0] sm:$0xff]
        %v1466 = vld [vmem:[%s380 + $0x3c8] sm:$0xff]
        %v1467 = vld [vmem:[%s380 + $0x3d0] sm:$0xf]
        %v1468 = vld [vmem:[%s380 + $0x3d4] sm:$0xff]
        %v1469 = vld [vmem:[%s380 + $0x3dc] sm:$0xff]
        %v1470 = vld [vmem:[%s380 + $0x3e4] sm:$0xff]
        %v1471 = vld [vmem:[%s380 + $0x3ec] sm:$0xf]
        %v1472 = vld [vmem:[%s380 + $0x3f0] sm:$0xff]
        %v1473 = vld [vmem:[%s380 + $0x3f8] sm:$0xff]
        %v1474 = vld [vmem:[%s380 + $0x400] sm:$0xff]
        %v1475 = vld [vmem:[%s380 + $0x408] sm:$0xf]
        %v1476 = vld [vmem:[%s380 + $0x40c] sm:$0xff]
        %v1477 = vld [vmem:[%s380 + $0x414] sm:$0xff]
        %v1478 = vld [vmem:[%s380 + $0x41c] sm:$0xff]
        %v1479 = vld [vmem:[%s380 + $0x424] sm:$0xf]
        %v1480 = vld [vmem:[%s380 + $0x428] sm:$0xff]
        %v1481 = vld [vmem:[%s380 + $0x430] sm:$0xff]
        %v1482 = vld [vmem:[%s380 + $0x438] sm:$0xff]
        %v1483 = vld [vmem:[%s380 + $0x440] sm:$0xf]
        %v1484 = vld [vmem:[%s380 + $0x444] sm:$0xff]
        %v1485 = vld [vmem:[%s380 + $0x44c] sm:$0xff]
        %v1486 = vld [vmem:[%s380 + $0x454] sm:$0xff]
        %v1487 = vld [vmem:[%s380 + $0x45c] sm:$0xf]
        %v1488 = vld [vmem:[%s380 + $0x460] sm:$0xff]
        %v1489 = vld [vmem:[%s380 + $0x468] sm:$0xff]
        %v1490 = vld [vmem:[%s380 + $0x470] sm:$0xff]
        %v1491 = vld [vmem:[%s380 + $0x478] sm:$0xf]
        %v1492 = vld [vmem:[%s380 + $0x47c] sm:$0xff]
        %v1493 = vld [vmem:[%s380 + $0x484] sm:$0xff]
        %v1494 = vld [vmem:[%s380 + $0x48c] sm:$0xff]
        %v1495 = vld [vmem:[%s380 + $0x494] sm:$0xf]
        %v1496 = vld [vmem:[%s380 + $0x498] sm:$0xff]
        %v1497 = vld [vmem:[%s380 + $0x4a0] sm:$0xff]
        %v1498 = vld [vmem:[%s380 + $0x4a8] sm:$0xff]
        %v1499 = vld [vmem:[%s380 + $0x4b0] sm:$0xf]
        %v1500 = vld [vmem:[%s380 + $0x4b4] sm:$0xff]
        %v1501 = vld [vmem:[%s380 + $0x4bc] sm:$0xff]
        %v1502 = vld [vmem:[%s380 + $0x4c4] sm:$0xff]
        %v1503 = vld [vmem:[%s380 + $0x4cc] sm:$0xf]
        %v1504 = vld [vmem:[%s380 + $0x4d0] sm:$0xff]
        %v1505 = vld [vmem:[%s380 + $0x4d8] sm:$0xff]
        %v1506 = vld [vmem:[%s380 + $0x4e0] sm:$0xff]
        %v1507 = vld [vmem:[%s380 + $0x4e8] sm:$0xf]
        %v1508 = vld [vmem:[%s380 + $0x4ec] sm:$0xff]
        %v1509 = vld [vmem:[%s380 + $0x4f4] sm:$0xff]
        %v1510 = vld [vmem:[%s380 + $0x4fc] sm:$0xff]
        %v1511 = vld [vmem:[%s380 + $0x504] sm:$0xf]
        %v1512 = vld [vmem:[%s380 + $0x508] sm:$0xff]
        %v1513 = vld [vmem:[%s380 + $0x510] sm:$0xff]
        %v1514 = vld [vmem:[%s380 + $0x518] sm:$0xff]
        %v1515 = vld [vmem:[%s380 + $0x520] sm:$0xf]
        %v1516 = vld [vmem:[%s380 + $0x524] sm:$0xff]
        %v1517 = vld [vmem:[%s380 + $0x52c] sm:$0xff]
        %v1518 = vld [vmem:[%s380 + $0x534] sm:$0xff]
        %v1519 = vld [vmem:[%s380 + $0x53c] sm:$0xf]
        %v1520 = vld [vmem:[%s380 + $0x540] sm:$0xff]
        %v1521 = vld [vmem:[%s380 + $0x548] sm:$0xff]
        %v1522 = vld [vmem:[%s380 + $0x550] sm:$0xff]
        %v1523 = vld [vmem:[%s380 + $0x558] sm:$0xf]
        %v1524 = vld [vmem:[%s380 + $0x55c] sm:$0xff]
        %v1525 = vld [vmem:[%s380 + $0x564] sm:$0xff]
        %v1526 = vld [vmem:[%s380 + $0x56c] sm:$0xff]
        %v1527 = vld [vmem:[%s380 + $0x574] sm:$0xf]
        %v1528 = vld [vmem:[%s380 + $0x578] sm:$0xff]
        %v1529 = vld [vmem:[%s380 + $0x580] sm:$0xff]
        %v1530 = vld [vmem:[%s380 + $0x588] sm:$0xff]
        %v1531 = vld [vmem:[%s380 + $0x590] sm:$0xf]
        %v1532 = vld [vmem:[%s380 + $0x594] sm:$0xff]
        %v1533 = vld [vmem:[%s380 + $0x59c] sm:$0xff]
        %v1534 = vld [vmem:[%s380 + $0x5a4] sm:$0xff]
        %v1535 = vld [vmem:[%s380 + $0x5ac] sm:$0xf]
        %v1536 = vld [vmem:[%s380 + $0x5b0] sm:$0xff]
        %v1537 = vld [vmem:[%s380 + $0x5b8] sm:$0xff]
        %v1538 = vld [vmem:[%s380 + $0x5c0] sm:$0xff]
        %v1539 = vld [vmem:[%s380 + $0x5c8] sm:$0xf]
        %v1540 = vld [vmem:[%s380 + $0x5cc] sm:$0xff]
        %v1541 = vld [vmem:[%s380 + $0x5d4] sm:$0xff]
        %v1542 = vld [vmem:[%s380 + $0x5dc] sm:$0xff]
        %v1543 = vld [vmem:[%s380 + $0x5e4] sm:$0xf]
        %v1544 = vld [vmem:[%s380 + $0x5e8] sm:$0xff]
        %v1545 = vld [vmem:[%s380 + $0x5f0] sm:$0xff]
        %v1546 = vld [vmem:[%s380 + $0x5f8] sm:$0xff]
        %v1547 = vld [vmem:[%s380 + $0x600] sm:$0xf]
        %v1548 = vld [vmem:[%s380 + $0x604] sm:$0xff]
        %v1549 = vld [vmem:[%s380 + $0x60c] sm:$0xff]
        %v1550 = vld [vmem:[%s380 + $0x614] sm:$0xff]
        %v1551 = vld [vmem:[%s380 + $0x61c] sm:$0xf]
        %v1552 = vld [vmem:[%s380 + $0x620] sm:$0xff]
        %v1553 = vld [vmem:[%s380 + $0x628] sm:$0xff]
        %v1554 = vld [vmem:[%s380 + $0x630] sm:$0xff]
        %v1555 = vld [vmem:[%s380 + $0x638] sm:$0xf]
        %v1556 = vld [vmem:[%s380 + $0x63c] sm:$0xff]
        %v1557 = vld [vmem:[%s380 + $0x644] sm:$0xff]
        %v1558 = vld [vmem:[%s380 + $0x64c] sm:$0xff]
        %v1559 = vld [vmem:[%s380 + $0x654] sm:$0xf]
        %v1560 = vld [vmem:[%s380 + $0x658] sm:$0xff]
        %v1561 = vld [vmem:[%s380 + $0x660] sm:$0xff]
        %v1562 = vld [vmem:[%s380 + $0x668] sm:$0xff]
        %v1563 = vld [vmem:[%s380 + $0x670] sm:$0xf]
        %v1564 = vld [vmem:[%s380 + $0x674] sm:$0xff]
        %v1565 = vld [vmem:[%s380 + $0x67c] sm:$0xff]
        %v1566 = vld [vmem:[%s380 + $0x684] sm:$0xff]
        %v1567 = vld [vmem:[%s380 + $0x68c] sm:$0xf]
        %v1568 = vld [vmem:[%s380 + $0x690] sm:$0xff]
        %v1569 = vld [vmem:[%s380 + $0x698] sm:$0xff]
        %v1570 = vld [vmem:[%s380 + $0x6a0] sm:$0xff]
        %v1571 = vld [vmem:[%s380 + $0x6a8] sm:$0xf]
        %v1572 = vld [vmem:[%s380 + $0x6ac] sm:$0xff]
        %v1573 = vld [vmem:[%s380 + $0x6b4] sm:$0xff]
        %v1574 = vld [vmem:[%s380 + $0x6bc] sm:$0xff]
        %v1575 = vld [vmem:[%s380 + $0x6c4] sm:$0xf]
        %v1576 = vld [vmem:[%s380 + $0x6c8] sm:$0xff]
        %v1577 = vld [vmem:[%s380 + $0x6d0] sm:$0xff]
        %v1578 = vld [vmem:[%s380 + $0x6d8] sm:$0xff]
        %v1579 = vld [vmem:[%s380 + $0x6e0] sm:$0xf]
        %v1580 = vld [vmem:[%s380 + $0x6e4] sm:$0xff]
        %v1581 = vld [vmem:[%s380 + $0x6ec] sm:$0xff]
        %v1582 = vld [vmem:[%s380 + $0x6f4] sm:$0xff]
        %v1583 = vld [vmem:[%s380 + $0x6fc] sm:$0xf]
        %v1584 = vld [vmem:[%s380 + $0x700] sm:$0xff]
        %v1585 = vld [vmem:[%s380 + $0x708] sm:$0xff]
        %v1586 = vld [vmem:[%s380 + $0x710] sm:$0xff]
        %v1587 = vld [vmem:[%s380 + $0x718] sm:$0xf]
        %v1588 = vld [vmem:[%s380 + $0x71c] sm:$0xff]
        %v1589 = vld [vmem:[%s380 + $0x724] sm:$0xff]
        %v1590 = vld [vmem:[%s380 + $0x72c] sm:$0xff]
        %v1591 = vld [vmem:[%s380 + $0x734] sm:$0xf]
        %v1592 = vld [vmem:[%s380 + $0x738] sm:$0xff]
        %v1593 = vld [vmem:[%s380 + $0x740] sm:$0xff]
        %v1594 = vld [vmem:[%s380 + $0x748] sm:$0xff]
        %v1595 = vld [vmem:[%s380 + $0x750] sm:$0xf]
        %v1596 = vld [vmem:[%s380 + $0x754] sm:$0xff]
        %v1597 = vld [vmem:[%s380 + $0x75c] sm:$0xff]
        %v1598 = vld [vmem:[%s380 + $0x764] sm:$0xff]
        %v1599 = vld [vmem:[%s380 + $0x76c] sm:$0xf]
        %v1600 = vld [vmem:[%s380 + $0x770] sm:$0xff]
        %v1601 = vld [vmem:[%s380 + $0x778] sm:$0xff]
        %v1602 = vld [vmem:[%s380 + $0x780] sm:$0xff]
        %v1603 = vld [vmem:[%s380 + $0x788] sm:$0xf]
        %v1604 = vld [vmem:[%s380 + $0x78c] sm:$0xff]
        %v1605 = vld [vmem:[%s380 + $0x794] sm:$0xff]
        %v1606 = vld [vmem:[%s380 + $0x79c] sm:$0xff]
        %v1607 = vld [vmem:[%s380 + $0x7a4] sm:$0xf]
        %v1608 = vld [vmem:[%s380 + $0x7a8] sm:$0xff]
        %v1609 = vld [vmem:[%s380 + $0x7b0] sm:$0xff]
        %v1610 = vld [vmem:[%s380 + $0x7b8] sm:$0xff]
        %v1611 = vld [vmem:[%s380 + $0x7c0] sm:$0xf]
        %v1612 = vld [vmem:[%s380 + $0x7c4] sm:$0xff]
        %v1613 = vld [vmem:[%s380 + $0x7cc] sm:$0xff]
        %v1614 = vld [vmem:[%s380 + $0x7d4] sm:$0xff]
        %v1615 = vld [vmem:[%s380 + $0x7dc] sm:$0xf]
        %v1616 = vld [vmem:[%s380 + $0x7e0] sm:$0xff]
        %v1617 = vld [vmem:[%s380 + $0x7e8] sm:$0xff]
        %v1618 = vld [vmem:[%s380 + $0x7f0] sm:$0xff]
        %v1619 = vld [vmem:[%s380 + $0x7f8] sm:$0xf]
        %v1620 = vld [vmem:[%s380 + $0x7fc] sm:$0xff]
        %v1621 = vld [vmem:[%s380 + $0x804] sm:$0xff]
        %v1622 = vld [vmem:[%s380 + $0x80c] sm:$0xff]
        %v1623 = vld [vmem:[%s380 + $0x814] sm:$0xf]
        %v1624 = vld [vmem:[%s380 + $0x818] sm:$0xff]
        %v1625 = vld [vmem:[%s380 + $0x820] sm:$0xff]
        %v1626 = vld [vmem:[%s380 + $0x828] sm:$0xff]
        %v1627 = vld [vmem:[%s380 + $0x830] sm:$0xf]
        %v1628 = vld [vmem:[%s380 + $0x834] sm:$0xff]
        %v1629 = vld [vmem:[%s380 + $0x83c] sm:$0xff]
        %v1630 = vld [vmem:[%s380 + $0x844] sm:$0xff]
        %v1631 = vld [vmem:[%s380 + $0x84c] sm:$0xf]
        %v1632 = vld [vmem:[%s380 + $0x850] sm:$0xff]
        %v1633 = vld [vmem:[%s380 + $0x858] sm:$0xff]
        %v1634 = vld [vmem:[%s380 + $0x860] sm:$0xff]
        %v1635 = vld [vmem:[%s380 + $0x868] sm:$0xf]
        %v1636 = vld [vmem:[%s380 + $0x86c] sm:$0xff]
        %v1637 = vld [vmem:[%s380 + $0x874] sm:$0xff]
        %v1638 = vld [vmem:[%s380 + $0x87c] sm:$0xff]
        %v1639 = vld [vmem:[%s380 + $0x884] sm:$0xf]
        %v1640 = vld [vmem:[%s380 + $0x888] sm:$0xff]
        %v1641 = vld [vmem:[%s380 + $0x890] sm:$0xff]
        %v1642 = vld [vmem:[%s380 + $0x898] sm:$0xff]
        %v1643 = vld [vmem:[%s380 + $0x8a0] sm:$0xf]
        %v1644 = vld [vmem:[%s380 + $0x8a4] sm:$0xff]
        %v1645 = vld [vmem:[%s380 + $0x8ac] sm:$0xff]
        %v1646 = vld [vmem:[%s380 + $0x8b4] sm:$0xff]
        %v1647 = vld [vmem:[%s380 + $0x8bc] sm:$0xf]
        %v1648 = vld [vmem:[%s380 + $0x8c0] sm:$0xff]
        %v1649 = vld [vmem:[%s380 + $0x8c8] sm:$0xff]
        %v1650 = vld [vmem:[%s380 + $0x8d0] sm:$0xff]
        %v1651 = vld [vmem:[%s380 + $0x8d8] sm:$0xf]
        %v1652 = vld [vmem:[%s380 + $0x8dc] sm:$0xff]
        %v1653 = vld [vmem:[%s380 + $0x8e4] sm:$0xff]
        %v1654 = vld [vmem:[%s380 + $0x8ec] sm:$0xff]
        %v1655 = vld [vmem:[%s380 + $0x8f4] sm:$0xf]
        %v1656 = vld [vmem:[%s380 + $0x8f8] sm:$0xff]
        %v1657 = vld [vmem:[%s380 + $0x900] sm:$0xff]
        %v1658 = vld [vmem:[%s380 + $0x908] sm:$0xff]
        %v1659 = vld [vmem:[%s380 + $0x910] sm:$0xf]
        %v1660 = vld [vmem:[%s380 + $0x914] sm:$0xff]
        %v1661 = vld [vmem:[%s380 + $0x91c] sm:$0xff]
        %v1662 = vld [vmem:[%s380 + $0x924] sm:$0xff]
        %v1663 = vld [vmem:[%s380 + $0x92c] sm:$0xf]
        %v1664 = vld [vmem:[%s380 + $0x930] sm:$0xff]
        %v1665 = vld [vmem:[%s380 + $0x938] sm:$0xff]
        %v1666 = vld [vmem:[%s380 + $0x940] sm:$0xff]
        %v1667 = vld [vmem:[%s380 + $0x948] sm:$0xf]
        %v1668 = vld [vmem:[%s380 + $0x94c] sm:$0xff]
        %v1669 = vld [vmem:[%s380 + $0x954] sm:$0xff]
        %v1670 = vld [vmem:[%s380 + $0x95c] sm:$0xff]
        %v1671 = vld [vmem:[%s380 + $0x964] sm:$0xf]
        %v1672 = vld [vmem:[%s380 + $0x968] sm:$0xff]
        %v1673 = vld [vmem:[%s380 + $0x970] sm:$0xff]
        %v1674 = vld [vmem:[%s380 + $0x978] sm:$0xff]
        %v1675 = vld [vmem:[%s380 + $0x980] sm:$0xf]
        %v1676 = vld [vmem:[%s380 + $0x984] sm:$0xff]
        %v1677 = vld [vmem:[%s380 + $0x98c] sm:$0xff]
        %v1678 = vld [vmem:[%s380 + $0x994] sm:$0xff]
        %v1679 = vld [vmem:[%s380 + $0x99c] sm:$0xf]
        %v1680 = vld [vmem:[%s380 + $0x9a0] sm:$0xff]
        %v1681 = vld [vmem:[%s380 + $0x9a8] sm:$0xff]
        %v1682 = vld [vmem:[%s380 + $0x9b0] sm:$0xff]
        %v1683 = vld [vmem:[%s380 + $0x9b8] sm:$0xf]
        %v1684 = vld [vmem:[%s380 + $0x9bc] sm:$0xff]
        %v1685 = vld [vmem:[%s380 + $0x9c4] sm:$0xff]
        %v1686 = vld [vmem:[%s380 + $0x9cc] sm:$0xff]
        %v1687 = vld [vmem:[%s380 + $0x9d4] sm:$0xf]
        %v1688 = vld [vmem:[%s380 + $0x9d8] sm:$0xff]
        %v1689 = vld [vmem:[%s380 + $0x9e0] sm:$0xff]
        %v1690 = vld [vmem:[%s380 + $0x9e8] sm:$0xff]
        %v1691 = vld [vmem:[%s380 + $0x9f0] sm:$0xf]
        %v1692 = vld [vmem:[%s380 + $0x9f4] sm:$0xff]
        %v1693 = vld [vmem:[%s380 + $0x9fc] sm:$0xff]
        %v1694 = vld [vmem:[%s380 + $0xa04] sm:$0xff]
        %v1695 = vld [vmem:[%s380 + $0xa0c] sm:$0xf]
        %v1696 = vld [vmem:[%s380 + $0xa10] sm:$0xff]
        %v1697 = vld [vmem:[%s380 + $0xa18] sm:$0xff]
        %v1698 = vld [vmem:[%s380 + $0xa20] sm:$0xff]
        %v1699 = vld [vmem:[%s380 + $0xa28] sm:$0xf]
        %v1700 = vld [vmem:[%s380 + $0xa2c] sm:$0xff]
        %v1701 = vld [vmem:[%s380 + $0xa34] sm:$0xff]
        %v1702 = vld [vmem:[%s380 + $0xa3c] sm:$0xff]
        %v1703 = vld [vmem:[%s380 + $0xa44] sm:$0xf]
        %v1704 = vld [vmem:[%s380 + $0xa48] sm:$0xff]
        %v1705 = vld [vmem:[%s380 + $0xa50] sm:$0xff]
        %v1706 = vld [vmem:[%s380 + $0xa58] sm:$0xff]
        %v1707 = vld [vmem:[%s380 + $0xa60] sm:$0xf]
        %v1708 = vld [vmem:[%s380 + $0xa64] sm:$0xff]
        %v1709 = vld [vmem:[%s380 + $0xa6c] sm:$0xff]
        %v1710 = vld [vmem:[%s380 + $0xa74] sm:$0xff]
        %v1711 = vld [vmem:[%s380 + $0xa7c] sm:$0xf]
        %v1712 = vld [vmem:[%s380 + $0xa80] sm:$0xff]
        %v1713 = vld [vmem:[%s380 + $0xa88] sm:$0xff]
        %v1714 = vld [vmem:[%s380 + $0xa90] sm:$0xff]
        %v1715 = vld [vmem:[%s380 + $0xa98] sm:$0xf]
        %v1716 = vld [vmem:[%s380 + $0xa9c] sm:$0xff]
        %v1717 = vld [vmem:[%s380 + $0xaa4] sm:$0xff]
        %v1718 = vld [vmem:[%s380 + $0xaac] sm:$0xff]
        %v1719 = vld [vmem:[%s380 + $0xab4] sm:$0xf]
        %v1720 = vld [vmem:[%s380 + $0xab8] sm:$0xff]
        %v1721 = vld [vmem:[%s380 + $0xac0] sm:$0xff]
        %v1722 = vld [vmem:[%s380 + $0xac8] sm:$0xff]
        %v1723 = vld [vmem:[%s380 + $0xad0] sm:$0xf]
        %v1724 = vld [vmem:[%s380 + $0xad4] sm:$0xff]
        %v1725 = vld [vmem:[%s380 + $0xadc] sm:$0xff]
        %v1726 = vld [vmem:[%s380 + $0xae4] sm:$0xff]
        %v1727 = vld [vmem:[%s380 + $0xaec] sm:$0xf]
        %v1728 = vld [vmem:[%s380 + $0xaf0] sm:$0xff]
        %v1729 = vld [vmem:[%s380 + $0xaf8] sm:$0xff]
        %v1730 = vld [vmem:[%s380 + $0xb00] sm:$0xff]
        %v1731 = vld [vmem:[%s380 + $0xb08] sm:$0xf]
        %v1732 = vld [vmem:[%s380 + $0xb0c] sm:$0xff]
        %v1733 = vld [vmem:[%s380 + $0xb14] sm:$0xff]
        %v1734 = vld [vmem:[%s380 + $0xb1c] sm:$0xff]
        %v1735 = vld [vmem:[%s380 + $0xb24] sm:$0xf]
        %v1736 = vld [vmem:[%s380 + $0xb28] sm:$0xff]
        %v1737 = vld [vmem:[%s380 + $0xb30] sm:$0xff]
        %v1738 = vld [vmem:[%s380 + $0xb38] sm:$0xff]
        %v1739 = vld [vmem:[%s380 + $0xb40] sm:$0xf]
        %v1740 = vld [vmem:[%s380 + $0xb44] sm:$0xff]
        %v1741 = vld [vmem:[%s380 + $0xb4c] sm:$0xff]
        %v1742 = vld [vmem:[%s380 + $0xb54] sm:$0xff]
        %v1743 = vld [vmem:[%s380 + $0xb5c] sm:$0xf]
        %v1744 = vld [vmem:[%s380 + $0xb60] sm:$0xff]
        %v1745 = vld [vmem:[%s380 + $0xb68] sm:$0xff]
        %v1746 = vld [vmem:[%s380 + $0xb70] sm:$0xff]
        %v1747 = vld [vmem:[%s380 + $0xb78] sm:$0xf]
        %v1748 = vld [vmem:[%s380 + $0xb7c] sm:$0xff]
        %v1749 = vld [vmem:[%s380 + $0xb84] sm:$0xff]
        %v1750 = vld [vmem:[%s380 + $0xb8c] sm:$0xff]
        %v1751 = vld [vmem:[%s380 + $0xb94] sm:$0xf]
        %v1752 = vld [vmem:[%s380 + $0xb98] sm:$0xff]
        %v1753 = vld [vmem:[%s380 + $0xba0] sm:$0xff]
        %v1754 = vld [vmem:[%s380 + $0xba8] sm:$0xff]
        %v1755 = vld [vmem:[%s380 + $0xbb0] sm:$0xf]
        %v1756 = vld [vmem:[%s380 + $0xbb4] sm:$0xff]
        %v1757 = vld [vmem:[%s380 + $0xbbc] sm:$0xff]
        %v1758 = vld [vmem:[%s380 + $0xbc4] sm:$0xff]
        %v1759 = vld [vmem:[%s380 + $0xbcc] sm:$0xf]
        %v1760 = vld [vmem:[%s380 + $0xbd0] sm:$0xff]
        %v1761 = vld [vmem:[%s380 + $0xbd8] sm:$0xff]
        %v1762 = vld [vmem:[%s380 + $0xbe0] sm:$0xff]
        %v1763 = vld [vmem:[%s380 + $0xbe8] sm:$0xf]
        %v1764 = vld [vmem:[%s380 + $0xbec] sm:$0xff]
        %v1765 = vld [vmem:[%s380 + $0xbf4] sm:$0xff]
        %v1766 = vld [vmem:[%s380 + $0xbfc] sm:$0xff]
        %v1767 = vld [vmem:[%s380 + $0xc04] sm:$0xf]
        %v1768 = vld [vmem:[%s380 + $0xc08] sm:$0xff]
        %v1769 = vld [vmem:[%s380 + $0xc10] sm:$0xff]
        %v1770 = vld [vmem:[%s380 + $0xc18] sm:$0xff]
        %v1771 = vld [vmem:[%s380 + $0xc20] sm:$0xf]
        %v1772 = vld [vmem:[%s380 + $0xc24] sm:$0xff]
        %v1773 = vld [vmem:[%s380 + $0xc2c] sm:$0xff]
        %v1774 = vld [vmem:[%s380 + $0xc34] sm:$0xff]
        %v1775 = vld [vmem:[%s380 + $0xc3c] sm:$0xf]
        %v1776 = vld [vmem:[%s380 + $0xc40] sm:$0xff]
        %v1777 = vld [vmem:[%s380 + $0xc48] sm:$0xff]
        %v1778 = vld [vmem:[%s380 + $0xc50] sm:$0xff]
        %v1779 = vld [vmem:[%s380 + $0xc58] sm:$0xf]
        %v1780 = vld [vmem:[%s380 + $0xc5c] sm:$0xff]
        %v1781 = vld [vmem:[%s380 + $0xc64] sm:$0xff]
        %v1782 = vld [vmem:[%s380 + $0xc6c] sm:$0xff]
        %v1783 = vld [vmem:[%s380 + $0xc74] sm:$0xf]
        %v1784 = vld [vmem:[%s380 + $0xc78] sm:$0xff]
        %v1785 = vld [vmem:[%s380 + $0xc80] sm:$0xff]
        %v1786 = vld [vmem:[%s380 + $0xc88] sm:$0xff]
        %v1787 = vld [vmem:[%s380 + $0xc90] sm:$0xf]
        %v1788 = vld [vmem:[%s380 + $0xc94] sm:$0xff]
        %v1789 = vld [vmem:[%s380 + $0xc9c] sm:$0xff]
        %v1790 = vld [vmem:[%s380 + $0xca4] sm:$0xff]
        %v1791 = vld [vmem:[%s380 + $0xcac] sm:$0xf]
        %v1792 = vld [vmem:[%s380 + $0xcb0] sm:$0xff]
        %v1793 = vld [vmem:[%s380 + $0xcb8] sm:$0xff]
        %v1794 = vld [vmem:[%s380 + $0xcc0] sm:$0xff]
        %v1795 = vld [vmem:[%s380 + $0xcc8] sm:$0xf]
        %v1796 = vld [vmem:[%s380 + $0xccc] sm:$0xff]
        %v1797 = vld [vmem:[%s380 + $0xcd4] sm:$0xff]
        %v1798 = vld [vmem:[%s380 + $0xcdc] sm:$0xff]
        %v1799 = vld [vmem:[%s380 + $0xce4] sm:$0xf]
        %v1800 = vld [vmem:[%s380 + $0xce8] sm:$0xff]
        %v1801 = vld [vmem:[%s380 + $0xcf0] sm:$0xff]
        %v1802 = vld [vmem:[%s380 + $0xcf8] sm:$0xff]
        %v1803 = vld [vmem:[%s380 + $0xd00] sm:$0xf]
        %v1804 = vld [vmem:[%s380 + $0xd04] sm:$0xff]
        %v1805 = vld [vmem:[%s380 + $0xd0c] sm:$0xff]
        %v1806 = vld [vmem:[%s380 + $0xd14] sm:$0xff]
        %v1807 = vld [vmem:[%s380 + $0xd1c] sm:$0xf]
        %v1808 = vld [vmem:[%s380 + $0xd20] sm:$0xff]
        %v1809 = vld [vmem:[%s380 + $0xd28] sm:$0xff]
        %v1810 = vld [vmem:[%s380 + $0xd30] sm:$0xff]
        %v1811 = vld [vmem:[%s380 + $0xd38] sm:$0xf]
        %v1812 = vld [vmem:[%s380 + $0xd3c] sm:$0xff]
        %v1813 = vld [vmem:[%s380 + $0xd44] sm:$0xff]
        %v1814 = vld [vmem:[%s380 + $0xd4c] sm:$0xff]
        %v1815 = vld [vmem:[%s380 + $0xd54] sm:$0xf]
        %v1816 = vld [vmem:[%s380 + $0xd58] sm:$0xff]
        %v1817 = vld [vmem:[%s380 + $0xd60] sm:$0xff]
        %v1818 = vld [vmem:[%s380 + $0xd68] sm:$0xff]
        %v1819 = vld [vmem:[%s380 + $0xd70] sm:$0xf]
        %v1820 = vld [vmem:[%s380 + $0xd74] sm:$0xff]
        %v1821 = vld [vmem:[%s380 + $0xd7c] sm:$0xff]
        %v1822 = vld [vmem:[%s380 + $0xd84] sm:$0xff]
        %v1823 = vld [vmem:[%s380 + $0xd8c] sm:$0xf]
        %v1824 = vld [vmem:[%s380 + $0xd90] sm:$0xff]
        %v1825 = vld [vmem:[%s380 + $0xd98] sm:$0xff]
        %v1826 = vld [vmem:[%s380 + $0xda0] sm:$0xff]
        %v1827 = vld [vmem:[%s380 + $0xda8] sm:$0xf]
        %v1828 = vld [vmem:[%s380 + $0xdac] sm:$0xff]
        %v1829 = vld [vmem:[%s380 + $0xdb4] sm:$0xff]
        %v1830 = vld [vmem:[%s380 + $0xdbc] sm:$0xff]
        %v1831 = vld [vmem:[%s380 + $0xdc4] sm:$0xf]
        %v1832 = vld [vmem:[%s380 + $0xdc8] sm:$0xff]
        %v1833 = vld [vmem:[%s380 + $0xdd0] sm:$0xff]
        %v1834 = vld [vmem:[%s380 + $0xdd8] sm:$0xff]
        %v1835 = vld [vmem:[%s380 + $0xde0] sm:$0xf]
        %v1836 = vld [vmem:[%s380 + $0xde4] sm:$0xff]
        %v1837 = vld [vmem:[%s380 + $0xdec] sm:$0xff]
        %v1838 = vld [vmem:[%s380 + $0xdf4] sm:$0xff]
        %v1839 = vld [vmem:[%s380 + $0xdfc] sm:$0xf]
        %v2352 = vunpack.c.l.b16 %v1328
        %v2353 = vunpack.c.h.b16 %v1328
        %v2354 = vunpack.c.l.b16 %v1329
        %v2355 = vunpack.c.h.b16 %v1329
        %v2356 = vunpack.c.l.b16 %v1330
        %v2357 = vunpack.c.h.b16 %v1330
        %v2358 = vunpack.c.l.b16 %v1331
        %v2359 = vunpack.c.l.b16 %v1332
        %v2360 = vunpack.c.h.b16 %v1332
        %v2361 = vunpack.c.l.b16 %v1333
        %v2362 = vunpack.c.h.b16 %v1333
        %v2363 = vunpack.c.l.b16 %v1334
        %v2364 = vunpack.c.h.b16 %v1334
        %v2365 = vunpack.c.l.b16 %v1335
        %v2366 = vunpack.c.l.b16 %v1336
        %v2367 = vunpack.c.h.b16 %v1336
        %v2368 = vunpack.c.l.b16 %v1337
        %v2369 = vunpack.c.h.b16 %v1337
        %v2370 = vunpack.c.l.b16 %v1338
        %v2371 = vunpack.c.h.b16 %v1338
        %v2372 = vunpack.c.l.b16 %v1339
        %v2373 = vunpack.c.l.b16 %v1340
        %v2374 = vunpack.c.h.b16 %v1340
        %v2375 = vunpack.c.l.b16 %v1341
        %v2376 = vunpack.c.h.b16 %v1341
        %v2377 = vunpack.c.l.b16 %v1342
        %v2378 = vunpack.c.h.b16 %v1342
        %v2379 = vunpack.c.l.b16 %v1343
        %v2380 = vunpack.c.l.b16 %v1344
        %v2381 = vunpack.c.h.b16 %v1344
        %v2382 = vunpack.c.l.b16 %v1345
        %v2383 = vunpack.c.h.b16 %v1345
        %v2384 = vunpack.c.l.b16 %v1346
        %v2385 = vunpack.c.h.b16 %v1346
        %v2386 = vunpack.c.l.b16 %v1347
        %v2387 = vunpack.c.l.b16 %v1348
        %v2388 = vunpack.c.h.b16 %v1348
        %v2389 = vunpack.c.l.b16 %v1349
        %v2390 = vunpack.c.h.b16 %v1349
        %v2391 = vunpack.c.l.b16 %v1350
        %v2392 = vunpack.c.h.b16 %v1350
        %v2393 = vunpack.c.l.b16 %v1351
        %v2394 = vunpack.c.l.b16 %v1352
        %v2395 = vunpack.c.h.b16 %v1352
        %v2396 = vunpack.c.l.b16 %v1353
        %v2397 = vunpack.c.h.b16 %v1353
        %v2398 = vunpack.c.l.b16 %v1354
        %v2399 = vunpack.c.h.b16 %v1354
        %v2400 = vunpack.c.l.b16 %v1355
        %v2401 = vunpack.c.l.b16 %v1356
        %v2402 = vunpack.c.h.b16 %v1356
        %v2403 = vunpack.c.l.b16 %v1357
        %v2404 = vunpack.c.h.b16 %v1357
        %v2405 = vunpack.c.l.b16 %v1358
        %v2406 = vunpack.c.h.b16 %v1358
        %v2407 = vunpack.c.l.b16 %v1359
        %v2408 = vunpack.c.l.b16 %v1360
        %v2409 = vunpack.c.h.b16 %v1360
        %v2410 = vunpack.c.l.b16 %v1361
        %v2411 = vunpack.c.h.b16 %v1361
        %v2412 = vunpack.c.l.b16 %v1362
        %v2413 = vunpack.c.h.b16 %v1362
        %v2414 = vunpack.c.l.b16 %v1363
        %v2415 = vunpack.c.l.b16 %v1364
        %v2416 = vunpack.c.h.b16 %v1364
        %v2417 = vunpack.c.l.b16 %v1365
        %v2418 = vunpack.c.h.b16 %v1365
        %v2419 = vunpack.c.l.b16 %v1366
        %v2420 = vunpack.c.h.b16 %v1366
        %v2421 = vunpack.c.l.b16 %v1367
        %v2422 = vunpack.c.l.b16 %v1368
        %v2423 = vunpack.c.h.b16 %v1368
        %v2424 = vunpack.c.l.b16 %v1369
        %v2425 = vunpack.c.h.b16 %v1369
        %v2426 = vunpack.c.l.b16 %v1370
        %v2427 = vunpack.c.h.b16 %v1370
        %v2428 = vunpack.c.l.b16 %v1371
        %v2429 = vunpack.c.l.b16 %v1372
        %v2430 = vunpack.c.h.b16 %v1372
        %v2431 = vunpack.c.l.b16 %v1373
        %v2432 = vunpack.c.h.b16 %v1373
        %v2433 = vunpack.c.l.b16 %v1374
        %v2434 = vunpack.c.h.b16 %v1374
        %v2435 = vunpack.c.l.b16 %v1375
        %v2436 = vunpack.c.l.b16 %v1376
        %v2437 = vunpack.c.h.b16 %v1376
        %v2438 = vunpack.c.l.b16 %v1377
        %v2439 = vunpack.c.h.b16 %v1377
        %v2440 = vunpack.c.l.b16 %v1378
        %v2441 = vunpack.c.h.b16 %v1378
        %v2442 = vunpack.c.l.b16 %v1379
        %v2443 = vunpack.c.l.b16 %v1380
        %v2444 = vunpack.c.h.b16 %v1380
        %v2445 = vunpack.c.l.b16 %v1381
        %v2446 = vunpack.c.h.b16 %v1381
        %v2447 = vunpack.c.l.b16 %v1382
        %v2448 = vunpack.c.h.b16 %v1382
        %v2449 = vunpack.c.l.b16 %v1383
        %v2450 = vunpack.c.l.b16 %v1384
        %v2451 = vunpack.c.h.b16 %v1384
        %v2452 = vunpack.c.l.b16 %v1385
        %v2453 = vunpack.c.h.b16 %v1385
        %v2454 = vunpack.c.l.b16 %v1386
        %v2455 = vunpack.c.h.b16 %v1386
        %v2456 = vunpack.c.l.b16 %v1387
        %v2457 = vunpack.c.l.b16 %v1388
        %v2458 = vunpack.c.h.b16 %v1388
        %v2459 = vunpack.c.l.b16 %v1389
        %v2460 = vunpack.c.h.b16 %v1389
        %v2461 = vunpack.c.l.b16 %v1390
        %v2462 = vunpack.c.h.b16 %v1390
        %v2463 = vunpack.c.l.b16 %v1391
        %v2464 = vunpack.c.l.b16 %v1392
        %v2465 = vunpack.c.h.b16 %v1392
        %v2466 = vunpack.c.l.b16 %v1393
        %v2467 = vunpack.c.h.b16 %v1393
        %v2468 = vunpack.c.l.b16 %v1394
        %v2469 = vunpack.c.h.b16 %v1394
        %v2470 = vunpack.c.l.b16 %v1395
        %v2471 = vunpack.c.l.b16 %v1396
        %v2472 = vunpack.c.h.b16 %v1396
        %v2473 = vunpack.c.l.b16 %v1397
        %v2474 = vunpack.c.h.b16 %v1397
        %v2475 = vunpack.c.l.b16 %v1398
        %v2476 = vunpack.c.h.b16 %v1398
        %v2477 = vunpack.c.l.b16 %v1399
        %v2478 = vunpack.c.l.b16 %v1400
        %v2479 = vunpack.c.h.b16 %v1400
        %v2480 = vunpack.c.l.b16 %v1401
        %v2481 = vunpack.c.h.b16 %v1401
        %v2482 = vunpack.c.l.b16 %v1402
        %v2483 = vunpack.c.h.b16 %v1402
        %v2484 = vunpack.c.l.b16 %v1403
        %v2485 = vunpack.c.l.b16 %v1404
        %v2486 = vunpack.c.h.b16 %v1404
        %v2487 = vunpack.c.l.b16 %v1405
        %v2488 = vunpack.c.h.b16 %v1405
        %v2489 = vunpack.c.l.b16 %v1406
        %v2490 = vunpack.c.h.b16 %v1406
        %v2491 = vunpack.c.l.b16 %v1407
        %v2492 = vunpack.c.l.b16 %v1408
        %v2493 = vunpack.c.h.b16 %v1408
        %v2494 = vunpack.c.l.b16 %v1409
        %v2495 = vunpack.c.h.b16 %v1409
        %v2496 = vunpack.c.l.b16 %v1410
        %v2497 = vunpack.c.h.b16 %v1410
        %v2498 = vunpack.c.l.b16 %v1411
        %v2499 = vunpack.c.l.b16 %v1412
        %v2500 = vunpack.c.h.b16 %v1412
        %v2501 = vunpack.c.l.b16 %v1413
        %v2502 = vunpack.c.h.b16 %v1413
        %v2503 = vunpack.c.l.b16 %v1414
        %v2504 = vunpack.c.h.b16 %v1414
        %v2505 = vunpack.c.l.b16 %v1415
        %v2506 = vunpack.c.l.b16 %v1416
        %v2507 = vunpack.c.h.b16 %v1416
        %v2508 = vunpack.c.l.b16 %v1417
        %v2509 = vunpack.c.h.b16 %v1417
        %v2510 = vunpack.c.l.b16 %v1418
        %v2511 = vunpack.c.h.b16 %v1418
        %v2512 = vunpack.c.l.b16 %v1419
        %v2513 = vunpack.c.l.b16 %v1420
        %v2514 = vunpack.c.h.b16 %v1420
        %v2515 = vunpack.c.l.b16 %v1421
        %v2516 = vunpack.c.h.b16 %v1421
        %v2517 = vunpack.c.l.b16 %v1422
        %v2518 = vunpack.c.h.b16 %v1422
        %v2519 = vunpack.c.l.b16 %v1423
        %v2520 = vunpack.c.l.b16 %v1424
        %v2521 = vunpack.c.h.b16 %v1424
        %v2522 = vunpack.c.l.b16 %v1425
        %v2523 = vunpack.c.h.b16 %v1425
        %v2524 = vunpack.c.l.b16 %v1426
        %v2525 = vunpack.c.h.b16 %v1426
        %v2526 = vunpack.c.l.b16 %v1427
        %v2527 = vunpack.c.l.b16 %v1428
        %v2528 = vunpack.c.h.b16 %v1428
        %v2529 = vunpack.c.l.b16 %v1429
        %v2530 = vunpack.c.h.b16 %v1429
        %v2531 = vunpack.c.l.b16 %v1430
        %v2532 = vunpack.c.h.b16 %v1430
        %v2533 = vunpack.c.l.b16 %v1431
        %v2534 = vunpack.c.l.b16 %v1432
        %v2535 = vunpack.c.h.b16 %v1432
        %v2536 = vunpack.c.l.b16 %v1433
        %v2537 = vunpack.c.h.b16 %v1433
        %v2538 = vunpack.c.l.b16 %v1434
        %v2539 = vunpack.c.h.b16 %v1434
        %v2540 = vunpack.c.l.b16 %v1435
        %v2541 = vunpack.c.l.b16 %v1436
        %v2542 = vunpack.c.h.b16 %v1436
        %v2543 = vunpack.c.l.b16 %v1437
        %v2544 = vunpack.c.h.b16 %v1437
        %v2545 = vunpack.c.l.b16 %v1438
        %v2546 = vunpack.c.h.b16 %v1438
        %v2547 = vunpack.c.l.b16 %v1439
        %v2548 = vunpack.c.l.b16 %v1440
        %v2549 = vunpack.c.h.b16 %v1440
        %v2550 = vunpack.c.l.b16 %v1441
        %v2551 = vunpack.c.h.b16 %v1441
        %v2552 = vunpack.c.l.b16 %v1442
        %v2553 = vunpack.c.h.b16 %v1442
        %v2554 = vunpack.c.l.b16 %v1443
        %v2555 = vunpack.c.l.b16 %v1444
        %v2556 = vunpack.c.h.b16 %v1444
        %v2557 = vunpack.c.l.b16 %v1445
        %v2558 = vunpack.c.h.b16 %v1445
        %v2559 = vunpack.c.l.b16 %v1446
        %v2560 = vunpack.c.h.b16 %v1446
        %v2561 = vunpack.c.l.b16 %v1447
        %v2562 = vunpack.c.l.b16 %v1448
        %v2563 = vunpack.c.h.b16 %v1448
        %v2564 = vunpack.c.l.b16 %v1449
        %v2565 = vunpack.c.h.b16 %v1449
        %v2566 = vunpack.c.l.b16 %v1450
        %v2567 = vunpack.c.h.b16 %v1450
        %v2568 = vunpack.c.l.b16 %v1451
        %v2569 = vunpack.c.l.b16 %v1452
        %v2570 = vunpack.c.h.b16 %v1452
        %v2571 = vunpack.c.l.b16 %v1453
        %v2572 = vunpack.c.h.b16 %v1453
        %v2573 = vunpack.c.l.b16 %v1454
        %v2574 = vunpack.c.h.b16 %v1454
        %v2575 = vunpack.c.l.b16 %v1455
        %v2576 = vunpack.c.l.b16 %v1456
        %v2577 = vunpack.c.h.b16 %v1456
        %v2578 = vunpack.c.l.b16 %v1457
        %v2579 = vunpack.c.h.b16 %v1457
        %v2580 = vunpack.c.l.b16 %v1458
        %v2581 = vunpack.c.h.b16 %v1458
        %v2582 = vunpack.c.l.b16 %v1459
        %v2583 = vunpack.c.l.b16 %v1460
        %v2584 = vunpack.c.h.b16 %v1460
        %v2585 = vunpack.c.l.b16 %v1461
        %v2586 = vunpack.c.h.b16 %v1461
        %v2587 = vunpack.c.l.b16 %v1462
        %v2588 = vunpack.c.h.b16 %v1462
        %v2589 = vunpack.c.l.b16 %v1463
        %v2590 = vunpack.c.l.b16 %v1464
        %v2591 = vunpack.c.h.b16 %v1464
        %v2592 = vunpack.c.l.b16 %v1465
        %v2593 = vunpack.c.h.b16 %v1465
        %v2594 = vunpack.c.l.b16 %v1466
        %v2595 = vunpack.c.h.b16 %v1466
        %v2596 = vunpack.c.l.b16 %v1467
        %v2597 = vunpack.c.l.b16 %v1468
        %v2598 = vunpack.c.h.b16 %v1468
        %v2599 = vunpack.c.l.b16 %v1469
        %v2600 = vunpack.c.h.b16 %v1469
        %v2601 = vunpack.c.l.b16 %v1470
        %v2602 = vunpack.c.h.b16 %v1470
        %v2603 = vunpack.c.l.b16 %v1471
        %v2604 = vunpack.c.l.b16 %v1472
        %v2605 = vunpack.c.h.b16 %v1472
        %v2606 = vunpack.c.l.b16 %v1473
        %v2607 = vunpack.c.h.b16 %v1473
        %v2608 = vunpack.c.l.b16 %v1474
        %v2609 = vunpack.c.h.b16 %v1474
        %v2610 = vunpack.c.l.b16 %v1475
        %v2611 = vunpack.c.l.b16 %v1476
        %v2612 = vunpack.c.h.b16 %v1476
        %v2613 = vunpack.c.l.b16 %v1477
        %v2614 = vunpack.c.h.b16 %v1477
        %v2615 = vunpack.c.l.b16 %v1478
        %v2616 = vunpack.c.h.b16 %v1478
        %v2617 = vunpack.c.l.b16 %v1479
        %v2618 = vunpack.c.l.b16 %v1480
        %v2619 = vunpack.c.h.b16 %v1480
        %v2620 = vunpack.c.l.b16 %v1481
        %v2621 = vunpack.c.h.b16 %v1481
        %v2622 = vunpack.c.l.b16 %v1482
        %v2623 = vunpack.c.h.b16 %v1482
        %v2624 = vunpack.c.l.b16 %v1483
        %v2625 = vunpack.c.l.b16 %v1484
        %v2626 = vunpack.c.h.b16 %v1484
        %v2627 = vunpack.c.l.b16 %v1485
        %v2628 = vunpack.c.h.b16 %v1485
        %v2629 = vunpack.c.l.b16 %v1486
        %v2630 = vunpack.c.h.b16 %v1486
        %v2631 = vunpack.c.l.b16 %v1487
        %v2632 = vunpack.c.l.b16 %v1488
        %v2633 = vunpack.c.h.b16 %v1488
        %v2634 = vunpack.c.l.b16 %v1489
        %v2635 = vunpack.c.h.b16 %v1489
        %v2636 = vunpack.c.l.b16 %v1490
        %v2637 = vunpack.c.h.b16 %v1490
        %v2638 = vunpack.c.l.b16 %v1491
        %v2639 = vunpack.c.l.b16 %v1492
        %v2640 = vunpack.c.h.b16 %v1492
        %v2641 = vunpack.c.l.b16 %v1493
        %v2642 = vunpack.c.h.b16 %v1493
        %v2643 = vunpack.c.l.b16 %v1494
        %v2644 = vunpack.c.h.b16 %v1494
        %v2645 = vunpack.c.l.b16 %v1495
        %v2646 = vunpack.c.l.b16 %v1496
        %v2647 = vunpack.c.h.b16 %v1496
        %v2648 = vunpack.c.l.b16 %v1497
        %v2649 = vunpack.c.h.b16 %v1497
        %v2650 = vunpack.c.l.b16 %v1498
        %v2651 = vunpack.c.h.b16 %v1498
        %v2652 = vunpack.c.l.b16 %v1499
        %v2653 = vunpack.c.l.b16 %v1500
        %v2654 = vunpack.c.h.b16 %v1500
        %v2655 = vunpack.c.l.b16 %v1501
        %v2656 = vunpack.c.h.b16 %v1501
        %v2657 = vunpack.c.l.b16 %v1502
        %v2658 = vunpack.c.h.b16 %v1502
        %v2659 = vunpack.c.l.b16 %v1503
        %v2660 = vunpack.c.l.b16 %v1504
        %v2661 = vunpack.c.h.b16 %v1504
        %v2662 = vunpack.c.l.b16 %v1505
        %v2663 = vunpack.c.h.b16 %v1505
        %v2664 = vunpack.c.l.b16 %v1506
        %v2665 = vunpack.c.h.b16 %v1506
        %v2666 = vunpack.c.l.b16 %v1507
        %v2667 = vunpack.c.l.b16 %v1508
        %v2668 = vunpack.c.h.b16 %v1508
        %v2669 = vunpack.c.l.b16 %v1509
        %v2670 = vunpack.c.h.b16 %v1509
        %v2671 = vunpack.c.l.b16 %v1510
        %v2672 = vunpack.c.h.b16 %v1510
        %v2673 = vunpack.c.l.b16 %v1511
        %v2674 = vunpack.c.l.b16 %v1512
        %v2675 = vunpack.c.h.b16 %v1512
        %v2676 = vunpack.c.l.b16 %v1513
        %v2677 = vunpack.c.h.b16 %v1513
        %v2678 = vunpack.c.l.b16 %v1514
        %v2679 = vunpack.c.h.b16 %v1514
        %v2680 = vunpack.c.l.b16 %v1515
        %v2681 = vunpack.c.l.b16 %v1516
        %v2682 = vunpack.c.h.b16 %v1516
        %v2683 = vunpack.c.l.b16 %v1517
        %v2684 = vunpack.c.h.b16 %v1517
        %v2685 = vunpack.c.l.b16 %v1518
        %v2686 = vunpack.c.h.b16 %v1518
        %v2687 = vunpack.c.l.b16 %v1519
        %v2688 = vunpack.c.l.b16 %v1520
        %v2689 = vunpack.c.h.b16 %v1520
        %v2690 = vunpack.c.l.b16 %v1521
        %v2691 = vunpack.c.h.b16 %v1521
        %v2692 = vunpack.c.l.b16 %v1522
        %v2693 = vunpack.c.h.b16 %v1522
        %v2694 = vunpack.c.l.b16 %v1523
        %v2695 = vunpack.c.l.b16 %v1524
        %v2696 = vunpack.c.h.b16 %v1524
        %v2697 = vunpack.c.l.b16 %v1525
        %v2698 = vunpack.c.h.b16 %v1525
        %v2699 = vunpack.c.l.b16 %v1526
        %v2700 = vunpack.c.h.b16 %v1526
        %v2701 = vunpack.c.l.b16 %v1527
        %v2702 = vunpack.c.l.b16 %v1528
        %v2703 = vunpack.c.h.b16 %v1528
        %v2704 = vunpack.c.l.b16 %v1529
        %v2705 = vunpack.c.h.b16 %v1529
        %v2706 = vunpack.c.l.b16 %v1530
        %v2707 = vunpack.c.h.b16 %v1530
        %v2708 = vunpack.c.l.b16 %v1531
        %v2709 = vunpack.c.l.b16 %v1532
        %v2710 = vunpack.c.h.b16 %v1532
        %v2711 = vunpack.c.l.b16 %v1533
        %v2712 = vunpack.c.h.b16 %v1533
        %v2713 = vunpack.c.l.b16 %v1534
        %v2714 = vunpack.c.h.b16 %v1534
        %v2715 = vunpack.c.l.b16 %v1535
        %v2716 = vunpack.c.l.b16 %v1536
        %v2717 = vunpack.c.h.b16 %v1536
        %v2718 = vunpack.c.l.b16 %v1537
        %v2719 = vunpack.c.h.b16 %v1537
        %v2720 = vunpack.c.l.b16 %v1538
        %v2721 = vunpack.c.h.b16 %v1538
        %v2722 = vunpack.c.l.b16 %v1539
        %v2723 = vunpack.c.l.b16 %v1540
        %v2724 = vunpack.c.h.b16 %v1540
        %v2725 = vunpack.c.l.b16 %v1541
        %v2726 = vunpack.c.h.b16 %v1541
        %v2727 = vunpack.c.l.b16 %v1542
        %v2728 = vunpack.c.h.b16 %v1542
        %v2729 = vunpack.c.l.b16 %v1543
        %v2730 = vunpack.c.l.b16 %v1544
        %v2731 = vunpack.c.h.b16 %v1544
        %v2732 = vunpack.c.l.b16 %v1545
        %v2733 = vunpack.c.h.b16 %v1545
        %v2734 = vunpack.c.l.b16 %v1546
        %v2735 = vunpack.c.h.b16 %v1546
        %v2736 = vunpack.c.l.b16 %v1547
        %v2737 = vunpack.c.l.b16 %v1548
        %v2738 = vunpack.c.h.b16 %v1548
        %v2739 = vunpack.c.l.b16 %v1549
        %v2740 = vunpack.c.h.b16 %v1549
        %v2741 = vunpack.c.l.b16 %v1550
        %v2742 = vunpack.c.h.b16 %v1550
        %v2743 = vunpack.c.l.b16 %v1551
        %v2744 = vunpack.c.l.b16 %v1552
        %v2745 = vunpack.c.h.b16 %v1552
        %v2746 = vunpack.c.l.b16 %v1553
        %v2747 = vunpack.c.h.b16 %v1553
        %v2748 = vunpack.c.l.b16 %v1554
        %v2749 = vunpack.c.h.b16 %v1554
        %v2750 = vunpack.c.l.b16 %v1555
        %v2751 = vunpack.c.l.b16 %v1556
        %v2752 = vunpack.c.h.b16 %v1556
        %v2753 = vunpack.c.l.b16 %v1557
        %v2754 = vunpack.c.h.b16 %v1557
        %v2755 = vunpack.c.l.b16 %v1558
        %v2756 = vunpack.c.h.b16 %v1558
        %v2757 = vunpack.c.l.b16 %v1559
        %v2758 = vunpack.c.l.b16 %v1560
        %v2759 = vunpack.c.h.b16 %v1560
        %v2760 = vunpack.c.l.b16 %v1561
        %v2761 = vunpack.c.h.b16 %v1561
        %v2762 = vunpack.c.l.b16 %v1562
        %v2763 = vunpack.c.h.b16 %v1562
        %v2764 = vunpack.c.l.b16 %v1563
        %v2765 = vunpack.c.l.b16 %v1564
        %v2766 = vunpack.c.h.b16 %v1564
        %v2767 = vunpack.c.l.b16 %v1565
        %v2768 = vunpack.c.h.b16 %v1565
        %v2769 = vunpack.c.l.b16 %v1566
        %v2770 = vunpack.c.h.b16 %v1566
        %v2771 = vunpack.c.l.b16 %v1567
        %v2772 = vunpack.c.l.b16 %v1568
        %v2773 = vunpack.c.h.b16 %v1568
        %v2774 = vunpack.c.l.b16 %v1569
        %v2775 = vunpack.c.h.b16 %v1569
        %v2776 = vunpack.c.l.b16 %v1570
        %v2777 = vunpack.c.h.b16 %v1570
        %v2778 = vunpack.c.l.b16 %v1571
        %v2779 = vunpack.c.l.b16 %v1572
        %v2780 = vunpack.c.h.b16 %v1572
        %v2781 = vunpack.c.l.b16 %v1573
        %v2782 = vunpack.c.h.b16 %v1573
        %v2783 = vunpack.c.l.b16 %v1574
        %v2784 = vunpack.c.h.b16 %v1574
        %v2785 = vunpack.c.l.b16 %v1575
        %v2786 = vunpack.c.l.b16 %v1576
        %v2787 = vunpack.c.h.b16 %v1576
        %v2788 = vunpack.c.l.b16 %v1577
        %v2789 = vunpack.c.h.b16 %v1577
        %v2790 = vunpack.c.l.b16 %v1578
        %v2791 = vunpack.c.h.b16 %v1578
        %v2792 = vunpack.c.l.b16 %v1579
        %v2793 = vunpack.c.l.b16 %v1580
        %v2794 = vunpack.c.h.b16 %v1580
        %v2795 = vunpack.c.l.b16 %v1581
        %v2796 = vunpack.c.h.b16 %v1581
        %v2797 = vunpack.c.l.b16 %v1582
        %v2798 = vunpack.c.h.b16 %v1582
        %v2799 = vunpack.c.l.b16 %v1583
        %v2800 = vunpack.c.l.b16 %v1584
        %v2801 = vunpack.c.h.b16 %v1584
        %v2802 = vunpack.c.l.b16 %v1585
        %v2803 = vunpack.c.h.b16 %v1585
        %v2804 = vunpack.c.l.b16 %v1586
        %v2805 = vunpack.c.h.b16 %v1586
        %v2806 = vunpack.c.l.b16 %v1587
        %v2807 = vunpack.c.l.b16 %v1588
        %v2808 = vunpack.c.h.b16 %v1588
        %v2809 = vunpack.c.l.b16 %v1589
        %v2810 = vunpack.c.h.b16 %v1589
        %v2811 = vunpack.c.l.b16 %v1590
        %v2812 = vunpack.c.h.b16 %v1590
        %v2813 = vunpack.c.l.b16 %v1591
        %v2814 = vunpack.c.l.b16 %v1592
        %v2815 = vunpack.c.h.b16 %v1592
        %v2816 = vunpack.c.l.b16 %v1593
        %v2817 = vunpack.c.h.b16 %v1593
        %v2818 = vunpack.c.l.b16 %v1594
        %v2819 = vunpack.c.h.b16 %v1594
        %v2820 = vunpack.c.l.b16 %v1595
        %v2821 = vunpack.c.l.b16 %v1596
        %v2822 = vunpack.c.h.b16 %v1596
        %v2823 = vunpack.c.l.b16 %v1597
        %v2824 = vunpack.c.h.b16 %v1597
        %v2825 = vunpack.c.l.b16 %v1598
        %v2826 = vunpack.c.h.b16 %v1598
        %v2827 = vunpack.c.l.b16 %v1599
        %v2828 = vunpack.c.l.b16 %v1600
        %v2829 = vunpack.c.h.b16 %v1600
        %v2830 = vunpack.c.l.b16 %v1601
        %v2831 = vunpack.c.h.b16 %v1601
        %v2832 = vunpack.c.l.b16 %v1602
        %v2833 = vunpack.c.h.b16 %v1602
        %v2834 = vunpack.c.l.b16 %v1603
        %v2835 = vunpack.c.l.b16 %v1604
        %v2836 = vunpack.c.h.b16 %v1604
        %v2837 = vunpack.c.l.b16 %v1605
        %v2838 = vunpack.c.h.b16 %v1605
        %v2839 = vunpack.c.l.b16 %v1606
        %v2840 = vunpack.c.h.b16 %v1606
        %v2841 = vunpack.c.l.b16 %v1607
        %v2842 = vunpack.c.l.b16 %v1608
        %v2843 = vunpack.c.h.b16 %v1608
        %v2844 = vunpack.c.l.b16 %v1609
        %v2845 = vunpack.c.h.b16 %v1609
        %v2846 = vunpack.c.l.b16 %v1610
        %v2847 = vunpack.c.h.b16 %v1610
        %v2848 = vunpack.c.l.b16 %v1611
        %v2849 = vunpack.c.l.b16 %v1612
        %v2850 = vunpack.c.h.b16 %v1612
        %v2851 = vunpack.c.l.b16 %v1613
        %v2852 = vunpack.c.h.b16 %v1613
        %v2853 = vunpack.c.l.b16 %v1614
        %v2854 = vunpack.c.h.b16 %v1614
        %v2855 = vunpack.c.l.b16 %v1615
        %v2856 = vunpack.c.l.b16 %v1616
        %v2857 = vunpack.c.h.b16 %v1616
        %v2858 = vunpack.c.l.b16 %v1617
        %v2859 = vunpack.c.h.b16 %v1617
        %v2860 = vunpack.c.l.b16 %v1618
        %v2861 = vunpack.c.h.b16 %v1618
        %v2862 = vunpack.c.l.b16 %v1619
        %v2863 = vunpack.c.l.b16 %v1620
        %v2864 = vunpack.c.h.b16 %v1620
        %v2865 = vunpack.c.l.b16 %v1621
        %v2866 = vunpack.c.h.b16 %v1621
        %v2867 = vunpack.c.l.b16 %v1622
        %v2868 = vunpack.c.h.b16 %v1622
        %v2869 = vunpack.c.l.b16 %v1623
        %v2870 = vunpack.c.l.b16 %v1624
        %v2871 = vunpack.c.h.b16 %v1624
        %v2872 = vunpack.c.l.b16 %v1625
        %v2873 = vunpack.c.h.b16 %v1625
        %v2874 = vunpack.c.l.b16 %v1626
        %v2875 = vunpack.c.h.b16 %v1626
        %v2876 = vunpack.c.l.b16 %v1627
        %v2877 = vunpack.c.l.b16 %v1628
        %v2878 = vunpack.c.h.b16 %v1628
        %v2879 = vunpack.c.l.b16 %v1629
        %v2880 = vunpack.c.h.b16 %v1629
        %v2881 = vunpack.c.l.b16 %v1630
        %v2882 = vunpack.c.h.b16 %v1630
        %v2883 = vunpack.c.l.b16 %v1631
        %v2884 = vunpack.c.l.b16 %v1632
        %v2885 = vunpack.c.h.b16 %v1632
        %v2886 = vunpack.c.l.b16 %v1633
        %v2887 = vunpack.c.h.b16 %v1633
        %v2888 = vunpack.c.l.b16 %v1634
        %v2889 = vunpack.c.h.b16 %v1634
        %v2890 = vunpack.c.l.b16 %v1635
        %v2891 = vunpack.c.l.b16 %v1636
        %v2892 = vunpack.c.h.b16 %v1636
        %v2893 = vunpack.c.l.b16 %v1637
        %v2894 = vunpack.c.h.b16 %v1637
        %v2895 = vunpack.c.l.b16 %v1638
        %v2896 = vunpack.c.h.b16 %v1638
        %v2897 = vunpack.c.l.b16 %v1639
        %v2898 = vunpack.c.l.b16 %v1640
        %v2899 = vunpack.c.h.b16 %v1640
        %v2900 = vunpack.c.l.b16 %v1641
        %v2901 = vunpack.c.h.b16 %v1641
        %v2902 = vunpack.c.l.b16 %v1642
        %v2903 = vunpack.c.h.b16 %v1642
        %v2904 = vunpack.c.l.b16 %v1643
        %v2905 = vunpack.c.l.b16 %v1644
        %v2906 = vunpack.c.h.b16 %v1644
        %v2907 = vunpack.c.l.b16 %v1645
        %v2908 = vunpack.c.h.b16 %v1645
        %v2909 = vunpack.c.l.b16 %v1646
        %v2910 = vunpack.c.h.b16 %v1646
        %v2911 = vunpack.c.l.b16 %v1647
        %v2912 = vunpack.c.l.b16 %v1648
        %v2913 = vunpack.c.h.b16 %v1648
        %v2914 = vunpack.c.l.b16 %v1649
        %v2915 = vunpack.c.h.b16 %v1649
        %v2916 = vunpack.c.l.b16 %v1650
        %v2917 = vunpack.c.h.b16 %v1650
        %v2918 = vunpack.c.l.b16 %v1651
        %v2919 = vunpack.c.l.b16 %v1652
        %v2920 = vunpack.c.h.b16 %v1652
        %v2921 = vunpack.c.l.b16 %v1653
        %v2922 = vunpack.c.h.b16 %v1653
        %v2923 = vunpack.c.l.b16 %v1654
        %v2924 = vunpack.c.h.b16 %v1654
        %v2925 = vunpack.c.l.b16 %v1655
        %v2926 = vunpack.c.l.b16 %v1656
        %v2927 = vunpack.c.h.b16 %v1656
        %v2928 = vunpack.c.l.b16 %v1657
        %v2929 = vunpack.c.h.b16 %v1657
        %v2930 = vunpack.c.l.b16 %v1658
        %v2931 = vunpack.c.h.b16 %v1658
        %v2932 = vunpack.c.l.b16 %v1659
        %v2933 = vunpack.c.l.b16 %v1660
        %v2934 = vunpack.c.h.b16 %v1660
        %v2935 = vunpack.c.l.b16 %v1661
        %v2936 = vunpack.c.h.b16 %v1661
        %v2937 = vunpack.c.l.b16 %v1662
        %v2938 = vunpack.c.h.b16 %v1662
        %v2939 = vunpack.c.l.b16 %v1663
        %v2940 = vunpack.c.l.b16 %v1664
        %v2941 = vunpack.c.h.b16 %v1664
        %v2942 = vunpack.c.l.b16 %v1665
        %v2943 = vunpack.c.h.b16 %v1665
        %v2944 = vunpack.c.l.b16 %v1666
        %v2945 = vunpack.c.h.b16 %v1666
        %v2946 = vunpack.c.l.b16 %v1667
        %v2947 = vunpack.c.l.b16 %v1668
        %v2948 = vunpack.c.h.b16 %v1668
        %v2949 = vunpack.c.l.b16 %v1669
        %v2950 = vunpack.c.h.b16 %v1669
        %v2951 = vunpack.c.l.b16 %v1670
        %v2952 = vunpack.c.h.b16 %v1670
        %v2953 = vunpack.c.l.b16 %v1671
        %v2954 = vunpack.c.l.b16 %v1672
        %v2955 = vunpack.c.h.b16 %v1672
        %v2956 = vunpack.c.l.b16 %v1673
        %v2957 = vunpack.c.h.b16 %v1673
        %v2958 = vunpack.c.l.b16 %v1674
        %v2959 = vunpack.c.h.b16 %v1674
        %v2960 = vunpack.c.l.b16 %v1675
        %v2961 = vunpack.c.l.b16 %v1676
        %v2962 = vunpack.c.h.b16 %v1676
        %v2963 = vunpack.c.l.b16 %v1677
        %v2964 = vunpack.c.h.b16 %v1677
        %v2965 = vunpack.c.l.b16 %v1678
        %v2966 = vunpack.c.h.b16 %v1678
        %v2967 = vunpack.c.l.b16 %v1679
        %v2968 = vunpack.c.l.b16 %v1680
        %v2969 = vunpack.c.h.b16 %v1680
        %v2970 = vunpack.c.l.b16 %v1681
        %v2971 = vunpack.c.h.b16 %v1681
        %v2972 = vunpack.c.l.b16 %v1682
        %v2973 = vunpack.c.h.b16 %v1682
        %v2974 = vunpack.c.l.b16 %v1683
        %v2975 = vunpack.c.l.b16 %v1684
        %v2976 = vunpack.c.h.b16 %v1684
        %v2977 = vunpack.c.l.b16 %v1685
        %v2978 = vunpack.c.h.b16 %v1685
        %v2979 = vunpack.c.l.b16 %v1686
        %v2980 = vunpack.c.h.b16 %v1686
        %v2981 = vunpack.c.l.b16 %v1687
        %v2982 = vunpack.c.l.b16 %v1688
        %v2983 = vunpack.c.h.b16 %v1688
        %v2984 = vunpack.c.l.b16 %v1689
        %v2985 = vunpack.c.h.b16 %v1689
        %v2986 = vunpack.c.l.b16 %v1690
        %v2987 = vunpack.c.h.b16 %v1690
        %v2988 = vunpack.c.l.b16 %v1691
        %v2989 = vunpack.c.l.b16 %v1692
        %v2990 = vunpack.c.h.b16 %v1692
        %v2991 = vunpack.c.l.b16 %v1693
        %v2992 = vunpack.c.h.b16 %v1693
        %v2993 = vunpack.c.l.b16 %v1694
        %v2994 = vunpack.c.h.b16 %v1694
        %v2995 = vunpack.c.l.b16 %v1695
        %v2996 = vunpack.c.l.b16 %v1696
        %v2997 = vunpack.c.h.b16 %v1696
        %v2998 = vunpack.c.l.b16 %v1697
        %v2999 = vunpack.c.h.b16 %v1697
        %v3000 = vunpack.c.l.b16 %v1698
        %v3001 = vunpack.c.h.b16 %v1698
        %v3002 = vunpack.c.l.b16 %v1699
        %v3003 = vunpack.c.l.b16 %v1700
        %v3004 = vunpack.c.h.b16 %v1700
        %v3005 = vunpack.c.l.b16 %v1701
        %v3006 = vunpack.c.h.b16 %v1701
        %v3007 = vunpack.c.l.b16 %v1702
        %v3008 = vunpack.c.h.b16 %v1702
        %v3009 = vunpack.c.l.b16 %v1703
        %v3010 = vunpack.c.l.b16 %v1704
        %v3011 = vunpack.c.h.b16 %v1704
        %v3012 = vunpack.c.l.b16 %v1705
        %v3013 = vunpack.c.h.b16 %v1705
        %v3014 = vunpack.c.l.b16 %v1706
        %v3015 = vunpack.c.h.b16 %v1706
        %v3016 = vunpack.c.l.b16 %v1707
        %v3017 = vunpack.c.l.b16 %v1708
        %v3018 = vunpack.c.h.b16 %v1708
        %v3019 = vunpack.c.l.b16 %v1709
        %v3020 = vunpack.c.h.b16 %v1709
        %v3021 = vunpack.c.l.b16 %v1710
        %v3022 = vunpack.c.h.b16 %v1710
        %v3023 = vunpack.c.l.b16 %v1711
        %v3024 = vunpack.c.l.b16 %v1712
        %v3025 = vunpack.c.h.b16 %v1712
        %v3026 = vunpack.c.l.b16 %v1713
        %v3027 = vunpack.c.h.b16 %v1713
        %v3028 = vunpack.c.l.b16 %v1714
        %v3029 = vunpack.c.h.b16 %v1714
        %v3030 = vunpack.c.l.b16 %v1715
        %v3031 = vunpack.c.l.b16 %v1716
        %v3032 = vunpack.c.h.b16 %v1716
        %v3033 = vunpack.c.l.b16 %v1717
        %v3034 = vunpack.c.h.b16 %v1717
        %v3035 = vunpack.c.l.b16 %v1718
        %v3036 = vunpack.c.h.b16 %v1718
        %v3037 = vunpack.c.l.b16 %v1719
        %v3038 = vunpack.c.l.b16 %v1720
        %v3039 = vunpack.c.h.b16 %v1720
        %v3040 = vunpack.c.l.b16 %v1721
        %v3041 = vunpack.c.h.b16 %v1721
        %v3042 = vunpack.c.l.b16 %v1722
        %v3043 = vunpack.c.h.b16 %v1722
        %v3044 = vunpack.c.l.b16 %v1723
        %v3045 = vunpack.c.l.b16 %v1724
        %v3046 = vunpack.c.h.b16 %v1724
        %v3047 = vunpack.c.l.b16 %v1725
        %v3048 = vunpack.c.h.b16 %v1725
        %v3049 = vunpack.c.l.b16 %v1726
        %v3050 = vunpack.c.h.b16 %v1726
        %v3051 = vunpack.c.l.b16 %v1727
        %v3052 = vunpack.c.l.b16 %v1728
        %v3053 = vunpack.c.h.b16 %v1728
        %v3054 = vunpack.c.l.b16 %v1729
        %v3055 = vunpack.c.h.b16 %v1729
        %v3056 = vunpack.c.l.b16 %v1730
        %v3057 = vunpack.c.h.b16 %v1730
        %v3058 = vunpack.c.l.b16 %v1731
        %v3059 = vunpack.c.l.b16 %v1732
        %v3060 = vunpack.c.h.b16 %v1732
        %v3061 = vunpack.c.l.b16 %v1733
        %v3062 = vunpack.c.h.b16 %v1733
        %v3063 = vunpack.c.l.b16 %v1734
        %v3064 = vunpack.c.h.b16 %v1734
        %v3065 = vunpack.c.l.b16 %v1735
        %v3066 = vunpack.c.l.b16 %v1736
        %v3067 = vunpack.c.h.b16 %v1736
        %v3068 = vunpack.c.l.b16 %v1737
        %v3069 = vunpack.c.h.b16 %v1737
        %v3070 = vunpack.c.l.b16 %v1738
        %v3071 = vunpack.c.h.b16 %v1738
        %v3072 = vunpack.c.l.b16 %v1739
        %v3073 = vunpack.c.l.b16 %v1740
        %v3074 = vunpack.c.h.b16 %v1740
        %v3075 = vunpack.c.l.b16 %v1741
        %v3076 = vunpack.c.h.b16 %v1741
        %v3077 = vunpack.c.l.b16 %v1742
        %v3078 = vunpack.c.h.b16 %v1742
        %v3079 = vunpack.c.l.b16 %v1743
        %v3080 = vunpack.c.l.b16 %v1744
        %v3081 = vunpack.c.h.b16 %v1744
        %v3082 = vunpack.c.l.b16 %v1745
        %v3083 = vunpack.c.h.b16 %v1745
        %v3084 = vunpack.c.l.b16 %v1746
        %v3085 = vunpack.c.h.b16 %v1746
        %v3086 = vunpack.c.l.b16 %v1747
        %v3087 = vunpack.c.l.b16 %v1748
        %v3088 = vunpack.c.h.b16 %v1748
        %v3089 = vunpack.c.l.b16 %v1749
        %v3090 = vunpack.c.h.b16 %v1749
        %v3091 = vunpack.c.l.b16 %v1750
        %v3092 = vunpack.c.h.b16 %v1750
        %v3093 = vunpack.c.l.b16 %v1751
        %v3094 = vunpack.c.l.b16 %v1752
        %v3095 = vunpack.c.h.b16 %v1752
        %v3096 = vunpack.c.l.b16 %v1753
        %v3097 = vunpack.c.h.b16 %v1753
        %v3098 = vunpack.c.l.b16 %v1754
        %v3099 = vunpack.c.h.b16 %v1754
        %v3100 = vunpack.c.l.b16 %v1755
        %v3101 = vunpack.c.l.b16 %v1756
        %v3102 = vunpack.c.h.b16 %v1756
        %v3103 = vunpack.c.l.b16 %v1757
        %v3104 = vunpack.c.h.b16 %v1757
        %v3105 = vunpack.c.l.b16 %v1758
        %v3106 = vunpack.c.h.b16 %v1758
        %v3107 = vunpack.c.l.b16 %v1759
        %v3108 = vunpack.c.l.b16 %v1760
        %v3109 = vunpack.c.h.b16 %v1760
        %v3110 = vunpack.c.l.b16 %v1761
        %v3111 = vunpack.c.h.b16 %v1761
        %v3112 = vunpack.c.l.b16 %v1762
        %v3113 = vunpack.c.h.b16 %v1762
        %v3114 = vunpack.c.l.b16 %v1763
        %v3115 = vunpack.c.l.b16 %v1764
        %v3116 = vunpack.c.h.b16 %v1764
        %v3117 = vunpack.c.l.b16 %v1765
        %v3118 = vunpack.c.h.b16 %v1765
        %v3119 = vunpack.c.l.b16 %v1766
        %v3120 = vunpack.c.h.b16 %v1766
        %v3121 = vunpack.c.l.b16 %v1767
        %v3122 = vunpack.c.l.b16 %v1768
        %v3123 = vunpack.c.h.b16 %v1768
        %v3124 = vunpack.c.l.b16 %v1769
        %v3125 = vunpack.c.h.b16 %v1769
        %v3126 = vunpack.c.l.b16 %v1770
        %v3127 = vunpack.c.h.b16 %v1770
        %v3128 = vunpack.c.l.b16 %v1771
        %v3129 = vunpack.c.l.b16 %v1772
        %v3130 = vunpack.c.h.b16 %v1772
        %v3131 = vunpack.c.l.b16 %v1773
        %v3132 = vunpack.c.h.b16 %v1773
        %v3133 = vunpack.c.l.b16 %v1774
        %v3134 = vunpack.c.h.b16 %v1774
        %v3135 = vunpack.c.l.b16 %v1775
        %v3136 = vunpack.c.l.b16 %v1776
        %v3137 = vunpack.c.h.b16 %v1776
        %v3138 = vunpack.c.l.b16 %v1777
        %v3139 = vunpack.c.h.b16 %v1777
        %v3140 = vunpack.c.l.b16 %v1778
        %v3141 = vunpack.c.h.b16 %v1778
        %v3142 = vunpack.c.l.b16 %v1779
        %v3143 = vunpack.c.l.b16 %v1780
        %v3144 = vunpack.c.h.b16 %v1780
        %v3145 = vunpack.c.l.b16 %v1781
        %v3146 = vunpack.c.h.b16 %v1781
        %v3147 = vunpack.c.l.b16 %v1782
        %v3148 = vunpack.c.h.b16 %v1782
        %v3149 = vunpack.c.l.b16 %v1783
        %v3150 = vunpack.c.l.b16 %v1784
        %v3151 = vunpack.c.h.b16 %v1784
        %v3152 = vunpack.c.l.b16 %v1785
        %v3153 = vunpack.c.h.b16 %v1785
        %v3154 = vunpack.c.l.b16 %v1786
        %v3155 = vunpack.c.h.b16 %v1786
        %v3156 = vunpack.c.l.b16 %v1787
        %v3157 = vunpack.c.l.b16 %v1788
        %v3158 = vunpack.c.h.b16 %v1788
        %v3159 = vunpack.c.l.b16 %v1789
        %v3160 = vunpack.c.h.b16 %v1789
        %v3161 = vunpack.c.l.b16 %v1790
        %v3162 = vunpack.c.h.b16 %v1790
        %v3163 = vunpack.c.l.b16 %v1791
        %v3164 = vunpack.c.l.b16 %v1792
        %v3165 = vunpack.c.h.b16 %v1792
        %v3166 = vunpack.c.l.b16 %v1793
        %v3167 = vunpack.c.h.b16 %v1793
        %v3168 = vunpack.c.l.b16 %v1794
        %v3169 = vunpack.c.h.b16 %v1794
        %v3170 = vunpack.c.l.b16 %v1795
        %v3171 = vunpack.c.l.b16 %v1796
        %v3172 = vunpack.c.h.b16 %v1796
        %v3173 = vunpack.c.l.b16 %v1797
        %v3174 = vunpack.c.h.b16 %v1797
        %v3175 = vunpack.c.l.b16 %v1798
        %v3176 = vunpack.c.h.b16 %v1798
        %v3177 = vunpack.c.l.b16 %v1799
        %v3178 = vunpack.c.l.b16 %v1800
        %v3179 = vunpack.c.h.b16 %v1800
        %v3180 = vunpack.c.l.b16 %v1801
        %v3181 = vunpack.c.h.b16 %v1801
        %v3182 = vunpack.c.l.b16 %v1802
        %v3183 = vunpack.c.h.b16 %v1802
        %v3184 = vunpack.c.l.b16 %v1803
        %v3185 = vunpack.c.l.b16 %v1804
        %v3186 = vunpack.c.h.b16 %v1804
        %v3187 = vunpack.c.l.b16 %v1805
        %v3188 = vunpack.c.h.b16 %v1805
        %v3189 = vunpack.c.l.b16 %v1806
        %v3190 = vunpack.c.h.b16 %v1806
        %v3191 = vunpack.c.l.b16 %v1807
        %v3192 = vunpack.c.l.b16 %v1808
        %v3193 = vunpack.c.h.b16 %v1808
        %v3194 = vunpack.c.l.b16 %v1809
        %v3195 = vunpack.c.h.b16 %v1809
        %v3196 = vunpack.c.l.b16 %v1810
        %v3197 = vunpack.c.h.b16 %v1810
        %v3198 = vunpack.c.l.b16 %v1811
        %v3199 = vunpack.c.l.b16 %v1812
        %v3200 = vunpack.c.h.b16 %v1812
        %v3201 = vunpack.c.l.b16 %v1813
        %v3202 = vunpack.c.h.b16 %v1813
        %v3203 = vunpack.c.l.b16 %v1814
        %v3204 = vunpack.c.h.b16 %v1814
        %v3205 = vunpack.c.l.b16 %v1815
        %v3206 = vunpack.c.l.b16 %v1816
        %v3207 = vunpack.c.h.b16 %v1816
        %v3208 = vunpack.c.l.b16 %v1817
        %v3209 = vunpack.c.h.b16 %v1817
        %v3210 = vunpack.c.l.b16 %v1818
        %v3211 = vunpack.c.h.b16 %v1818
        %v3212 = vunpack.c.l.b16 %v1819
        %v3213 = vunpack.c.l.b16 %v1820
        %v3214 = vunpack.c.h.b16 %v1820
        %v3215 = vunpack.c.l.b16 %v1821
        %v3216 = vunpack.c.h.b16 %v1821
        %v3217 = vunpack.c.l.b16 %v1822
        %v3218 = vunpack.c.h.b16 %v1822
        %v3219 = vunpack.c.l.b16 %v1823
        %v3220 = vunpack.c.l.b16 %v1824
        %v3221 = vunpack.c.h.b16 %v1824
        %v3222 = vunpack.c.l.b16 %v1825
        %v3223 = vunpack.c.h.b16 %v1825
        %v3224 = vunpack.c.l.b16 %v1826
        %v3225 = vunpack.c.h.b16 %v1826
        %v3226 = vunpack.c.l.b16 %v1827
        %v3227 = vunpack.c.l.b16 %v1828
        %v3228 = vunpack.c.h.b16 %v1828
        %v3229 = vunpack.c.l.b16 %v1829
        %v3230 = vunpack.c.h.b16 %v1829
        %v3231 = vunpack.c.l.b16 %v1830
        %v3232 = vunpack.c.h.b16 %v1830
        %v3233 = vunpack.c.l.b16 %v1831
        %v3234 = vunpack.c.l.b16 %v1832
        %v3235 = vunpack.c.h.b16 %v1832
        %v3236 = vunpack.c.l.b16 %v1833
        %v3237 = vunpack.c.h.b16 %v1833
        %v3238 = vunpack.c.l.b16 %v1834
        %v3239 = vunpack.c.h.b16 %v1834
        %v3240 = vunpack.c.l.b16 %v1835
        %v3241 = vunpack.c.l.b16 %v1836
        %v3242 = vunpack.c.h.b16 %v1836
        %v3243 = vunpack.c.l.b16 %v1837
        %v3244 = vunpack.c.h.b16 %v1837
        %v3245 = vunpack.c.l.b16 %v1838
        %v3246 = vunpack.c.h.b16 %v1838
        %v3247 = vunpack.c.l.b16 %v1839
        %v3248 = vpack.c.b16 %v2359, %v2352
        %v3249 = vpack.c.b16 %v2360, %v2353
        %v3250 = vpack.c.b16 %v2361, %v2354
        %v3251 = vpack.c.b16 %v2362, %v2355
        %v3252 = vpack.c.b16 %v2363, %v2356
        %v3253 = vpack.c.b16 %v2364, %v2357
        %v3254 = vpack.c.b16 %v2365, %v2358
        %v3255 = vpack.c.b16 %v2373, %v2366
        %v3256 = vpack.c.b16 %v2374, %v2367
        %v3257 = vpack.c.b16 %v2375, %v2368
        %v3258 = vpack.c.b16 %v2376, %v2369
        %v3259 = vpack.c.b16 %v2377, %v2370
        %v3260 = vpack.c.b16 %v2378, %v2371
        %v3261 = vpack.c.b16 %v2379, %v2372
        %v3262 = vpack.c.b16 %v2387, %v2380
        %v3263 = vpack.c.b16 %v2388, %v2381
        %v3264 = vpack.c.b16 %v2389, %v2382
        %v3265 = vpack.c.b16 %v2390, %v2383
        %v3266 = vpack.c.b16 %v2391, %v2384
        %v3267 = vpack.c.b16 %v2392, %v2385
        %v3268 = vpack.c.b16 %v2393, %v2386
        %v3269 = vpack.c.b16 %v2401, %v2394
        %v3270 = vpack.c.b16 %v2402, %v2395
        %v3271 = vpack.c.b16 %v2403, %v2396
        %v3272 = vpack.c.b16 %v2404, %v2397
        %v3273 = vpack.c.b16 %v2405, %v2398
        %v3274 = vpack.c.b16 %v2406, %v2399
        %v3275 = vpack.c.b16 %v2407, %v2400
        %v3276 = vpack.c.b16 %v2415, %v2408
        %v3277 = vpack.c.b16 %v2416, %v2409
        %v3278 = vpack.c.b16 %v2417, %v2410
        %v3279 = vpack.c.b16 %v2418, %v2411
        %v3280 = vpack.c.b16 %v2419, %v2412
        %v3281 = vpack.c.b16 %v2420, %v2413
        %v3282 = vpack.c.b16 %v2421, %v2414
        %v3283 = vpack.c.b16 %v2429, %v2422
        %v3284 = vpack.c.b16 %v2430, %v2423
        %v3285 = vpack.c.b16 %v2431, %v2424
        %v3286 = vpack.c.b16 %v2432, %v2425
        %v3287 = vpack.c.b16 %v2433, %v2426
        %v3288 = vpack.c.b16 %v2434, %v2427
        %v3289 = vpack.c.b16 %v2435, %v2428
        %v3290 = vpack.c.b16 %v2443, %v2436
        %v3291 = vpack.c.b16 %v2444, %v2437
        %v3292 = vpack.c.b16 %v2445, %v2438
        %v3293 = vpack.c.b16 %v2446, %v2439
        %v3294 = vpack.c.b16 %v2447, %v2440
        %v3295 = vpack.c.b16 %v2448, %v2441
        %v3296 = vpack.c.b16 %v2449, %v2442
        %v3297 = vpack.c.b16 %v2457, %v2450
        %v3298 = vpack.c.b16 %v2458, %v2451
        %v3299 = vpack.c.b16 %v2459, %v2452
        %v3300 = vpack.c.b16 %v2460, %v2453
        %v3301 = vpack.c.b16 %v2461, %v2454
        %v3302 = vpack.c.b16 %v2462, %v2455
        %v3303 = vpack.c.b16 %v2463, %v2456
        %v3304 = vpack.c.b16 %v2471, %v2464
        %v3305 = vpack.c.b16 %v2472, %v2465
        %v3306 = vpack.c.b16 %v2473, %v2466
        %v3307 = vpack.c.b16 %v2474, %v2467
        %v3308 = vpack.c.b16 %v2475, %v2468
        %v3309 = vpack.c.b16 %v2476, %v2469
        %v3310 = vpack.c.b16 %v2477, %v2470
        %v3311 = vpack.c.b16 %v2485, %v2478
        %v3312 = vpack.c.b16 %v2486, %v2479
        %v3313 = vpack.c.b16 %v2487, %v2480
        %v3314 = vpack.c.b16 %v2488, %v2481
        %v3315 = vpack.c.b16 %v2489, %v2482
        %v3316 = vpack.c.b16 %v2490, %v2483
        %v3317 = vpack.c.b16 %v2491, %v2484
        %v3318 = vpack.c.b16 %v2499, %v2492
        %v3319 = vpack.c.b16 %v2500, %v2493
        %v3320 = vpack.c.b16 %v2501, %v2494
        %v3321 = vpack.c.b16 %v2502, %v2495
        %v3322 = vpack.c.b16 %v2503, %v2496
        %v3323 = vpack.c.b16 %v2504, %v2497
        %v3324 = vpack.c.b16 %v2505, %v2498
        %v3325 = vpack.c.b16 %v2513, %v2506
        %v3326 = vpack.c.b16 %v2514, %v2507
        %v3327 = vpack.c.b16 %v2515, %v2508
        %v3328 = vpack.c.b16 %v2516, %v2509
        %v3329 = vpack.c.b16 %v2517, %v2510
        %v3330 = vpack.c.b16 %v2518, %v2511
        %v3331 = vpack.c.b16 %v2519, %v2512
        %v3332 = vpack.c.b16 %v2527, %v2520
        %v3333 = vpack.c.b16 %v2528, %v2521
        %v3334 = vpack.c.b16 %v2529, %v2522
        %v3335 = vpack.c.b16 %v2530, %v2523
        %v3336 = vpack.c.b16 %v2531, %v2524
        %v3337 = vpack.c.b16 %v2532, %v2525
        %v3338 = vpack.c.b16 %v2533, %v2526
        %v3339 = vpack.c.b16 %v2541, %v2534
        %v3340 = vpack.c.b16 %v2542, %v2535
        %v3341 = vpack.c.b16 %v2543, %v2536
        %v3342 = vpack.c.b16 %v2544, %v2537
        %v3343 = vpack.c.b16 %v2545, %v2538
        %v3344 = vpack.c.b16 %v2546, %v2539
        %v3345 = vpack.c.b16 %v2547, %v2540
        %v3346 = vpack.c.b16 %v2555, %v2548
        %v3347 = vpack.c.b16 %v2556, %v2549
        %v3348 = vpack.c.b16 %v2557, %v2550
        %v3349 = vpack.c.b16 %v2558, %v2551
        %v3350 = vpack.c.b16 %v2559, %v2552
        %v3351 = vpack.c.b16 %v2560, %v2553
        %v3352 = vpack.c.b16 %v2561, %v2554
        %v3353 = vpack.c.b16 %v2569, %v2562
        %v3354 = vpack.c.b16 %v2570, %v2563
        %v3355 = vpack.c.b16 %v2571, %v2564
        %v3356 = vpack.c.b16 %v2572, %v2565
        %v3357 = vpack.c.b16 %v2573, %v2566
        %v3358 = vpack.c.b16 %v2574, %v2567
        %v3359 = vpack.c.b16 %v2575, %v2568
        %v3360 = vpack.c.b16 %v2583, %v2576
        %v3361 = vpack.c.b16 %v2584, %v2577
        %v3362 = vpack.c.b16 %v2585, %v2578
        %v3363 = vpack.c.b16 %v2586, %v2579
        %v3364 = vpack.c.b16 %v2587, %v2580
        %v3365 = vpack.c.b16 %v2588, %v2581
        %v3366 = vpack.c.b16 %v2589, %v2582
        %v3367 = vpack.c.b16 %v2597, %v2590
        %v3368 = vpack.c.b16 %v2598, %v2591
        %v3369 = vpack.c.b16 %v2599, %v2592
        %v3370 = vpack.c.b16 %v2600, %v2593
        %v3371 = vpack.c.b16 %v2601, %v2594
        %v3372 = vpack.c.b16 %v2602, %v2595
        %v3373 = vpack.c.b16 %v2603, %v2596
        %v3374 = vpack.c.b16 %v2611, %v2604
        %v3375 = vpack.c.b16 %v2612, %v2605
        %v3376 = vpack.c.b16 %v2613, %v2606
        %v3377 = vpack.c.b16 %v2614, %v2607
        %v3378 = vpack.c.b16 %v2615, %v2608
        %v3379 = vpack.c.b16 %v2616, %v2609
        %v3380 = vpack.c.b16 %v2617, %v2610
        %v3381 = vpack.c.b16 %v2625, %v2618
        %v3382 = vpack.c.b16 %v2626, %v2619
        %v3383 = vpack.c.b16 %v2627, %v2620
        %v3384 = vpack.c.b16 %v2628, %v2621
        %v3385 = vpack.c.b16 %v2629, %v2622
        %v3386 = vpack.c.b16 %v2630, %v2623
        %v3387 = vpack.c.b16 %v2631, %v2624
        %v3388 = vpack.c.b16 %v2639, %v2632
        %v3389 = vpack.c.b16 %v2640, %v2633
        %v3390 = vpack.c.b16 %v2641, %v2634
        %v3391 = vpack.c.b16 %v2642, %v2635
        %v3392 = vpack.c.b16 %v2643, %v2636
        %v3393 = vpack.c.b16 %v2644, %v2637
        %v3394 = vpack.c.b16 %v2645, %v2638
        %v3395 = vpack.c.b16 %v2653, %v2646
        %v3396 = vpack.c.b16 %v2654, %v2647
        %v3397 = vpack.c.b16 %v2655, %v2648
        %v3398 = vpack.c.b16 %v2656, %v2649
        %v3399 = vpack.c.b16 %v2657, %v2650
        %v3400 = vpack.c.b16 %v2658, %v2651
        %v3401 = vpack.c.b16 %v2659, %v2652
        %v3402 = vpack.c.b16 %v2667, %v2660
        %v3403 = vpack.c.b16 %v2668, %v2661
        %v3404 = vpack.c.b16 %v2669, %v2662
        %v3405 = vpack.c.b16 %v2670, %v2663
        %v3406 = vpack.c.b16 %v2671, %v2664
        %v3407 = vpack.c.b16 %v2672, %v2665
        %v3408 = vpack.c.b16 %v2673, %v2666
        %v3409 = vpack.c.b16 %v2681, %v2674
        %v3410 = vpack.c.b16 %v2682, %v2675
        %v3411 = vpack.c.b16 %v2683, %v2676
        %v3412 = vpack.c.b16 %v2684, %v2677
        %v3413 = vpack.c.b16 %v2685, %v2678
        %v3414 = vpack.c.b16 %v2686, %v2679
        %v3415 = vpack.c.b16 %v2687, %v2680
        %v3416 = vpack.c.b16 %v2695, %v2688
        %v3417 = vpack.c.b16 %v2696, %v2689
        %v3418 = vpack.c.b16 %v2697, %v2690
        %v3419 = vpack.c.b16 %v2698, %v2691
        %v3420 = vpack.c.b16 %v2699, %v2692
        %v3421 = vpack.c.b16 %v2700, %v2693
        %v3422 = vpack.c.b16 %v2701, %v2694
        %v3423 = vpack.c.b16 %v2709, %v2702
        %v3424 = vpack.c.b16 %v2710, %v2703
        %v3425 = vpack.c.b16 %v2711, %v2704
        %v3426 = vpack.c.b16 %v2712, %v2705
        %v3427 = vpack.c.b16 %v2713, %v2706
        %v3428 = vpack.c.b16 %v2714, %v2707
        %v3429 = vpack.c.b16 %v2715, %v2708
        %v3430 = vpack.c.b16 %v2723, %v2716
        %v3431 = vpack.c.b16 %v2724, %v2717
        %v3432 = vpack.c.b16 %v2725, %v2718
        %v3433 = vpack.c.b16 %v2726, %v2719
        %v3434 = vpack.c.b16 %v2727, %v2720
        %v3435 = vpack.c.b16 %v2728, %v2721
        %v3436 = vpack.c.b16 %v2729, %v2722
        %v3437 = vpack.c.b16 %v2737, %v2730
        %v3438 = vpack.c.b16 %v2738, %v2731
        %v3439 = vpack.c.b16 %v2739, %v2732
        %v3440 = vpack.c.b16 %v2740, %v2733
        %v3441 = vpack.c.b16 %v2741, %v2734
        %v3442 = vpack.c.b16 %v2742, %v2735
        %v3443 = vpack.c.b16 %v2743, %v2736
        %v3444 = vpack.c.b16 %v2751, %v2744
        %v3445 = vpack.c.b16 %v2752, %v2745
        %v3446 = vpack.c.b16 %v2753, %v2746
        %v3447 = vpack.c.b16 %v2754, %v2747
        %v3448 = vpack.c.b16 %v2755, %v2748
        %v3449 = vpack.c.b16 %v2756, %v2749
        %v3450 = vpack.c.b16 %v2757, %v2750
        %v3451 = vpack.c.b16 %v2765, %v2758
        %v3452 = vpack.c.b16 %v2766, %v2759
        %v3453 = vpack.c.b16 %v2767, %v2760
        %v3454 = vpack.c.b16 %v2768, %v2761
        %v3455 = vpack.c.b16 %v2769, %v2762
        %v3456 = vpack.c.b16 %v2770, %v2763
        %v3457 = vpack.c.b16 %v2771, %v2764
        %v3458 = vpack.c.b16 %v2779, %v2772
        %v3459 = vpack.c.b16 %v2780, %v2773
        %v3460 = vpack.c.b16 %v2781, %v2774
        %v3461 = vpack.c.b16 %v2782, %v2775
        %v3462 = vpack.c.b16 %v2783, %v2776
        %v3463 = vpack.c.b16 %v2784, %v2777
        %v3464 = vpack.c.b16 %v2785, %v2778
        %v3465 = vpack.c.b16 %v2793, %v2786
        %v3466 = vpack.c.b16 %v2794, %v2787
        %v3467 = vpack.c.b16 %v2795, %v2788
        %v3468 = vpack.c.b16 %v2796, %v2789
        %v3469 = vpack.c.b16 %v2797, %v2790
        %v3470 = vpack.c.b16 %v2798, %v2791
        %v3471 = vpack.c.b16 %v2799, %v2792
        %v3472 = vpack.c.b16 %v2807, %v2800
        %v3473 = vpack.c.b16 %v2808, %v2801
        %v3474 = vpack.c.b16 %v2809, %v2802
        %v3475 = vpack.c.b16 %v2810, %v2803
        %v3476 = vpack.c.b16 %v2811, %v2804
        %v3477 = vpack.c.b16 %v2812, %v2805
        %v3478 = vpack.c.b16 %v2813, %v2806
        %v3479 = vpack.c.b16 %v2821, %v2814
        %v3480 = vpack.c.b16 %v2822, %v2815
        %v3481 = vpack.c.b16 %v2823, %v2816
        %v3482 = vpack.c.b16 %v2824, %v2817
        %v3483 = vpack.c.b16 %v2825, %v2818
        %v3484 = vpack.c.b16 %v2826, %v2819
        %v3485 = vpack.c.b16 %v2827, %v2820
        %v3486 = vpack.c.b16 %v2835, %v2828
        %v3487 = vpack.c.b16 %v2836, %v2829
        %v3488 = vpack.c.b16 %v2837, %v2830
        %v3489 = vpack.c.b16 %v2838, %v2831
        %v3490 = vpack.c.b16 %v2839, %v2832
        %v3491 = vpack.c.b16 %v2840, %v2833
        %v3492 = vpack.c.b16 %v2841, %v2834
        %v3493 = vpack.c.b16 %v2849, %v2842
        %v3494 = vpack.c.b16 %v2850, %v2843
        %v3495 = vpack.c.b16 %v2851, %v2844
        %v3496 = vpack.c.b16 %v2852, %v2845
        %v3497 = vpack.c.b16 %v2853, %v2846
        %v3498 = vpack.c.b16 %v2854, %v2847
        %v3499 = vpack.c.b16 %v2855, %v2848
        %v3500 = vpack.c.b16 %v2863, %v2856
        %v3501 = vpack.c.b16 %v2864, %v2857
        %v3502 = vpack.c.b16 %v2865, %v2858
        %v3503 = vpack.c.b16 %v2866, %v2859
        %v3504 = vpack.c.b16 %v2867, %v2860
        %v3505 = vpack.c.b16 %v2868, %v2861
        %v3506 = vpack.c.b16 %v2869, %v2862
        %v3507 = vpack.c.b16 %v2877, %v2870
        %v3508 = vpack.c.b16 %v2878, %v2871
        %v3509 = vpack.c.b16 %v2879, %v2872
        %v3510 = vpack.c.b16 %v2880, %v2873
        %v3511 = vpack.c.b16 %v2881, %v2874
        %v3512 = vpack.c.b16 %v2882, %v2875
        %v3513 = vpack.c.b16 %v2883, %v2876
        %v3514 = vpack.c.b16 %v2891, %v2884
        %v3515 = vpack.c.b16 %v2892, %v2885
        %v3516 = vpack.c.b16 %v2893, %v2886
        %v3517 = vpack.c.b16 %v2894, %v2887
        %v3518 = vpack.c.b16 %v2895, %v2888
        %v3519 = vpack.c.b16 %v2896, %v2889
        %v3520 = vpack.c.b16 %v2897, %v2890
        %v3521 = vpack.c.b16 %v2905, %v2898
        %v3522 = vpack.c.b16 %v2906, %v2899
        %v3523 = vpack.c.b16 %v2907, %v2900
        %v3524 = vpack.c.b16 %v2908, %v2901
        %v3525 = vpack.c.b16 %v2909, %v2902
        %v3526 = vpack.c.b16 %v2910, %v2903
        %v3527 = vpack.c.b16 %v2911, %v2904
        %v3528 = vpack.c.b16 %v2919, %v2912
        %v3529 = vpack.c.b16 %v2920, %v2913
        %v3530 = vpack.c.b16 %v2921, %v2914
        %v3531 = vpack.c.b16 %v2922, %v2915
        %v3532 = vpack.c.b16 %v2923, %v2916
        %v3533 = vpack.c.b16 %v2924, %v2917
        %v3534 = vpack.c.b16 %v2925, %v2918
        %v3535 = vpack.c.b16 %v2933, %v2926
        %v3536 = vpack.c.b16 %v2934, %v2927
        %v3537 = vpack.c.b16 %v2935, %v2928
        %v3538 = vpack.c.b16 %v2936, %v2929
        %v3539 = vpack.c.b16 %v2937, %v2930
        %v3540 = vpack.c.b16 %v2938, %v2931
        %v3541 = vpack.c.b16 %v2939, %v2932
        %v3542 = vpack.c.b16 %v2947, %v2940
        %v3543 = vpack.c.b16 %v2948, %v2941
        %v3544 = vpack.c.b16 %v2949, %v2942
        %v3545 = vpack.c.b16 %v2950, %v2943
        %v3546 = vpack.c.b16 %v2951, %v2944
        %v3547 = vpack.c.b16 %v2952, %v2945
        %v3548 = vpack.c.b16 %v2953, %v2946
        %v3549 = vpack.c.b16 %v2961, %v2954
        %v3550 = vpack.c.b16 %v2962, %v2955
        %v3551 = vpack.c.b16 %v2963, %v2956
        %v3552 = vpack.c.b16 %v2964, %v2957
        %v3553 = vpack.c.b16 %v2965, %v2958
        %v3554 = vpack.c.b16 %v2966, %v2959
        %v3555 = vpack.c.b16 %v2967, %v2960
        %v3556 = vpack.c.b16 %v2975, %v2968
        %v3557 = vpack.c.b16 %v2976, %v2969
        %v3558 = vpack.c.b16 %v2977, %v2970
        %v3559 = vpack.c.b16 %v2978, %v2971
        %v3560 = vpack.c.b16 %v2979, %v2972
        %v3561 = vpack.c.b16 %v2980, %v2973
        %v3562 = vpack.c.b16 %v2981, %v2974
        %v3563 = vpack.c.b16 %v2989, %v2982
        %v3564 = vpack.c.b16 %v2990, %v2983
        %v3565 = vpack.c.b16 %v2991, %v2984
        %v3566 = vpack.c.b16 %v2992, %v2985
        %v3567 = vpack.c.b16 %v2993, %v2986
        %v3568 = vpack.c.b16 %v2994, %v2987
        %v3569 = vpack.c.b16 %v2995, %v2988
        %v3570 = vpack.c.b16 %v3003, %v2996
        %v3571 = vpack.c.b16 %v3004, %v2997
        %v3572 = vpack.c.b16 %v3005, %v2998
        %v3573 = vpack.c.b16 %v3006, %v2999
        %v3574 = vpack.c.b16 %v3007, %v3000
        %v3575 = vpack.c.b16 %v3008, %v3001
        %v3576 = vpack.c.b16 %v3009, %v3002
        %v3577 = vpack.c.b16 %v3017, %v3010
        %v3578 = vpack.c.b16 %v3018, %v3011
        %v3579 = vpack.c.b16 %v3019, %v3012
        %v3580 = vpack.c.b16 %v3020, %v3013
        %v3581 = vpack.c.b16 %v3021, %v3014
        %v3582 = vpack.c.b16 %v3022, %v3015
        %v3583 = vpack.c.b16 %v3023, %v3016
        %v3584 = vpack.c.b16 %v3031, %v3024
        %v3585 = vpack.c.b16 %v3032, %v3025
        %v3586 = vpack.c.b16 %v3033, %v3026
        %v3587 = vpack.c.b16 %v3034, %v3027
        %v3588 = vpack.c.b16 %v3035, %v3028
        %v3589 = vpack.c.b16 %v3036, %v3029
        %v3590 = vpack.c.b16 %v3037, %v3030
        %v3591 = vpack.c.b16 %v3045, %v3038
        %v3592 = vpack.c.b16 %v3046, %v3039
        %v3593 = vpack.c.b16 %v3047, %v3040
        %v3594 = vpack.c.b16 %v3048, %v3041
        %v3595 = vpack.c.b16 %v3049, %v3042
        %v3596 = vpack.c.b16 %v3050, %v3043
        %v3597 = vpack.c.b16 %v3051, %v3044
        %v3598 = vpack.c.b16 %v3059, %v3052
        %v3599 = vpack.c.b16 %v3060, %v3053
        %v3600 = vpack.c.b16 %v3061, %v3054
        %v3601 = vpack.c.b16 %v3062, %v3055
        %v3602 = vpack.c.b16 %v3063, %v3056
        %v3603 = vpack.c.b16 %v3064, %v3057
        %v3604 = vpack.c.b16 %v3065, %v3058
        %v3605 = vpack.c.b16 %v3073, %v3066
        %v3606 = vpack.c.b16 %v3074, %v3067
        %v3607 = vpack.c.b16 %v3075, %v3068
        %v3608 = vpack.c.b16 %v3076, %v3069
        %v3609 = vpack.c.b16 %v3077, %v3070
        %v3610 = vpack.c.b16 %v3078, %v3071
        %v3611 = vpack.c.b16 %v3079, %v3072
        %v3612 = vpack.c.b16 %v3087, %v3080
        %v3613 = vpack.c.b16 %v3088, %v3081
        %v3614 = vpack.c.b16 %v3089, %v3082
        %v3615 = vpack.c.b16 %v3090, %v3083
        %v3616 = vpack.c.b16 %v3091, %v3084
        %v3617 = vpack.c.b16 %v3092, %v3085
        %v3618 = vpack.c.b16 %v3093, %v3086
        %v3619 = vpack.c.b16 %v3101, %v3094
        %v3620 = vpack.c.b16 %v3102, %v3095
        %v3621 = vpack.c.b16 %v3103, %v3096
        %v3622 = vpack.c.b16 %v3104, %v3097
        %v3623 = vpack.c.b16 %v3105, %v3098
        %v3624 = vpack.c.b16 %v3106, %v3099
        %v3625 = vpack.c.b16 %v3107, %v3100
        %v3626 = vpack.c.b16 %v3115, %v3108
        %v3627 = vpack.c.b16 %v3116, %v3109
        %v3628 = vpack.c.b16 %v3117, %v3110
        %v3629 = vpack.c.b16 %v3118, %v3111
        %v3630 = vpack.c.b16 %v3119, %v3112
        %v3631 = vpack.c.b16 %v3120, %v3113
        %v3632 = vpack.c.b16 %v3121, %v3114
        %v3633 = vpack.c.b16 %v3129, %v3122
        %v3634 = vpack.c.b16 %v3130, %v3123
        %v3635 = vpack.c.b16 %v3131, %v3124
        %v3636 = vpack.c.b16 %v3132, %v3125
        %v3637 = vpack.c.b16 %v3133, %v3126
        %v3638 = vpack.c.b16 %v3134, %v3127
        %v3639 = vpack.c.b16 %v3135, %v3128
        %v3640 = vpack.c.b16 %v3143, %v3136
        %v3641 = vpack.c.b16 %v3144, %v3137
        %v3642 = vpack.c.b16 %v3145, %v3138
        %v3643 = vpack.c.b16 %v3146, %v3139
        %v3644 = vpack.c.b16 %v3147, %v3140
        %v3645 = vpack.c.b16 %v3148, %v3141
        %v3646 = vpack.c.b16 %v3149, %v3142
        %v3647 = vpack.c.b16 %v3157, %v3150
        %v3648 = vpack.c.b16 %v3158, %v3151
        %v3649 = vpack.c.b16 %v3159, %v3152
        %v3650 = vpack.c.b16 %v3160, %v3153
        %v3651 = vpack.c.b16 %v3161, %v3154
        %v3652 = vpack.c.b16 %v3162, %v3155
        %v3653 = vpack.c.b16 %v3163, %v3156
        %v3654 = vpack.c.b16 %v3171, %v3164
        %v3655 = vpack.c.b16 %v3172, %v3165
        %v3656 = vpack.c.b16 %v3173, %v3166
        %v3657 = vpack.c.b16 %v3174, %v3167
        %v3658 = vpack.c.b16 %v3175, %v3168
        %v3659 = vpack.c.b16 %v3176, %v3169
        %v3660 = vpack.c.b16 %v3177, %v3170
        %v3661 = vpack.c.b16 %v3185, %v3178
        %v3662 = vpack.c.b16 %v3186, %v3179
        %v3663 = vpack.c.b16 %v3187, %v3180
        %v3664 = vpack.c.b16 %v3188, %v3181
        %v3665 = vpack.c.b16 %v3189, %v3182
        %v3666 = vpack.c.b16 %v3190, %v3183
        %v3667 = vpack.c.b16 %v3191, %v3184
        %v3668 = vpack.c.b16 %v3199, %v3192
        %v3669 = vpack.c.b16 %v3200, %v3193
        %v3670 = vpack.c.b16 %v3201, %v3194
        %v3671 = vpack.c.b16 %v3202, %v3195
        %v3672 = vpack.c.b16 %v3203, %v3196
        %v3673 = vpack.c.b16 %v3204, %v3197
        %v3674 = vpack.c.b16 %v3205, %v3198
        %v3675 = vpack.c.b16 %v3213, %v3206
        %v3676 = vpack.c.b16 %v3214, %v3207
        %v3677 = vpack.c.b16 %v3215, %v3208
        %v3678 = vpack.c.b16 %v3216, %v3209
        %v3679 = vpack.c.b16 %v3217, %v3210
        %v3680 = vpack.c.b16 %v3218, %v3211
        %v3681 = vpack.c.b16 %v3219, %v3212
        %v3682 = vpack.c.b16 %v3227, %v3220
        %v3683 = vpack.c.b16 %v3228, %v3221
        %v3684 = vpack.c.b16 %v3229, %v3222
        %v3685 = vpack.c.b16 %v3230, %v3223
        %v3686 = vpack.c.b16 %v3231, %v3224
        %v3687 = vpack.c.b16 %v3232, %v3225
        %v3688 = vpack.c.b16 %v3233, %v3226
        %v3689 = vpack.c.b16 %v3241, %v3234
        %v3690 = vpack.c.b16 %v3242, %v3235
        %v3691 = vpack.c.b16 %v3243, %v3236
        %v3692 = vpack.c.b16 %v3244, %v3237
        %v3693 = vpack.c.b16 %v3245, %v3238
        %v3694 = vpack.c.b16 %v3246, %v3239
        %v3695 = vpack.c.b16 %v3247, %v3240
        %4144 = vmatprep.subr.bf16.mxu0 %v3298
        %4145 = vmatpush1.bf16.msra.mxu0 %v3297
        %4146 = vmatprep.subr.bf16.mxu0 %v3291
        %4147 = vmatpush1.bf16.msra.mxu0 %v3290
        %4148 = vmatprep.subr.bf16.mxu0 %v3284
        %4149 = vmatpush1.bf16.msra.mxu0 %v3283
        %4150 = vmatprep.subr.bf16.mxu0 %v3277
        %4151 = vmatpush1.bf16.msra.mxu0 %v3276
        %4152 = vmatprep.subr.bf16.mxu0 %v3270
        %4153 = vmatpush1.bf16.msra.mxu0 %v3269
        %4154 = vmatprep.subr.bf16.mxu0 %v3263
        %4155 = vmatpush1.bf16.msra.mxu0 %v3262
        %4156 = vmatprep.subr.bf16.mxu0 %v3256
        %4157 = vmatpush1.bf16.msra.mxu0 %v3255
        %4158 = vmatprep.subr.bf16.mxu0 %v3249
        %4159 = vmatpush1.bf16.msra.mxu0 %v3248
        %4160 = vmatprep.subr.bf16.mxu0 %v3354
        %4161 = vmatpush2.bf16.msra.mxu0 %v3353
        %4162 = vmatprep.subr.bf16.mxu0 %v3347
        %4163 = vmatpush2.bf16.msra.mxu0 %v3346
        %4164 = vmatprep.subr.bf16.mxu0 %v3340
        %4165 = vmatpush2.bf16.msra.mxu0 %v3339
        %4166 = vmatprep.subr.bf16.mxu0 %v3333
        %4167 = vmatpush2.bf16.msra.mxu0 %v3332
        %4168 = vmatprep.subr.bf16.mxu0 %v3326
        %4169 = vmatpush2.bf16.msra.mxu0 %v3325
        %4170 = vmatprep.subr.bf16.mxu0 %v3319
        %4171 = vmatpush2.bf16.msra.mxu0 %v3318
        %4172 = vmatprep.subr.bf16.mxu0 %v3312
        %4173 = vmatpush2.bf16.msra.mxu0 %v3311
        %4174 = vmatprep.subr.bf16.mxu0 %v3305
        %4175 = vmatpush2.bf16.msra.mxu0 %v3304
        %4176 = vmatprep.mubr.bf16.mxu0 %v1321
        %4177 = vmatmul.mubr.bf16.gmra.mxu0 %v1320
        %v4178 = vpop.f32.mrf.mxu0
        %v4179 = vadd.f32 0.0, %v4178
        %v4180 = vpop.f32.mrf.mxu0
        %v4181 = vadd.f32 0.0, %v4180
        %v4182 = vpop.f32.mrf.mxu0
        %v4183 = vpop.f32.mrf.mxu0
        %4184 = vdwg.mxu0
        %4185 = vmatprep.subr.bf16.mxu0 %v3410
        %4186 = vmatpush1.bf16.msra.mxu0 %v3409
        %4187 = vmatprep.subr.bf16.mxu0 %v3403
        %4188 = vmatpush1.bf16.msra.mxu0 %v3402
        %4189 = vmatprep.subr.bf16.mxu0 %v3396
        %4190 = vmatpush1.bf16.msra.mxu0 %v3395
        %4191 = vmatprep.subr.bf16.mxu0 %v3389
        %4192 = vmatpush1.bf16.msra.mxu0 %v3388
        %4193 = vmatprep.subr.bf16.mxu0 %v3382
        %4194 = vmatpush1.bf16.msra.mxu0 %v3381
        %4195 = vmatprep.subr.bf16.mxu0 %v3375
        %4196 = vmatpush1.bf16.msra.mxu0 %v3374
        %4197 = vmatprep.subr.bf16.mxu0 %v3368
        %4198 = vmatpush1.bf16.msra.mxu0 %v3367
        %4199 = vmatprep.subr.bf16.mxu0 %v3361
        %4200 = vmatpush1.bf16.msra.mxu0 %v3360
        %4201 = vmatprep.subr.bf16.mxu0 %v3466
        %4202 = vmatpush2.bf16.msra.mxu0 %v3465
        %4203 = vmatprep.subr.bf16.mxu0 %v3459
        %4204 = vmatpush2.bf16.msra.mxu0 %v3458
        %4205 = vmatprep.subr.bf16.mxu0 %v3452
        %4206 = vmatpush2.bf16.msra.mxu0 %v3451
        %4207 = vmatprep.subr.bf16.mxu0 %v3445
        %4208 = vmatpush2.bf16.msra.mxu0 %v3444
        %4209 = vmatprep.subr.bf16.mxu0 %v3438
        %4210 = vmatpush2.bf16.msra.mxu0 %v3437
        %4211 = vmatprep.subr.bf16.mxu0 %v3431
        %4212 = vmatpush2.bf16.msra.mxu0 %v3430
        %4213 = vmatprep.subr.bf16.mxu0 %v3424
        %4214 = vmatpush2.bf16.msra.mxu0 %v3423
        %4215 = vmatprep.subr.bf16.mxu0 %v3417
        %4216 = vmatpush2.bf16.msra.mxu0 %v3416
        %4217 = vmatprep.mubr.bf16.mxu0 %v1323
        %4218 = vmatmul.mubr.bf16.gmra.mxu0 %v1322
        %v4219 = vpop.f32.mrf.mxu0
        %v4220 = vadd.f32 %v4179, %v4219
        %v4221 = vpop.f32.mrf.mxu0
        %v4222 = vadd.f32 %v4181, %v4221
        %v4223 = vpop.f32.mrf.mxu0
        %v4224 = vpop.f32.mrf.mxu0
        %4225 = vdwg.mxu0
        %4226 = vmatprep.subr.bf16.mxu0 %v3522
        %4227 = vmatpush1.bf16.msra.mxu0 %v3521
        %4228 = vmatprep.subr.bf16.mxu0 %v3515
        %4229 = vmatpush1.bf16.msra.mxu0 %v3514
        %4230 = vmatprep.subr.bf16.mxu0 %v3508
        %4231 = vmatpush1.bf16.msra.mxu0 %v3507
        %4232 = vmatprep.subr.bf16.mxu0 %v3501
        %4233 = vmatpush1.bf16.msra.mxu0 %v3500
        %4234 = vmatprep.subr.bf16.mxu0 %v3494
        %4235 = vmatpush1.bf16.msra.mxu0 %v3493
        %4236 = vmatprep.subr.bf16.mxu0 %v3487
        %4237 = vmatpush1.bf16.msra.mxu0 %v3486
        %4238 = vmatprep.subr.bf16.mxu0 %v3480
        %4239 = vmatpush1.bf16.msra.mxu0 %v3479
        %4240 = vmatprep.subr.bf16.mxu0 %v3473
        %4241 = vmatpush1.bf16.msra.mxu0 %v3472
        %4242 = vmatprep.subr.bf16.mxu0 %v3578
        %4243 = vmatpush2.bf16.msra.mxu0 %v3577
        %4244 = vmatprep.subr.bf16.mxu0 %v3571
        %4245 = vmatpush2.bf16.msra.mxu0 %v3570
        %4246 = vmatprep.subr.bf16.mxu0 %v3564
        %4247 = vmatpush2.bf16.msra.mxu0 %v3563
        %4248 = vmatprep.subr.bf16.mxu0 %v3557
        %4249 = vmatpush2.bf16.msra.mxu0 %v3556
        %4250 = vmatprep.subr.bf16.mxu0 %v3550
        %4251 = vmatpush2.bf16.msra.mxu0 %v3549
        %4252 = vmatprep.subr.bf16.mxu0 %v3543
        %4253 = vmatpush2.bf16.msra.mxu0 %v3542
        %4254 = vmatprep.subr.bf16.mxu0 %v3536
        %4255 = vmatpush2.bf16.msra.mxu0 %v3535
        %4256 = vmatprep.subr.bf16.mxu0 %v3529
        %4257 = vmatpush2.bf16.msra.mxu0 %v3528
        %4258 = vmatprep.mubr.bf16.mxu0 %v1325
        %4259 = vmatmul.mubr.bf16.gmra.mxu0 %v1324
        %v4260 = vpop.f32.mrf.mxu0
        %v4261 = vadd.f32 %v4220, %v4260
        %v4262 = vpop.f32.mrf.mxu0
        %v4263 = vadd.f32 %v4222, %v4262
        %v4264 = vpop.f32.mrf.mxu0
        %v4265 = vpop.f32.mrf.mxu0
        %4266 = vdwg.mxu0
        %4267 = vmatprep.subr.bf16.mxu0 %v3634
        %4268 = vmatpush1.bf16.msra.mxu0 %v3633
        %4269 = vmatprep.subr.bf16.mxu0 %v3627
        %4270 = vmatpush1.bf16.msra.mxu0 %v3626
        %4271 = vmatprep.subr.bf16.mxu0 %v3620
        %4272 = vmatpush1.bf16.msra.mxu0 %v3619
        %4273 = vmatprep.subr.bf16.mxu0 %v3613
        %4274 = vmatpush1.bf16.msra.mxu0 %v3612
        %4275 = vmatprep.subr.bf16.mxu0 %v3606
        %4276 = vmatpush1.bf16.msra.mxu0 %v3605
        %4277 = vmatprep.subr.bf16.mxu0 %v3599
        %4278 = vmatpush1.bf16.msra.mxu0 %v3598
        %4279 = vmatprep.subr.bf16.mxu0 %v3592
        %4280 = vmatpush1.bf16.msra.mxu0 %v3591
        %4281 = vmatprep.subr.bf16.mxu0 %v3585
        %4282 = vmatpush1.bf16.msra.mxu0 %v3584
        %4283 = vmatprep.subr.bf16.mxu0 %v3690
        %4284 = vmatpush2.bf16.msra.mxu0 %v3689
        %4285 = vmatprep.subr.bf16.mxu0 %v3683
        %4286 = vmatpush2.bf16.msra.mxu0 %v3682
        %4287 = vmatprep.subr.bf16.mxu0 %v3676
        %4288 = vmatpush2.bf16.msra.mxu0 %v3675
        %4289 = vmatprep.subr.bf16.mxu0 %v3669
        %4290 = vmatpush2.bf16.msra.mxu0 %v3668
        %4291 = vmatprep.subr.bf16.mxu0 %v3662
        %4292 = vmatpush2.bf16.msra.mxu0 %v3661
        %4293 = vmatprep.subr.bf16.mxu0 %v3655
        %4294 = vmatpush2.bf16.msra.mxu0 %v3654
        %4295 = vmatprep.subr.bf16.mxu0 %v3648
        %4296 = vmatpush2.bf16.msra.mxu0 %v3647
        %4297 = vmatprep.subr.bf16.mxu0 %v3641
        %4298 = vmatpush2.bf16.msra.mxu0 %v3640
        %4299 = vmatprep.mubr.bf16.mxu0 %v1327
        %4300 = vmatmul.mubr.bf16.gmra.mxu0 %v1326
        %v4301 = vpop.f32.mrf.mxu0
        %v4302 = vadd.f32 %v4261, %v4301
        %v4303 = vpop.f32.mrf.mxu0
        %v4304 = vadd.f32 %v4263, %v4303
        %v4305 = vpop.f32.mrf.mxu0
        %v4306 = vpop.f32.mrf.mxu0
        %4307 = vdwg.mxu0
        %4308 = vmatprep.subr.bf16.mxu0 %v3300
        %4309 = vmatpush1.bf16.msra.mxu0 %v3299
        %4310 = vmatprep.subr.bf16.mxu0 %v3293
        %4311 = vmatpush1.bf16.msra.mxu0 %v3292
        %4312 = vmatprep.subr.bf16.mxu0 %v3286
        %4313 = vmatpush1.bf16.msra.mxu0 %v3285
        %4314 = vmatprep.subr.bf16.mxu0 %v3279
        %4315 = vmatpush1.bf16.msra.mxu0 %v3278
        %4316 = vmatprep.subr.bf16.mxu0 %v3272
        %4317 = vmatpush1.bf16.msra.mxu0 %v3271
        %4318 = vmatprep.subr.bf16.mxu0 %v3265
        %4319 = vmatpush1.bf16.msra.mxu0 %v3264
        %4320 = vmatprep.subr.bf16.mxu0 %v3258
        %4321 = vmatpush1.bf16.msra.mxu0 %v3257
        %4322 = vmatprep.subr.bf16.mxu0 %v3251
        %4323 = vmatpush1.bf16.msra.mxu0 %v3250
        %4324 = vmatprep.subr.bf16.mxu0 %v3356
        %4325 = vmatpush2.bf16.msra.mxu0 %v3355
        %4326 = vmatprep.subr.bf16.mxu0 %v3349
        %4327 = vmatpush2.bf16.msra.mxu0 %v3348
        %4328 = vmatprep.subr.bf16.mxu0 %v3342
        %4329 = vmatpush2.bf16.msra.mxu0 %v3341
        %4330 = vmatprep.subr.bf16.mxu0 %v3335
        %4331 = vmatpush2.bf16.msra.mxu0 %v3334
        %4332 = vmatprep.subr.bf16.mxu0 %v3328
        %4333 = vmatpush2.bf16.msra.mxu0 %v3327
        %4334 = vmatprep.subr.bf16.mxu0 %v3321
        %4335 = vmatpush2.bf16.msra.mxu0 %v3320
        %4336 = vmatprep.subr.bf16.mxu0 %v3314
        %4337 = vmatpush2.bf16.msra.mxu0 %v3313
        %4338 = vmatprep.subr.bf16.mxu0 %v3307
        %4339 = vmatpush2.bf16.msra.mxu0 %v3306
        %4340 = vmatprep.mubr.bf16.mxu0 %v1321
        %4341 = vmatmul.mubr.bf16.gmra.mxu0 %v1320
        %v4342 = vpop.f32.mrf.mxu0
        %v4343 = vadd.f32 0.0, %v4342
        %v4344 = vpop.f32.mrf.mxu0
        %v4345 = vadd.f32 0.0, %v4344
        %v4346 = vpop.f32.mrf.mxu0
        %v4347 = vpop.f32.mrf.mxu0
        %4348 = vdwg.mxu0
        %4349 = vmatprep.subr.bf16.mxu0 %v3412
        %4350 = vmatpush1.bf16.msra.mxu0 %v3411
        %4351 = vmatprep.subr.bf16.mxu0 %v3405
        %4352 = vmatpush1.bf16.msra.mxu0 %v3404
        %4353 = vmatprep.subr.bf16.mxu0 %v3398
        %4354 = vmatpush1.bf16.msra.mxu0 %v3397
        %4355 = vmatprep.subr.bf16.mxu0 %v3391
        %4356 = vmatpush1.bf16.msra.mxu0 %v3390
        %4357 = vmatprep.subr.bf16.mxu0 %v3384
        %4358 = vmatpush1.bf16.msra.mxu0 %v3383
        %4359 = vmatprep.subr.bf16.mxu0 %v3377
        %4360 = vmatpush1.bf16.msra.mxu0 %v3376
        %4361 = vmatprep.subr.bf16.mxu0 %v3370
        %4362 = vmatpush1.bf16.msra.mxu0 %v3369
        %4363 = vmatprep.subr.bf16.mxu0 %v3363
        %4364 = vmatpush1.bf16.msra.mxu0 %v3362
        %4365 = vmatprep.subr.bf16.mxu0 %v3468
        %4366 = vmatpush2.bf16.msra.mxu0 %v3467
        %4367 = vmatprep.subr.bf16.mxu0 %v3461
        %4368 = vmatpush2.bf16.msra.mxu0 %v3460
        %4369 = vmatprep.subr.bf16.mxu0 %v3454
        %4370 = vmatpush2.bf16.msra.mxu0 %v3453
        %4371 = vmatprep.subr.bf16.mxu0 %v3447
        %4372 = vmatpush2.bf16.msra.mxu0 %v3446
        %4373 = vmatprep.subr.bf16.mxu0 %v3440
        %4374 = vmatpush2.bf16.msra.mxu0 %v3439
        %4375 = vmatprep.subr.bf16.mxu0 %v3433
        %4376 = vmatpush2.bf16.msra.mxu0 %v3432
        %4377 = vmatprep.subr.bf16.mxu0 %v3426
        %4378 = vmatpush2.bf16.msra.mxu0 %v3425
        %4379 = vmatprep.subr.bf16.mxu0 %v3419
        %4380 = vmatpush2.bf16.msra.mxu0 %v3418
        %4381 = vmatprep.mubr.bf16.mxu0 %v1323
        %4382 = vmatmul.mubr.bf16.gmra.mxu0 %v1322
        %v4383 = vpop.f32.mrf.mxu0
        %v4384 = vadd.f32 %v4343, %v4383
        %v4385 = vpop.f32.mrf.mxu0
        %v4386 = vadd.f32 %v4345, %v4385
        %v4387 = vpop.f32.mrf.mxu0
        %v4388 = vpop.f32.mrf.mxu0
        %4389 = vdwg.mxu0
        %4390 = vmatprep.subr.bf16.mxu0 %v3524
        %4391 = vmatpush1.bf16.msra.mxu0 %v3523
        %4392 = vmatprep.subr.bf16.mxu0 %v3517
        %4393 = vmatpush1.bf16.msra.mxu0 %v3516
        %4394 = vmatprep.subr.bf16.mxu0 %v3510
        %4395 = vmatpush1.bf16.msra.mxu0 %v3509
        %4396 = vmatprep.subr.bf16.mxu0 %v3503
        %4397 = vmatpush1.bf16.msra.mxu0 %v3502
        %4398 = vmatprep.subr.bf16.mxu0 %v3496
        %4399 = vmatpush1.bf16.msra.mxu0 %v3495
        %4400 = vmatprep.subr.bf16.mxu0 %v3489
        %4401 = vmatpush1.bf16.msra.mxu0 %v3488
        %4402 = vmatprep.subr.bf16.mxu0 %v3482
        %4403 = vmatpush1.bf16.msra.mxu0 %v3481
        %4404 = vmatprep.subr.bf16.mxu0 %v3475
        %4405 = vmatpush1.bf16.msra.mxu0 %v3474
        %4406 = vmatprep.subr.bf16.mxu0 %v3580
        %4407 = vmatpush2.bf16.msra.mxu0 %v3579
        %4408 = vmatprep.subr.bf16.mxu0 %v3573
        %4409 = vmatpush2.bf16.msra.mxu0 %v3572
        %4410 = vmatprep.subr.bf16.mxu0 %v3566
        %4411 = vmatpush2.bf16.msra.mxu0 %v3565
        %4412 = vmatprep.subr.bf16.mxu0 %v3559
        %4413 = vmatpush2.bf16.msra.mxu0 %v3558
        %4414 = vmatprep.subr.bf16.mxu0 %v3552
        %4415 = vmatpush2.bf16.msra.mxu0 %v3551
        %4416 = vmatprep.subr.bf16.mxu0 %v3545
        %4417 = vmatpush2.bf16.msra.mxu0 %v3544
        %4418 = vmatprep.subr.bf16.mxu0 %v3538
        %4419 = vmatpush2.bf16.msra.mxu0 %v3537
        %4420 = vmatprep.subr.bf16.mxu0 %v3531
        %4421 = vmatpush2.bf16.msra.mxu0 %v3530
        %4422 = vmatprep.mubr.bf16.mxu0 %v1325
        %4423 = vmatmul.mubr.bf16.gmra.mxu0 %v1324
        %v4424 = vpop.f32.mrf.mxu0
        %v4425 = vadd.f32 %v4384, %v4424
        %v4426 = vpop.f32.mrf.mxu0
        %v4427 = vadd.f32 %v4386, %v4426
        %v4428 = vpop.f32.mrf.mxu0
        %v4429 = vpop.f32.mrf.mxu0
        %4430 = vdwg.mxu0
        %4431 = vmatprep.subr.bf16.mxu0 %v3636
        %4432 = vmatpush1.bf16.msra.mxu0 %v3635
        %4433 = vmatprep.subr.bf16.mxu0 %v3629
        %4434 = vmatpush1.bf16.msra.mxu0 %v3628
        %4435 = vmatprep.subr.bf16.mxu0 %v3622
        %4436 = vmatpush1.bf16.msra.mxu0 %v3621
        %4437 = vmatprep.subr.bf16.mxu0 %v3615
        %4438 = vmatpush1.bf16.msra.mxu0 %v3614
        %4439 = vmatprep.subr.bf16.mxu0 %v3608
        %4440 = vmatpush1.bf16.msra.mxu0 %v3607
        %4441 = vmatprep.subr.bf16.mxu0 %v3601
        %4442 = vmatpush1.bf16.msra.mxu0 %v3600
        %4443 = vmatprep.subr.bf16.mxu0 %v3594
        %4444 = vmatpush1.bf16.msra.mxu0 %v3593
        %4445 = vmatprep.subr.bf16.mxu0 %v3587
        %4446 = vmatpush1.bf16.msra.mxu0 %v3586
        %4447 = vmatprep.subr.bf16.mxu0 %v3692
        %4448 = vmatpush2.bf16.msra.mxu0 %v3691
        %4449 = vmatprep.subr.bf16.mxu0 %v3685
        %4450 = vmatpush2.bf16.msra.mxu0 %v3684
        %4451 = vmatprep.subr.bf16.mxu0 %v3678
        %4452 = vmatpush2.bf16.msra.mxu0 %v3677
        %4453 = vmatprep.subr.bf16.mxu0 %v3671
        %4454 = vmatpush2.bf16.msra.mxu0 %v3670
        %4455 = vmatprep.subr.bf16.mxu0 %v3664
        %4456 = vmatpush2.bf16.msra.mxu0 %v3663
        %4457 = vmatprep.subr.bf16.mxu0 %v3657
        %4458 = vmatpush2.bf16.msra.mxu0 %v3656
        %4459 = vmatprep.subr.bf16.mxu0 %v3650
        %4460 = vmatpush2.bf16.msra.mxu0 %v3649
        %4461 = vmatprep.subr.bf16.mxu0 %v3643
        %4462 = vmatpush2.bf16.msra.mxu0 %v3642
        %4463 = vmatprep.mubr.bf16.mxu0 %v1327
        %4464 = vmatmul.mubr.bf16.gmra.mxu0 %v1326
        %v4465 = vpop.f32.mrf.mxu0
        %v4466 = vadd.f32 %v4425, %v4465
        %v4467 = vpop.f32.mrf.mxu0
        %v4468 = vadd.f32 %v4427, %v4467
        %v4469 = vpop.f32.mrf.mxu0
        %v4470 = vpop.f32.mrf.mxu0
        %4471 = vdwg.mxu0
        %4472 = vmatprep.subr.bf16.mxu0 %v3302
        %4473 = vmatpush1.bf16.msra.mxu0 %v3301
        %4474 = vmatprep.subr.bf16.mxu0 %v3295
        %4475 = vmatpush1.bf16.msra.mxu0 %v3294
        %4476 = vmatprep.subr.bf16.mxu0 %v3288
        %4477 = vmatpush1.bf16.msra.mxu0 %v3287
        %4478 = vmatprep.subr.bf16.mxu0 %v3281
        %4479 = vmatpush1.bf16.msra.mxu0 %v3280
        %4480 = vmatprep.subr.bf16.mxu0 %v3274
        %4481 = vmatpush1.bf16.msra.mxu0 %v3273
        %4482 = vmatprep.subr.bf16.mxu0 %v3267
        %4483 = vmatpush1.bf16.msra.mxu0 %v3266
        %4484 = vmatprep.subr.bf16.mxu0 %v3260
        %4485 = vmatpush1.bf16.msra.mxu0 %v3259
        %4486 = vmatprep.subr.bf16.mxu0 %v3253
        %4487 = vmatpush1.bf16.msra.mxu0 %v3252
        %4488 = vmatprep.subr.bf16.mxu0 %v3358
        %4489 = vmatpush2.bf16.msra.mxu0 %v3357
        %4490 = vmatprep.subr.bf16.mxu0 %v3351
        %4491 = vmatpush2.bf16.msra.mxu0 %v3350
        %4492 = vmatprep.subr.bf16.mxu0 %v3344
        %4493 = vmatpush2.bf16.msra.mxu0 %v3343
        %4494 = vmatprep.subr.bf16.mxu0 %v3337
        %4495 = vmatpush2.bf16.msra.mxu0 %v3336
        %4496 = vmatprep.subr.bf16.mxu0 %v3330
        %4497 = vmatpush2.bf16.msra.mxu0 %v3329
        %4498 = vmatprep.subr.bf16.mxu0 %v3323
        %4499 = vmatpush2.bf16.msra.mxu0 %v3322
        %4500 = vmatprep.subr.bf16.mxu0 %v3316
        %4501 = vmatpush2.bf16.msra.mxu0 %v3315
        %4502 = vmatprep.subr.bf16.mxu0 %v3309
        %4503 = vmatpush2.bf16.msra.mxu0 %v3308
        %4504 = vmatprep.mubr.bf16.mxu0 %v1321
        %4505 = vmatmul.mubr.bf16.gmra.mxu0 %v1320
        %v4506 = vpop.f32.mrf.mxu0
        %v4507 = vadd.f32 0.0, %v4506
        %v4508 = vpop.f32.mrf.mxu0
        %v4509 = vadd.f32 0.0, %v4508
        %v4510 = vpop.f32.mrf.mxu0
        %v4511 = vpop.f32.mrf.mxu0
        %4512 = vdwg.mxu0
        %4513 = vmatprep.subr.bf16.mxu0 %v3414
        %4514 = vmatpush1.bf16.msra.mxu0 %v3413
        %4515 = vmatprep.subr.bf16.mxu0 %v3407
        %4516 = vmatpush1.bf16.msra.mxu0 %v3406
        %4517 = vmatprep.subr.bf16.mxu0 %v3400
        %4518 = vmatpush1.bf16.msra.mxu0 %v3399
        %4519 = vmatprep.subr.bf16.mxu0 %v3393
        %4520 = vmatpush1.bf16.msra.mxu0 %v3392
        %4521 = vmatprep.subr.bf16.mxu0 %v3386
        %4522 = vmatpush1.bf16.msra.mxu0 %v3385
        %4523 = vmatprep.subr.bf16.mxu0 %v3379
        %4524 = vmatpush1.bf16.msra.mxu0 %v3378
        %4525 = vmatprep.subr.bf16.mxu0 %v3372
        %4526 = vmatpush1.bf16.msra.mxu0 %v3371
        %4527 = vmatprep.subr.bf16.mxu0 %v3365
        %4528 = vmatpush1.bf16.msra.mxu0 %v3364
        %4529 = vmatprep.subr.bf16.mxu0 %v3470
        %4530 = vmatpush2.bf16.msra.mxu0 %v3469
        %4531 = vmatprep.subr.bf16.mxu0 %v3463
        %4532 = vmatpush2.bf16.msra.mxu0 %v3462
        %4533 = vmatprep.subr.bf16.mxu0 %v3456
        %4534 = vmatpush2.bf16.msra.mxu0 %v3455
        %4535 = vmatprep.subr.bf16.mxu0 %v3449
        %4536 = vmatpush2.bf16.msra.mxu0 %v3448
        %4537 = vmatprep.subr.bf16.mxu0 %v3442
        %4538 = vmatpush2.bf16.msra.mxu0 %v3441
        %4539 = vmatprep.subr.bf16.mxu0 %v3435
        %4540 = vmatpush2.bf16.msra.mxu0 %v3434
        %4541 = vmatprep.subr.bf16.mxu0 %v3428
        %4542 = vmatpush2.bf16.msra.mxu0 %v3427
        %4543 = vmatprep.subr.bf16.mxu0 %v3421
        %4544 = vmatpush2.bf16.msra.mxu0 %v3420
        %4545 = vmatprep.mubr.bf16.mxu0 %v1323
        %4546 = vmatmul.mubr.bf16.gmra.mxu0 %v1322
        %v4547 = vpop.f32.mrf.mxu0
        %v4548 = vadd.f32 %v4507, %v4547
        %v4549 = vpop.f32.mrf.mxu0
        %v4550 = vadd.f32 %v4509, %v4549
        %v4551 = vpop.f32.mrf.mxu0
        %v4552 = vpop.f32.mrf.mxu0
        %4553 = vdwg.mxu0
        %4554 = vmatprep.subr.bf16.mxu0 %v3526
        %4555 = vmatpush1.bf16.msra.mxu0 %v3525
        %4556 = vmatprep.subr.bf16.mxu0 %v3519
        %4557 = vmatpush1.bf16.msra.mxu0 %v3518
        %4558 = vmatprep.subr.bf16.mxu0 %v3512
        %4559 = vmatpush1.bf16.msra.mxu0 %v3511
        %4560 = vmatprep.subr.bf16.mxu0 %v3505
        %4561 = vmatpush1.bf16.msra.mxu0 %v3504
        %4562 = vmatprep.subr.bf16.mxu0 %v3498
        %4563 = vmatpush1.bf16.msra.mxu0 %v3497
        %4564 = vmatprep.subr.bf16.mxu0 %v3491
        %4565 = vmatpush1.bf16.msra.mxu0 %v3490
        %4566 = vmatprep.subr.bf16.mxu0 %v3484
        %4567 = vmatpush1.bf16.msra.mxu0 %v3483
        %4568 = vmatprep.subr.bf16.mxu0 %v3477
        %4569 = vmatpush1.bf16.msra.mxu0 %v3476
        %4570 = vmatprep.subr.bf16.mxu0 %v3582
        %4571 = vmatpush2.bf16.msra.mxu0 %v3581
        %4572 = vmatprep.subr.bf16.mxu0 %v3575
        %4573 = vmatpush2.bf16.msra.mxu0 %v3574
        %4574 = vmatprep.subr.bf16.mxu0 %v3568
        %4575 = vmatpush2.bf16.msra.mxu0 %v3567
        %4576 = vmatprep.subr.bf16.mxu0 %v3561
        %4577 = vmatpush2.bf16.msra.mxu0 %v3560
        %4578 = vmatprep.subr.bf16.mxu0 %v3554
        %4579 = vmatpush2.bf16.msra.mxu0 %v3553
        %4580 = vmatprep.subr.bf16.mxu0 %v3547
        %4581 = vmatpush2.bf16.msra.mxu0 %v3546
        %4582 = vmatprep.subr.bf16.mxu0 %v3540
        %4583 = vmatpush2.bf16.msra.mxu0 %v3539
        %4584 = vmatprep.subr.bf16.mxu0 %v3533
        %4585 = vmatpush2.bf16.msra.mxu0 %v3532
        %4586 = vmatprep.mubr.bf16.mxu0 %v1325
        %4587 = vmatmul.mubr.bf16.gmra.mxu0 %v1324
        %v4588 = vpop.f32.mrf.mxu0
        %v4589 = vadd.f32 %v4548, %v4588
        %v4590 = vpop.f32.mrf.mxu0
        %v4591 = vadd.f32 %v4550, %v4590
        %v4592 = vpop.f32.mrf.mxu0
        %v4593 = vpop.f32.mrf.mxu0
        %4594 = vdwg.mxu0
        %4595 = vmatprep.subr.bf16.mxu0 %v3638
        %4596 = vmatpush1.bf16.msra.mxu0 %v3637
        %4597 = vmatprep.subr.bf16.mxu0 %v3631
        %4598 = vmatpush1.bf16.msra.mxu0 %v3630
        %4599 = vmatprep.subr.bf16.mxu0 %v3624
        %4600 = vmatpush1.bf16.msra.mxu0 %v3623
        %4601 = vmatprep.subr.bf16.mxu0 %v3617
        %4602 = vmatpush1.bf16.msra.mxu0 %v3616
        %4603 = vmatprep.subr.bf16.mxu0 %v3610
        %4604 = vmatpush1.bf16.msra.mxu0 %v3609
        %4605 = vmatprep.subr.bf16.mxu0 %v3603
        %4606 = vmatpush1.bf16.msra.mxu0 %v3602
        %4607 = vmatprep.subr.bf16.mxu0 %v3596
        %4608 = vmatpush1.bf16.msra.mxu0 %v3595
        %4609 = vmatprep.subr.bf16.mxu0 %v3589
        %4610 = vmatpush1.bf16.msra.mxu0 %v3588
        %4611 = vmatprep.subr.bf16.mxu0 %v3694
        %4612 = vmatpush2.bf16.msra.mxu0 %v3693
        %4613 = vmatprep.subr.bf16.mxu0 %v3687
        %4614 = vmatpush2.bf16.msra.mxu0 %v3686
        %4615 = vmatprep.subr.bf16.mxu0 %v3680
        %4616 = vmatpush2.bf16.msra.mxu0 %v3679
        %4617 = vmatprep.subr.bf16.mxu0 %v3673
        %4618 = vmatpush2.bf16.msra.mxu0 %v3672
        %4619 = vmatprep.subr.bf16.mxu0 %v3666
        %4620 = vmatpush2.bf16.msra.mxu0 %v3665
        %4621 = vmatprep.subr.bf16.mxu0 %v3659
        %4622 = vmatpush2.bf16.msra.mxu0 %v3658
        %4623 = vmatprep.subr.bf16.mxu0 %v3652
        %4624 = vmatpush2.bf16.msra.mxu0 %v3651
        %4625 = vmatprep.subr.bf16.mxu0 %v3645
        %4626 = vmatpush2.bf16.msra.mxu0 %v3644
        %4627 = vmatprep.mubr.bf16.mxu0 %v1327
        %4628 = vmatmul.mubr.bf16.gmra.mxu0 %v1326
        %v4629 = vpop.f32.mrf.mxu0
        %v4630 = vadd.f32 %v4589, %v4629
        %v4631 = vpop.f32.mrf.mxu0
        %v4632 = vadd.f32 %v4591, %v4631
        %v4633 = vpop.f32.mrf.mxu0
        %v4634 = vpop.f32.mrf.mxu0
        %4635 = vdwg.mxu0
        %4636 = vmatprep.subr.bf16.mxu0 0
        %4637 = vmatpush1.bf16.msra.mxu0 %v3303
        %4638 = vmatprep.subr.bf16.mxu0 0
        %4639 = vmatpush1.bf16.msra.mxu0 %v3296
        %4640 = vmatprep.subr.bf16.mxu0 0
        %4641 = vmatpush1.bf16.msra.mxu0 %v3289
        %4642 = vmatprep.subr.bf16.mxu0 0
        %4643 = vmatpush1.bf16.msra.mxu0 %v3282
        %4644 = vmatprep.subr.bf16.mxu0 0
        %4645 = vmatpush1.bf16.msra.mxu0 %v3275
        %4646 = vmatprep.subr.bf16.mxu0 0
        %4647 = vmatpush1.bf16.msra.mxu0 %v3268
        %4648 = vmatprep.subr.bf16.mxu0 0
        %4649 = vmatpush1.bf16.msra.mxu0 %v3261
        %4650 = vmatprep.subr.bf16.mxu0 0
        %4651 = vmatpush1.bf16.msra.mxu0 %v3254
        %4652 = vmatprep.subr.bf16.mxu0 0
        %4653 = vmatpush2.bf16.msra.mxu0 %v3359
        %4654 = vmatprep.subr.bf16.mxu0 0
        %4655 = vmatpush2.bf16.msra.mxu0 %v3352
        %4656 = vmatprep.subr.bf16.mxu0 0
        %4657 = vmatpush2.bf16.msra.mxu0 %v3345
        %4658 = vmatprep.subr.bf16.mxu0 0
        %4659 = vmatpush2.bf16.msra.mxu0 %v3338
        %4660 = vmatprep.subr.bf16.mxu0 0
        %4661 = vmatpush2.bf16.msra.mxu0 %v3331
        %4662 = vmatprep.subr.bf16.mxu0 0
        %4663 = vmatpush2.bf16.msra.mxu0 %v3324
        %4664 = vmatprep.subr.bf16.mxu0 0
        %4665 = vmatpush2.bf16.msra.mxu0 %v3317
        %4666 = vmatprep.subr.bf16.mxu0 0
        %4667 = vmatpush2.bf16.msra.mxu0 %v3310
        %4668 = vmatprep.mubr.bf16.mxu0 %v1321
        %4669 = vmatmul.mubr.bf16.gmra.mxu0 %v1320
        %v4670 = vpop.f32.mrf.mxu0
        %v4671 = vadd.f32 0.0, %v4670
        %v4672 = vpop.f32.mrf.mxu0
        %v4673 = vpop.f32.mrf.mxu0
        %v4674 = vpop.f32.mrf.mxu0
        %4675 = vdwg.mxu0
        %4676 = vmatprep.subr.bf16.mxu0 0
        %4677 = vmatpush1.bf16.msra.mxu0 %v3415
        %4678 = vmatprep.subr.bf16.mxu0 0
        %4679 = vmatpush1.bf16.msra.mxu0 %v3408
        %4680 = vmatprep.subr.bf16.mxu0 0
        %4681 = vmatpush1.bf16.msra.mxu0 %v3401
        %4682 = vmatprep.subr.bf16.mxu0 0
        %4683 = vmatpush1.bf16.msra.mxu0 %v3394
        %4684 = vmatprep.subr.bf16.mxu0 0
        %4685 = vmatpush1.bf16.msra.mxu0 %v3387
        %4686 = vmatprep.subr.bf16.mxu0 0
        %4687 = vmatpush1.bf16.msra.mxu0 %v3380
        %4688 = vmatprep.subr.bf16.mxu0 0
        %4689 = vmatpush1.bf16.msra.mxu0 %v3373
        %4690 = vmatprep.subr.bf16.mxu0 0
        %4691 = vmatpush1.bf16.msra.mxu0 %v3366
        %4692 = vmatprep.subr.bf16.mxu0 0
        %4693 = vmatpush2.bf16.msra.mxu0 %v3471
        %4694 = vmatprep.subr.bf16.mxu0 0
        %4695 = vmatpush2.bf16.msra.mxu0 %v3464
        %4696 = vmatprep.subr.bf16.mxu0 0
        %4697 = vmatpush2.bf16.msra.mxu0 %v3457
        %4698 = vmatprep.subr.bf16.mxu0 0
        %4699 = vmatpush2.bf16.msra.mxu0 %v3450
        %4700 = vmatprep.subr.bf16.mxu0 0
        %4701 = vmatpush2.bf16.msra.mxu0 %v3443
        %4702 = vmatprep.subr.bf16.mxu0 0
        %4703 = vmatpush2.bf16.msra.mxu0 %v3436
        %4704 = vmatprep.subr.bf16.mxu0 0
        %4705 = vmatpush2.bf16.msra.mxu0 %v3429
        %4706 = vmatprep.subr.bf16.mxu0 0
        %4707 = vmatpush2.bf16.msra.mxu0 %v3422
        %4708 = vmatprep.mubr.bf16.mxu0 %v1323
        %4709 = vmatmul.mubr.bf16.gmra.mxu0 %v1322
        %v4710 = vpop.f32.mrf.mxu0
        %v4711 = vadd.f32 %v4671, %v4710
        %v4712 = vpop.f32.mrf.mxu0
        %v4713 = vpop.f32.mrf.mxu0
        %v4714 = vpop.f32.mrf.mxu0
        %4715 = vdwg.mxu0
        %4716 = vmatprep.subr.bf16.mxu0 0
        %4717 = vmatpush1.bf16.msra.mxu0 %v3527
        %4718 = vmatprep.subr.bf16.mxu0 0
        %4719 = vmatpush1.bf16.msra.mxu0 %v3520
        %4720 = vmatprep.subr.bf16.mxu0 0
        %4721 = vmatpush1.bf16.msra.mxu0 %v3513
        %4722 = vmatprep.subr.bf16.mxu0 0
        %4723 = vmatpush1.bf16.msra.mxu0 %v3506
        %4724 = vmatprep.subr.bf16.mxu0 0
        %4725 = vmatpush1.bf16.msra.mxu0 %v3499
        %4726 = vmatprep.subr.bf16.mxu0 0
        %4727 = vmatpush1.bf16.msra.mxu0 %v3492
        %4728 = vmatprep.subr.bf16.mxu0 0
        %4729 = vmatpush1.bf16.msra.mxu0 %v3485
        %4730 = vmatprep.subr.bf16.mxu0 0
        %4731 = vmatpush1.bf16.msra.mxu0 %v3478
        %4732 = vmatprep.subr.bf16.mxu0 0
        %4733 = vmatpush2.bf16.msra.mxu0 %v3583
        %4734 = vmatprep.subr.bf16.mxu0 0
        %4735 = vmatpush2.bf16.msra.mxu0 %v3576
        %4736 = vmatprep.subr.bf16.mxu0 0
        %4737 = vmatpush2.bf16.msra.mxu0 %v3569
        %4738 = vmatprep.subr.bf16.mxu0 0
        %4739 = vmatpush2.bf16.msra.mxu0 %v3562
        %4740 = vmatprep.subr.bf16.mxu0 0
        %4741 = vmatpush2.bf16.msra.mxu0 %v3555
        %4742 = vmatprep.subr.bf16.mxu0 0
        %4743 = vmatpush2.bf16.msra.mxu0 %v3548
        %4744 = vmatprep.subr.bf16.mxu0 0
        %4745 = vmatpush2.bf16.msra.mxu0 %v3541
        %4746 = vmatprep.subr.bf16.mxu0 0
        %4747 = vmatpush2.bf16.msra.mxu0 %v3534
        %4748 = vmatprep.mubr.bf16.mxu0 %v1325
        %4749 = vmatmul.mubr.bf16.gmra.mxu0 %v1324
        %v4750 = vpop.f32.mrf.mxu0
        %v4751 = vadd.f32 %v4711, %v4750
        %v4752 = vpop.f32.mrf.mxu0
        %v4753 = vpop.f32.mrf.mxu0
        %v4754 = vpop.f32.mrf.mxu0
        %4755 = vdwg.mxu0
        %4756 = vmatprep.subr.bf16.mxu0 0
        %4757 = vmatpush1.bf16.msra.mxu0 %v3639
        %4758 = vmatprep.subr.bf16.mxu0 0
        %4759 = vmatpush1.bf16.msra.mxu0 %v3632
        %4760 = vmatprep.subr.bf16.mxu0 0
        %4761 = vmatpush1.bf16.msra.mxu0 %v3625
        %4762 = vmatprep.subr.bf16.mxu0 0
        %4763 = vmatpush1.bf16.msra.mxu0 %v3618
        %4764 = vmatprep.subr.bf16.mxu0 0
        %4765 = vmatpush1.bf16.msra.mxu0 %v3611
        %4766 = vmatprep.subr.bf16.mxu0 0
        %4767 = vmatpush1.bf16.msra.mxu0 %v3604
        %4768 = vmatprep.subr.bf16.mxu0 0
        %4769 = vmatpush1.bf16.msra.mxu0 %v3597
        %4770 = vmatprep.subr.bf16.mxu0 0
        %4771 = vmatpush1.bf16.msra.mxu0 %v3590
        %4772 = vmatprep.subr.bf16.mxu0 0
        %4773 = vmatpush2.bf16.msra.mxu0 %v3695
        %4774 = vmatprep.subr.bf16.mxu0 0
        %4775 = vmatpush2.bf16.msra.mxu0 %v3688
        %4776 = vmatprep.subr.bf16.mxu0 0
        %4777 = vmatpush2.bf16.msra.mxu0 %v3681
        %4778 = vmatprep.subr.bf16.mxu0 0
        %4779 = vmatpush2.bf16.msra.mxu0 %v3674
        %4780 = vmatprep.subr.bf16.mxu0 0
        %4781 = vmatpush2.bf16.msra.mxu0 %v3667
        %4782 = vmatprep.subr.bf16.mxu0 0
        %4783 = vmatpush2.bf16.msra.mxu0 %v3660
        %4784 = vmatprep.subr.bf16.mxu0 0
        %4785 = vmatpush2.bf16.msra.mxu0 %v3653
        %4786 = vmatprep.subr.bf16.mxu0 0
        %4787 = vmatpush2.bf16.msra.mxu0 %v3646
        %4788 = vmatprep.mubr.bf16.mxu0 %v1327
        %4789 = vmatmul.mubr.bf16.gmra.mxu0 %v1326
        %v4790 = vpop.f32.mrf.mxu0
        %v4791 = vadd.f32 %v4751, %v4790
        %v4792 = vpop.f32.mrf.mxu0
        %v4793 = vpop.f32.mrf.mxu0
        %v4794 = vpop.f32.mrf.mxu0
        %4795 = vdwg.mxu0
        %v4796 = vsel %vm1042, %v4302, 0.0
        %v4797 = vrot.slane %v4796, 4
        %v4798 = vadd.f32 %v4796, %v4797
        %v4799 = vrot.slane %v4798, 2
        %v4800 = vadd.f32 %v4798, %v4799
        %v4801 = vrot.slane %v4800, 1
        %v4802 = vadd.f32 %v4800, %v4801
        %v4803 = vsel %vm1042, %v4304, 0.0
        %v4804 = vrot.slane %v4803, 4
        %v4805 = vadd.f32 %v4803, %v4804
        %v4806 = vrot.slane %v4805, 2
        %v4807 = vadd.f32 %v4805, %v4806
        %v4808 = vrot.slane %v4807, 1
        %v4809 = vadd.f32 %v4807, %v4808
        %v4810 = vsel %vm1042, %v4466, 0.0
        %v4811 = vrot.slane %v4810, 4
        %v4812 = vadd.f32 %v4810, %v4811
        %v4813 = vrot.slane %v4812, 2
        %v4814 = vadd.f32 %v4812, %v4813
        %v4815 = vrot.slane %v4814, 1
        %v4816 = vadd.f32 %v4814, %v4815
        %v4817 = vsel %vm1042, %v4468, 0.0
        %v4818 = vrot.slane %v4817, 4
        %v4819 = vadd.f32 %v4817, %v4818
        %v4820 = vrot.slane %v4819, 2
        %v4821 = vadd.f32 %v4819, %v4820
        %v4822 = vrot.slane %v4821, 1
        %v4823 = vadd.f32 %v4821, %v4822
        %v4824 = vsel %vm1042, %v4630, 0.0
        %v4825 = vrot.slane %v4824, 4
        %v4826 = vadd.f32 %v4824, %v4825
        %v4827 = vrot.slane %v4826, 2
        %v4828 = vadd.f32 %v4826, %v4827
        %v4829 = vrot.slane %v4828, 1
        %v4830 = vadd.f32 %v4828, %v4829
        %v4831 = vsel %vm1042, %v4632, 0.0
        %v4832 = vrot.slane %v4831, 4
        %v4833 = vadd.f32 %v4831, %v4832
        %v4834 = vrot.slane %v4833, 2
        %v4835 = vadd.f32 %v4833, %v4834
        %v4836 = vrot.slane %v4835, 1
        %v4837 = vadd.f32 %v4835, %v4836
        %v4838 = vsel %vm1042, %v4791, 0.0
        %v4839 = vrot.slane %v4838, 4
        %v4840 = vadd.f32 %v4838, %v4839
        %v4841 = vrot.slane %v4840, 2
        %v4842 = vadd.f32 %v4840, %v4841
        %v4843 = vrot.slane %v4842, 1
        %v4844 = vadd.f32 %v4842, %v4843
        %v4845 = vmul.f32 %v4802, %v1099
        %v4846 = vmul.f32 %v4809, %v1099
        %v4847 = vmul.f32 %v4816, %v1099
        %v4848 = vmul.f32 %v4823, %v1099
        %v4849 = vmul.f32 %v4830, %v1099
        %v4850 = vmul.f32 %v4837, %v1099
        %v4851 = vmul.f32 %v4844, %v1099
        %v4852 = vsub.f32 %v4302, %v4845
        %v4853 = vsub.f32 %v4304, %v4846
        %v4854 = vsub.f32 %v4466, %v4847
        %v4855 = vsub.f32 %v4468, %v4848
        %v4856 = vsub.f32 %v4630, %v4849
        %v4857 = vsub.f32 %v4632, %v4850
        %v4858 = vsub.f32 %v4791, %v4851
        %v4859 = vmul.f32 %v4852, %v4852
        %v4860 = vmul.f32 %v4853, %v4853
        %v4861 = vmul.f32 %v4854, %v4854
        %v4862 = vmul.f32 %v4855, %v4855
        %v4863 = vmul.f32 %v4856, %v4856
        %v4864 = vmul.f32 %v4857, %v4857
        %v4865 = vmul.f32 %v4858, %v4858
        %v4866 = vsel %vm1042, %v4859, 0.0
        %v4867 = vrot.slane %v4866, 4
        %v4868 = vadd.f32 %v4866, %v4867
        %v4869 = vrot.slane %v4868, 2
        %v4870 = vadd.f32 %v4868, %v4869
        %v4871 = vrot.slane %v4870, 1
        %v4872 = vadd.f32 %v4870, %v4871
        %v4873 = vsel %vm1042, %v4860, 0.0
        %v4874 = vrot.slane %v4873, 4
        %v4875 = vadd.f32 %v4873, %v4874
        %v4876 = vrot.slane %v4875, 2
        %v4877 = vadd.f32 %v4875, %v4876
        %v4878 = vrot.slane %v4877, 1
        %v4879 = vadd.f32 %v4877, %v4878
        %v4880 = vsel %vm1042, %v4861, 0.0
        %v4881 = vrot.slane %v4880, 4
        %v4882 = vadd.f32 %v4880, %v4881
        %v4883 = vrot.slane %v4882, 2
        %v4884 = vadd.f32 %v4882, %v4883
        %v4885 = vrot.slane %v4884, 1
        %v4886 = vadd.f32 %v4884, %v4885
        %v4887 = vsel %vm1042, %v4862, 0.0
        %v4888 = vrot.slane %v4887, 4
        %v4889 = vadd.f32 %v4887, %v4888
        %v4890 = vrot.slane %v4889, 2
        %v4891 = vadd.f32 %v4889, %v4890
        %v4892 = vrot.slane %v4891, 1
        %v4893 = vadd.f32 %v4891, %v4892
        %v4894 = vsel %vm1042, %v4863, 0.0
        %v4895 = vrot.slane %v4894, 4
        %v4896 = vadd.f32 %v4894, %v4895
        %v4897 = vrot.slane %v4896, 2
        %v4898 = vadd.f32 %v4896, %v4897
        %v4899 = vrot.slane %v4898, 1
        %v4900 = vadd.f32 %v4898, %v4899
        %v4901 = vsel %vm1042, %v4864, 0.0
        %v4902 = vrot.slane %v4901, 4
        %v4903 = vadd.f32 %v4901, %v4902
        %v4904 = vrot.slane %v4903, 2
        %v4905 = vadd.f32 %v4903, %v4904
        %v4906 = vrot.slane %v4905, 1
        %v4907 = vadd.f32 %v4905, %v4906
        %v4908 = vsel %vm1042, %v4865, 0.0
        %v4909 = vrot.slane %v4908, 4
        %v4910 = vadd.f32 %v4908, %v4909
        %v4911 = vrot.slane %v4910, 2
        %v4912 = vadd.f32 %v4910, %v4911
        %v4913 = vrot.slane %v4912, 1
        %v4914 = vadd.f32 %v4912, %v4913
        %v4915 = vmul.f32 %v4872, %v1099
        %v4916 = vmul.f32 %v4879, %v1099
        %v4917 = vmul.f32 %v4886, %v1099
        %v4918 = vmul.f32 %v4893, %v1099
        %v4919 = vmul.f32 %v4900, %v1099
        %v4920 = vmul.f32 %v4907, %v1099
        %v4921 = vmul.f32 %v4914, %v1099
        %v4922 = vadd.f32 %v4915, 1e-05
        %v4923 = vadd.f32 %v4916, 1e-05
        %v4924 = vadd.f32 %v4917, 1e-05
        %v4925 = vadd.f32 %v4918, 1e-05
        %v4926 = vadd.f32 %v4919, 1e-05
        %v4927 = vadd.f32 %v4920, 1e-05
        %v4928 = vadd.f32 %v4921, 1e-05
        %v4929 = vrsqrt.pop %v4922
        %v4930 = vrsqrt.pop %v4923
        %v4931 = vrsqrt.pop %v4924
        %v4932 = vrsqrt.pop %v4925
        %v4933 = vrsqrt.pop %v4926
        %v4934 = vrsqrt.pop %v4927
        %v4935 = vrsqrt.pop %v4928
        %v4936 = vmul.f32 %v4852, %v4929
        %v4937 = vmul.f32 %v4853, %v4930
        %v4938 = vmul.f32 %v4854, %v4931
        %v4939 = vmul.f32 %v4855, %v4932
        %v4940 = vmul.f32 %v4856, %v4933
        %v4941 = vmul.f32 %v4857, %v4934
        %v4942 = vmul.f32 %v4858, %v4935
        %v4943 = vld [vmem:[%s389] sm:$0xff]
        %v4945 = vlaneseq
        %v4946 = vshrl.u32 %v4945, 7
        %v4947 = vsub.s32 0, %v4946
        %v4948 = vrot.slane %v4943, %v4947
        %v4949 = vlaneseq
        %v4950 = vshrl.u32 %v4949, 7
        %v4951 = vsub.s32 1, %v4950
        %v4952 = vrot.slane %v4943, %v4951
        %v4953 = vlaneseq
        %v4954 = vshrl.u32 %v4953, 7
        %v4955 = vsub.s32 2, %v4954
        %v4956 = vrot.slane %v4943, %v4955
        %v4957 = vlaneseq
        %v4958 = vshrl.u32 %v4957, 7
        %v4959 = vsub.s32 3, %v4958
        %v4960 = vrot.slane %v4943, %v4959
        %v4961 = vlaneseq
        %v4962 = vshrl.u32 %v4961, 7
        %v4963 = vsub.s32 4, %v4962
        %v4964 = vrot.slane %v4943, %v4963
        %v4965 = vlaneseq
        %v4966 = vshrl.u32 %v4965, 7
        %v4967 = vsub.s32 5, %v4966
        %v4968 = vrot.slane %v4943, %v4967
        %v4969 = vlaneseq
        %v4970 = vshrl.u32 %v4969, 7
        %v4971 = vsub.s32 6, %v4970
        %v4972 = vrot.slane %v4943, %v4971
        %v4980 = vmul.f32 %v4936, %v4948
        %v4981 = vmul.f32 %v4937, %v4952
        %v4982 = vmul.f32 %v4938, %v4956
        %v4983 = vmul.f32 %v4939, %v4960
        %v4984 = vmul.f32 %v4940, %v4964
        %v4985 = vmul.f32 %v4941, %v4968
        %v4986 = vmul.f32 %v4942, %v4972
        %v4987 = vld [vmem:[%s398] sm:$0xff]
        %v4989 = vlaneseq
        %v4990 = vshrl.u32 %v4989, 7
        %v4991 = vsub.s32 0, %v4990
        %v4992 = vrot.slane %v4987, %v4991
        %v4993 = vlaneseq
        %v4994 = vshrl.u32 %v4993, 7
        %v4995 = vsub.s32 1, %v4994
        %v4996 = vrot.slane %v4987, %v4995
        %v4997 = vlaneseq
        %v4998 = vshrl.u32 %v4997, 7
        %v4999 = vsub.s32 2, %v4998
        %v5000 = vrot.slane %v4987, %v4999
        %v5001 = vlaneseq
        %v5002 = vshrl.u32 %v5001, 7
        %v5003 = vsub.s32 3, %v5002
        %v5004 = vrot.slane %v4987, %v5003
        %v5005 = vlaneseq
        %v5006 = vshrl.u32 %v5005, 7
        %v5007 = vsub.s32 4, %v5006
        %v5008 = vrot.slane %v4987, %v5007
        %v5009 = vlaneseq
        %v5010 = vshrl.u32 %v5009, 7
        %v5011 = vsub.s32 5, %v5010
        %v5012 = vrot.slane %v4987, %v5011
        %v5013 = vlaneseq
        %v5014 = vshrl.u32 %v5013, 7
        %v5015 = vsub.s32 6, %v5014
        %v5016 = vrot.slane %v4987, %v5015
        %v5024 = vadd.f32 %v4980, %v4992
        %v5025 = vadd.f32 %v4981, %v4996
        %v5026 = vadd.f32 %v4982, %v5000
        %v5027 = vadd.f32 %v4983, %v5004
        %v5028 = vadd.f32 %v4984, %v5008
        %v5029 = vadd.f32 %v4985, %v5012
        %v5030 = vadd.f32 %v4986, %v5016
        %v5031 = vmax.f32 %v5024, 0.0
        %v5032 = vmax.f32 %v5025, 0.0
        %v5033 = vmax.f32 %v5026, 0.0
        %v5034 = vmax.f32 %v5027, 0.0
        %v5035 = vmax.f32 %v5028, 0.0
        %v5036 = vmax.f32 %v5029, 0.0
        %v5037 = vmax.f32 %v5030, 0.0
        %v5045 = vcombine.low %v5031, %v5032
        %v5046 = vcombine.low %v5033, %v5034
        %v5048 = vunpack.c.l.s4 1983009808
        %v5049 = vunpack.c.0.s8 %v5048
        %v5050 = vlaneseq
        %v5051 = vshrl.u32 %v5050, 7
        %v5052 = vsub.s32 %v5049, %v5051
        %v5053 = vrot.slane %v5045, %v5052
        %v5055 = vunpack.c.l.s4 1983009808
        %v5056 = vunpack.c.0.s8 %v5055
        %v5057 = vlaneseq
        %v5058 = vshrl.u32 %v5057, 7
        %v5059 = vsub.s32 %v5056, %v5058
        %v5060 = vrot.slane %v5046, %v5059
        %v5061 = vcombine.low %v5053, %v5060
        %v5062 = vcombine.low %v5035, %v5036
        %v5064 = vunpack.c.l.s4 1983009808
        %v5065 = vunpack.c.0.s8 %v5064
        %v5066 = vlaneseq
        %v5067 = vshrl.u32 %v5066, 7
        %v5068 = vsub.s32 %v5065, %v5067
        %v5069 = vrot.slane %v5062, %v5068
        %v5071 = vunpack.c.l.s4 1983009808
        %v5072 = vunpack.c.0.s8 %v5071
        %v5073 = vlaneseq
        %v5074 = vshrl.u32 %v5073, 7
        %v5075 = vsub.s32 %v5072, %v5074
        %v5076 = vrot.slane %v5037, %v5075
        %v5077 = vcombine.low %v5069, %v5076
        %5080 = vst [vmem:[%s448] sm:$0xff] %v5061
        %5081 = vst [vmem:[%s448 + $0x8] sm:$0x3f] %v5077
        %s5082 = smul.u32 7, %s22
        %p5083 = scmp.lt.s32.totalorder %s5082, 48
        %s5084 = scalar_select %p5083, %s5082, 48
        %s5085 = smul.addr %s5084, 2
        %s5086 = scalar_lea.vmem %s8, %s5085
        // Predicated region
        $region81: #{generator_forward.3} parent=51 // pred_check
          %p5087 = pneg %p223
        $region82: #{generator_forward.3} parent=51 // pred_check_branch
          %5089 = sbr.rel (%p5087) target = $region84
        $region83: #{generator_forward.3} parent=51 // pred_region
          %s5090 = smul.u32 7, %s22
        $region84: #{generator_forward.3} parent=51 // pred_fallthru
          _
      $region52: #{generator_forward.3} parent=5 // pred_fallthru
        _
      %p5091 = scmp.le.s32.totalorder 2, %s17
      // Predicated region
      $region85: #{generator_forward.3} parent=5 // pred_check
        %p5092 = pneg %p5091
      $region86: #{generator_forward.3} parent=5 // pred_check_branch
        %5094 = sbr.rel (%p5092) target = $region88
      $region87: #{generator_forward.3} parent=5 // pred_region
        %s5095 = ssub.s32 %s17, 2
        // Predicated region
        $region89: #{generator_forward.3} parent=87 // pred_check
          %p5096 = pneg %p229
        $region90: #{generator_forward.3} parent=87 // pred_check_branch
          %5098 = sbr.rel (%p5096) target = $region92
        $region91: #{generator_forward.3} parent=87 // pred_region
          %s5099 = smul.u32 7, %s23
          %p5100 = scmp.lt.s32.totalorder %s5099, 48
          %s5101 = scalar_select %p5100, %s5099, 48
          %s5102 = smul.addr %s5101, 2
          %s5103 = scalar_lea.vmem %s8, %s5102
        $region92: #{generator_forward.3} parent=87 // pred_fallthru
          _
      $region88: #{generator_forward.3} parent=5 // pred_fallthru
        _
    $region6: #{generator_forward.3} parent=1 // loop_footer
      %s21 = sadd.s32 1, %s17
    $region7: #{generator_forward.3} parent=1 // loop_footer_branch
      %16 = sbr.rel target = $region3
    $region8: #{generator_forward.3} parent=1 // loop_exit
      _
    %5104 = vsyncpa [#allocation3], 1
    %s5105 = scalar_lea.sflag [#allocation3], 1
    %5106 = vsyncpa %s5105, 1
    %5107 = vsyncpa [#allocation5], 1
    %5108 = vsyncpa [#allocation8], 1

// kernel: generator_forward.5
$region0: #{generator_forward.5}
  #allocation0 [shape = 'u32[]', space=smem, size = 0x4, offset = 0x4, fixed_abs, tag = 'smem constant byte address 0x4 - core index']
  #allocation1 [shape = 'u32[144,128]{1,0:T(1,128)}', space=vmem, size = 0x12000, scoped, tag = 'internal scratch']
  %s0 = inlined_call_operand.vmem [shape: bf16[392,576], index: 0, kind: input, shape index: {}]
  %s1 = inlined_call_operand.vmem [shape: bf16[576,4], index: 1, kind: input, shape index: {}]
  %s2 = inlined_call_operand.vmem [shape: f32[1,4], index: 2, kind: input, shape index: {}]
  %s3 = inlined_call_operand.vmem [shape: f32[1,4], index: 3, kind: input, shape index: {}]
  %s4 = inlined_call_operand.vmem [shape: f32[1,4], index: 4, kind: input, shape index: {}]
  %s5 = inlined_call_operand.vmem [shape: f32[392,4], index: 5, kind: output, shape index: {}]
  %s6 = sld [smem:[#allocation0]]
  $region30: #{generator_forward.5} parent=0
    _
  %s8 = ssub.s32 1, %s6
  %s9 = scalar_select 0, %s8, %s6
  // Predicated region
  $region2: #{generator_forward.5} parent=0 // pred_check
    _
  $region3: #{generator_forward.5} parent=0 // pred_check_branch
    %11 = sbr.rel (0) target = $region5
  $region4: #{generator_forward.5} parent=0 // pred_region
    _
  $region5: #{generator_forward.5} parent=0 // pred_fallthru
    _
  // Predicated region
  $region6: #{generator_forward.5} parent=0 // pred_check
    _
  $region7: #{generator_forward.5} parent=0 // pred_check_branch
    %13 = sbr.rel (0) target = $region9
  $region8: #{generator_forward.5} parent=0 // pred_region
    _
  $region9: #{generator_forward.5} parent=0 // pred_fallthru
    _
  // Predicated region
  $region10: #{generator_forward.5} parent=0 // pred_check
    _
  $region11: #{generator_forward.5} parent=0 // pred_check_branch
    %15 = sbr.rel (0) target = $region13
  $region12: #{generator_forward.5} parent=0 // pred_region
    _
  $region13: #{generator_forward.5} parent=0 // pred_fallthru
    _
  // Predicated region
  $region14: #{generator_forward.5} parent=0 // pred_check
    _
  $region15: #{generator_forward.5} parent=0 // pred_check_branch
    %17 = sbr.rel (0) target = $region17
  $region16: #{generator_forward.5} parent=0 // pred_region
    _
  $region17: #{generator_forward.5} parent=0 // pred_fallthru
    _
  // Predicated region
  $region18: #{generator_forward.5} parent=0 // pred_check
    _
  $region19: #{generator_forward.5} parent=0 // pred_check_branch
    %19 = sbr.rel (0) target = $region21
  $region20: #{generator_forward.5} parent=0 // pred_region
    _
  $region21: #{generator_forward.5} parent=0 // pred_fallthru
    _
  %v21 = vld [vmem:[%s0] sm:$0xff]
  %v22 = vld [vmem:[%s0 + $0x8] sm:$0xff]
  %v23 = vld [vmem:[%s0 + $0x10] sm:$0xf]
  %v24 = vld [vmem:[%s0 + $0x14] sm:$0xff]
  %v25 = vld [vmem:[%s0 + $0x1c] sm:$0xff]
  %v26 = vld [vmem:[%s0 + $0x24] sm:$0xf]
  %v27 = vld [vmem:[%s0 + $0x28] sm:$0xff]
  %v28 = vld [vmem:[%s0 + $0x30] sm:$0xff]
  %v29 = vld [vmem:[%s0 + $0x38] sm:$0xf]
  %v30 = vld [vmem:[%s0 + $0x3c] sm:$0xff]
  %v31 = vld [vmem:[%s0 + $0x44] sm:$0xff]
  %v32 = vld [vmem:[%s0 + $0x4c] sm:$0xf]
  %v33 = vld [vmem:[%s0 + $0x50] sm:$0xff]
  %v34 = vld [vmem:[%s0 + $0x58] sm:$0xff]
  %v35 = vld [vmem:[%s0 + $0x60] sm:$0xf]
  %v36 = vld [vmem:[%s0 + $0x64] sm:$0xff]
  %v37 = vld [vmem:[%s0 + $0x6c] sm:$0xff]
  %v38 = vld [vmem:[%s0 + $0x74] sm:$0xf]
  %v39 = vld [vmem:[%s0 + $0x78] sm:$0xff]
  %v40 = vld [vmem:[%s0 + $0x80] sm:$0xff]
  %v41 = vld [vmem:[%s0 + $0x88] sm:$0xf]
  %v42 = vld [vmem:[%s0 + $0x8c] sm:$0xff]
  %v43 = vld [vmem:[%s0 + $0x94] sm:$0xff]
  %v44 = vld [vmem:[%s0 + $0x9c] sm:$0xf]
  %v45 = vld [vmem:[%s0 + $0xa0] sm:$0xff]
  %v46 = vld [vmem:[%s0 + $0xa8] sm:$0xff]
  %v47 = vld [vmem:[%s0 + $0xb0] sm:$0xf]
  %v48 = vld [vmem:[%s0 + $0xb4] sm:$0xff]
  %v49 = vld [vmem:[%s0 + $0xbc] sm:$0xff]
  %v50 = vld [vmem:[%s0 + $0xc4] sm:$0xf]
  %v51 = vld [vmem:[%s0 + $0xc8] sm:$0xff]
  %v52 = vld [vmem:[%s0 + $0xd0] sm:$0xff]
  %v53 = vld [vmem:[%s0 + $0xd8] sm:$0xf]
  %v54 = vld [vmem:[%s0 + $0xdc] sm:$0xff]
  %v55 = vld [vmem:[%s0 + $0xe4] sm:$0xff]
  %v56 = vld [vmem:[%s0 + $0xec] sm:$0xf]
  %v57 = vld [vmem:[%s0 + $0xf0] sm:$0xff]
  %v58 = vld [vmem:[%s0 + $0xf8] sm:$0xff]
  %v59 = vld [vmem:[%s0 + $0x100] sm:$0xf]
  %v60 = vld [vmem:[%s0 + $0x104] sm:$0xff]
  %v61 = vld [vmem:[%s0 + $0x10c] sm:$0xff]
  %v62 = vld [vmem:[%s0 + $0x114] sm:$0xf]
  %v63 = vld [vmem:[%s0 + $0x118] sm:$0xff]
  %v64 = vld [vmem:[%s0 + $0x120] sm:$0xff]
  %v65 = vld [vmem:[%s0 + $0x128] sm:$0xf]
  %v66 = vld [vmem:[%s0 + $0x12c] sm:$0xff]
  %v67 = vld [vmem:[%s0 + $0x134] sm:$0xff]
  %v68 = vld [vmem:[%s0 + $0x13c] sm:$0xf]
  %v69 = vld [vmem:[%s0 + $0x140] sm:$0xff]
  %v70 = vld [vmem:[%s0 + $0x148] sm:$0xff]
  %v71 = vld [vmem:[%s0 + $0x150] sm:$0xf]
  %v72 = vld [vmem:[%s0 + $0x154] sm:$0xff]
  %v73 = vld [vmem:[%s0 + $0x15c] sm:$0xff]
  %v74 = vld [vmem:[%s0 + $0x164] sm:$0xf]
  %v75 = vld [vmem:[%s0 + $0x168] sm:$0xff]
  %v76 = vld [vmem:[%s0 + $0x170] sm:$0xff]
  %v77 = vld [vmem:[%s0 + $0x178] sm:$0xf]
  %v78 = vld [vmem:[%s0 + $0x17c] sm:$0xff]
  %v79 = vld [vmem:[%s0 + $0x184] sm:$0xff]
  %v80 = vld [vmem:[%s0 + $0x18c] sm:$0xf]
  %v81 = vld [vmem:[%s0 + $0x190] sm:$0xff]
  %v82 = vld [vmem:[%s0 + $0x198] sm:$0xff]
  %v83 = vld [vmem:[%s0 + $0x1a0] sm:$0xf]
  %v84 = vld [vmem:[%s0 + $0x1a4] sm:$0xff]
  %v85 = vld [vmem:[%s0 + $0x1ac] sm:$0xff]
  %v86 = vld [vmem:[%s0 + $0x1b4] sm:$0xf]
  %v87 = vld [vmem:[%s0 + $0x1b8] sm:$0xff]
  %v88 = vld [vmem:[%s0 + $0x1c0] sm:$0xff]
  %v89 = vld [vmem:[%s0 + $0x1c8] sm:$0xf]
  %v90 = vld [vmem:[%s0 + $0x1cc] sm:$0xff]
  %v91 = vld [vmem:[%s0 + $0x1d4] sm:$0xff]
  %v92 = vld [vmem:[%s0 + $0x1dc] sm:$0xf]
  %v93 = vld [vmem:[%s0 + $0x1e0] sm:$0xff]
  %v94 = vld [vmem:[%s0 + $0x1e8] sm:$0xff]
  %v95 = vld [vmem:[%s0 + $0x1f0] sm:$0xf]
  %v96 = vld [vmem:[%s0 + $0x1f4] sm:$0xff]
  %v97 = vld [vmem:[%s0 + $0x1fc] sm:$0xff]
  %v98 = vld [vmem:[%s0 + $0x204] sm:$0xf]
  %v99 = vld [vmem:[%s0 + $0x208] sm:$0xff]
  %v100 = vld [vmem:[%s0 + $0x210] sm:$0xff]
  %v101 = vld [vmem:[%s0 + $0x218] sm:$0xf]
  %v102 = vld [vmem:[%s0 + $0x21c] sm:$0xff]
  %v103 = vld [vmem:[%s0 + $0x224] sm:$0xff]
  %v104 = vld [vmem:[%s0 + $0x22c] sm:$0xf]
  %v105 = vld [vmem:[%s0 + $0x230] sm:$0xff]
  %v106 = vld [vmem:[%s0 + $0x238] sm:$0xff]
  %v107 = vld [vmem:[%s0 + $0x240] sm:$0xf]
  %v108 = vld [vmem:[%s0 + $0x244] sm:$0xff]
  %v109 = vld [vmem:[%s0 + $0x24c] sm:$0xff]
  %v110 = vld [vmem:[%s0 + $0x254] sm:$0xf]
  %v111 = vld [vmem:[%s0 + $0x258] sm:$0xff]
  %v112 = vld [vmem:[%s0 + $0x260] sm:$0xff]
  %v113 = vld [vmem:[%s0 + $0x268] sm:$0xf]
  %v114 = vld [vmem:[%s0 + $0x26c] sm:$0xff]
  %v115 = vld [vmem:[%s0 + $0x274] sm:$0xff]
  %v116 = vld [vmem:[%s0 + $0x27c] sm:$0xf]
  %v117 = vld [vmem:[%s0 + $0x280] sm:$0xff]
  %v118 = vld [vmem:[%s0 + $0x288] sm:$0xff]
  %v119 = vld [vmem:[%s0 + $0x290] sm:$0xf]
  %v120 = vld [vmem:[%s0 + $0x294] sm:$0xff]
  %v121 = vld [vmem:[%s0 + $0x29c] sm:$0xff]
  %v122 = vld [vmem:[%s0 + $0x2a4] sm:$0xf]
  %v123 = vld [vmem:[%s0 + $0x2a8] sm:$0xff]
  %v124 = vld [vmem:[%s0 + $0x2b0] sm:$0xff]
  %v125 = vld [vmem:[%s0 + $0x2b8] sm:$0xf]
  %v126 = vld [vmem:[%s0 + $0x2bc] sm:$0xff]
  %v127 = vld [vmem:[%s0 + $0x2c4] sm:$0xff]
  %v128 = vld [vmem:[%s0 + $0x2cc] sm:$0xf]
  %v129 = vld [vmem:[%s0 + $0x2d0] sm:$0xff]
  %v130 = vld [vmem:[%s0 + $0x2d8] sm:$0xff]
  %v131 = vld [vmem:[%s0 + $0x2e0] sm:$0xf]
  %v132 = vld [vmem:[%s0 + $0x2e4] sm:$0xff]
  %v133 = vld [vmem:[%s0 + $0x2ec] sm:$0xff]
  %v134 = vld [vmem:[%s0 + $0x2f4] sm:$0xf]
  %v135 = vld [vmem:[%s0 + $0x2f8] sm:$0xff]
  %v136 = vld [vmem:[%s0 + $0x300] sm:$0xff]
  %v137 = vld [vmem:[%s0 + $0x308] sm:$0xf]
  %v138 = vld [vmem:[%s0 + $0x30c] sm:$0xff]
  %v139 = vld [vmem:[%s0 + $0x314] sm:$0xff]
  %v140 = vld [vmem:[%s0 + $0x31c] sm:$0xf]
  %v141 = vld [vmem:[%s0 + $0x320] sm:$0xff]
  %v142 = vld [vmem:[%s0 + $0x328] sm:$0xff]
  %v143 = vld [vmem:[%s0 + $0x330] sm:$0xf]
  %v144 = vld [vmem:[%s0 + $0x334] sm:$0xff]
  %v145 = vld [vmem:[%s0 + $0x33c] sm:$0xff]
  %v146 = vld [vmem:[%s0 + $0x344] sm:$0xf]
  %v147 = vld [vmem:[%s0 + $0x348] sm:$0xff]
  %v148 = vld [vmem:[%s0 + $0x350] sm:$0xff]
  %v149 = vld [vmem:[%s0 + $0x358] sm:$0xf]
  %v150 = vld [vmem:[%s0 + $0x35c] sm:$0xff]
  %v151 = vld [vmem:[%s0 + $0x364] sm:$0xff]
  %v152 = vld [vmem:[%s0 + $0x36c] sm:$0xf]
  %v153 = vld [vmem:[%s0 + $0x370] sm:$0xff]
  %v154 = vld [vmem:[%s0 + $0x378] sm:$0xff]
  %v155 = vld [vmem:[%s0 + $0x380] sm:$0xf]
  %v156 = vld [vmem:[%s0 + $0x384] sm:$0xff]
  %v157 = vld [vmem:[%s0 + $0x38c] sm:$0xff]
  %v158 = vld [vmem:[%s0 + $0x394] sm:$0xf]
  %v159 = vld [vmem:[%s0 + $0x398] sm:$0xff]
  %v160 = vld [vmem:[%s0 + $0x3a0] sm:$0xff]
  %v161 = vld [vmem:[%s0 + $0x3a8] sm:$0xf]
  %v162 = vld [vmem:[%s0 + $0x3ac] sm:$0xff]
  %v163 = vld [vmem:[%s0 + $0x3b4] sm:$0xff]
  %v164 = vld [vmem:[%s0 + $0x3bc] sm:$0xf]
  %v165 = vld [vmem:[%s0 + $0x3c0] sm:$0xff]
  %v166 = vld [vmem:[%s0 + $0x3c8] sm:$0xff]
  %v167 = vld [vmem:[%s0 + $0x3d0] sm:$0xf]
  %v168 = vld [vmem:[%s1] sm:$0xf]
  %v169 = vld [vmem:[%s1 + $0x4] sm:$0xf]
  %v170 = vld [vmem:[%s1 + $0x8] sm:$0xf]
  %v171 = vld [vmem:[%s1 + $0xc] sm:$0xf]
  %v172 = vld [vmem:[%s1 + $0x10] sm:$0xf]
  %v173 = vld [vmem:[%s1 + $0x14] sm:$0xf]
  %v174 = vld [vmem:[%s1 + $0x18] sm:$0xf]
  %v175 = vld [vmem:[%s1 + $0x1c] sm:$0xf]
  %v176 = vld [vmem:[%s1 + $0x20] sm:$0xf]
  %v177 = vld [vmem:[%s1 + $0x24] sm:$0xf]
  %v178 = vld [vmem:[%s1 + $0x28] sm:$0xf]
  %v179 = vld [vmem:[%s1 + $0x2c] sm:$0xf]
  %v180 = vld [vmem:[%s1 + $0x30] sm:$0xf]
  %v181 = vld [vmem:[%s1 + $0x34] sm:$0xf]
  %v182 = vld [vmem:[%s1 + $0x38] sm:$0xf]
  %v183 = vld [vmem:[%s1 + $0x3c] sm:$0xf]
  %v184 = vld [vmem:[%s1 + $0x40] sm:$0xf]
  %v185 = vld [vmem:[%s1 + $0x44] sm:$0xf]
  %v186 = vld [vmem:[%s1 + $0x48] sm:$0xf]
  %v187 = vld [vmem:[%s1 + $0x4c] sm:$0xf]
  %v188 = vld [vmem:[%s1 + $0x50] sm:$0xf]
  %v189 = vld [vmem:[%s1 + $0x54] sm:$0xf]
  %v190 = vld [vmem:[%s1 + $0x58] sm:$0xf]
  %v191 = vld [vmem:[%s1 + $0x5c] sm:$0xf]
  %v192 = vld [vmem:[%s1 + $0x60] sm:$0xf]
  %v193 = vld [vmem:[%s1 + $0x64] sm:$0xf]
  %v194 = vld [vmem:[%s1 + $0x68] sm:$0xf]
  %v195 = vld [vmem:[%s1 + $0x6c] sm:$0xf]
  %v196 = vld [vmem:[%s1 + $0x70] sm:$0xf]
  %v197 = vld [vmem:[%s1 + $0x74] sm:$0xf]
  %v198 = vld [vmem:[%s1 + $0x78] sm:$0xf]
  %v199 = vld [vmem:[%s1 + $0x7c] sm:$0xf]
  %v200 = vld [vmem:[%s1 + $0x80] sm:$0xf]
  %v201 = vld [vmem:[%s1 + $0x84] sm:$0xf]
  %v202 = vld [vmem:[%s1 + $0x88] sm:$0xf]
  %v203 = vld [vmem:[%s1 + $0x8c] sm:$0xf]
  %v204 = vld [vmem:[%s1 + $0x90] sm:$0xf]
  %v205 = vld [vmem:[%s1 + $0x94] sm:$0xf]
  %v206 = vld [vmem:[%s1 + $0x98] sm:$0xf]
  %v207 = vld [vmem:[%s1 + $0x9c] sm:$0xf]
  %v208 = vld [vmem:[%s1 + $0xa0] sm:$0xf]
  %v209 = vld [vmem:[%s1 + $0xa4] sm:$0xf]
  %v210 = vld [vmem:[%s1 + $0xa8] sm:$0xf]
  %v211 = vld [vmem:[%s1 + $0xac] sm:$0xf]
  %v212 = vld [vmem:[%s1 + $0xb0] sm:$0xf]
  %v213 = vld [vmem:[%s1 + $0xb4] sm:$0xf]
  %v214 = vld [vmem:[%s1 + $0xb8] sm:$0xf]
  %v215 = vld [vmem:[%s1 + $0xbc] sm:$0xf]
  %v216 = vld [vmem:[%s1 + $0xc0] sm:$0xf]
  %v217 = vld [vmem:[%s1 + $0xc4] sm:$0xf]
  %v218 = vld [vmem:[%s1 + $0xc8] sm:$0xf]
  %v219 = vld [vmem:[%s1 + $0xcc] sm:$0xf]
  %v220 = vld [vmem:[%s1 + $0xd0] sm:$0xf]
  %v221 = vld [vmem:[%s1 + $0xd4] sm:$0xf]
  %v222 = vld [vmem:[%s1 + $0xd8] sm:$0xf]
  %v223 = vld [vmem:[%s1 + $0xdc] sm:$0xf]
  %v224 = vld [vmem:[%s1 + $0xe0] sm:$0xf]
  %v225 = vld [vmem:[%s1 + $0xe4] sm:$0xf]
  %v226 = vld [vmem:[%s1 + $0xe8] sm:$0xf]
  %v227 = vld [vmem:[%s1 + $0xec] sm:$0xf]
  %v228 = vld [vmem:[%s1 + $0xf0] sm:$0xf]
  %v229 = vld [vmem:[%s1 + $0xf4] sm:$0xf]
  %v230 = vld [vmem:[%s1 + $0xf8] sm:$0xf]
  %v231 = vld [vmem:[%s1 + $0xfc] sm:$0xf]
  %v232 = vld [vmem:[%s1 + $0x100] sm:$0xf]
  %v233 = vld [vmem:[%s1 + $0x104] sm:$0xf]
  %v234 = vld [vmem:[%s1 + $0x108] sm:$0xf]
  %v235 = vld [vmem:[%s1 + $0x10c] sm:$0xf]
  %v236 = vld [vmem:[%s1 + $0x110] sm:$0xf]
  %v237 = vld [vmem:[%s1 + $0x114] sm:$0xf]
  %v238 = vld [vmem:[%s1 + $0x118] sm:$0xf]
  %v239 = vld [vmem:[%s1 + $0x11c] sm:$0xf]
  %v240 = vld [vmem:[%s2] sm:$0x1]
  %v242 = vlaneseq
  %v243 = vshrl.u32 %v242, 7
  %v244 = vsub.s32 0, %v243
  %v245 = vrot.slane %v240, %v244
  %v394 = vunpack.c.l.b16 %v21
  %v395 = vunpack.c.h.b16 %v21
  %v396 = vunpack.c.l.b16 %v22
  %v397 = vunpack.c.h.b16 %v22
  %v398 = vunpack.c.l.b16 %v23
  %v399 = vunpack.c.l.b16 %v24
  %v400 = vunpack.c.h.b16 %v24
  %v401 = vunpack.c.l.b16 %v25
  %v402 = vunpack.c.h.b16 %v25
  %v403 = vunpack.c.l.b16 %v26
  %v404 = vunpack.c.l.b16 %v27
  %v405 = vunpack.c.h.b16 %v27
  %v406 = vunpack.c.l.b16 %v28
  %v407 = vunpack.c.h.b16 %v28
  %v408 = vunpack.c.l.b16 %v29
  %v409 = vunpack.c.l.b16 %v30
  %v410 = vunpack.c.h.b16 %v30
  %v411 = vunpack.c.l.b16 %v31
  %v412 = vunpack.c.h.b16 %v31
  %v413 = vunpack.c.l.b16 %v32
  %v414 = vunpack.c.l.b16 %v33
  %v415 = vunpack.c.h.b16 %v33
  %v416 = vunpack.c.l.b16 %v34
  %v417 = vunpack.c.h.b16 %v34
  %v418 = vunpack.c.l.b16 %v35
  %v419 = vunpack.c.l.b16 %v36
  %v420 = vunpack.c.h.b16 %v36
  %v421 = vunpack.c.l.b16 %v37
  %v422 = vunpack.c.h.b16 %v37
  %v423 = vunpack.c.l.b16 %v38
  %v424 = vunpack.c.l.b16 %v39
  %v425 = vunpack.c.h.b16 %v39
  %v426 = vunpack.c.l.b16 %v40
  %v427 = vunpack.c.h.b16 %v40
  %v428 = vunpack.c.l.b16 %v41
  %v429 = vunpack.c.l.b16 %v42
  %v430 = vunpack.c.h.b16 %v42
  %v431 = vunpack.c.l.b16 %v43
  %v432 = vunpack.c.h.b16 %v43
  %v433 = vunpack.c.l.b16 %v44
  %v434 = vunpack.c.l.b16 %v45
  %v435 = vunpack.c.h.b16 %v45
  %v436 = vunpack.c.l.b16 %v46
  %v437 = vunpack.c.h.b16 %v46
  %v438 = vunpack.c.l.b16 %v47
  %v439 = vunpack.c.l.b16 %v48
  %v440 = vunpack.c.h.b16 %v48
  %v441 = vunpack.c.l.b16 %v49
  %v442 = vunpack.c.h.b16 %v49
  %v443 = vunpack.c.l.b16 %v50
  %v444 = vunpack.c.l.b16 %v51
  %v445 = vunpack.c.h.b16 %v51
  %v446 = vunpack.c.l.b16 %v52
  %v447 = vunpack.c.h.b16 %v52
  %v448 = vunpack.c.l.b16 %v53
  %v449 = vunpack.c.l.b16 %v54
  %v450 = vunpack.c.h.b16 %v54
  %v451 = vunpack.c.l.b16 %v55
  %v452 = vunpack.c.h.b16 %v55
  %v453 = vunpack.c.l.b16 %v56
  %v454 = vunpack.c.l.b16 %v57
  %v455 = vunpack.c.h.b16 %v57
  %v456 = vunpack.c.l.b16 %v58
  %v457 = vunpack.c.h.b16 %v58
  %v458 = vunpack.c.l.b16 %v59
  %v459 = vunpack.c.l.b16 %v60
  %v460 = vunpack.c.h.b16 %v60
  %v461 = vunpack.c.l.b16 %v61
  %v462 = vunpack.c.h.b16 %v61
  %v463 = vunpack.c.l.b16 %v62
  %v464 = vunpack.c.l.b16 %v63
  %v465 = vunpack.c.h.b16 %v63
  %v466 = vunpack.c.l.b16 %v64
  %v467 = vunpack.c.h.b16 %v64
  %v468 = vunpack.c.l.b16 %v65
  %v469 = vunpack.c.l.b16 %v66
  %v470 = vunpack.c.h.b16 %v66
  %v471 = vunpack.c.l.b16 %v67
  %v472 = vunpack.c.h.b16 %v67
  %v473 = vunpack.c.l.b16 %v68
  %v474 = vunpack.c.l.b16 %v69
  %v475 = vunpack.c.h.b16 %v69
  %v476 = vunpack.c.l.b16 %v70
  %v477 = vunpack.c.h.b16 %v70
  %v478 = vunpack.c.l.b16 %v71
  %v479 = vunpack.c.l.b16 %v72
  %v480 = vunpack.c.h.b16 %v72
  %v481 = vunpack.c.l.b16 %v73
  %v482 = vunpack.c.h.b16 %v73
  %v483 = vunpack.c.l.b16 %v74
  %v484 = vunpack.c.l.b16 %v75
  %v485 = vunpack.c.h.b16 %v75
  %v486 = vunpack.c.l.b16 %v76
  %v487 = vunpack.c.h.b16 %v76
  %v488 = vunpack.c.l.b16 %v77
  %v489 = vunpack.c.l.b16 %v78
  %v490 = vunpack.c.h.b16 %v78
  %v491 = vunpack.c.l.b16 %v79
  %v492 = vunpack.c.h.b16 %v79
  %v493 = vunpack.c.l.b16 %v80
  %v494 = vunpack.c.l.b16 %v81
  %v495 = vunpack.c.h.b16 %v81
  %v496 = vunpack.c.l.b16 %v82
  %v497 = vunpack.c.h.b16 %v82
  %v498 = vunpack.c.l.b16 %v83
  %v499 = vunpack.c.l.b16 %v84
  %v500 = vunpack.c.h.b16 %v84
  %v501 = vunpack.c.l.b16 %v85
  %v502 = vunpack.c.h.b16 %v85
  %v503 = vunpack.c.l.b16 %v86
  %v504 = vunpack.c.l.b16 %v87
  %v505 = vunpack.c.h.b16 %v87
  %v506 = vunpack.c.l.b16 %v88
  %v507 = vunpack.c.h.b16 %v88
  %v508 = vunpack.c.l.b16 %v89
  %v509 = vunpack.c.l.b16 %v90
  %v510 = vunpack.c.h.b16 %v90
  %v511 = vunpack.c.l.b16 %v91
  %v512 = vunpack.c.h.b16 %v91
  %v513 = vunpack.c.l.b16 %v92
  %v514 = vunpack.c.l.b16 %v93
  %v515 = vunpack.c.h.b16 %v93
  %v516 = vunpack.c.l.b16 %v94
  %v517 = vunpack.c.h.b16 %v94
  %v518 = vunpack.c.l.b16 %v95
  %v519 = vunpack.c.l.b16 %v96
  %v520 = vunpack.c.h.b16 %v96
  %v521 = vunpack.c.l.b16 %v97
  %v522 = vunpack.c.h.b16 %v97
  %v523 = vunpack.c.l.b16 %v98
  %v524 = vunpack.c.l.b16 %v99
  %v525 = vunpack.c.h.b16 %v99
  %v526 = vunpack.c.l.b16 %v100
  %v527 = vunpack.c.h.b16 %v100
  %v528 = vunpack.c.l.b16 %v101
  %v529 = vunpack.c.l.b16 %v102
  %v530 = vunpack.c.h.b16 %v102
  %v531 = vunpack.c.l.b16 %v103
  %v532 = vunpack.c.h.b16 %v103
  %v533 = vunpack.c.l.b16 %v104
  %v534 = vunpack.c.l.b16 %v105
  %v535 = vunpack.c.h.b16 %v105
  %v536 = vunpack.c.l.b16 %v106
  %v537 = vunpack.c.h.b16 %v106
  %v538 = vunpack.c.l.b16 %v107
  %v539 = vunpack.c.l.b16 %v108
  %v540 = vunpack.c.h.b16 %v108
  %v541 = vunpack.c.l.b16 %v109
  %v542 = vunpack.c.h.b16 %v109
  %v543 = vunpack.c.l.b16 %v110
  %v544 = vunpack.c.l.b16 %v111
  %v545 = vunpack.c.h.b16 %v111
  %v546 = vunpack.c.l.b16 %v112
  %v547 = vunpack.c.h.b16 %v112
  %v548 = vunpack.c.l.b16 %v113
  %v549 = vunpack.c.l.b16 %v114
  %v550 = vunpack.c.h.b16 %v114
  %v551 = vunpack.c.l.b16 %v115
  %v552 = vunpack.c.h.b16 %v115
  %v553 = vunpack.c.l.b16 %v116
  %v554 = vunpack.c.l.b16 %v117
  %v555 = vunpack.c.h.b16 %v117
  %v556 = vunpack.c.l.b16 %v118
  %v557 = vunpack.c.h.b16 %v118
  %v558 = vunpack.c.l.b16 %v119
  %v559 = vunpack.c.l.b16 %v120
  %v560 = vunpack.c.h.b16 %v120
  %v561 = vunpack.c.l.b16 %v121
  %v562 = vunpack.c.h.b16 %v121
  %v563 = vunpack.c.l.b16 %v122
  %v564 = vunpack.c.l.b16 %v123
  %v565 = vunpack.c.h.b16 %v123
  %v566 = vunpack.c.l.b16 %v124
  %v567 = vunpack.c.h.b16 %v124
  %v568 = vunpack.c.l.b16 %v125
  %v569 = vunpack.c.l.b16 %v126
  %v570 = vunpack.c.h.b16 %v126
  %v571 = vunpack.c.l.b16 %v127
  %v572 = vunpack.c.h.b16 %v127
  %v573 = vunpack.c.l.b16 %v128
  %v574 = vunpack.c.l.b16 %v129
  %v575 = vunpack.c.h.b16 %v129
  %v576 = vunpack.c.l.b16 %v130
  %v577 = vunpack.c.h.b16 %v130
  %v578 = vunpack.c.l.b16 %v131
  %v579 = vunpack.c.l.b16 %v132
  %v580 = vunpack.c.h.b16 %v132
  %v581 = vunpack.c.l.b16 %v133
  %v582 = vunpack.c.h.b16 %v133
  %v583 = vunpack.c.l.b16 %v134
  %v584 = vunpack.c.l.b16 %v135
  %v585 = vunpack.c.h.b16 %v135
  %v586 = vunpack.c.l.b16 %v136
  %v587 = vunpack.c.h.b16 %v136
  %v588 = vunpack.c.l.b16 %v137
  %v589 = vunpack.c.l.b16 %v138
  %v590 = vunpack.c.h.b16 %v138
  %v591 = vunpack.c.l.b16 %v139
  %v592 = vunpack.c.h.b16 %v139
  %v593 = vunpack.c.l.b16 %v140
  %v594 = vunpack.c.l.b16 %v141
  %v595 = vunpack.c.h.b16 %v141
  %v596 = vunpack.c.l.b16 %v142
  %v597 = vunpack.c.h.b16 %v142
  %v598 = vunpack.c.l.b16 %v143
  %v599 = vunpack.c.l.b16 %v144
  %v600 = vunpack.c.h.b16 %v144
  %v601 = vunpack.c.l.b16 %v145
  %v602 = vunpack.c.h.b16 %v145
  %v603 = vunpack.c.l.b16 %v146
  %v604 = vunpack.c.l.b16 %v147
  %v605 = vunpack.c.h.b16 %v147
  %v606 = vunpack.c.l.b16 %v148
  %v607 = vunpack.c.h.b16 %v148
  %v608 = vunpack.c.l.b16 %v149
  %v609 = vunpack.c.l.b16 %v150
  %v610 = vunpack.c.h.b16 %v150
  %v611 = vunpack.c.l.b16 %v151
  %v612 = vunpack.c.h.b16 %v151
  %v613 = vunpack.c.l.b16 %v152
  %v614 = vunpack.c.l.b16 %v153
  %v615 = vunpack.c.h.b16 %v153
  %v616 = vunpack.c.l.b16 %v154
  %v617 = vunpack.c.h.b16 %v154
  %v618 = vunpack.c.l.b16 %v155
  %v619 = vunpack.c.l.b16 %v156
  %v620 = vunpack.c.h.b16 %v156
  %v621 = vunpack.c.l.b16 %v157
  %v622 = vunpack.c.h.b16 %v157
  %v623 = vunpack.c.l.b16 %v158
  %v624 = vunpack.c.l.b16 %v159
  %v625 = vunpack.c.h.b16 %v159
  %v626 = vunpack.c.l.b16 %v160
  %v627 = vunpack.c.h.b16 %v160
  %v628 = vunpack.c.l.b16 %v161
  %v629 = vunpack.c.l.b16 %v162
  %v630 = vunpack.c.h.b16 %v162
  %v631 = vunpack.c.l.b16 %v163
  %v632 = vunpack.c.h.b16 %v163
  %v633 = vunpack.c.l.b16 %v164
  %v634 = vunpack.c.l.b16 %v165
  %v635 = vunpack.c.h.b16 %v165
  %v636 = vunpack.c.l.b16 %v166
  %v637 = vunpack.c.h.b16 %v166
  %v638 = vunpack.c.l.b16 %v167
  %v639 = vpack.c.b16 %v399, %v394
  %v640 = vpack.c.b16 %v400, %v395
  %v641 = vpack.c.b16 %v401, %v396
  %v642 = vpack.c.b16 %v402, %v397
  %v643 = vpack.c.b16 %v403, %v398
  %v644 = vpack.c.b16 %v409, %v404
  %v645 = vpack.c.b16 %v410, %v405
  %v646 = vpack.c.b16 %v411, %v406
  %v647 = vpack.c.b16 %v412, %v407
  %v648 = vpack.c.b16 %v413, %v408
  %v649 = vpack.c.b16 %v419, %v414
  %v650 = vpack.c.b16 %v420, %v415
  %v651 = vpack.c.b16 %v421, %v416
  %v652 = vpack.c.b16 %v422, %v417
  %v653 = vpack.c.b16 %v423, %v418
  %v654 = vpack.c.b16 %v429, %v424
  %v655 = vpack.c.b16 %v430, %v425
  %v656 = vpack.c.b16 %v431, %v426
  %v657 = vpack.c.b16 %v432, %v427
  %v658 = vpack.c.b16 %v433, %v428
  %v659 = vpack.c.b16 %v439, %v434
  %v660 = vpack.c.b16 %v440, %v435
  %v661 = vpack.c.b16 %v441, %v436
  %v662 = vpack.c.b16 %v442, %v437
  %v663 = vpack.c.b16 %v443, %v438
  %v664 = vpack.c.b16 %v449, %v444
  %v665 = vpack.c.b16 %v450, %v445
  %v666 = vpack.c.b16 %v451, %v446
  %v667 = vpack.c.b16 %v452, %v447
  %v668 = vpack.c.b16 %v453, %v448
  %v669 = vpack.c.b16 %v459, %v454
  %v670 = vpack.c.b16 %v460, %v455
  %v671 = vpack.c.b16 %v461, %v456
  %v672 = vpack.c.b16 %v462, %v457
  %v673 = vpack.c.b16 %v463, %v458
  %v674 = vpack.c.b16 %v469, %v464
  %v675 = vpack.c.b16 %v470, %v465
  %v676 = vpack.c.b16 %v471, %v466
  %v677 = vpack.c.b16 %v472, %v467
  %v678 = vpack.c.b16 %v473, %v468
  %v679 = vpack.c.b16 %v479, %v474
  %v680 = vpack.c.b16 %v480, %v475
  %v681 = vpack.c.b16 %v481, %v476
  %v682 = vpack.c.b16 %v482, %v477
  %v683 = vpack.c.b16 %v483, %v478
  %v684 = vpack.c.b16 %v489, %v484
  %v685 = vpack.c.b16 %v490, %v485
  %v686 = vpack.c.b16 %v491, %v486
  %v687 = vpack.c.b16 %v492, %v487
  %v688 = vpack.c.b16 %v493, %v488
  %v689 = vpack.c.b16 %v499, %v494
  %v690 = vpack.c.b16 %v500, %v495
  %v691 = vpack.c.b16 %v501, %v496
  %v692 = vpack.c.b16 %v502, %v497
  %v693 = vpack.c.b16 %v503, %v498
  %v694 = vpack.c.b16 %v509, %v504
  %v695 = vpack.c.b16 %v510, %v505
  %v696 = vpack.c.b16 %v511, %v506
  %v697 = vpack.c.b16 %v512, %v507
  %v698 = vpack.c.b16 %v513, %v508
  %v699 = vpack.c.b16 %v519, %v514
  %v700 = vpack.c.b16 %v520, %v515
  %v701 = vpack.c.b16 %v521, %v516
  %v702 = vpack.c.b16 %v522, %v517
  %v703 = vpack.c.b16 %v523, %v518
  %v704 = vpack.c.b16 %v529, %v524
  %v705 = vpack.c.b16 %v530, %v525
  %v706 = vpack.c.b16 %v531, %v526
  %v707 = vpack.c.b16 %v532, %v527
  %v708 = vpack.c.b16 %v533, %v528
  %v709 = vpack.c.b16 %v539, %v534
  %v710 = vpack.c.b16 %v540, %v535
  %v711 = vpack.c.b16 %v541, %v536
  %v712 = vpack.c.b16 %v542, %v537
  %v713 = vpack.c.b16 %v543, %v538
  %v714 = vpack.c.b16 %v549, %v544
  %v715 = vpack.c.b16 %v550, %v545
  %v716 = vpack.c.b16 %v551, %v546
  %v717 = vpack.c.b16 %v552, %v547
  %v718 = vpack.c.b16 %v553, %v548
  %v719 = vpack.c.b16 %v559, %v554
  %v720 = vpack.c.b16 %v560, %v555
  %v721 = vpack.c.b16 %v561, %v556
  %v722 = vpack.c.b16 %v562, %v557
  %v723 = vpack.c.b16 %v563, %v558
  %v724 = vpack.c.b16 %v569, %v564
  %v725 = vpack.c.b16 %v570, %v565
  %v726 = vpack.c.b16 %v571, %v566
  %v727 = vpack.c.b16 %v572, %v567
  %v728 = vpack.c.b16 %v573, %v568
  %v729 = vpack.c.b16 %v579, %v574
  %v730 = vpack.c.b16 %v580, %v575
  %v731 = vpack.c.b16 %v581, %v576
  %v732 = vpack.c.b16 %v582, %v577
  %v733 = vpack.c.b16 %v583, %v578
  %v734 = vpack.c.b16 %v589, %v584
  %v735 = vpack.c.b16 %v590, %v585
  %v736 = vpack.c.b16 %v591, %v586
  %v737 = vpack.c.b16 %v592, %v587
  %v738 = vpack.c.b16 %v593, %v588
  %v739 = vpack.c.b16 %v599, %v594
  %v740 = vpack.c.b16 %v600, %v595
  %v741 = vpack.c.b16 %v601, %v596
  %v742 = vpack.c.b16 %v602, %v597
  %v743 = vpack.c.b16 %v603, %v598
  %v744 = vpack.c.b16 %v609, %v604
  %v745 = vpack.c.b16 %v610, %v605
  %v746 = vpack.c.b16 %v611, %v606
  %v747 = vpack.c.b16 %v612, %v607
  %v748 = vpack.c.b16 %v613, %v608
  %v749 = vpack.c.b16 %v619, %v614
  %v750 = vpack.c.b16 %v620, %v615
  %v751 = vpack.c.b16 %v621, %v616
  %v752 = vpack.c.b16 %v622, %v617
  %v753 = vpack.c.b16 %v623, %v618
  %v754 = vpack.c.b16 %v629, %v624
  %v755 = vpack.c.b16 %v630, %v625
  %v756 = vpack.c.b16 %v631, %v626
  %v757 = vpack.c.b16 %v632, %v627
  %v758 = vpack.c.b16 %v633, %v628
  %v759 = vpack.c.b16 %v634, %v634
  %v760 = vpack.c.b16 %v635, %v635
  %v761 = vpack.c.b16 %v636, %v636
  %v762 = vpack.c.b16 %v637, %v637
  %v763 = vpack.c.b16 %v638, %v638
  %v936 = vunpack.c.l.b16 %v168
  %v937 = vunpack.c.l.b16 %v169
  %v938 = vunpack.c.l.b16 %v170
  %v939 = vunpack.c.l.b16 %v171
  %v940 = vunpack.c.l.b16 %v172
  %v941 = vunpack.c.l.b16 %v173
  %v942 = vunpack.c.l.b16 %v174
  %v943 = vunpack.c.l.b16 %v175
  %v944 = vunpack.c.l.b16 %v176
  %v945 = vunpack.c.l.b16 %v177
  %v946 = vunpack.c.l.b16 %v178
  %v947 = vunpack.c.l.b16 %v179
  %v948 = vunpack.c.l.b16 %v180
  %v949 = vunpack.c.l.b16 %v181
  %v950 = vunpack.c.l.b16 %v182
  %v951 = vunpack.c.l.b16 %v183
  %v952 = vunpack.c.l.b16 %v184
  %v953 = vunpack.c.l.b16 %v185
  %v954 = vunpack.c.l.b16 %v186
  %v955 = vunpack.c.l.b16 %v187
  %v956 = vunpack.c.l.b16 %v188
  %v957 = vunpack.c.l.b16 %v189
  %v958 = vunpack.c.l.b16 %v190
  %v959 = vunpack.c.l.b16 %v191
  %v960 = vunpack.c.l.b16 %v192
  %v961 = vunpack.c.l.b16 %v193
  %v962 = vunpack.c.l.b16 %v194
  %v963 = vunpack.c.l.b16 %v195
  %v964 = vunpack.c.l.b16 %v196
  %v965 = vunpack.c.l.b16 %v197
  %v966 = vunpack.c.l.b16 %v198
  %v967 = vunpack.c.l.b16 %v199
  %v968 = vunpack.c.l.b16 %v200
  %v969 = vunpack.c.l.b16 %v201
  %v970 = vunpack.c.l.b16 %v202
  %v971 = vunpack.c.l.b16 %v203
  %v972 = vunpack.c.l.b16 %v204
  %v973 = vunpack.c.l.b16 %v205
  %v974 = vunpack.c.l.b16 %v206
  %v975 = vunpack.c.l.b16 %v207
  %v976 = vunpack.c.l.b16 %v208
  %v977 = vunpack.c.l.b16 %v209
  %v978 = vunpack.c.l.b16 %v210
  %v979 = vunpack.c.l.b16 %v211
  %v980 = vunpack.c.l.b16 %v212
  %v981 = vunpack.c.l.b16 %v213
  %v982 = vunpack.c.l.b16 %v214
  %v983 = vunpack.c.l.b16 %v215
  %v984 = vunpack.c.l.b16 %v216
  %v985 = vunpack.c.l.b16 %v217
  %v986 = vunpack.c.l.b16 %v218
  %v987 = vunpack.c.l.b16 %v219
  %v988 = vunpack.c.l.b16 %v220
  %v989 = vunpack.c.l.b16 %v221
  %v990 = vunpack.c.l.b16 %v222
  %v991 = vunpack.c.l.b16 %v223
  %v992 = vunpack.c.l.b16 %v224
  %v993 = vunpack.c.l.b16 %v225
  %v994 = vunpack.c.l.b16 %v226
  %v995 = vunpack.c.l.b16 %v227
  %v996 = vunpack.c.l.b16 %v228
  %v997 = vunpack.c.l.b16 %v229
  %v998 = vunpack.c.l.b16 %v230
  %v999 = vunpack.c.l.b16 %v231
  %v1000 = vunpack.c.l.b16 %v232
  %v1001 = vunpack.c.l.b16 %v233
  %v1002 = vunpack.c.l.b16 %v234
  %v1003 = vunpack.c.l.b16 %v235
  %v1004 = vunpack.c.l.b16 %v236
  %v1005 = vunpack.c.l.b16 %v237
  %v1006 = vunpack.c.l.b16 %v238
  %v1007 = vunpack.c.l.b16 %v239
  %v1008 = vpack.c.b16 %v937, %v936
  %v1009 = vpack.c.b16 %v939, %v938
  %v1010 = vpack.c.b16 %v941, %v940
  %v1011 = vpack.c.b16 %v943, %v942
  %v1012 = vpack.c.b16 %v945, %v944
  %v1013 = vpack.c.b16 %v947, %v946
  %v1014 = vpack.c.b16 %v949, %v948
  %v1015 = vpack.c.b16 %v951, %v950
  %v1016 = vpack.c.b16 %v953, %v952
  %v1017 = vpack.c.b16 %v955, %v954
  %v1018 = vpack.c.b16 %v957, %v956
  %v1019 = vpack.c.b16 %v959, %v958
  %v1020 = vpack.c.b16 %v961, %v960
  %v1021 = vpack.c.b16 %v963, %v962
  %v1022 = vpack.c.b16 %v965, %v964
  %v1023 = vpack.c.b16 %v967, %v966
  %v1024 = vpack.c.b16 %v969, %v968
  %v1025 = vpack.c.b16 %v971, %v970
  %v1026 = vpack.c.b16 %v973, %v972
  %v1027 = vpack.c.b16 %v975, %v974
  %v1028 = vpack.c.b16 %v977, %v976
  %v1029 = vpack.c.b16 %v979, %v978
  %v1030 = vpack.c.b16 %v981, %v980
  %v1031 = vpack.c.b16 %v983, %v982
  %v1032 = vpack.c.b16 %v985, %v984
  %v1033 = vpack.c.b16 %v987, %v986
  %v1034 = vpack.c.b16 %v989, %v988
  %v1035 = vpack.c.b16 %v991, %v990
  %v1036 = vpack.c.b16 %v993, %v992
  %v1037 = vpack.c.b16 %v995, %v994
  %v1038 = vpack.c.b16 %v997, %v996
  %v1039 = vpack.c.b16 %v999, %v998
  %v1040 = vpack.c.b16 %v1001, %v1000
  %v1041 = vpack.c.b16 %v1003, %v1002
  %v1042 = vpack.c.b16 %v1005, %v1004
  %v1043 = vpack.c.b16 %v1007, %v1006
  %vm1080 = vcmask 523264
  %v1082 = vsel %vm1080, %v643, 0
  %v1085 = vsel %vm1080, %v648, 0
  %v1088 = vsel %vm1080, %v653, 0
  %v1091 = vsel %vm1080, %v658, 0
  %v1094 = vsel %vm1080, %v663, 0
  %v1097 = vsel %vm1080, %v668, 0
  %v1100 = vsel %vm1080, %v673, 0
  %v1103 = vsel %vm1080, %v678, 0
  %v1106 = vsel %vm1080, %v683, 0
  %v1109 = vsel %vm1080, %v688, 0
  %v1112 = vsel %vm1080, %v693, 0
  %v1115 = vsel %vm1080, %v698, 0
  %v1118 = vsel %vm1080, %v703, 0
  %v1121 = vsel %vm1080, %v708, 0
  %v1124 = vsel %vm1080, %v713, 0
  %v1127 = vsel %vm1080, %v718, 0
  %v1130 = vsel %vm1080, %v723, 0
  %v1133 = vsel %vm1080, %v728, 0
  %v1136 = vsel %vm1080, %v733, 0
  %v1139 = vsel %vm1080, %v738, 0
  %v1142 = vsel %vm1080, %v743, 0
  %v1145 = vsel %vm1080, %v748, 0
  %v1148 = vsel %vm1080, %v753, 0
  %v1151 = vsel %vm1080, %v758, 0
  %v1154 = vsel %vm1080, %v763, 0
  %1156 = vmatprep.subr.bf16.mxu0 0
  %1157 = vmatpush1.bf16.msra.mxu0 %v1015
  %1158 = vmatprep.subr.bf16.mxu0 0
  %1159 = vmatpush1.bf16.msra.mxu0 %v1014
  %1160 = vmatprep.subr.bf16.mxu0 0
  %1161 = vmatpush1.bf16.msra.mxu0 %v1013
  %1162 = vmatprep.subr.bf16.mxu0 0
  %1163 = vmatpush1.bf16.msra.mxu0 %v1012
  %1164 = vmatprep.subr.bf16.mxu0 0
  %1165 = vmatpush1.bf16.msra.mxu0 %v1011
  %1166 = vmatprep.subr.bf16.mxu0 0
  %1167 = vmatpush1.bf16.msra.mxu0 %v1010
  %1168 = vmatprep.subr.bf16.mxu0 0
  %1169 = vmatpush1.bf16.msra.mxu0 %v1009
  %1170 = vmatprep.subr.bf16.mxu0 0
  %1171 = vmatpush1.bf16.msra.mxu0 %v1008
  %1172 = vmatprep.subr.bf16.mxu0 0
  %1173 = vmatpush2.bf16.msra.mxu0 %v1023
  %1174 = vmatprep.subr.bf16.mxu0 0
  %1175 = vmatpush2.bf16.msra.mxu0 %v1022
  %1176 = vmatprep.subr.bf16.mxu0 0
  %1177 = vmatpush2.bf16.msra.mxu0 %v1021
  %1178 = vmatprep.subr.bf16.mxu0 0
  %1179 = vmatpush2.bf16.msra.mxu0 %v1020
  %1180 = vmatprep.subr.bf16.mxu0 0
  %1181 = vmatpush2.bf16.msra.mxu0 %v1019
  %1182 = vmatprep.subr.bf16.mxu0 0
  %1183 = vmatpush2.bf16.msra.mxu0 %v1018
  %1184 = vmatprep.subr.bf16.mxu0 0
  %1185 = vmatpush2.bf16.msra.mxu0 %v1017
  %1186 = vmatprep.subr.bf16.mxu0 0
  %1187 = vmatpush2.bf16.msra.mxu0 %v1016
  %1188 = vmatprep.mubr.bf16.mxu0 %v640
  %1189 = vmatmul.mubr.bf16.gmra.mxu0 %v639
  %v1190 = vpop.f32.mrf.mxu0
  %v1191 = vadd.f32 %v245, %v1190
  %v1192 = vpop.f32.mrf.mxu0
  %v1193 = vpop.f32.mrf.mxu0
  %v1194 = vadd.f32 %v245, %v1193
  %v1195 = vpop.f32.mrf.mxu0
  %1196 = vmatprep.mubr.bf16.mxu0 %v645
  %1197 = vmatmul.mubr.bf16.gmra.mxu0 %v644
  %v1198 = vpop.f32.mrf.mxu0
  %v1199 = vadd.f32 %v245, %v1198
  %v1200 = vpop.f32.mrf.mxu0
  %v1201 = vpop.f32.mrf.mxu0
  %v1202 = vadd.f32 %v245, %v1201
  %v1203 = vpop.f32.mrf.mxu0
  %1204 = vmatprep.mubr.bf16.mxu0 %v650
  %1205 = vmatmul.mubr.bf16.gmra.mxu0 %v649
  %v1206 = vpop.f32.mrf.mxu0
  %v1207 = vadd.f32 %v245, %v1206
  %v1208 = vpop.f32.mrf.mxu0
  %v1209 = vpop.f32.mrf.mxu0
  %v1210 = vadd.f32 %v245, %v1209
  %v1211 = vpop.f32.mrf.mxu0
  %1212 = vmatprep.mubr.bf16.mxu0 %v655
  %1213 = vmatmul.mubr.bf16.gmra.mxu0 %v654
  %v1214 = vpop.f32.mrf.mxu0
  %v1215 = vadd.f32 %v245, %v1214
  %v1216 = vpop.f32.mrf.mxu0
  %v1217 = vpop.f32.mrf.mxu0
  %v1218 = vadd.f32 %v245, %v1217
  %v1219 = vpop.f32.mrf.mxu0
  %1220 = vmatprep.mubr.bf16.mxu0 %v660
  %1221 = vmatmul.mubr.bf16.gmra.mxu0 %v659
  %v1222 = vpop.f32.mrf.mxu0
  %v1223 = vadd.f32 %v245, %v1222
  %v1224 = vpop.f32.mrf.mxu0
  %v1225 = vpop.f32.mrf.mxu0
  %v1226 = vadd.f32 %v245, %v1225
  %v1227 = vpop.f32.mrf.mxu0
  %1228 = vmatprep.mubr.bf16.mxu0 %v665
  %1229 = vmatmul.mubr.bf16.gmra.mxu0 %v664
  %v1230 = vpop.f32.mrf.mxu0
  %v1231 = vadd.f32 %v245, %v1230
  %v1232 = vpop.f32.mrf.mxu0
  %v1233 = vpop.f32.mrf.mxu0
  %v1234 = vadd.f32 %v245, %v1233
  %v1235 = vpop.f32.mrf.mxu0
  %1236 = vmatprep.mubr.bf16.mxu0 %v670
  %1237 = vmatmul.mubr.bf16.gmra.mxu0 %v669
  %v1238 = vpop.f32.mrf.mxu0
  %v1239 = vadd.f32 %v245, %v1238
  %v1240 = vpop.f32.mrf.mxu0
  %v1241 = vpop.f32.mrf.mxu0
  %v1242 = vadd.f32 %v245, %v1241
  %v1243 = vpop.f32.mrf.mxu0
  %1244 = vmatprep.mubr.bf16.mxu0 %v675
  %1245 = vmatmul.mubr.bf16.gmra.mxu0 %v674
  %v1246 = vpop.f32.mrf.mxu0
  %v1247 = vadd.f32 %v245, %v1246
  %v1248 = vpop.f32.mrf.mxu0
  %v1249 = vpop.f32.mrf.mxu0
  %v1250 = vadd.f32 %v245, %v1249
  %v1251 = vpop.f32.mrf.mxu0
  %1252 = vmatprep.mubr.bf16.mxu0 %v680
  %1253 = vmatmul.mubr.bf16.gmra.mxu0 %v679
  %v1254 = vpop.f32.mrf.mxu0
  %v1255 = vadd.f32 %v245, %v1254
  %v1256 = vpop.f32.mrf.mxu0
  %v1257 = vpop.f32.mrf.mxu0
  %v1258 = vadd.f32 %v245, %v1257
  %v1259 = vpop.f32.mrf.mxu0
  %1260 = vmatprep.mubr.bf16.mxu0 %v685
  %1261 = vmatmul.mubr.bf16.gmra.mxu0 %v684
  %v1262 = vpop.f32.mrf.mxu0
  %v1263 = vadd.f32 %v245, %v1262
  %v1264 = vpop.f32.mrf.mxu0
  %v1265 = vpop.f32.mrf.mxu0
  %v1266 = vadd.f32 %v245, %v1265
  %v1267 = vpop.f32.mrf.mxu0
  %1268 = vmatprep.mubr.bf16.mxu0 %v690
  %1269 = vmatmul.mubr.bf16.gmra.mxu0 %v689
  %v1270 = vpop.f32.mrf.mxu0
  %v1271 = vadd.f32 %v245, %v1270
  %v1272 = vpop.f32.mrf.mxu0
  %v1273 = vpop.f32.mrf.mxu0
  %v1274 = vadd.f32 %v245, %v1273
  %v1275 = vpop.f32.mrf.mxu0
  %1276 = vmatprep.mubr.bf16.mxu0 %v695
  %1277 = vmatmul.mubr.bf16.gmra.mxu0 %v694
  %v1278 = vpop.f32.mrf.mxu0
  %v1279 = vadd.f32 %v245, %v1278
  %v1280 = vpop.f32.mrf.mxu0
  %v1281 = vpop.f32.mrf.mxu0
  %v1282 = vadd.f32 %v245, %v1281
  %v1283 = vpop.f32.mrf.mxu0
  %1284 = vmatprep.mubr.bf16.mxu0 %v700
  %1285 = vmatmul.mubr.bf16.gmra.mxu0 %v699
  %v1286 = vpop.f32.mrf.mxu0
  %v1287 = vadd.f32 %v245, %v1286
  %v1288 = vpop.f32.mrf.mxu0
  %v1289 = vpop.f32.mrf.mxu0
  %v1290 = vadd.f32 %v245, %v1289
  %v1291 = vpop.f32.mrf.mxu0
  %1292 = vmatprep.mubr.bf16.mxu0 %v705
  %1293 = vmatmul.mubr.bf16.gmra.mxu0 %v704
  %v1294 = vpop.f32.mrf.mxu0
  %v1295 = vadd.f32 %v245, %v1294
  %v1296 = vpop.f32.mrf.mxu0
  %v1297 = vpop.f32.mrf.mxu0
  %v1298 = vadd.f32 %v245, %v1297
  %v1299 = vpop.f32.mrf.mxu0
  %1300 = vmatprep.mubr.bf16.mxu0 %v710
  %1301 = vmatmul.mubr.bf16.gmra.mxu0 %v709
  %v1302 = vpop.f32.mrf.mxu0
  %v1303 = vadd.f32 %v245, %v1302
  %v1304 = vpop.f32.mrf.mxu0
  %v1305 = vpop.f32.mrf.mxu0
  %v1306 = vadd.f32 %v245, %v1305
  %v1307 = vpop.f32.mrf.mxu0
  %1308 = vmatprep.mubr.bf16.mxu0 %v715
  %1309 = vmatmul.mubr.bf16.gmra.mxu0 %v714
  %v1310 = vpop.f32.mrf.mxu0
  %v1311 = vadd.f32 %v245, %v1310
  %v1312 = vpop.f32.mrf.mxu0
  %v1313 = vpop.f32.mrf.mxu0
  %v1314 = vadd.f32 %v245, %v1313
  %v1315 = vpop.f32.mrf.mxu0
  %1316 = vmatprep.mubr.bf16.mxu0 %v720
  %1317 = vmatmul.mubr.bf16.gmra.mxu0 %v719
  %v1318 = vpop.f32.mrf.mxu0
  %v1319 = vadd.f32 %v245, %v1318
  %v1320 = vpop.f32.mrf.mxu0
  %v1321 = vpop.f32.mrf.mxu0
  %v1322 = vadd.f32 %v245, %v1321
  %v1323 = vpop.f32.mrf.mxu0
  %1324 = vmatprep.mubr.bf16.mxu0 %v725
  %1325 = vmatmul.mubr.bf16.gmra.mxu0 %v724
  %v1326 = vpop.f32.mrf.mxu0
  %v1327 = vadd.f32 %v245, %v1326
  %v1328 = vpop.f32.mrf.mxu0
  %v1329 = vpop.f32.mrf.mxu0
  %v1330 = vadd.f32 %v245, %v1329
  %v1331 = vpop.f32.mrf.mxu0
  %1332 = vmatprep.mubr.bf16.mxu0 %v730
  %1333 = vmatmul.mubr.bf16.gmra.mxu0 %v729
  %v1334 = vpop.f32.mrf.mxu0
  %v1335 = vadd.f32 %v245, %v1334
  %v1336 = vpop.f32.mrf.mxu0
  %v1337 = vpop.f32.mrf.mxu0
  %v1338 = vadd.f32 %v245, %v1337
  %v1339 = vpop.f32.mrf.mxu0
  %1340 = vmatprep.mubr.bf16.mxu0 %v735
  %1341 = vmatmul.mubr.bf16.gmra.mxu0 %v734
  %v1342 = vpop.f32.mrf.mxu0
  %v1343 = vadd.f32 %v245, %v1342
  %v1344 = vpop.f32.mrf.mxu0
  %v1345 = vpop.f32.mrf.mxu0
  %v1346 = vadd.f32 %v245, %v1345
  %v1347 = vpop.f32.mrf.mxu0
  %1348 = vmatprep.mubr.bf16.mxu0 %v740
  %1349 = vmatmul.mubr.bf16.gmra.mxu0 %v739
  %v1350 = vpop.f32.mrf.mxu0
  %v1351 = vadd.f32 %v245, %v1350
  %v1352 = vpop.f32.mrf.mxu0
  %v1353 = vpop.f32.mrf.mxu0
  %v1354 = vadd.f32 %v245, %v1353
  %v1355 = vpop.f32.mrf.mxu0
  %1356 = vmatprep.mubr.bf16.mxu0 %v745
  %1357 = vmatmul.mubr.bf16.gmra.mxu0 %v744
  %v1358 = vpop.f32.mrf.mxu0
  %v1359 = vadd.f32 %v245, %v1358
  %v1360 = vpop.f32.mrf.mxu0
  %v1361 = vpop.f32.mrf.mxu0
  %v1362 = vadd.f32 %v245, %v1361
  %v1363 = vpop.f32.mrf.mxu0
  %1364 = vmatprep.mubr.bf16.mxu0 %v750
  %1365 = vmatmul.mubr.bf16.gmra.mxu0 %v749
  %v1366 = vpop.f32.mrf.mxu0
  %v1367 = vadd.f32 %v245, %v1366
  %v1368 = vpop.f32.mrf.mxu0
  %v1369 = vpop.f32.mrf.mxu0
  %v1370 = vadd.f32 %v245, %v1369
  %v1371 = vpop.f32.mrf.mxu0
  %1372 = vmatprep.mubr.bf16.mxu0 %v755
  %1373 = vmatmul.mubr.bf16.gmra.mxu0 %v754
  %v1374 = vpop.f32.mrf.mxu0
  %v1375 = vadd.f32 %v245, %v1374
  %v1376 = vpop.f32.mrf.mxu0
  %v1377 = vpop.f32.mrf.mxu0
  %v1378 = vadd.f32 %v245, %v1377
  %v1379 = vpop.f32.mrf.mxu0
  %1380 = vmatprep.mubr.bf16.mxu0 %v760
  %1381 = vmatmul.mubr.bf16.gmra.mxu0 %v759
  %v1382 = vpop.f32.mrf.mxu0
  %v1383 = vadd.f32 %v245, %v1382
  %v1384 = vpop.f32.mrf.mxu0
  %v1385 = vpop.f32.mrf.mxu0
  %v1386 = vpop.f32.mrf.mxu0
  %1387 = vdwg.mxu0
  %1388 = vmatprep.subr.bf16.mxu0 0
  %1389 = vmatpush1.bf16.msra.mxu0 %v1031
  %1390 = vmatprep.subr.bf16.mxu0 0
  %1391 = vmatpush1.bf16.msra.mxu0 %v1030
  %1392 = vmatprep.subr.bf16.mxu0 0
  %1393 = vmatpush1.bf16.msra.mxu0 %v1029
  %1394 = vmatprep.subr.bf16.mxu0 0
  %1395 = vmatpush1.bf16.msra.mxu0 %v1028
  %1396 = vmatprep.subr.bf16.mxu0 0
  %1397 = vmatpush1.bf16.msra.mxu0 %v1027
  %1398 = vmatprep.subr.bf16.mxu0 0
  %1399 = vmatpush1.bf16.msra.mxu0 %v1026
  %1400 = vmatprep.subr.bf16.mxu0 0
  %1401 = vmatpush1.bf16.msra.mxu0 %v1025
  %1402 = vmatprep.subr.bf16.mxu0 0
  %1403 = vmatpush1.bf16.msra.mxu0 %v1024
  %1404 = vmatprep.subr.bf16.mxu0 0
  %1405 = vmatpush2.bf16.msra.mxu0 %v1039
  %1406 = vmatprep.subr.bf16.mxu0 0
  %1407 = vmatpush2.bf16.msra.mxu0 %v1038
  %1408 = vmatprep.subr.bf16.mxu0 0
  %1409 = vmatpush2.bf16.msra.mxu0 %v1037
  %1410 = vmatprep.subr.bf16.mxu0 0
  %1411 = vmatpush2.bf16.msra.mxu0 %v1036
  %1412 = vmatprep.subr.bf16.mxu0 0
  %1413 = vmatpush2.bf16.msra.mxu0 %v1035
  %1414 = vmatprep.subr.bf16.mxu0 0
  %1415 = vmatpush2.bf16.msra.mxu0 %v1034
  %1416 = vmatprep.subr.bf16.mxu0 0
  %1417 = vmatpush2.bf16.msra.mxu0 %v1033
  %1418 = vmatprep.subr.bf16.mxu0 0
  %1419 = vmatpush2.bf16.msra.mxu0 %v1032
  %1420 = vmatprep.mubr.bf16.mxu0 %v642
  %1421 = vmatmul.mubr.bf16.gmra.mxu0 %v641
  %v1422 = vpop.f32.mrf.mxu0
  %v1423 = vadd.f32 %v1191, %v1422
  %v1424 = vpop.f32.mrf.mxu0
  %v1425 = vpop.f32.mrf.mxu0
  %v1426 = vadd.f32 %v1194, %v1425
  %v1427 = vpop.f32.mrf.mxu0
  %1428 = vmatprep.mubr.bf16.mxu0 %v647
  %1429 = vmatmul.mubr.bf16.gmra.mxu0 %v646
  %v1430 = vpop.f32.mrf.mxu0
  %v1431 = vadd.f32 %v1199, %v1430
  %v1432 = vpop.f32.mrf.mxu0
  %v1433 = vpop.f32.mrf.mxu0
  %v1434 = vadd.f32 %v1202, %v1433
  %v1435 = vpop.f32.mrf.mxu0
  %1436 = vmatprep.mubr.bf16.mxu0 %v652
  %1437 = vmatmul.mubr.bf16.gmra.mxu0 %v651
  %v1438 = vpop.f32.mrf.mxu0
  %v1439 = vadd.f32 %v1207, %v1438
  %v1440 = vpop.f32.mrf.mxu0
  %v1441 = vpop.f32.mrf.mxu0
  %v1442 = vadd.f32 %v1210, %v1441
  %v1443 = vpop.f32.mrf.mxu0
  %1444 = vmatprep.mubr.bf16.mxu0 %v657
  %1445 = vmatmul.mubr.bf16.gmra.mxu0 %v656
  %v1446 = vpop.f32.mrf.mxu0
  %v1447 = vadd.f32 %v1215, %v1446
  %v1448 = vpop.f32.mrf.mxu0
  %v1449 = vpop.f32.mrf.mxu0
  %v1450 = vadd.f32 %v1218, %v1449
  %v1451 = vpop.f32.mrf.mxu0
  %1452 = vmatprep.mubr.bf16.mxu0 %v662
  %1453 = vmatmul.mubr.bf16.gmra.mxu0 %v661
  %v1454 = vpop.f32.mrf.mxu0
  %v1455 = vadd.f32 %v1223, %v1454
  %v1456 = vpop.f32.mrf.mxu0
  %v1457 = vpop.f32.mrf.mxu0
  %v1458 = vadd.f32 %v1226, %v1457
  %v1459 = vpop.f32.mrf.mxu0
  %1460 = vmatprep.mubr.bf16.mxu0 %v667
  %1461 = vmatmul.mubr.bf16.gmra.mxu0 %v666
  %v1462 = vpop.f32.mrf.mxu0
  %v1463 = vadd.f32 %v1231, %v1462
  %v1464 = vpop.f32.mrf.mxu0
  %v1465 = vpop.f32.mrf.mxu0
  %v1466 = vadd.f32 %v1234, %v1465
  %v1467 = vpop.f32.mrf.mxu0
  %1468 = vmatprep.mubr.bf16.mxu0 %v672
  %1469 = vmatmul.mubr.bf16.gmra.mxu0 %v671
  %v1470 = vpop.f32.mrf.mxu0
  %v1471 = vadd.f32 %v1239, %v1470
  %v1472 = vpop.f32.mrf.mxu0
  %v1473 = vpop.f32.mrf.mxu0
  %v1474 = vadd.f32 %v1242, %v1473
  %v1475 = vpop.f32.mrf.mxu0
  %1476 = vmatprep.mubr.bf16.mxu0 %v677
  %1477 = vmatmul.mubr.bf16.gmra.mxu0 %v676
  %v1478 = vpop.f32.mrf.mxu0
  %v1479 = vadd.f32 %v1247, %v1478
  %v1480 = vpop.f32.mrf.mxu0
  %v1481 = vpop.f32.mrf.mxu0
  %v1482 = vadd.f32 %v1250, %v1481
  %v1483 = vpop.f32.mrf.mxu0
  %1484 = vmatprep.mubr.bf16.mxu0 %v682
  %1485 = vmatmul.mubr.bf16.gmra.mxu0 %v681
  %v1486 = vpop.f32.mrf.mxu0
  %v1487 = vadd.f32 %v1255, %v1486
  %v1488 = vpop.f32.mrf.mxu0
  %v1489 = vpop.f32.mrf.mxu0
  %v1490 = vadd.f32 %v1258, %v1489
  %v1491 = vpop.f32.mrf.mxu0
  %1492 = vmatprep.mubr.bf16.mxu0 %v687
  %1493 = vmatmul.mubr.bf16.gmra.mxu0 %v686
  %v1494 = vpop.f32.mrf.mxu0
  %v1495 = vadd.f32 %v1263, %v1494
  %v1496 = vpop.f32.mrf.mxu0
  %v1497 = vpop.f32.mrf.mxu0
  %v1498 = vadd.f32 %v1266, %v1497
  %v1499 = vpop.f32.mrf.mxu0
  %1500 = vmatprep.mubr.bf16.mxu0 %v692
  %1501 = vmatmul.mubr.bf16.gmra.mxu0 %v691
  %v1502 = vpop.f32.mrf.mxu0
  %v1503 = vadd.f32 %v1271, %v1502
  %v1504 = vpop.f32.mrf.mxu0
  %v1505 = vpop.f32.mrf.mxu0
  %v1506 = vadd.f32 %v1274, %v1505
  %v1507 = vpop.f32.mrf.mxu0
  %1508 = vmatprep.mubr.bf16.mxu0 %v697
  %1509 = vmatmul.mubr.bf16.gmra.mxu0 %v696
  %v1510 = vpop.f32.mrf.mxu0
  %v1511 = vadd.f32 %v1279, %v1510
  %v1512 = vpop.f32.mrf.mxu0
  %v1513 = vpop.f32.mrf.mxu0
  %v1514 = vadd.f32 %v1282, %v1513
  %v1515 = vpop.f32.mrf.mxu0
  %1516 = vmatprep.mubr.bf16.mxu0 %v702
  %1517 = vmatmul.mubr.bf16.gmra.mxu0 %v701
  %v1518 = vpop.f32.mrf.mxu0
  %v1519 = vadd.f32 %v1287, %v1518
  %v1520 = vpop.f32.mrf.mxu0
  %v1521 = vpop.f32.mrf.mxu0
  %v1522 = vadd.f32 %v1290, %v1521
  %v1523 = vpop.f32.mrf.mxu0
  %1524 = vmatprep.mubr.bf16.mxu0 %v707
  %1525 = vmatmul.mubr.bf16.gmra.mxu0 %v706
  %v1526 = vpop.f32.mrf.mxu0
  %v1527 = vadd.f32 %v1295, %v1526
  %v1528 = vpop.f32.mrf.mxu0
  %v1529 = vpop.f32.mrf.mxu0
  %v1530 = vadd.f32 %v1298, %v1529
  %v1531 = vpop.f32.mrf.mxu0
  %1532 = vmatprep.mubr.bf16.mxu0 %v712
  %1533 = vmatmul.mubr.bf16.gmra.mxu0 %v711
  %v1534 = vpop.f32.mrf.mxu0
  %v1535 = vadd.f32 %v1303, %v1534
  %v1536 = vpop.f32.mrf.mxu0
  %v1537 = vpop.f32.mrf.mxu0
  %v1538 = vadd.f32 %v1306, %v1537
  %v1539 = vpop.f32.mrf.mxu0
  %1540 = vmatprep.mubr.bf16.mxu0 %v717
  %1541 = vmatmul.mubr.bf16.gmra.mxu0 %v716
  %v1542 = vpop.f32.mrf.mxu0
  %v1543 = vadd.f32 %v1311, %v1542
  %v1544 = vpop.f32.mrf.mxu0
  %v1545 = vpop.f32.mrf.mxu0
  %v1546 = vadd.f32 %v1314, %v1545
  %v1547 = vpop.f32.mrf.mxu0
  %1548 = vmatprep.mubr.bf16.mxu0 %v722
  %1549 = vmatmul.mubr.bf16.gmra.mxu0 %v721
  %v1550 = vpop.f32.mrf.mxu0
  %v1551 = vadd.f32 %v1319, %v1550
  %v1552 = vpop.f32.mrf.mxu0
  %v1553 = vpop.f32.mrf.mxu0
  %v1554 = vadd.f32 %v1322, %v1553
  %v1555 = vpop.f32.mrf.mxu0
  %1556 = vmatprep.mubr.bf16.mxu0 %v727
  %1557 = vmatmul.mubr.bf16.gmra.mxu0 %v726
  %v1558 = vpop.f32.mrf.mxu0
  %v1559 = vadd.f32 %v1327, %v1558
  %v1560 = vpop.f32.mrf.mxu0
  %v1561 = vpop.f32.mrf.mxu0
  %v1562 = vadd.f32 %v1330, %v1561
  %v1563 = vpop.f32.mrf.mxu0
  %1564 = vmatprep.mubr.bf16.mxu0 %v732
  %1565 = vmatmul.mubr.bf16.gmra.mxu0 %v731
  %v1566 = vpop.f32.mrf.mxu0
  %v1567 = vadd.f32 %v1335, %v1566
  %v1568 = vpop.f32.mrf.mxu0
  %v1569 = vpop.f32.mrf.mxu0
  %v1570 = vadd.f32 %v1338, %v1569
  %v1571 = vpop.f32.mrf.mxu0
  %1572 = vmatprep.mubr.bf16.mxu0 %v737
  %1573 = vmatmul.mubr.bf16.gmra.mxu0 %v736
  %v1574 = vpop.f32.mrf.mxu0
  %v1575 = vadd.f32 %v1343, %v1574
  %v1576 = vpop.f32.mrf.mxu0
  %v1577 = vpop.f32.mrf.mxu0
  %v1578 = vadd.f32 %v1346, %v1577
  %v1579 = vpop.f32.mrf.mxu0
  %1580 = vmatprep.mubr.bf16.mxu0 %v742
  %1581 = vmatmul.mubr.bf16.gmra.mxu0 %v741
  %v1582 = vpop.f32.mrf.mxu0
  %v1583 = vadd.f32 %v1351, %v1582
  %v1584 = vpop.f32.mrf.mxu0
  %v1585 = vpop.f32.mrf.mxu0
  %v1586 = vadd.f32 %v1354, %v1585
  %v1587 = vpop.f32.mrf.mxu0
  %1588 = vmatprep.mubr.bf16.mxu0 %v747
  %1589 = vmatmul.mubr.bf16.gmra.mxu0 %v746
  %v1590 = vpop.f32.mrf.mxu0
  %v1591 = vadd.f32 %v1359, %v1590
  %v1592 = vpop.f32.mrf.mxu0
  %v1593 = vpop.f32.mrf.mxu0
  %v1594 = vadd.f32 %v1362, %v1593
  %v1595 = vpop.f32.mrf.mxu0
  %1596 = vmatprep.mubr.bf16.mxu0 %v752
  %1597 = vmatmul.mubr.bf16.gmra.mxu0 %v751
  %v1598 = vpop.f32.mrf.mxu0
  %v1599 = vadd.f32 %v1367, %v1598
  %v1600 = vpop.f32.mrf.mxu0
  %v1601 = vpop.f32.mrf.mxu0
  %v1602 = vadd.f32 %v1370, %v1601
  %v1603 = vpop.f32.mrf.mxu0
  %1604 = vmatprep.mubr.bf16.mxu0 %v757
  %1605 = vmatmul.mubr.bf16.gmra.mxu0 %v756
  %v1606 = vpop.f32.mrf.mxu0
  %v1607 = vadd.f32 %v1375, %v1606
  %v1608 = vpop.f32.mrf.mxu0
  %v1609 = vpop.f32.mrf.mxu0
  %v1610 = vadd.f32 %v1378, %v1609
  %v1611 = vpop.f32.mrf.mxu0
  %1612 = vmatprep.mubr.bf16.mxu0 %v762
  %1613 = vmatmul.mubr.bf16.gmra.mxu0 %v761
  %v1614 = vpop.f32.mrf.mxu0
  %v1615 = vadd.f32 %v1383, %v1614
  %v1616 = vpop.f32.mrf.mxu0
  %v1617 = vpop.f32.mrf.mxu0
  %v1618 = vpop.f32.mrf.mxu0
  %1619 = vdwg.mxu0
  %1620 = vmatprep.subr.bf16.mxu0 0
  %1621 = vmatpush1.bf16.msra.mxu0 0
  %1622 = vmatprep.subr.bf16.mxu0 0
  %1623 = vmatpush1.bf16.msra.mxu0 0
  %1624 = vmatprep.subr.bf16.mxu0 0
  %1625 = vmatpush1.bf16.msra.mxu0 0
  %1626 = vmatprep.subr.bf16.mxu0 0
  %1627 = vmatpush1.bf16.msra.mxu0 0
  %1628 = vmatprep.subr.bf16.mxu0 0
  %1629 = vmatpush1.bf16.msra.mxu0 %v1043
  %1630 = vmatprep.subr.bf16.mxu0 0
  %1631 = vmatpush1.bf16.msra.mxu0 %v1042
  %1632 = vmatprep.subr.bf16.mxu0 0
  %1633 = vmatpush1.bf16.msra.mxu0 %v1041
  %1634 = vmatprep.subr.bf16.mxu0 0
  %1635 = vmatpush1.bf16.msra.mxu0 %v1040
  %1636 = vmatprep.subr.bf16.mxu0 0
  %1637 = vmatpush2.bf16.msra.mxu0 0
  %1638 = vmatprep.subr.bf16.mxu0 0
  %1639 = vmatpush2.bf16.msra.mxu0 0
  %1640 = vmatprep.subr.bf16.mxu0 0
  %1641 = vmatpush2.bf16.msra.mxu0 0
  %1642 = vmatprep.subr.bf16.mxu0 0
  %1643 = vmatpush2.bf16.msra.mxu0 0
  %1644 = vmatprep.subr.bf16.mxu0 0
  %1645 = vmatpush2.bf16.msra.mxu0 0
  %1646 = vmatprep.subr.bf16.mxu0 0
  %1647 = vmatpush2.bf16.msra.mxu0 0
  %1648 = vmatprep.subr.bf16.mxu0 0
  %1649 = vmatpush2.bf16.msra.mxu0 0
  %1650 = vmatprep.subr.bf16.mxu0 0
  %1651 = vmatpush2.bf16.msra.mxu0 0
  %1652 = vmatprep.mubr.bf16.mxu0 0
  %1653 = vmatmul.mubr.bf16.gmra.mxu0 %v1082
  %v1654 = vpop.f32.mrf.mxu0
  %v1655 = vadd.f32 %v1423, %v1654
  %v1656 = vpop.f32.mrf.mxu0
  %v1657 = vpop.f32.mrf.mxu0
  %v1658 = vadd.f32 %v1426, %v1657
  %v1659 = vpop.f32.mrf.mxu0
  %1660 = vmatprep.mubr.bf16.mxu0 0
  %1661 = vmatmul.mubr.bf16.gmra.mxu0 %v1085
  %v1662 = vpop.f32.mrf.mxu0
  %v1663 = vadd.f32 %v1431, %v1662
  %v1664 = vpop.f32.mrf.mxu0
  %v1665 = vpop.f32.mrf.mxu0
  %v1666 = vadd.f32 %v1434, %v1665
  %v1667 = vpop.f32.mrf.mxu0
  %1668 = vmatprep.mubr.bf16.mxu0 0
  %1669 = vmatmul.mubr.bf16.gmra.mxu0 %v1088
  %v1670 = vpop.f32.mrf.mxu0
  %v1671 = vadd.f32 %v1439, %v1670
  %v1672 = vpop.f32.mrf.mxu0
  %v1673 = vpop.f32.mrf.mxu0
  %v1674 = vadd.f32 %v1442, %v1673
  %v1675 = vpop.f32.mrf.mxu0
  %1676 = vmatprep.mubr.bf16.mxu0 0
  %1677 = vmatmul.mubr.bf16.gmra.mxu0 %v1091
  %v1678 = vpop.f32.mrf.mxu0
  %v1679 = vadd.f32 %v1447, %v1678
  %v1680 = vpop.f32.mrf.mxu0
  %v1681 = vpop.f32.mrf.mxu0
  %v1682 = vadd.f32 %v1450, %v1681
  %v1683 = vpop.f32.mrf.mxu0
  %1684 = vmatprep.mubr.bf16.mxu0 0
  %1685 = vmatmul.mubr.bf16.gmra.mxu0 %v1094
  %v1686 = vpop.f32.mrf.mxu0
  %v1687 = vadd.f32 %v1455, %v1686
  %v1688 = vpop.f32.mrf.mxu0
  %v1689 = vpop.f32.mrf.mxu0
  %v1690 = vadd.f32 %v1458, %v1689
  %v1691 = vpop.f32.mrf.mxu0
  %1692 = vmatprep.mubr.bf16.mxu0 0
  %1693 = vmatmul.mubr.bf16.gmra.mxu0 %v1097
  %v1694 = vpop.f32.mrf.mxu0
  %v1695 = vadd.f32 %v1463, %v1694
  %v1696 = vpop.f32.mrf.mxu0
  %v1697 = vpop.f32.mrf.mxu0
  %v1698 = vadd.f32 %v1466, %v1697
  %v1699 = vpop.f32.mrf.mxu0
  %1700 = vmatprep.mubr.bf16.mxu0 0
  %1701 = vmatmul.mubr.bf16.gmra.mxu0 %v1100
  %v1702 = vpop.f32.mrf.mxu0
  %v1703 = vadd.f32 %v1471, %v1702
  %v1704 = vpop.f32.mrf.mxu0
  %v1705 = vpop.f32.mrf.mxu0
  %v1706 = vadd.f32 %v1474, %v1705
  %v1707 = vpop.f32.mrf.mxu0
  %1708 = vmatprep.mubr.bf16.mxu0 0
  %1709 = vmatmul.mubr.bf16.gmra.mxu0 %v1103
  %v1710 = vpop.f32.mrf.mxu0
  %v1711 = vadd.f32 %v1479, %v1710
  %v1712 = vpop.f32.mrf.mxu0
  %v1713 = vpop.f32.mrf.mxu0
  %v1714 = vadd.f32 %v1482, %v1713
  %v1715 = vpop.f32.mrf.mxu0
  %1716 = vmatprep.mubr.bf16.mxu0 0
  %1717 = vmatmul.mubr.bf16.gmra.mxu0 %v1106
  %v1718 = vpop.f32.mrf.mxu0
  %v1719 = vadd.f32 %v1487, %v1718
  %v1720 = vpop.f32.mrf.mxu0
  %v1721 = vpop.f32.mrf.mxu0
  %v1722 = vadd.f32 %v1490, %v1721
  %v1723 = vpop.f32.mrf.mxu0
  %1724 = vmatprep.mubr.bf16.mxu0 0
  %1725 = vmatmul.mubr.bf16.gmra.mxu0 %v1109
  %v1726 = vpop.f32.mrf.mxu0
  %v1727 = vadd.f32 %v1495, %v1726
  %v1728 = vpop.f32.mrf.mxu0
  %v1729 = vpop.f32.mrf.mxu0
  %v1730 = vadd.f32 %v1498, %v1729
  %v1731 = vpop.f32.mrf.mxu0
  %1732 = vmatprep.mubr.bf16.mxu0 0
  %1733 = vmatmul.mubr.bf16.gmra.mxu0 %v1112
  %v1734 = vpop.f32.mrf.mxu0
  %v1735 = vadd.f32 %v1503, %v1734
  %v1736 = vpop.f32.mrf.mxu0
  %v1737 = vpop.f32.mrf.mxu0
  %v1738 = vadd.f32 %v1506, %v1737
  %v1739 = vpop.f32.mrf.mxu0
  %1740 = vmatprep.mubr.bf16.mxu0 0
  %1741 = vmatmul.mubr.bf16.gmra.mxu0 %v1115
  %v1742 = vpop.f32.mrf.mxu0
  %v1743 = vadd.f32 %v1511, %v1742
  %v1744 = vpop.f32.mrf.mxu0
  %v1745 = vpop.f32.mrf.mxu0
  %v1746 = vadd.f32 %v1514, %v1745
  %v1747 = vpop.f32.mrf.mxu0
  %1748 = vmatprep.mubr.bf16.mxu0 0
  %1749 = vmatmul.mubr.bf16.gmra.mxu0 %v1118
  %v1750 = vpop.f32.mrf.mxu0
  %v1751 = vadd.f32 %v1519, %v1750
  %v1752 = vpop.f32.mrf.mxu0
  %v1753 = vpop.f32.mrf.mxu0
  %v1754 = vadd.f32 %v1522, %v1753
  %v1755 = vpop.f32.mrf.mxu0
  %1756 = vmatprep.mubr.bf16.mxu0 0
  %1757 = vmatmul.mubr.bf16.gmra.mxu0 %v1121
  %v1758 = vpop.f32.mrf.mxu0
  %v1759 = vadd.f32 %v1527, %v1758
  %v1760 = vpop.f32.mrf.mxu0
  %v1761 = vpop.f32.mrf.mxu0
  %v1762 = vadd.f32 %v1530, %v1761
  %v1763 = vpop.f32.mrf.mxu0
  %1764 = vmatprep.mubr.bf16.mxu0 0
  %1765 = vmatmul.mubr.bf16.gmra.mxu0 %v1124
  %v1766 = vpop.f32.mrf.mxu0
  %v1767 = vadd.f32 %v1535, %v1766
  %v1768 = vpop.f32.mrf.mxu0
  %v1769 = vpop.f32.mrf.mxu0
  %v1770 = vadd.f32 %v1538, %v1769
  %v1771 = vpop.f32.mrf.mxu0
  %1772 = vmatprep.mubr.bf16.mxu0 0
  %1773 = vmatmul.mubr.bf16.gmra.mxu0 %v1127
  %v1774 = vpop.f32.mrf.mxu0
  %v1775 = vadd.f32 %v1543, %v1774
  %v1776 = vpop.f32.mrf.mxu0
  %v1777 = vpop.f32.mrf.mxu0
  %v1778 = vadd.f32 %v1546, %v1777
  %v1779 = vpop.f32.mrf.mxu0
  %1780 = vmatprep.mubr.bf16.mxu0 0
  %1781 = vmatmul.mubr.bf16.gmra.mxu0 %v1130
  %v1782 = vpop.f32.mrf.mxu0
  %v1783 = vadd.f32 %v1551, %v1782
  %v1784 = vpop.f32.mrf.mxu0
  %v1785 = vpop.f32.mrf.mxu0
  %v1786 = vadd.f32 %v1554, %v1785
  %v1787 = vpop.f32.mrf.mxu0
  %1788 = vmatprep.mubr.bf16.mxu0 0
  %1789 = vmatmul.mubr.bf16.gmra.mxu0 %v1133
  %v1790 = vpop.f32.mrf.mxu0
  %v1791 = vadd.f32 %v1559, %v1790
  %v1792 = vpop.f32.mrf.mxu0
  %v1793 = vpop.f32.mrf.mxu0
  %v1794 = vadd.f32 %v1562, %v1793
  %v1795 = vpop.f32.mrf.mxu0
  %1796 = vmatprep.mubr.bf16.mxu0 0
  %1797 = vmatmul.mubr.bf16.gmra.mxu0 %v1136
  %v1798 = vpop.f32.mrf.mxu0
  %v1799 = vadd.f32 %v1567, %v1798
  %v1800 = vpop.f32.mrf.mxu0
  %v1801 = vpop.f32.mrf.mxu0
  %v1802 = vadd.f32 %v1570, %v1801
  %v1803 = vpop.f32.mrf.mxu0
  %1804 = vmatprep.mubr.bf16.mxu0 0
  %1805 = vmatmul.mubr.bf16.gmra.mxu0 %v1139
  %v1806 = vpop.f32.mrf.mxu0
  %v1807 = vadd.f32 %v1575, %v1806
  %v1808 = vpop.f32.mrf.mxu0
  %v1809 = vpop.f32.mrf.mxu0
  %v1810 = vadd.f32 %v1578, %v1809
  %v1811 = vpop.f32.mrf.mxu0
  %1812 = vmatprep.mubr.bf16.mxu0 0
  %1813 = vmatmul.mubr.bf16.gmra.mxu0 %v1142
  %v1814 = vpop.f32.mrf.mxu0
  %v1815 = vadd.f32 %v1583, %v1814
  %v1816 = vpop.f32.mrf.mxu0
  %v1817 = vpop.f32.mrf.mxu0
  %v1818 = vadd.f32 %v1586, %v1817
  %v1819 = vpop.f32.mrf.mxu0
  %1820 = vmatprep.mubr.bf16.mxu0 0
  %1821 = vmatmul.mubr.bf16.gmra.mxu0 %v1145
  %v1822 = vpop.f32.mrf.mxu0
  %v1823 = vadd.f32 %v1591, %v1822
  %v1824 = vpop.f32.mrf.mxu0
  %v1825 = vpop.f32.mrf.mxu0
  %v1826 = vadd.f32 %v1594, %v1825
  %v1827 = vpop.f32.mrf.mxu0
  %1828 = vmatprep.mubr.bf16.mxu0 0
  %1829 = vmatmul.mubr.bf16.gmra.mxu0 %v1148
  %v1830 = vpop.f32.mrf.mxu0
  %v1831 = vadd.f32 %v1599, %v1830
  %v1832 = vpop.f32.mrf.mxu0
  %v1833 = vpop.f32.mrf.mxu0
  %v1834 = vadd.f32 %v1602, %v1833
  %v1835 = vpop.f32.mrf.mxu0
  %1836 = vmatprep.mubr.bf16.mxu0 0
  %1837 = vmatmul.mubr.bf16.gmra.mxu0 %v1151
  %v1838 = vpop.f32.mrf.mxu0
  %v1839 = vadd.f32 %v1607, %v1838
  %v1840 = vpop.f32.mrf.mxu0
  %v1841 = vpop.f32.mrf.mxu0
  %v1842 = vadd.f32 %v1610, %v1841
  %v1843 = vpop.f32.mrf.mxu0
  %1844 = vmatprep.mubr.bf16.mxu0 0
  %1845 = vmatmul.mubr.bf16.gmra.mxu0 %v1154
  %v1846 = vpop.f32.mrf.mxu0
  %v1847 = vadd.f32 %v1615, %v1846
  %v1848 = vpop.f32.mrf.mxu0
  %v1849 = vpop.f32.mrf.mxu0
  %v1850 = vpop.f32.mrf.mxu0
  %1851 = vdwg.mxu0
  %v1852 = vtanh.pop %v1655
  %v1853 = vtanh.pop %v1658
  %v1854 = vtanh.pop %v1663
  %v1855 = vtanh.pop %v1666
  %v1856 = vtanh.pop %v1671
  %v1857 = vtanh.pop %v1674
  %v1858 = vtanh.pop %v1679
  %v1859 = vtanh.pop %v1682
  %v1860 = vtanh.pop %v1687
  %v1861 = vtanh.pop %v1690
  %v1862 = vtanh.pop %v1695
  %v1863 = vtanh.pop %v1698
  %v1864 = vtanh.pop %v1703
  %v1865 = vtanh.pop %v1706
  %v1866 = vtanh.pop %v1711
  %v1867 = vtanh.pop %v1714
  %v1868 = vtanh.pop %v1719
  %v1869 = vtanh.pop %v1722
  %v1870 = vtanh.pop %v1727
  %v1871 = vtanh.pop %v1730
  %v1872 = vtanh.pop %v1735
  %v1873 = vtanh.pop %v1738
  %v1874 = vtanh.pop %v1743
  %v1875 = vtanh.pop %v1746
  %v1876 = vtanh.pop %v1751
  %v1877 = vtanh.pop %v1754
  %v1878 = vtanh.pop %v1759
  %v1879 = vtanh.pop %v1762
  %v1880 = vtanh.pop %v1767
  %v1881 = vtanh.pop %v1770
  %v1882 = vtanh.pop %v1775
  %v1883 = vtanh.pop %v1778
  %v1884 = vtanh.pop %v1783
  %v1885 = vtanh.pop %v1786
  %v1886 = vtanh.pop %v1791
  %v1887 = vtanh.pop %v1794
  %v1888 = vtanh.pop %v1799
  %v1889 = vtanh.pop %v1802
  %v1890 = vtanh.pop %v1807
  %v1891 = vtanh.pop %v1810
  %v1892 = vtanh.pop %v1815
  %v1893 = vtanh.pop %v1818
  %v1894 = vtanh.pop %v1823
  %v1895 = vtanh.pop %v1826
  %v1896 = vtanh.pop %v1831
  %v1897 = vtanh.pop %v1834
  %v1898 = vtanh.pop %v1839
  %v1899 = vtanh.pop %v1842
  %v1900 = vtanh.pop %v1847
  %vm1901 = vcmask 31744
  %1902 = vst.msk [vmem:[%s5] sm:$0xff] %vm1901, %v1852
  %1903 = vst.msk [vmem:[%s5 + $0x8] sm:$0xff] %vm1901, %v1853
  %1904 = vst.msk [vmem:[%s5 + $0x10] sm:$0xff] %vm1901, %v1854
  %1905 = vst.msk [vmem:[%s5 + $0x18] sm:$0xff] %vm1901, %v1855
  %1906 = vst.msk [vmem:[%s5 + $0x20] sm:$0xff] %vm1901, %v1856
  %1907 = vst.msk [vmem:[%s5 + $0x28] sm:$0xff] %vm1901, %v1857
  %1908 = vst.msk [vmem:[%s5 + $0x30] sm:$0xff] %vm1901, %v1858
  %1909 = vst.msk [vmem:[%s5 + $0x38] sm:$0xff] %vm1901, %v1859
  %1910 = vst.msk [vmem:[%s5 + $0x40] sm:$0xff] %vm1901, %v1860
  %1911 = vst.msk [vmem:[%s5 + $0x48] sm:$0xff] %vm1901, %v1861
  %1912 = vst.msk [vmem:[%s5 + $0x50] sm:$0xff] %vm1901, %v1862
  %1913 = vst.msk [vmem:[%s5 + $0x58] sm:$0xff] %vm1901, %v1863
  %1914 = vst.msk [vmem:[%s5 + $0x60] sm:$0xff] %vm1901, %v1864
  %1915 = vst.msk [vmem:[%s5 + $0x68] sm:$0xff] %vm1901, %v1865
  %1916 = vst.msk [vmem:[%s5 + $0x70] sm:$0xff] %vm1901, %v1866
  %1917 = vst.msk [vmem:[%s5 + $0x78] sm:$0xff] %vm1901, %v1867
  %1918 = vst.msk [vmem:[%s5 + $0x80] sm:$0xff] %vm1901, %v1868
  %1919 = vst.msk [vmem:[%s5 + $0x88] sm:$0xff] %vm1901, %v1869
  %1920 = vst.msk [vmem:[%s5 + $0x90] sm:$0xff] %vm1901, %v1870
  %1921 = vst.msk [vmem:[%s5 + $0x98] sm:$0xff] %vm1901, %v1871
  %1922 = vst.msk [vmem:[%s5 + $0xa0] sm:$0xff] %vm1901, %v1872
  %1923 = vst.msk [vmem:[%s5 + $0xa8] sm:$0xff] %vm1901, %v1873
  %1924 = vst.msk [vmem:[%s5 + $0xb0] sm:$0xff] %vm1901, %v1874
  %1925 = vst.msk [vmem:[%s5 + $0xb8] sm:$0xff] %vm1901, %v1875
  %1926 = vst.msk [vmem:[%s5 + $0xc0] sm:$0xff] %vm1901, %v1876
  %1927 = vst.msk [vmem:[%s5 + $0xc8] sm:$0xff] %vm1901, %v1877
  %1928 = vst.msk [vmem:[%s5 + $0xd0] sm:$0xff] %vm1901, %v1878
  %1929 = vst.msk [vmem:[%s5 + $0xd8] sm:$0xff] %vm1901, %v1879
  %1930 = vst.msk [vmem:[%s5 + $0xe0] sm:$0xff] %vm1901, %v1880
  %1931 = vst.msk [vmem:[%s5 + $0xe8] sm:$0xff] %vm1901, %v1881
  %1932 = vst.msk [vmem:[%s5 + $0xf0] sm:$0xff] %vm1901, %v1882
  %1933 = vst.msk [vmem:[%s5 + $0xf8] sm:$0xff] %vm1901, %v1883
  %1934 = vst.msk [vmem:[%s5 + $0x100] sm:$0xff] %vm1901, %v1884
  %1935 = vst.msk [vmem:[%s5 + $0x108] sm:$0xff] %vm1901, %v1885
  %1936 = vst.msk [vmem:[%s5 + $0x110] sm:$0xff] %vm1901, %v1886
  %1937 = vst.msk [vmem:[%s5 + $0x118] sm:$0xff] %vm1901, %v1887
  %1938 = vst.msk [vmem:[%s5 + $0x120] sm:$0xff] %vm1901, %v1888
  %1939 = vst.msk [vmem:[%s5 + $0x128] sm:$0xff] %vm1901, %v1889
  %1940 = vst.msk [vmem:[%s5 + $0x130] sm:$0xff] %vm1901, %v1890
  %1941 = vst.msk [vmem:[%s5 + $0x138] sm:$0xff] %vm1901, %v1891
  %1942 = vst.msk [vmem:[%s5 + $0x140] sm:$0xff] %vm1901, %v1892
  %1943 = vst.msk [vmem:[%s5 + $0x148] sm:$0xff] %vm1901, %v1893
  %1944 = vst.msk [vmem:[%s5 + $0x150] sm:$0xff] %vm1901, %v1894
  %1945 = vst.msk [vmem:[%s5 + $0x158] sm:$0xff] %vm1901, %v1895
  %1946 = vst.msk [vmem:[%s5 + $0x160] sm:$0xff] %vm1901, %v1896
  %1947 = vst.msk [vmem:[%s5 + $0x168] sm:$0xff] %vm1901, %v1897
  %1948 = vst.msk [vmem:[%s5 + $0x170] sm:$0xff] %vm1901, %v1898
  %1949 = vst.msk [vmem:[%s5 + $0x178] sm:$0xff] %vm1901, %v1899
  %1950 = vst.msk [vmem:[%s5 + $0x180] sm:$0xff] %vm1901, %v1900
  // Predicated region
  $region22: #{generator_forward.5} parent=0 // pred_check
    _
  $region23: #{generator_forward.5} parent=0 // pred_check_branch
    %1952 = sbr.rel (0) target = $region25
  $region24: #{generator_forward.5} parent=0 // pred_region
    _
  $region25: #{generator_forward.5} parent=0 // pred_fallthru
    _
  // Predicated region
  $region26: #{generator_forward.5} parent=0 // pred_check
    _
  $region27: #{generator_forward.5} parent=0 // pred_check_branch
    %1954 = sbr.rel (0) target = $region29
  $region28: #{generator_forward.5} parent=0 // pred_region
    _
  $region29: #{generator_forward.5} parent=0 // pred_fallthru
    _

</llo_original>
